<compile_context>
chip_gen: v6e
topology: v6e:2x2x1
jax: 0.10.0
libtpu: 0.0.40
codegen_flags: <defaults>
</compile_context>

<pallas_src>
import functools

import jax
import jax.numpy as jnp
from jax.experimental import pallas as pl
from jax.experimental.pallas import tpu as pltpu

EPS = 1e-5   # nn.BatchNorm2d default
LANE = 128   # TPU lane width


def _round_up(x, m):
    return (x + m - 1) // m * m


# ---------------------------------------------------------------------------
# Kernel 1: fused convolution + partial BatchNorm statistics
#   grid = (N, OH // TOH); x block = one whole padded image (resident per n),
#   weights resident; output block = (1, TOH, OW, Coutp) lane-dense rows.
# ---------------------------------------------------------------------------
def conv_stats_kernel(x_ref, w_ref, y_ref, s_ref, ss_ref, *,
                      kh, kw, ow, toh, stride, cin, coutp):
    rt = pl.program_id(1)

    tile_sum = jnp.zeros((1, 1, coutp), jnp.float32)
    tile_ssq = jnp.zeros((1, 1, coutp), jnp.float32)

    for t in range(toh):                      # output rows in this tile
        base = (rt * toh + t) * stride        # first padded input row needed
        acc = jnp.zeros((ow, coutp), jnp.float32)
        for i in range(kh):
            # One padded input row: (Wp, Cin)
            rowv = x_ref[0, pl.ds(base + i, 1), :, :][0]
            for j in range(kw):
                if stride == 1:
                    lhs = rowv[j:j + ow, :]                       # (OW, Cin)
                else:
                    lhs = jax.lax.slice(
                        rowv, (j, 0),
                        (j + (ow - 1) * stride + 1, cin),
                        (stride, 1))                              # (OW, Cin)
                acc = acc + jnp.dot(lhs, w_ref[i * kw + j],
                                    preferred_element_type=jnp.float32)
        y_ref[0, t] = acc                                          # (OW, Coutp)
        tile_sum = tile_sum + jnp.sum(acc, axis=0, keepdims=True)[None]
        tile_ssq = tile_ssq + jnp.sum(acc * acc, axis=0, keepdims=True)[None]

    @pl.when(rt == 0)
    def _():
        s_ref[...] = tile_sum
        ss_ref[...] = tile_ssq

    @pl.when(rt > 0)
    def _():
        s_ref[...] = s_ref[...] + tile_sum
        ss_ref[...] = ss_ref[...] + tile_ssq


def conv_bn_stats_pallas(xpad, wmat, *, n, oh, ow, kh, kw, toh, stride):
    _, hp, wp, cin = xpad.shape
    coutp = wmat.shape[-1]
    kernel = functools.partial(conv_stats_kernel, kh=kh, kw=kw, ow=ow, toh=toh,
                               stride=stride, cin=cin, coutp=coutp)
    y, s, ss = pl.pallas_call(
        kernel,
        out_shape=(
            jax.ShapeDtypeStruct((n, oh, ow, coutp), jnp.float32),  # conv out
            jax.ShapeDtypeStruct((n, 1, coutp), jnp.float32),       # sum
            jax.ShapeDtypeStruct((n, 1, coutp), jnp.float32),       # sum sq
        ),
        grid=(n, oh // toh),
        in_specs=[
            pl.BlockSpec((1, hp, wp, cin), lambda b, r: (b, 0, 0, 0)),
            pl.BlockSpec((kh * kw, cin, coutp), lambda b, r: (0, 0, 0)),
        ],
        out_specs=(
            pl.BlockSpec((1, toh, ow, coutp), lambda b, r: (b, r, 0, 0)),
            pl.BlockSpec((1, 1, coutp), lambda b, r: (b, 0, 0)),
            pl.BlockSpec((1, 1, coutp), lambda b, r: (b, 0, 0)),
        ),
        compiler_params=pltpu.CompilerParams(
            dimension_semantics=("parallel", "arbitrary")),
    )(xpad, wmat)
    return y, s, ss


# ---------------------------------------------------------------------------
# Kernel 2: normalize (precomputed per-channel scale/shift) + ReLU, tiled over M
# ---------------------------------------------------------------------------
def bn_relu_kernel(x_ref, scale_ref, shift_ref, o_ref):
    o_ref[...] = jnp.maximum(x_ref[...] * scale_ref[...] + shift_ref[...], 0.0)


def bn_relu_pallas(x, scale, shift, *, tm=256):
    m, c = x.shape
    tm = min(tm, m)
    return pl.pallas_call(
        bn_relu_kernel,
        out_shape=jax.ShapeDtypeStruct((m, c), jnp.float32),
        grid=(pl.cdiv(m, tm),),
        in_specs=[
            pl.BlockSpec((tm, c), lambda i: (i, 0)),
            pl.BlockSpec((1, c), lambda i: (0, 0)),
            pl.BlockSpec((1, c), lambda i: (0, 0)),
        ],
        out_specs=pl.BlockSpec((tm, c), lambda i: (i, 0)),
        compiler_params=pltpu.CompilerParams(dimension_semantics=("parallel",)),
    )(x, scale, shift)


# ---------------------------------------------------------------------------
# Full forward
# ---------------------------------------------------------------------------
@functools.partial(jax.jit,
                   static_argnames=("kernel_size", "stride", "padding",
                                    "compute_dtype"))
def layer_forward(x, weight, bias, gamma, beta, *, kernel_size, stride, padding,
                  compute_dtype=jnp.float32):
    # `bias` is accepted for interface parity with nn.Conv2d but not applied:
    # training-mode BatchNorm subtracts the per-channel batch mean of the conv
    # output, so a per-channel constant bias cancels exactly.
    del bias
    n, cin, h, w = x.shape
    cout = weight.shape[0]
    kh = kw = kernel_size
    oh = (h + 2 * padding - kh) // stride + 1
    ow = (w + 2 * padding - kw) // stride + 1
    coutp = max(LANE, _round_up(cout, LANE))   # lane-dense channel dim

    # Input: NCHW -> NHWC + spatial zero pad (no HBM im2col patches).
    xh = jnp.transpose(x, (0, 2, 3, 1)).astype(compute_dtype)
    xpad = jnp.pad(xh, ((0, 0), (padding, padding), (padding, padding), (0, 0)))

    # Weights: (Cout, Cin, KH, KW) -> (KH*KW, Cin, Coutp), zero-padded channels.
    # TODO(synk): pre-store weights in this layout to avoid the per-call transpose.
    wmat = jnp.transpose(weight, (2, 3, 1, 0)).reshape(kh * kw, cin, cout)
    wmat = jnp.pad(wmat, ((0, 0), (0, 0), (0, coutp - cout))).astype(compute_dtype)

    toh = next(d for d in (8, 4, 2, 1) if oh % d == 0)   # rows per grid step
    y, s, ss = conv_bn_stats_pallas(xpad, wmat, n=n, oh=oh, ow=ow, kh=kh, kw=kw,
                                    toh=toh, stride=stride)

    # Finalize BN statistics (tiny per-channel math in XLA).
    m = n * oh * ow
    total = jnp.sum(s, axis=(0, 1))
    total_sq = jnp.sum(ss, axis=(0, 1))
    mean = total / m
    var = jnp.maximum(total_sq / m - mean * mean, 0.0)     # biased batch var
    gp = jnp.pad(gamma, (0, coutp - cout))
    bp = jnp.pad(beta, (0, coutp - cout))
    scale = gp * jax.lax.rsqrt(var + EPS)
    shift = bp - mean * scale

    # Tiled normalize + ReLU over the flat (M, Coutp) view (free reshape).
    z = bn_relu_pallas(y.reshape(m, coutp),
                       scale.reshape(1, coutp), shift.reshape(1, coutp))

    # Slice away channel padding, back to NCHW.
    return z[:, :cout].reshape(n, oh, ow, cout).transpose(0, 3, 1, 2)


# ---------------------------------------------------------------------------
# Reference (pure JAX) for validation
# ---------------------------------------------------------------------------
def layer_reference(x, weight, bias, gamma, beta, *, stride, padding):
    conv = jax.lax.conv_general_dilated(
        x, weight, window_strides=(stride, stride),
        padding=[(padding, padding), (padding, padding)],
        dimension_numbers=("NCHW", "OIHW", "NCHW"))
    conv = conv + bias[None, :, None, None]
    mean = conv.mean(axis=(0, 2, 3), keepdims=True)
    var = ((conv - mean) ** 2).mean(axis=(0, 2, 3), keepdims=True)
    xhat = (conv - mean) * jax.lax.rsqrt(var + EPS)
    y = xhat * gamma[None, :, None, None] + beta[None, :, None, None]
    return jnp.maximum(y, 0.0)


if __name__ == "__main__":
    # layer(input_channel=4, output_channel=8, kernel_size=3, stride=1, padding=1)
    Cin, Cout, KS, STRIDE, PAD = 4, 8, 3, 1, 1
    N, H, W = 2, 16, 16

    key = jax.random.PRNGKey(0)
    kx, kw_, kb = jax.random.split(key, 3)
    x = jax.random.normal(kx, (N, Cin, H, W), dtype=jnp.float32)
    weight = jax.random.normal(kw_, (Cout, Cin, KS, KS), dtype=jnp.float32) * 0.1
    bias = jax.random.normal(kb, (Cout,), dtype=jnp.float32) * 0.1
    gamma = jnp.ones((Cout,), dtype=jnp.float32)   # BatchNorm2d weight init
    beta = jnp.zeros((Cout,), dtype=jnp.float32)   # BatchNorm2d bias init

    out = layer_forward(x, weight, bias, gamma, beta,
                        kernel_size=KS, stride=STRIDE, padding=PAD)
    out = jax.block_until_ready(out)

    ref = layer_reference(x, weight, bias, gamma, beta, stride=STRIDE, padding=PAD)
    assert out.shape == ref.shape == (N, Cout, H, W)
    assert jnp.allclose(out, ref, atol=1e-3, rtol=1e-3)

    print("KERNEL_OK")
</pallas_src>

<mosaic_0001>
module attributes {stable_mosaic.version = 11 : i64} {
  func.func @conv_stats_kernel(%arg0: i32, %arg1: i32, %arg2: memref<1x18x18x4xf32, #tpu.memory_space<vmem>>, %arg3: memref<9x4x128xf32, #tpu.memory_space<vmem>>, %arg4: memref<1x8x16x128xf32, #tpu.memory_space<vmem>>, %arg5: memref<1x1x128xf32, #tpu.memory_space<vmem>>, %arg6: memref<1x1x128xf32, #tpu.memory_space<vmem>>) attributes {dimension_semantics = [#tpu.dimension_semantics<parallel>, #tpu.dimension_semantics<arbitrary>], iteration_bounds = array<i64: 2, 2>, scalar_prefetch = 0 : i64, scratch_operands = 0 : i64, tpu.core_type = #tpu.core_type<tc>, window_params = [{transform_indices = @transform_0, window_bounds = array<i64: 1, 18, 18, 4>}, {pipeline_mode = #tpu.pipeline_mode<synchronous>, transform_indices = @transform_1, window_bounds = array<i64: 9, 4, 128>}, {transform_indices = @transform_2, window_bounds = array<i64: 1, 8, 16, 128>}, {transform_indices = @transform_3, window_bounds = array<i64: 1, 1, 128>}, {transform_indices = @transform_4, window_bounds = array<i64: 1, 1, 128>}]} {
    %cst = arith.constant 0.000000e+00 : f32
    %0 = vector.broadcast %cst : f32 to vector<1x1x128xf32>
    %cst_0 = arith.constant 0.000000e+00 : f32
    %1 = vector.broadcast %cst_0 : f32 to vector<1x1x128xf32>
    %c8_i32 = arith.constant 8 : i32
    %2 = arith.muli %arg1, %c8_i32 : i32
    %c0_i32 = arith.constant 0 : i32
    %3 = arith.addi %2, %c0_i32 : i32
    %c1_i32 = arith.constant 1 : i32
    %4 = arith.muli %3, %c1_i32 : i32
    %cst_1 = arith.constant 0.000000e+00 : f32
    %5 = vector.broadcast %cst_1 : f32 to vector<16x128xf32>
    %c0_i32_2 = arith.constant 0 : i32
    %6 = arith.addi %4, %c0_i32_2 : i32
    %c0 = arith.constant 0 : index
    %7 = arith.index_cast %6 : i32 to index
    %c0_3 = arith.constant 0 : index
    %c0_4 = arith.constant 0 : index
    %8 = vector.load %arg2[%c0, %7, %c0_3, %c0_4] : memref<1x18x18x4xf32, #tpu.memory_space<vmem>>, vector<1x1x18x4xf32>
    %9 = vector.shape_cast %8 : vector<1x1x18x4xf32> to vector<1x18x4xf32>
    %10 = vector.shape_cast %9 : vector<1x18x4xf32> to vector<18x4xf32>
    %11 = vector.extract_strided_slice %10 {offsets = [0, 0], sizes = [16, 4], strides = [1, 1]} : vector<18x4xf32> to vector<16x4xf32>
    %c0_5 = arith.constant 0 : index
    %c0_6 = arith.constant 0 : index
    %c0_7 = arith.constant 0 : index
    %12 = vector.load %arg3[%c0_5, %c0_6, %c0_7] : memref<9x4x128xf32, #tpu.memory_space<vmem>>, vector<1x4x128xf32>
    %13 = vector.shape_cast %12 : vector<1x4x128xf32> to vector<4x128xf32>
    %cst_8 = arith.constant dense<0.000000e+00> : vector<16x128xf32>
    %14 = tpu.matmul %11, %13, %cst_8 {dimension_numbers = #tpu.dot_dimension_numbers<[1], [0], [0], [1], [0, 0, 1, 1], [], []>} : vector<16x4xf32>, vector<4x128xf32>, vector<16x128xf32> -> vector<16x128xf32>
    %15 = arith.addf %5, %14 : vector<16x128xf32>
    %16 = vector.extract_strided_slice %10 {offsets = [1, 0], sizes = [16, 4], strides = [1, 1]} : vector<18x4xf32> to vector<16x4xf32>
    %c1 = arith.constant 1 : index
    %c0_9 = arith.constant 0 : index
    %c0_10 = arith.constant 0 : index
    %17 = vector.load %arg3[%c1, %c0_9, %c0_10] : memref<9x4x128xf32, #tpu.memory_space<vmem>>, vector<1x4x128xf32>
    %18 = vector.shape_cast %17 : vector<1x4x128xf32> to vector<4x128xf32>
    %cst_11 = arith.constant dense<0.000000e+00> : vector<16x128xf32>
    %19 = tpu.matmul %16, %18, %cst_11 {dimension_numbers = #tpu.dot_dimension_numbers<[1], [0], [0], [1], [0, 0, 1, 1], [], []>} : vector<16x4xf32>, vector<4x128xf32>, vector<16x128xf32> -> vector<16x128xf32>
    %20 = arith.addf %15, %19 : vector<16x128xf32>
    %21 = vector.extract_strided_slice %10 {offsets = [2, 0], sizes = [16, 4], strides = [1, 1]} : vector<18x4xf32> to vector<16x4xf32>
    %c2 = arith.constant 2 : index
    %c0_12 = arith.constant 0 : index
    %c0_13 = arith.constant 0 : index
    %22 = vector.load %arg3[%c2, %c0_12, %c0_13] : memref<9x4x128xf32, #tpu.memory_space<vmem>>, vector<1x4x128xf32>
    %23 = vector.shape_cast %22 : vector<1x4x128xf32> to vector<4x128xf32>
    %cst_14 = arith.constant dense<0.000000e+00> : vector<16x128xf32>
    %24 = tpu.matmul %21, %23, %cst_14 {dimension_numbers = #tpu.dot_dimension_numbers<[1], [0], [0], [1], [0, 0, 1, 1], [], []>} : vector<16x4xf32>, vector<4x128xf32>, vector<16x128xf32> -> vector<16x128xf32>
    %25 = arith.addf %20, %24 : vector<16x128xf32>
    %c1_i32_15 = arith.constant 1 : i32
    %26 = arith.addi %4, %c1_i32_15 : i32
    %c0_16 = arith.constant 0 : index
    %27 = arith.index_cast %26 : i32 to index
    %c0_17 = arith.constant 0 : index
    %c0_18 = arith.constant 0 : index
    %28 = vector.load %arg2[%c0_16, %27, %c0_17, %c0_18] : memref<1x18x18x4xf32, #tpu.memory_space<vmem>>, vector<1x1x18x4xf32>
    %29 = vector.shape_cast %28 : vector<1x1x18x4xf32> to vector<1x18x4xf32>
    %30 = vector.shape_cast %29 : vector<1x18x4xf32> to vector<18x4xf32>
    %31 = vector.extract_strided_slice %30 {offsets = [0, 0], sizes = [16, 4], strides = [1, 1]} : vector<18x4xf32> to vector<16x4xf32>
    %c3 = arith.constant 3 : index
    %c0_19 = arith.constant 0 : index
    %c0_20 = arith.constant 0 : index
    %32 = vector.load %arg3[%c3, %c0_19, %c0_20] : memref<9x4x128xf32, #tpu.memory_space<vmem>>, vector<1x4x128xf32>
    %33 = vector.shape_cast %32 : vector<1x4x128xf32> to vector<4x128xf32>
    %cst_21 = arith.constant dense<0.000000e+00> : vector<16x128xf32>
    %34 = tpu.matmul %31, %33, %cst_21 {dimension_numbers = #tpu.dot_dimension_numbers<[1], [0], [0], [1], [0, 0, 1, 1], [], []>} : vector<16x4xf32>, vector<4x128xf32>, vector<16x128xf32> -> vector<16x128xf32>
    %35 = arith.addf %25, %34 : vector<16x128xf32>
    %36 = vector.extract_strided_slice %30 {offsets = [1, 0], sizes = [16, 4], strides = [1, 1]} : vector<18x4xf32> to vector<16x4xf32>
    %c4 = arith.constant 4 : index
    %c0_22 = arith.constant 0 : index
    %c0_23 = arith.constant 0 : index
    %37 = vector.load %arg3[%c4, %c0_22, %c0_23] : memref<9x4x128xf32, #tpu.memory_space<vmem>>, vector<1x4x128xf32>
    %38 = vector.shape_cast %37 : vector<1x4x128xf32> to vector<4x128xf32>
    %cst_24 = arith.constant dense<0.000000e+00> : vector<16x128xf32>
    %39 = tpu.matmul %36, %38, %cst_24 {dimension_numbers = #tpu.dot_dimension_numbers<[1], [0], [0], [1], [0, 0, 1, 1], [], []>} : vector<16x4xf32>, vector<4x128xf32>, vector<16x128xf32> -> vector<16x128xf32>
    %40 = arith.addf %35, %39 : vector<16x128xf32>
    %41 = vector.extract_strided_slice %30 {offsets = [2, 0], sizes = [16, 4], strides = [1, 1]} : vector<18x4xf32> to vector<16x4xf32>
    %c5 = arith.constant 5 : index
    %c0_25 = arith.constant 0 : index
    %c0_26 = arith.constant 0 : index
    %42 = vector.load %arg3[%c5, %c0_25, %c0_26] : memref<9x4x128xf32, #tpu.memory_space<vmem>>, vector<1x4x128xf32>
    %43 = vector.shape_cast %42 : vector<1x4x128xf32> to vector<4x128xf32>
    %cst_27 = arith.constant dense<0.000000e+00> : vector<16x128xf32>
    %44 = tpu.matmul %41, %43, %cst_27 {dimension_numbers = #tpu.dot_dimension_numbers<[1], [0], [0], [1], [0, 0, 1, 1], [], []>} : vector<16x4xf32>, vector<4x128xf32>, vector<16x128xf32> -> vector<16x128xf32>
    %45 = arith.addf %40, %44 : vector<16x128xf32>
    %c2_i32 = arith.constant 2 : i32
    %46 = arith.addi %4, %c2_i32 : i32
    %c0_28 = arith.constant 0 : index
    %47 = arith.index_cast %46 : i32 to index
    %c0_29 = arith.constant 0 : index
    %c0_30 = arith.constant 0 : index
    %48 = vector.load %arg2[%c0_28, %47, %c0_29, %c0_30] : memref<1x18x18x4xf32, #tpu.memory_space<vmem>>, vector<1x1x18x4xf32>
    %49 = vector.shape_cast %48 : vector<1x1x18x4xf32> to vector<1x18x4xf32>
    %50 = vector.shape_cast %49 : vector<1x18x4xf32> to vector<18x4xf32>
    %51 = vector.extract_strided_slice %50 {offsets = [0, 0], sizes = [16, 4], strides = [1, 1]} : vector<18x4xf32> to vector<16x4xf32>
    %c6 = arith.constant 6 : index
    %c0_31 = arith.constant 0 : index
    %c0_32 = arith.constant 0 : index
    %52 = vector.load %arg3[%c6, %c0_31, %c0_32] : memref<9x4x128xf32, #tpu.memory_space<vmem>>, vector<1x4x128xf32>
    %53 = vector.shape_cast %52 : vector<1x4x128xf32> to vector<4x128xf32>
    %cst_33 = arith.constant dense<0.000000e+00> : vector<16x128xf32>
    %54 = tpu.matmul %51, %53, %cst_33 {dimension_numbers = #tpu.dot_dimension_numbers<[1], [0], [0], [1], [0, 0, 1, 1], [], []>} : vector<16x4xf32>, vector<4x128xf32>, vector<16x128xf32> -> vector<16x128xf32>
    %55 = arith.addf %45, %54 : vector<16x128xf32>
    %56 = vector.extract_strided_slice %50 {offsets = [1, 0], sizes = [16, 4], strides = [1, 1]} : vector<18x4xf32> to vector<16x4xf32>
    %c7 = arith.constant 7 : index
    %c0_34 = arith.constant 0 : index
    %c0_35 = arith.constant 0 : index
    %57 = vector.load %arg3[%c7, %c0_34, %c0_35] : memref<9x4x128xf32, #tpu.memory_space<vmem>>, vector<1x4x128xf32>
    %58 = vector.shape_cast %57 : vector<1x4x128xf32> to vector<4x128xf32>
    %cst_36 = arith.constant dense<0.000000e+00> : vector<16x128xf32>
    %59 = tpu.matmul %56, %58, %cst_36 {dimension_numbers = #tpu.dot_dimension_numbers<[1], [0], [0], [1], [0, 0, 1, 1], [], []>} : vector<16x4xf32>, vector<4x128xf32>, vector<16x128xf32> -> vector<16x128xf32>
    %60 = arith.addf %55, %59 : vector<16x128xf32>
    %61 = vector.extract_strided_slice %50 {offsets = [2, 0], sizes = [16, 4], strides = [1, 1]} : vector<18x4xf32> to vector<16x4xf32>
    %c8 = arith.constant 8 : index
    %c0_37 = arith.constant 0 : index
    %c0_38 = arith.constant 0 : index
    %62 = vector.load %arg3[%c8, %c0_37, %c0_38] : memref<9x4x128xf32, #tpu.memory_space<vmem>>, vector<1x4x128xf32>
    %63 = vector.shape_cast %62 : vector<1x4x128xf32> to vector<4x128xf32>
    %cst_39 = arith.constant dense<0.000000e+00> : vector<16x128xf32>
    %64 = tpu.matmul %61, %63, %cst_39 {dimension_numbers = #tpu.dot_dimension_numbers<[1], [0], [0], [1], [0, 0, 1, 1], [], []>} : vector<16x4xf32>, vector<4x128xf32>, vector<16x128xf32> -> vector<16x128xf32>
    %65 = arith.addf %60, %64 : vector<16x128xf32>
    %c0_40 = arith.constant 0 : index
    %c0_41 = arith.constant 0 : index
    %c0_42 = arith.constant 0 : index
    %c0_43 = arith.constant 0 : index
    %66 = vector.load %arg4[%c0_40, %c0_41, %c0_42, %c0_43] : memref<1x8x16x128xf32, #tpu.memory_space<vmem>>, vector<1x1x16x128xf32>
    %67 = vector.shape_cast %66 : vector<1x1x16x128xf32> to vector<16x128xf32>
    %68 = vector.shape_cast %65 : vector<16x128xf32> to vector<1x1x16x128xf32>
    tpu.vector_store %arg4[%c0_40, %c0_41, %c0_42, %c0_43], %68 {strides = array<i32>} : memref<1x8x16x128xf32, #tpu.memory_space<vmem>>, vector<1x1x16x128xf32>,
    %cst_44 = arith.constant dense<0.000000e+00> : vector<128xf32>
    %69 = vector.multi_reduction <add>, %65, %cst_44 [0] : vector<16x128xf32> to vector<128xf32>
    %70 = vector.shape_cast %69 : vector<128xf32> to vector<1x128xf32>
    %71 = vector.shape_cast %70 : vector<1x128xf32> to vector<1x1x128xf32>
    %72 = arith.addf %0, %71 : vector<1x1x128xf32>
    %73 = arith.mulf %65, %65 : vector<16x128xf32>
    %cst_45 = arith.constant dense<0.000000e+00> : vector<128xf32>
    %74 = vector.multi_reduction <add>, %73, %cst_45 [0] : vector<16x128xf32> to vector<128xf32>
    %75 = vector.shape_cast %74 : vector<128xf32> to vector<1x128xf32>
    %76 = vector.shape_cast %75 : vector<1x128xf32> to vector<1x1x128xf32>
    %77 = arith.addf %1, %76 : vector<1x1x128xf32>
    %c8_i32_46 = arith.constant 8 : i32
    %78 = arith.muli %arg1, %c8_i32_46 : i32
    %c1_i32_47 = arith.constant 1 : i32
    %79 = arith.addi %78, %c1_i32_47 : i32
    %c1_i32_48 = arith.constant 1 : i32
    %80 = arith.muli %79, %c1_i32_48 : i32
    %cst_49 = arith.constant 0.000000e+00 : f32
    %81 = vector.broadcast %cst_49 : f32 to vector<16x128xf32>
    %c0_i32_50 = arith.constant 0 : i32
    %82 = arith.addi %80, %c0_i32_50 : i32
    %c0_51 = arith.constant 0 : index
    %83 = arith.index_cast %82 : i32 to index
    %c0_52 = arith.constant 0 : index
    %c0_53 = arith.constant 0 : index
    %84 = vector.load %arg2[%c0_51, %83, %c0_52, %c0_53] : memref<1x18x18x4xf32, #tpu.memory_space<vmem>>, vector<1x1x18x4xf32>
    %85 = vector.shape_cast %84 : vector<1x1x18x4xf32> to vector<1x18x4xf32>
    %86 = vector.shape_cast %85 : vector<1x18x4xf32> to vector<18x4xf32>
    %87 = vector.extract_strided_slice %86 {offsets = [0, 0], sizes = [16, 4], strides = [1, 1]} : vector<18x4xf32> to vector<16x4xf32>
    %c0_54 = arith.constant 0 : index
    %c0_55 = arith.constant 0 : index
    %c0_56 = arith.constant 0 : index
    %88 = vector.load %arg3[%c0_54, %c0_55, %c0_56] : memref<9x4x128xf32, #tpu.memory_space<vmem>>, vector<1x4x128xf32>
    %89 = vector.shape_cast %88 : vector<1x4x128xf32> to vector<4x128xf32>
    %cst_57 = arith.constant dense<0.000000e+00> : vector<16x128xf32>
    %90 = tpu.matmul %87, %89, %cst_57 {dimension_numbers = #tpu.dot_dimension_numbers<[1], [0], [0], [1], [0, 0, 1, 1], [], []>} : vector<16x4xf32>, vector<4x128xf32>, vector<16x128xf32> -> vector<16x128xf32>
    %91 = arith.addf %81, %90 : vector<16x128xf32>
    %92 = vector.extract_strided_slice %86 {offsets = [1, 0], sizes = [16, 4], strides = [1, 1]} : vector<18x4xf32> to vector<16x4xf32>
    %c1_58 = arith.constant 1 : index
    %c0_59 = arith.constant 0 : index
    %c0_60 = arith.constant 0 : index
    %93 = vector.load %arg3[%c1_58, %c0_59, %c0_60] : memref<9x4x128xf32, #tpu.memory_space<vmem>>, vector<1x4x128xf32>
    %94 = vector.shape_cast %93 : vector<1x4x128xf32> to vector<4x128xf32>
    %cst_61 = arith.constant dense<0.000000e+00> : vector<16x128xf32>
    %95 = tpu.matmul %92, %94, %cst_61 {dimension_numbers = #tpu.dot_dimension_numbers<[1], [0], [0], [1], [0, 0, 1, 1], [], []>} : vector<16x4xf32>, vector<4x128xf32>, vector<16x128xf32> -> vector<16x128xf32>
    %96 = arith.addf %91, %95 : vector<16x128xf32>
    %97 = vector.extract_strided_slice %86 {offsets = [2, 0], sizes = [16, 4], strides = [1, 1]} : vector<18x4xf32> to vector<16x4xf32>
    %c2_62 = arith.constant 2 : index
    %c0_63 = arith.constant 0 : index
    %c0_64 = arith.constant 0 : index
    %98 = vector.load %arg3[%c2_62, %c0_63, %c0_64] : memref<9x4x128xf32, #tpu.memory_space<vmem>>, vector<1x4x128xf32>
    %99 = vector.shape_cast %98 : vector<1x4x128xf32> to vector<4x128xf32>
    %cst_65 = arith.constant dense<0.000000e+00> : vector<16x128xf32>
    %100 = tpu.matmul %97, %99, %cst_65 {dimension_numbers = #tpu.dot_dimension_numbers<[1], [0], [0], [1], [0, 0, 1, 1], [], []>} : vector<16x4xf32>, vector<4x128xf32>, vector<16x128xf32> -> vector<16x128xf32>
    %101 = arith.addf %96, %100 : vector<16x128xf32>
    %c1_i32_66 = arith.constant 1 : i32
    %102 = arith.addi %80, %c1_i32_66 : i32
    %c0_67 = arith.constant 0 : index
    %103 = arith.index_cast %102 : i32 to index
    %c0_68 = arith.constant 0 : index
    %c0_69 = arith.constant 0 : index
    %104 = vector.load %arg2[%c0_67, %103, %c0_68, %c0_69] : memref<1x18x18x4xf32, #tpu.memory_space<vmem>>, vector<1x1x18x4xf32>
    %105 = vector.shape_cast %104 : vector<1x1x18x4xf32> to vector<1x18x4xf32>
    %106 = vector.shape_cast %105 : vector<1x18x4xf32> to vector<18x4xf32>
    %107 = vector.extract_strided_slice %106 {offsets = [0, 0], sizes = [16, 4], strides = [1, 1]} : vector<18x4xf32> to vector<16x4xf32>
    %c3_70 = arith.constant 3 : index
    %c0_71 = arith.constant 0 : index
    %c0_72 = arith.constant 0 : index
    %108 = vector.load %arg3[%c3_70, %c0_71, %c0_72] : memref<9x4x128xf32, #tpu.memory_space<vmem>>, vector<1x4x128xf32>
    %109 = vector.shape_cast %108 : vector<1x4x128xf32> to vector<4x128xf32>
    %cst_73 = arith.constant dense<0.000000e+00> : vector<16x128xf32>
    %110 = tpu.matmul %107, %109, %cst_73 {dimension_numbers = #tpu.dot_dimension_numbers<[1], [0], [0], [1], [0, 0, 1, 1], [], []>} : vector<16x4xf32>, vector<4x128xf32>, vector<16x128xf32> -> vector<16x128xf32>
    %111 = arith.addf %101, %110 : vector<16x128xf32>
    %112 = vector.extract_strided_slice %106 {offsets = [1, 0], sizes = [16, 4], strides = [1, 1]} : vector<18x4xf32> to vector<16x4xf32>
    %c4_74 = arith.constant 4 : index
    %c0_75 = arith.constant 0 : index
    %c0_76 = arith.constant 0 : index
    %113 = vector.load %arg3[%c4_74, %c0_75, %c0_76] : memref<9x4x128xf32, #tpu.memory_space<vmem>>, vector<1x4x128xf32>
    %114 = vector.shape_cast %113 : vector<1x4x128xf32> to vector<4x128xf32>
    %cst_77 = arith.constant dense<0.000000e+00> : vector<16x128xf32>
    %115 = tpu.matmul %112, %114, %cst_77 {dimension_numbers = #tpu.dot_dimension_numbers<[1], [0], [0], [1], [0, 0, 1, 1], [], []>} : vector<16x4xf32>, vector<4x128xf32>, vector<16x128xf32> -> vector<16x128xf32>
    %116 = arith.addf %111, %115 : vector<16x128xf32>
    %117 = vector.extract_strided_slice %106 {offsets = [2, 0], sizes = [16, 4], strides = [1, 1]} : vector<18x4xf32> to vector<16x4xf32>
    %c5_78 = arith.constant 5 : index
    %c0_79 = arith.constant 0 : index
    %c0_80 = arith.constant 0 : index
    %118 = vector.load %arg3[%c5_78, %c0_79, %c0_80] : memref<9x4x128xf32, #tpu.memory_space<vmem>>, vector<1x4x128xf32>
    %119 = vector.shape_cast %118 : vector<1x4x128xf32> to vector<4x128xf32>
    %cst_81 = arith.constant dense<0.000000e+00> : vector<16x128xf32>
    %120 = tpu.matmul %117, %119, %cst_81 {dimension_numbers = #tpu.dot_dimension_numbers<[1], [0], [0], [1], [0, 0, 1, 1], [], []>} : vector<16x4xf32>, vector<4x128xf32>, vector<16x128xf32> -> vector<16x128xf32>
    %121 = arith.addf %116, %120 : vector<16x128xf32>
    %c2_i32_82 = arith.constant 2 : i32
    %122 = arith.addi %80, %c2_i32_82 : i32
    %c0_83 = arith.constant 0 : index
    %123 = arith.index_cast %122 : i32 to index
    %c0_84 = arith.constant 0 : index
    %c0_85 = arith.constant 0 : index
    %124 = vector.load %arg2[%c0_83, %123, %c0_84, %c0_85] : memref<1x18x18x4xf32, #tpu.memory_space<vmem>>, vector<1x1x18x4xf32>
    %125 = vector.shape_cast %124 : vector<1x1x18x4xf32> to vector<1x18x4xf32>
    %126 = vector.shape_cast %125 : vector<1x18x4xf32> to vector<18x4xf32>
    %127 = vector.extract_strided_slice %126 {offsets = [0, 0], sizes = [16, 4], strides = [1, 1]} : vector<18x4xf32> to vector<16x4xf32>
    %c6_86 = arith.constant 6 : index
    %c0_87 = arith.constant 0 : index
    %c0_88 = arith.constant 0 : index
    %128 = vector.load %arg3[%c6_86, %c0_87, %c0_88] : memref<9x4x128xf32, #tpu.memory_space<vmem>>, vector<1x4x128xf32>
    %129 = vector.shape_cast %128 : vector<1x4x128xf32> to vector<4x128xf32>
    %cst_89 = arith.constant dense<0.000000e+00> : vector<16x128xf32>
    %130 = tpu.matmul %127, %129, %cst_89 {dimension_numbers = #tpu.dot_dimension_numbers<[1], [0], [0], [1], [0, 0, 1, 1], [], []>} : vector<16x4xf32>, vector<4x128xf32>, vector<16x128xf32> -> vector<16x128xf32>
    %131 = arith.addf %121, %130 : vector<16x128xf32>
    %132 = vector.extract_strided_slice %126 {offsets = [1, 0], sizes = [16, 4], strides = [1, 1]} : vector<18x4xf32> to vector<16x4xf32>
    %c7_90 = arith.constant 7 : index
    %c0_91 = arith.constant 0 : index
    %c0_92 = arith.constant 0 : index
    %133 = vector.load %arg3[%c7_90, %c0_91, %c0_92] : memref<9x4x128xf32, #tpu.memory_space<vmem>>, vector<1x4x128xf32>
    %134 = vector.shape_cast %133 : vector<1x4x128xf32> to vector<4x128xf32>
    %cst_93 = arith.constant dense<0.000000e+00> : vector<16x128xf32>
    %135 = tpu.matmul %132, %134, %cst_93 {dimension_numbers = #tpu.dot_dimension_numbers<[1], [0], [0], [1], [0, 0, 1, 1], [], []>} : vector<16x4xf32>, vector<4x128xf32>, vector<16x128xf32> -> vector<16x128xf32>
    %136 = arith.addf %131, %135 : vector<16x128xf32>
    %137 = vector.extract_strided_slice %126 {offsets = [2, 0], sizes = [16, 4], strides = [1, 1]} : vector<18x4xf32> to vector<16x4xf32>
    %c8_94 = arith.constant 8 : index
    %c0_95 = arith.constant 0 : index
    %c0_96 = arith.constant 0 : index
    %138 = vector.load %arg3[%c8_94, %c0_95, %c0_96] : memref<9x4x128xf32, #tpu.memory_space<vmem>>, vector<1x4x128xf32>
    %139 = vector.shape_cast %138 : vector<1x4x128xf32> to vector<4x128xf32>
    %cst_97 = arith.constant dense<0.000000e+00> : vector<16x128xf32>
    %140 = tpu.matmul %137, %139, %cst_97 {dimension_numbers = #tpu.dot_dimension_numbers<[1], [0], [0], [1], [0, 0, 1, 1], [], []>} : vector<16x4xf32>, vector<4x128xf32>, vector<16x128xf32> -> vector<16x128xf32>
    %141 = arith.addf %136, %140 : vector<16x128xf32>
    %c0_98 = arith.constant 0 : index
    %c1_99 = arith.constant 1 : index
    %c0_100 = arith.constant 0 : index
    %c0_101 = arith.constant 0 : index
    %142 = vector.load %arg4[%c0_98, %c1_99, %c0_100, %c0_101] : memref<1x8x16x128xf32, #tpu.memory_space<vmem>>, vector<1x1x16x128xf32>
    %143 = vector.shape_cast %142 : vector<1x1x16x128xf32> to vector<16x128xf32>
    %144 = vector.shape_cast %141 : vector<16x128xf32> to vector<1x1x16x128xf32>
    tpu.vector_store %arg4[%c0_98, %c1_99, %c0_100, %c0_101], %144 {strides = array<i32>} : memref<1x8x16x128xf32, #tpu.memory_space<vmem>>, vector<1x1x16x128xf32>,
    %cst_102 = arith.constant dense<0.000000e+00> : vector<128xf32>
    %145 = vector.multi_reduction <add>, %141, %cst_102 [0] : vector<16x128xf32> to vector<128xf32>
    %146 = vector.shape_cast %145 : vector<128xf32> to vector<1x128xf32>
    %147 = vector.shape_cast %146 : vector<1x128xf32> to vector<1x1x128xf32>
    %148 = arith.addf %72, %147 : vector<1x1x128xf32>
    %149 = arith.mulf %141, %141 : vector<16x128xf32>
    %cst_103 = arith.constant dense<0.000000e+00> : vector<128xf32>
    %150 = vector.multi_reduction <add>, %149, %cst_103 [0] : vector<16x128xf32> to vector<128xf32>
    %151 = vector.shape_cast %150 : vector<128xf32> to vector<1x128xf32>
    %152 = vector.shape_cast %151 : vector<1x128xf32> to vector<1x1x128xf32>
    %153 = arith.addf %77, %152 : vector<1x1x128xf32>
    %c8_i32_104 = arith.constant 8 : i32
    %154 = arith.muli %arg1, %c8_i32_104 : i32
    %c2_i32_105 = arith.constant 2 : i32
    %155 = arith.addi %154, %c2_i32_105 : i32
    %c1_i32_106 = arith.constant 1 : i32
    %156 = arith.muli %155, %c1_i32_106 : i32
    %cst_107 = arith.constant 0.000000e+00 : f32
    %157 = vector.broadcast %cst_107 : f32 to vector<16x128xf32>
    %c0_i32_108 = arith.constant 0 : i32
    %158 = arith.addi %156, %c0_i32_108 : i32
    %c0_109 = arith.constant 0 : index
    %159 = arith.index_cast %158 : i32 to index
    %c0_110 = arith.constant 0 : index
    %c0_111 = arith.constant 0 : index
    %160 = vector.load %arg2[%c0_109, %159, %c0_110, %c0_111] : memref<1x18x18x4xf32, #tpu.memory_space<vmem>>, vector<1x1x18x4xf32>
    %161 = vector.shape_cast %160 : vector<1x1x18x4xf32> to vector<1x18x4xf32>
    %162 = vector.shape_cast %161 : vector<1x18x4xf32> to vector<18x4xf32>
    %163 = vector.extract_strided_slice %162 {offsets = [0, 0], sizes = [16, 4], strides = [1, 1]} : vector<18x4xf32> to vector<16x4xf32>
    %c0_112 = arith.constant 0 : index
    %c0_113 = arith.constant 0 : index
    %c0_114 = arith.constant 0 : index
    %164 = vector.load %arg3[%c0_112, %c0_113, %c0_114] : memref<9x4x128xf32, #tpu.memory_space<vmem>>, vector<1x4x128xf32>
    %165 = vector.shape_cast %164 : vector<1x4x128xf32> to vector<4x128xf32>
    %cst_115 = arith.constant dense<0.000000e+00> : vector<16x128xf32>
    %166 = tpu.matmul %163, %165, %cst_115 {dimension_numbers = #tpu.dot_dimension_numbers<[1], [0], [0], [1], [0, 0, 1, 1], [], []>} : vector<16x4xf32>, vector<4x128xf32>, vector<16x128xf32> -> vector<16x128xf32>
    %167 = arith.addf %157, %166 : vector<16x128xf32>
    %168 = vector.extract_strided_slice %162 {offsets = [1, 0], sizes = [16, 4], strides = [1, 1]} : vector<18x4xf32> to vector<16x4xf32>
    %c1_116 = arith.constant 1 : index
    %c0_117 = arith.constant 0 : index
    %c0_118 = arith.constant 0 : index
    %169 = vector.load %arg3[%c1_116, %c0_117, %c0_118] : memref<9x4x128xf32, #tpu.memory_space<vmem>>, vector<1x4x128xf32>
    %170 = vector.shape_cast %169 : vector<1x4x128xf32> to vector<4x128xf32>
    %cst_119 = arith.constant dense<0.000000e+00> : vector<16x128xf32>
    %171 = tpu.matmul %168, %170, %cst_119 {dimension_numbers = #tpu.dot_dimension_numbers<[1], [0], [0], [1], [0, 0, 1, 1], [], []>} : vector<16x4xf32>, vector<4x128xf32>, vector<16x128xf32> -> vector<16x128xf32>
    %172 = arith.addf %167, %171 : vector<16x128xf32>
    %173 = vector.extract_strided_slice %162 {offsets = [2, 0], sizes = [16, 4], strides = [1, 1]} : vector<18x4xf32> to vector<16x4xf32>
    %c2_120 = arith.constant 2 : index
    %c0_121 = arith.constant 0 : index
    %c0_122 = arith.constant 0 : index
    %174 = vector.load %arg3[%c2_120, %c0_121, %c0_122] : memref<9x4x128xf32, #tpu.memory_space<vmem>>, vector<1x4x128xf32>
    %175 = vector.shape_cast %174 : vector<1x4x128xf32> to vector<4x128xf32>
    %cst_123 = arith.constant dense<0.000000e+00> : vector<16x128xf32>
    %176 = tpu.matmul %173, %175, %cst_123 {dimension_numbers = #tpu.dot_dimension_numbers<[1], [0], [0], [1], [0, 0, 1, 1], [], []>} : vector<16x4xf32>, vector<4x128xf32>, vector<16x128xf32> -> vector<16x128xf32>
    %177 = arith.addf %172, %176 : vector<16x128xf32>
    %c1_i32_124 = arith.constant 1 : i32
    %178 = arith.addi %156, %c1_i32_124 : i32
    %c0_125 = arith.constant 0 : index
    %179 = arith.index_cast %178 : i32 to index
    %c0_126 = arith.constant 0 : index
    %c0_127 = arith.constant 0 : index
    %180 = vector.load %arg2[%c0_125, %179, %c0_126, %c0_127] : memref<1x18x18x4xf32, #tpu.memory_space<vmem>>, vector<1x1x18x4xf32>
    %181 = vector.shape_cast %180 : vector<1x1x18x4xf32> to vector<1x18x4xf32>
    %182 = vector.shape_cast %181 : vector<1x18x4xf32> to vector<18x4xf32>
    %183 = vector.extract_strided_slice %182 {offsets = [0, 0], sizes = [16, 4], strides = [1, 1]} : vector<18x4xf32> to vector<16x4xf32>
    %c3_128 = arith.constant 3 : index
    %c0_129 = arith.constant 0 : index
    %c0_130 = arith.constant 0 : index
    %184 = vector.load %arg3[%c3_128, %c0_129, %c0_130] : memref<9x4x128xf32, #tpu.memory_space<vmem>>, vector<1x4x128xf32>
    %185 = vector.shape_cast %184 : vector<1x4x128xf32> to vector<4x128xf32>
    %cst_131 = arith.constant dense<0.000000e+00> : vector<16x128xf32>
    %186 = tpu.matmul %183, %185, %cst_131 {dimension_numbers = #tpu.dot_dimension_numbers<[1], [0], [0], [1], [0, 0, 1, 1], [], []>} : vector<16x4xf32>, vector<4x128xf32>, vector<16x128xf32> -> vector<16x128xf32>
    %187 = arith.addf %177, %186 : vector<16x128xf32>
    %188 = vector.extract_strided_slice %182 {offsets = [1, 0], sizes = [16, 4], strides = [1, 1]} : vector<18x4xf32> to vector<16x4xf32>
    %c4_132 = arith.constant 4 : index
    %c0_133 = arith.constant 0 : index
    %c0_134 = arith.constant 0 : index
    %189 = vector.load %arg3[%c4_132, %c0_133, %c0_134] : memref<9x4x128xf32, #tpu.memory_space<vmem>>, vector<1x4x128xf32>
    %190 = vector.shape_cast %189 : vector<1x4x128xf32> to vector<4x128xf32>
    %cst_135 = arith.constant dense<0.000000e+00> : vector<16x128xf32>
    %191 = tpu.matmul %188, %190, %cst_135 {dimension_numbers = #tpu.dot_dimension_numbers<[1], [0], [0], [1], [0, 0, 1, 1], [], []>} : vector<16x4xf32>, vector<4x128xf32>, vector<16x128xf32> -> vector<16x128xf32>
    %192 = arith.addf %187, %191 : vector<16x128xf32>
    %193 = vector.extract_strided_slice %182 {offsets = [2, 0], sizes = [16, 4], strides = [1, 1]} : vector<18x4xf32> to vector<16x4xf32>
    %c5_136 = arith.constant 5 : index
    %c0_137 = arith.constant 0 : index
    %c0_138 = arith.constant 0 : index
    %194 = vector.load %arg3[%c5_136, %c0_137, %c0_138] : memref<9x4x128xf32, #tpu.memory_space<vmem>>, vector<1x4x128xf32>
    %195 = vector.shape_cast %194 : vector<1x4x128xf32> to vector<4x128xf32>
    %cst_139 = arith.constant dense<0.000000e+00> : vector<16x128xf32>
    %196 = tpu.matmul %193, %195, %cst_139 {dimension_numbers = #tpu.dot_dimension_numbers<[1], [0], [0], [1], [0, 0, 1, 1], [], []>} : vector<16x4xf32>, vector<4x128xf32>, vector<16x128xf32> -> vector<16x128xf32>
    %197 = arith.addf %192, %196 : vector<16x128xf32>
    %c2_i32_140 = arith.constant 2 : i32
    %198 = arith.addi %156, %c2_i32_140 : i32
    %c0_141 = arith.constant 0 : index
    %199 = arith.index_cast %198 : i32 to index
    %c0_142 = arith.constant 0 : index
    %c0_143 = arith.constant 0 : index
    %200 = vector.load %arg2[%c0_141, %199, %c0_142, %c0_143] : memref<1x18x18x4xf32, #tpu.memory_space<vmem>>, vector<1x1x18x4xf32>
    %201 = vector.shape_cast %200 : vector<1x1x18x4xf32> to vector<1x18x4xf32>
    %202 = vector.shape_cast %201 : vector<1x18x4xf32> to vector<18x4xf32>
    %203 = vector.extract_strided_slice %202 {offsets = [0, 0], sizes = [16, 4], strides = [1, 1]} : vector<18x4xf32> to vector<16x4xf32>
    %c6_144 = arith.constant 6 : index
    %c0_145 = arith.constant 0 : index
    %c0_146 = arith.constant 0 : index
    %204 = vector.load %arg3[%c6_144, %c0_145, %c0_146] : memref<9x4x128xf32, #tpu.memory_space<vmem>>, vector<1x4x128xf32>
    %205 = vector.shape_cast %204 : vector<1x4x128xf32> to vector<4x128xf32>
    %cst_147 = arith.constant dense<0.000000e+00> : vector<16x128xf32>
    %206 = tpu.matmul %203, %205, %cst_147 {dimension_numbers = #tpu.dot_dimension_numbers<[1], [0], [0], [1], [0, 0, 1, 1], [], []>} : vector<16x4xf32>, vector<4x128xf32>, vector<16x128xf32> -> vector<16x128xf32>
    %207 = arith.addf %197, %206 : vector<16x128xf32>
    %208 = vector.extract_strided_slice %202 {offsets = [1, 0], sizes = [16, 4], strides = [1, 1]} : vector<18x4xf32> to vector<16x4xf32>
    %c7_148 = arith.constant 7 : index
    %c0_149 = arith.constant 0 : index
    %c0_150 = arith.constant 0 : index
    %209 = vector.load %arg3[%c7_148, %c0_149, %c0_150] : memref<9x4x128xf32, #tpu.memory_space<vmem>>, vector<1x4x128xf32>
    %210 = vector.shape_cast %209 : vector<1x4x128xf32> to vector<4x128xf32>
    %cst_151 = arith.constant dense<0.000000e+00> : vector<16x128xf32>
    %211 = tpu.matmul %208, %210, %cst_151 {dimension_numbers = #tpu.dot_dimension_numbers<[1], [0], [0], [1], [0, 0, 1, 1], [], []>} : vector<16x4xf32>, vector<4x128xf32>, vector<16x128xf32> -> vector<16x128xf32>
    %212 = arith.addf %207, %211 : vector<16x128xf32>
    %213 = vector.extract_strided_slice %202 {offsets = [2, 0], sizes = [16, 4], strides = [1, 1]} : vector<18x4xf32> to vector<16x4xf32>
    %c8_152 = arith.constant 8 : index
    %c0_153 = arith.constant 0 : index
    %c0_154 = arith.constant 0 : index
    %214 = vector.load %arg3[%c8_152, %c0_153, %c0_154] : memref<9x4x128xf32, #tpu.memory_space<vmem>>, vector<1x4x128xf32>
    %215 = vector.shape_cast %214 : vector<1x4x128xf32> to vector<4x128xf32>
    %cst_155 = arith.constant dense<0.000000e+00> : vector<16x128xf32>
    %216 = tpu.matmul %213, %215, %cst_155 {dimension_numbers = #tpu.dot_dimension_numbers<[1], [0], [0], [1], [0, 0, 1, 1], [], []>} : vector<16x4xf32>, vector<4x128xf32>, vector<16x128xf32> -> vector<16x128xf32>
    %217 = arith.addf %212, %216 : vector<16x128xf32>
    %c0_156 = arith.constant 0 : index
    %c2_157 = arith.constant 2 : index
    %c0_158 = arith.constant 0 : index
    %c0_159 = arith.constant 0 : index
    %218 = vector.load %arg4[%c0_156, %c2_157, %c0_158, %c0_159] : memref<1x8x16x128xf32, #tpu.memory_space<vmem>>, vector<1x1x16x128xf32>
    %219 = vector.shape_cast %218 : vector<1x1x16x128xf32> to vector<16x128xf32>
    %220 = vector.shape_cast %217 : vector<16x128xf32> to vector<1x1x16x128xf32>
    tpu.vector_store %arg4[%c0_156, %c2_157, %c0_158, %c0_159], %220 {strides = array<i32>} : memref<1x8x16x128xf32, #tpu.memory_space<vmem>>, vector<1x1x16x128xf32>,
    %cst_160 = arith.constant dense<0.000000e+00> : vector<128xf32>
    %221 = vector.multi_reduction <add>, %217, %cst_160 [0] : vector<16x128xf32> to vector<128xf32>
    %222 = vector.shape_cast %221 : vector<128xf32> to vector<1x128xf32>
    %223 = vector.shape_cast %222 : vector<1x128xf32> to vector<1x1x128xf32>
    %224 = arith.addf %148, %223 : vector<1x1x128xf32>
    %225 = arith.mulf %217, %217 : vector<16x128xf32>
    %cst_161 = arith.constant dense<0.000000e+00> : vector<128xf32>
    %226 = vector.multi_reduction <add>, %225, %cst_161 [0] : vector<16x128xf32> to vector<128xf32>
    %227 = vector.shape_cast %226 : vector<128xf32> to vector<1x128xf32>
    %228 = vector.shape_cast %227 : vector<1x128xf32> to vector<1x1x128xf32>
    %229 = arith.addf %153, %228 : vector<1x1x128xf32>
    %c8_i32_162 = arith.constant 8 : i32
    %230 = arith.muli %arg1, %c8_i32_162 : i32
    %c3_i32 = arith.constant 3 : i32
    %231 = arith.addi %230, %c3_i32 : i32
    %c1_i32_163 = arith.constant 1 : i32
    %232 = arith.muli %231, %c1_i32_163 : i32
    %cst_164 = arith.constant 0.000000e+00 : f32
    %233 = vector.broadcast %cst_164 : f32 to vector<16x128xf32>
    %c0_i32_165 = arith.constant 0 : i32
    %234 = arith.addi %232, %c0_i32_165 : i32
    %c0_166 = arith.constant 0 : index
    %235 = arith.index_cast %234 : i32 to index
    %c0_167 = arith.constant 0 : index
    %c0_168 = arith.constant 0 : index
    %236 = vector.load %arg2[%c0_166, %235, %c0_167, %c0_168] : memref<1x18x18x4xf32, #tpu.memory_space<vmem>>, vector<1x1x18x4xf32>
    %237 = vector.shape_cast %236 : vector<1x1x18x4xf32> to vector<1x18x4xf32>
    %238 = vector.shape_cast %237 : vector<1x18x4xf32> to vector<18x4xf32>
    %239 = vector.extract_strided_slice %238 {offsets = [0, 0], sizes = [16, 4], strides = [1, 1]} : vector<18x4xf32> to vector<16x4xf32>
    %c0_169 = arith.constant 0 : index
    %c0_170 = arith.constant 0 : index
    %c0_171 = arith.constant 0 : index
    %240 = vector.load %arg3[%c0_169, %c0_170, %c0_171] : memref<9x4x128xf32, #tpu.memory_space<vmem>>, vector<1x4x128xf32>
    %241 = vector.shape_cast %240 : vector<1x4x128xf32> to vector<4x128xf32>
    %cst_172 = arith.constant dense<0.000000e+00> : vector<16x128xf32>
    %242 = tpu.matmul %239, %241, %cst_172 {dimension_numbers = #tpu.dot_dimension_numbers<[1], [0], [0], [1], [0, 0, 1, 1], [], []>} : vector<16x4xf32>, vector<4x128xf32>, vector<16x128xf32> -> vector<16x128xf32>
    %243 = arith.addf %233, %242 : vector<16x128xf32>
    %244 = vector.extract_strided_slice %238 {offsets = [1, 0], sizes = [16, 4], strides = [1, 1]} : vector<18x4xf32> to vector<16x4xf32>
    %c1_173 = arith.constant 1 : index
    %c0_174 = arith.constant 0 : index
    %c0_175 = arith.constant 0 : index
    %245 = vector.load %arg3[%c1_173, %c0_174, %c0_175] : memref<9x4x128xf32, #tpu.memory_space<vmem>>, vector<1x4x128xf32>
    %246 = vector.shape_cast %245 : vector<1x4x128xf32> to vector<4x128xf32>
    %cst_176 = arith.constant dense<0.000000e+00> : vector<16x128xf32>
    %247 = tpu.matmul %244, %246, %cst_176 {dimension_numbers = #tpu.dot_dimension_numbers<[1], [0], [0], [1], [0, 0, 1, 1], [], []>} : vector<16x4xf32>, vector<4x128xf32>, vector<16x128xf32> -> vector<16x128xf32>
    %248 = arith.addf %243, %247 : vector<16x128xf32>
    %249 = vector.extract_strided_slice %238 {offsets = [2, 0], sizes = [16, 4], strides = [1, 1]} : vector<18x4xf32> to vector<16x4xf32>
    %c2_177 = arith.constant 2 : index
    %c0_178 = arith.constant 0 : index
    %c0_179 = arith.constant 0 : index
    %250 = vector.load %arg3[%c2_177, %c0_178, %c0_179] : memref<9x4x128xf32, #tpu.memory_space<vmem>>, vector<1x4x128xf32>
    %251 = vector.shape_cast %250 : vector<1x4x128xf32> to vector<4x128xf32>
    %cst_180 = arith.constant dense<0.000000e+00> : vector<16x128xf32>
    %252 = tpu.matmul %249, %251, %cst_180 {dimension_numbers = #tpu.dot_dimension_numbers<[1], [0], [0], [1], [0, 0, 1, 1], [], []>} : vector<16x4xf32>, vector<4x128xf32>, vector<16x128xf32> -> vector<16x128xf32>
    %253 = arith.addf %248, %252 : vector<16x128xf32>
    %c1_i32_181 = arith.constant 1 : i32
    %254 = arith.addi %232, %c1_i32_181 : i32
    %c0_182 = arith.constant 0 : index
    %255 = arith.index_cast %254 : i32 to index
    %c0_183 = arith.constant 0 : index
    %c0_184 = arith.constant 0 : index
    %256 = vector.load %arg2[%c0_182, %255, %c0_183, %c0_184] : memref<1x18x18x4xf32, #tpu.memory_space<vmem>>, vector<1x1x18x4xf32>
    %257 = vector.shape_cast %256 : vector<1x1x18x4xf32> to vector<1x18x4xf32>
    %258 = vector.shape_cast %257 : vector<1x18x4xf32> to vector<18x4xf32>
    %259 = vector.extract_strided_slice %258 {offsets = [0, 0], sizes = [16, 4], strides = [1, 1]} : vector<18x4xf32> to vector<16x4xf32>
    %c3_185 = arith.constant 3 : index
    %c0_186 = arith.constant 0 : index
    %c0_187 = arith.constant 0 : index
    %260 = vector.load %arg3[%c3_185, %c0_186, %c0_187] : memref<9x4x128xf32, #tpu.memory_space<vmem>>, vector<1x4x128xf32>
    %261 = vector.shape_cast %260 : vector<1x4x128xf32> to vector<4x128xf32>
    %cst_188 = arith.constant dense<0.000000e+00> : vector<16x128xf32>
    %262 = tpu.matmul %259, %261, %cst_188 {dimension_numbers = #tpu.dot_dimension_numbers<[1], [0], [0], [1], [0, 0, 1, 1], [], []>} : vector<16x4xf32>, vector<4x128xf32>, vector<16x128xf32> -> vector<16x128xf32>
    %263 = arith.addf %253, %262 : vector<16x128xf32>
    %264 = vector.extract_strided_slice %258 {offsets = [1, 0], sizes = [16, 4], strides = [1, 1]} : vector<18x4xf32> to vector<16x4xf32>
    %c4_189 = arith.constant 4 : index
    %c0_190 = arith.constant 0 : index
    %c0_191 = arith.constant 0 : index
    %265 = vector.load %arg3[%c4_189, %c0_190, %c0_191] : memref<9x4x128xf32, #tpu.memory_space<vmem>>, vector<1x4x128xf32>
    %266 = vector.shape_cast %265 : vector<1x4x128xf32> to vector<4x128xf32>
    %cst_192 = arith.constant dense<0.000000e+00> : vector<16x128xf32>
    %267 = tpu.matmul %264, %266, %cst_192 {dimension_numbers = #tpu.dot_dimension_numbers<[1], [0], [0], [1], [0, 0, 1, 1], [], []>} : vector<16x4xf32>, vector<4x128xf32>, vector<16x128xf32> -> vector<16x128xf32>
    %268 = arith.addf %263, %267 : vector<16x128xf32>
    %269 = vector.extract_strided_slice %258 {offsets = [2, 0], sizes = [16, 4], strides = [1, 1]} : vector<18x4xf32> to vector<16x4xf32>
    %c5_193 = arith.constant 5 : index
    %c0_194 = arith.constant 0 : index
    %c0_195 = arith.constant 0 : index
    %270 = vector.load %arg3[%c5_193, %c0_194, %c0_195] : memref<9x4x128xf32, #tpu.memory_space<vmem>>, vector<1x4x128xf32>
    %271 = vector.shape_cast %270 : vector<1x4x128xf32> to vector<4x128xf32>
    %cst_196 = arith.constant dense<0.000000e+00> : vector<16x128xf32>
    %272 = tpu.matmul %269, %271, %cst_196 {dimension_numbers = #tpu.dot_dimension_numbers<[1], [0], [0], [1], [0, 0, 1, 1], [], []>} : vector<16x4xf32>, vector<4x128xf32>, vector<16x128xf32> -> vector<16x128xf32>
    %273 = arith.addf %268, %272 : vector<16x128xf32>
    %c2_i32_197 = arith.constant 2 : i32
    %274 = arith.addi %232, %c2_i32_197 : i32
    %c0_198 = arith.constant 0 : index
    %275 = arith.index_cast %274 : i32 to index
    %c0_199 = arith.constant 0 : index
    %c0_200 = arith.constant 0 : index
    %276 = vector.load %arg2[%c0_198, %275, %c0_199, %c0_200] : memref<1x18x18x4xf32, #tpu.memory_space<vmem>>, vector<1x1x18x4xf32>
    %277 = vector.shape_cast %276 : vector<1x1x18x4xf32> to vector<1x18x4xf32>
    %278 = vector.shape_cast %277 : vector<1x18x4xf32> to vector<18x4xf32>
    %279 = vector.extract_strided_slice %278 {offsets = [0, 0], sizes = [16, 4], strides = [1, 1]} : vector<18x4xf32> to vector<16x4xf32>
    %c6_201 = arith.constant 6 : index
    %c0_202 = arith.constant 0 : index
    %c0_203 = arith.constant 0 : index
    %280 = vector.load %arg3[%c6_201, %c0_202, %c0_203] : memref<9x4x128xf32, #tpu.memory_space<vmem>>, vector<1x4x128xf32>
    %281 = vector.shape_cast %280 : vector<1x4x128xf32> to vector<4x128xf32>
    %cst_204 = arith.constant dense<0.000000e+00> : vector<16x128xf32>
    %282 = tpu.matmul %279, %281, %cst_204 {dimension_numbers = #tpu.dot_dimension_numbers<[1], [0], [0], [1], [0, 0, 1, 1], [], []>} : vector<16x4xf32>, vector<4x128xf32>, vector<16x128xf32> -> vector<16x128xf32>
    %283 = arith.addf %273, %282 : vector<16x128xf32>
    %284 = vector.extract_strided_slice %278 {offsets = [1, 0], sizes = [16, 4], strides = [1, 1]} : vector<18x4xf32> to vector<16x4xf32>
    %c7_205 = arith.constant 7 : index
    %c0_206 = arith.constant 0 : index
    %c0_207 = arith.constant 0 : index
    %285 = vector.load %arg3[%c7_205, %c0_206, %c0_207] : memref<9x4x128xf32, #tpu.memory_space<vmem>>, vector<1x4x128xf32>
    %286 = vector.shape_cast %285 : vector<1x4x128xf32> to vector<4x128xf32>
    %cst_208 = arith.constant dense<0.000000e+00> : vector<16x128xf32>
    %287 = tpu.matmul %284, %286, %cst_208 {dimension_numbers = #tpu.dot_dimension_numbers<[1], [0], [0], [1], [0, 0, 1, 1], [], []>} : vector<16x4xf32>, vector<4x128xf32>, vector<16x128xf32> -> vector<16x128xf32>
    %288 = arith.addf %283, %287 : vector<16x128xf32>
    %289 = vector.extract_strided_slice %278 {offsets = [2, 0], sizes = [16, 4], strides = [1, 1]} : vector<18x4xf32> to vector<16x4xf32>
    %c8_209 = arith.constant 8 : index
    %c0_210 = arith.constant 0 : index
    %c0_211 = arith.constant 0 : index
    %290 = vector.load %arg3[%c8_209, %c0_210, %c0_211] : memref<9x4x128xf32, #tpu.memory_space<vmem>>, vector<1x4x128xf32>
    %291 = vector.shape_cast %290 : vector<1x4x128xf32> to vector<4x128xf32>
    %cst_212 = arith.constant dense<0.000000e+00> : vector<16x128xf32>
    %292 = tpu.matmul %289, %291, %cst_212 {dimension_numbers = #tpu.dot_dimension_numbers<[1], [0], [0], [1], [0, 0, 1, 1], [], []>} : vector<16x4xf32>, vector<4x128xf32>, vector<16x128xf32> -> vector<16x128xf32>
    %293 = arith.addf %288, %292 : vector<16x128xf32>
    %c0_213 = arith.constant 0 : index
    %c3_214 = arith.constant 3 : index
    %c0_215 = arith.constant 0 : index
    %c0_216 = arith.constant 0 : index
    %294 = vector.load %arg4[%c0_213, %c3_214, %c0_215, %c0_216] : memref<1x8x16x128xf32, #tpu.memory_space<vmem>>, vector<1x1x16x128xf32>
    %295 = vector.shape_cast %294 : vector<1x1x16x128xf32> to vector<16x128xf32>
    %296 = vector.shape_cast %293 : vector<16x128xf32> to vector<1x1x16x128xf32>
    tpu.vector_store %arg4[%c0_213, %c3_214, %c0_215, %c0_216], %296 {strides = array<i32>} : memref<1x8x16x128xf32, #tpu.memory_space<vmem>>, vector<1x1x16x128xf32>,
    %cst_217 = arith.constant dense<0.000000e+00> : vector<128xf32>
    %297 = vector.multi_reduction <add>, %293, %cst_217 [0] : vector<16x128xf32> to vector<128xf32>
    %298 = vector.shape_cast %297 : vector<128xf32> to vector<1x128xf32>
    %299 = vector.shape_cast %298 : vector<1x128xf32> to vector<1x1x128xf32>
    %300 = arith.addf %224, %299 : vector<1x1x128xf32>
    %301 = arith.mulf %293, %293 : vector<16x128xf32>
    %cst_218 = arith.constant dense<0.000000e+00> : vector<128xf32>
    %302 = vector.multi_reduction <add>, %301, %cst_218 [0] : vector<16x128xf32> to vector<128xf32>
    %303 = vector.shape_cast %302 : vector<128xf32> to vector<1x128xf32>
    %304 = vector.shape_cast %303 : vector<1x128xf32> to vector<1x1x128xf32>
    %305 = arith.addf %229, %304 : vector<1x1x128xf32>
    %c8_i32_219 = arith.constant 8 : i32
    %306 = arith.muli %arg1, %c8_i32_219 : i32
    %c4_i32 = arith.constant 4 : i32
    %307 = arith.addi %306, %c4_i32 : i32
    %c1_i32_220 = arith.constant 1 : i32
    %308 = arith.muli %307, %c1_i32_220 : i32
    %cst_221 = arith.constant 0.000000e+00 : f32
    %309 = vector.broadcast %cst_221 : f32 to vector<16x128xf32>
    %c0_i32_222 = arith.constant 0 : i32
    %310 = arith.addi %308, %c0_i32_222 : i32
    %c0_223 = arith.constant 0 : index
    %311 = arith.index_cast %310 : i32 to index
    %c0_224 = arith.constant 0 : index
    %c0_225 = arith.constant 0 : index
    %312 = vector.load %arg2[%c0_223, %311, %c0_224, %c0_225] : memref<1x18x18x4xf32, #tpu.memory_space<vmem>>, vector<1x1x18x4xf32>
    %313 = vector.shape_cast %312 : vector<1x1x18x4xf32> to vector<1x18x4xf32>
    %314 = vector.shape_cast %313 : vector<1x18x4xf32> to vector<18x4xf32>
    %315 = vector.extract_strided_slice %314 {offsets = [0, 0], sizes = [16, 4], strides = [1, 1]} : vector<18x4xf32> to vector<16x4xf32>
    %c0_226 = arith.constant 0 : index
    %c0_227 = arith.constant 0 : index
    %c0_228 = arith.constant 0 : index
    %316 = vector.load %arg3[%c0_226, %c0_227, %c0_228] : memref<9x4x128xf32, #tpu.memory_space<vmem>>, vector<1x4x128xf32>
    %317 = vector.shape_cast %316 : vector<1x4x128xf32> to vector<4x128xf32>
    %cst_229 = arith.constant dense<0.000000e+00> : vector<16x128xf32>
    %318 = tpu.matmul %315, %317, %cst_229 {dimension_numbers = #tpu.dot_dimension_numbers<[1], [0], [0], [1], [0, 0, 1, 1], [], []>} : vector<16x4xf32>, vector<4x128xf32>, vector<16x128xf32> -> vector<16x128xf32>
    %319 = arith.addf %309, %318 : vector<16x128xf32>
    %320 = vector.extract_strided_slice %314 {offsets = [1, 0], sizes = [16, 4], strides = [1, 1]} : vector<18x4xf32> to vector<16x4xf32>
    %c1_230 = arith.constant 1 : index
    %c0_231 = arith.constant 0 : index
    %c0_232 = arith.constant 0 : index
    %321 = vector.load %arg3[%c1_230, %c0_231, %c0_232] : memref<9x4x128xf32, #tpu.memory_space<vmem>>, vector<1x4x128xf32>
    %322 = vector.shape_cast %321 : vector<1x4x128xf32> to vector<4x128xf32>
    %cst_233 = arith.constant dense<0.000000e+00> : vector<16x128xf32>
    %323 = tpu.matmul %320, %322, %cst_233 {dimension_numbers = #tpu.dot_dimension_numbers<[1], [0], [0], [1], [0, 0, 1, 1], [], []>} : vector<16x4xf32>, vector<4x128xf32>, vector<16x128xf32> -> vector<16x128xf32>
    %324 = arith.addf %319, %323 : vector<16x128xf32>
    %325 = vector.extract_strided_slice %314 {offsets = [2, 0], sizes = [16, 4], strides = [1, 1]} : vector<18x4xf32> to vector<16x4xf32>
    %c2_234 = arith.constant 2 : index
    %c0_235 = arith.constant 0 : index
    %c0_236 = arith.constant 0 : index
    %326 = vector.load %arg3[%c2_234, %c0_235, %c0_236] : memref<9x4x128xf32, #tpu.memory_space<vmem>>, vector<1x4x128xf32>
    %327 = vector.shape_cast %326 : vector<1x4x128xf32> to vector<4x128xf32>
    %cst_237 = arith.constant dense<0.000000e+00> : vector<16x128xf32>
    %328 = tpu.matmul %325, %327, %cst_237 {dimension_numbers = #tpu.dot_dimension_numbers<[1], [0], [0], [1], [0, 0, 1, 1], [], []>} : vector<16x4xf32>, vector<4x128xf32>, vector<16x128xf32> -> vector<16x128xf32>
    %329 = arith.addf %324, %328 : vector<16x128xf32>
    %c1_i32_238 = arith.constant 1 : i32
    %330 = arith.addi %308, %c1_i32_238 : i32
    %c0_239 = arith.constant 0 : index
    %331 = arith.index_cast %330 : i32 to index
    %c0_240 = arith.constant 0 : index
    %c0_241 = arith.constant 0 : index
    %332 = vector.load %arg2[%c0_239, %331, %c0_240, %c0_241] : memref<1x18x18x4xf32, #tpu.memory_space<vmem>>, vector<1x1x18x4xf32>
    %333 = vector.shape_cast %332 : vector<1x1x18x4xf32> to vector<1x18x4xf32>
    %334 = vector.shape_cast %333 : vector<1x18x4xf32> to vector<18x4xf32>
    %335 = vector.extract_strided_slice %334 {offsets = [0, 0], sizes = [16, 4], strides = [1, 1]} : vector<18x4xf32> to vector<16x4xf32>
    %c3_242 = arith.constant 3 : index
    %c0_243 = arith.constant 0 : index
    %c0_244 = arith.constant 0 : index
    %336 = vector.load %arg3[%c3_242, %c0_243, %c0_244] : memref<9x4x128xf32, #tpu.memory_space<vmem>>, vector<1x4x128xf32>
    %337 = vector.shape_cast %336 : vector<1x4x128xf32> to vector<4x128xf32>
    %cst_245 = arith.constant dense<0.000000e+00> : vector<16x128xf32>
    %338 = tpu.matmul %335, %337, %cst_245 {dimension_numbers = #tpu.dot_dimension_numbers<[1], [0], [0], [1], [0, 0, 1, 1], [], []>} : vector<16x4xf32>, vector<4x128xf32>, vector<16x128xf32> -> vector<16x128xf32>
    %339 = arith.addf %329, %338 : vector<16x128xf32>
    %340 = vector.extract_strided_slice %334 {offsets = [1, 0], sizes = [16, 4], strides = [1, 1]} : vector<18x4xf32> to vector<16x4xf32>
    %c4_246 = arith.constant 4 : index
    %c0_247 = arith.constant 0 : index
    %c0_248 = arith.constant 0 : index
    %341 = vector.load %arg3[%c4_246, %c0_247, %c0_248] : memref<9x4x128xf32, #tpu.memory_space<vmem>>, vector<1x4x128xf32>
    %342 = vector.shape_cast %341 : vector<1x4x128xf32> to vector<4x128xf32>
    %cst_249 = arith.constant dense<0.000000e+00> : vector<16x128xf32>
    %343 = tpu.matmul %340, %342, %cst_249 {dimension_numbers = #tpu.dot_dimension_numbers<[1], [0], [0], [1], [0, 0, 1, 1], [], []>} : vector<16x4xf32>, vector<4x128xf32>, vector<16x128xf32> -> vector<16x128xf32>
    %344 = arith.addf %339, %343 : vector<16x128xf32>
    %345 = vector.extract_strided_slice %334 {offsets = [2, 0], sizes = [16, 4], strides = [1, 1]} : vector<18x4xf32> to vector<16x4xf32>
    %c5_250 = arith.constant 5 : index
    %c0_251 = arith.constant 0 : index
    %c0_252 = arith.constant 0 : index
    %346 = vector.load %arg3[%c5_250, %c0_251, %c0_252] : memref<9x4x128xf32, #tpu.memory_space<vmem>>, vector<1x4x128xf32>
    %347 = vector.shape_cast %346 : vector<1x4x128xf32> to vector<4x128xf32>
    %cst_253 = arith.constant dense<0.000000e+00> : vector<16x128xf32>
    %348 = tpu.matmul %345, %347, %cst_253 {dimension_numbers = #tpu.dot_dimension_numbers<[1], [0], [0], [1], [0, 0, 1, 1], [], []>} : vector<16x4xf32>, vector<4x128xf32>, vector<16x128xf32> -> vector<16x128xf32>
    %349 = arith.addf %344, %348 : vector<16x128xf32>
    %c2_i32_254 = arith.constant 2 : i32
    %350 = arith.addi %308, %c2_i32_254 : i32
    %c0_255 = arith.constant 0 : index
    %351 = arith.index_cast %350 : i32 to index
    %c0_256 = arith.constant 0 : index
    %c0_257 = arith.constant 0 : index
    %352 = vector.load %arg2[%c0_255, %351, %c0_256, %c0_257] : memref<1x18x18x4xf32, #tpu.memory_space<vmem>>, vector<1x1x18x4xf32>
    %353 = vector.shape_cast %352 : vector<1x1x18x4xf32> to vector<1x18x4xf32>
    %354 = vector.shape_cast %353 : vector<1x18x4xf32> to vector<18x4xf32>
    %355 = vector.extract_strided_slice %354 {offsets = [0, 0], sizes = [16, 4], strides = [1, 1]} : vector<18x4xf32> to vector<16x4xf32>
    %c6_258 = arith.constant 6 : index
    %c0_259 = arith.constant 0 : index
    %c0_260 = arith.constant 0 : index
    %356 = vector.load %arg3[%c6_258, %c0_259, %c0_260] : memref<9x4x128xf32, #tpu.memory_space<vmem>>, vector<1x4x128xf32>
    %357 = vector.shape_cast %356 : vector<1x4x128xf32> to vector<4x128xf32>
    %cst_261 = arith.constant dense<0.000000e+00> : vector<16x128xf32>
    %358 = tpu.matmul %355, %357, %cst_261 {dimension_numbers = #tpu.dot_dimension_numbers<[1], [0], [0], [1], [0, 0, 1, 1], [], []>} : vector<16x4xf32>, vector<4x128xf32>, vector<16x128xf32> -> vector<16x128xf32>
    %359 = arith.addf %349, %358 : vector<16x128xf32>
    %360 = vector.extract_strided_slice %354 {offsets = [1, 0], sizes = [16, 4], strides = [1, 1]} : vector<18x4xf32> to vector<16x4xf32>
    %c7_262 = arith.constant 7 : index
    %c0_263 = arith.constant 0 : index
    %c0_264 = arith.constant 0 : index
    %361 = vector.load %arg3[%c7_262, %c0_263, %c0_264] : memref<9x4x128xf32, #tpu.memory_space<vmem>>, vector<1x4x128xf32>
    %362 = vector.shape_cast %361 : vector<1x4x128xf32> to vector<4x128xf32>
    %cst_265 = arith.constant dense<0.000000e+00> : vector<16x128xf32>
    %363 = tpu.matmul %360, %362, %cst_265 {dimension_numbers = #tpu.dot_dimension_numbers<[1], [0], [0], [1], [0, 0, 1, 1], [], []>} : vector<16x4xf32>, vector<4x128xf32>, vector<16x128xf32> -> vector<16x128xf32>
    %364 = arith.addf %359, %363 : vector<16x128xf32>
    %365 = vector.extract_strided_slice %354 {offsets = [2, 0], sizes = [16, 4], strides = [1, 1]} : vector<18x4xf32> to vector<16x4xf32>
    %c8_266 = arith.constant 8 : index
    %c0_267 = arith.constant 0 : index
    %c0_268 = arith.constant 0 : index
    %366 = vector.load %arg3[%c8_266, %c0_267, %c0_268] : memref<9x4x128xf32, #tpu.memory_space<vmem>>, vector<1x4x128xf32>
    %367 = vector.shape_cast %366 : vector<1x4x128xf32> to vector<4x128xf32>
    %cst_269 = arith.constant dense<0.000000e+00> : vector<16x128xf32>
    %368 = tpu.matmul %365, %367, %cst_269 {dimension_numbers = #tpu.dot_dimension_numbers<[1], [0], [0], [1], [0, 0, 1, 1], [], []>} : vector<16x4xf32>, vector<4x128xf32>, vector<16x128xf32> -> vector<16x128xf32>
    %369 = arith.addf %364, %368 : vector<16x128xf32>
    %c0_270 = arith.constant 0 : index
    %c4_271 = arith.constant 4 : index
    %c0_272 = arith.constant 0 : index
    %c0_273 = arith.constant 0 : index
    %370 = vector.load %arg4[%c0_270, %c4_271, %c0_272, %c0_273] : memref<1x8x16x128xf32, #tpu.memory_space<vmem>>, vector<1x1x16x128xf32>
    %371 = vector.shape_cast %370 : vector<1x1x16x128xf32> to vector<16x128xf32>
    %372 = vector.shape_cast %369 : vector<16x128xf32> to vector<1x1x16x128xf32>
    tpu.vector_store %arg4[%c0_270, %c4_271, %c0_272, %c0_273], %372 {strides = array<i32>} : memref<1x8x16x128xf32, #tpu.memory_space<vmem>>, vector<1x1x16x128xf32>,
    %cst_274 = arith.constant dense<0.000000e+00> : vector<128xf32>
    %373 = vector.multi_reduction <add>, %369, %cst_274 [0] : vector<16x128xf32> to vector<128xf32>
    %374 = vector.shape_cast %373 : vector<128xf32> to vector<1x128xf32>
    %375 = vector.shape_cast %374 : vector<1x128xf32> to vector<1x1x128xf32>
    %376 = arith.addf %300, %375 : vector<1x1x128xf32>
    %377 = arith.mulf %369, %369 : vector<16x128xf32>
    %cst_275 = arith.constant dense<0.000000e+00> : vector<128xf32>
    %378 = vector.multi_reduction <add>, %377, %cst_275 [0] : vector<16x128xf32> to vector<128xf32>
    %379 = vector.shape_cast %378 : vector<128xf32> to vector<1x128xf32>
    %380 = vector.shape_cast %379 : vector<1x128xf32> to vector<1x1x128xf32>
    %381 = arith.addf %305, %380 : vector<1x1x128xf32>
    %c8_i32_276 = arith.constant 8 : i32
    %382 = arith.muli %arg1, %c8_i32_276 : i32
    %c5_i32 = arith.constant 5 : i32
    %383 = arith.addi %382, %c5_i32 : i32
    %c1_i32_277 = arith.constant 1 : i32
    %384 = arith.muli %383, %c1_i32_277 : i32
    %cst_278 = arith.constant 0.000000e+00 : f32
    %385 = vector.broadcast %cst_278 : f32 to vector<16x128xf32>
    %c0_i32_279 = arith.constant 0 : i32
    %386 = arith.addi %384, %c0_i32_279 : i32
    %c0_280 = arith.constant 0 : index
    %387 = arith.index_cast %386 : i32 to index
    %c0_281 = arith.constant 0 : index
    %c0_282 = arith.constant 0 : index
    %388 = vector.load %arg2[%c0_280, %387, %c0_281, %c0_282] : memref<1x18x18x4xf32, #tpu.memory_space<vmem>>, vector<1x1x18x4xf32>
    %389 = vector.shape_cast %388 : vector<1x1x18x4xf32> to vector<1x18x4xf32>
    %390 = vector.shape_cast %389 : vector<1x18x4xf32> to vector<18x4xf32>
    %391 = vector.extract_strided_slice %390 {offsets = [0, 0], sizes = [16, 4], strides = [1, 1]} : vector<18x4xf32> to vector<16x4xf32>
    %c0_283 = arith.constant 0 : index
    %c0_284 = arith.constant 0 : index
    %c0_285 = arith.constant 0 : index
    %392 = vector.load %arg3[%c0_283, %c0_284, %c0_285] : memref<9x4x128xf32, #tpu.memory_space<vmem>>, vector<1x4x128xf32>
    %393 = vector.shape_cast %392 : vector<1x4x128xf32> to vector<4x128xf32>
    %cst_286 = arith.constant dense<0.000000e+00> : vector<16x128xf32>
    %394 = tpu.matmul %391, %393, %cst_286 {dimension_numbers = #tpu.dot_dimension_numbers<[1], [0], [0], [1], [0, 0, 1, 1], [], []>} : vector<16x4xf32>, vector<4x128xf32>, vector<16x128xf32> -> vector<16x128xf32>
    %395 = arith.addf %385, %394 : vector<16x128xf32>
    %396 = vector.extract_strided_slice %390 {offsets = [1, 0], sizes = [16, 4], strides = [1, 1]} : vector<18x4xf32> to vector<16x4xf32>
    %c1_287 = arith.constant 1 : index
    %c0_288 = arith.constant 0 : index
    %c0_289 = arith.constant 0 : index
    %397 = vector.load %arg3[%c1_287, %c0_288, %c0_289] : memref<9x4x128xf32, #tpu.memory_space<vmem>>, vector<1x4x128xf32>
    %398 = vector.shape_cast %397 : vector<1x4x128xf32> to vector<4x128xf32>
    %cst_290 = arith.constant dense<0.000000e+00> : vector<16x128xf32>
    %399 = tpu.matmul %396, %398, %cst_290 {dimension_numbers = #tpu.dot_dimension_numbers<[1], [0], [0], [1], [0, 0, 1, 1], [], []>} : vector<16x4xf32>, vector<4x128xf32>, vector<16x128xf32> -> vector<16x128xf32>
    %400 = arith.addf %395, %399 : vector<16x128xf32>
    %401 = vector.extract_strided_slice %390 {offsets = [2, 0], sizes = [16, 4], strides = [1, 1]} : vector<18x4xf32> to vector<16x4xf32>
    %c2_291 = arith.constant 2 : index
    %c0_292 = arith.constant 0 : index
    %c0_293 = arith.constant 0 : index
    %402 = vector.load %arg3[%c2_291, %c0_292, %c0_293] : memref<9x4x128xf32, #tpu.memory_space<vmem>>, vector<1x4x128xf32>
    %403 = vector.shape_cast %402 : vector<1x4x128xf32> to vector<4x128xf32>
    %cst_294 = arith.constant dense<0.000000e+00> : vector<16x128xf32>
    %404 = tpu.matmul %401, %403, %cst_294 {dimension_numbers = #tpu.dot_dimension_numbers<[1], [0], [0], [1], [0, 0, 1, 1], [], []>} : vector<16x4xf32>, vector<4x128xf32>, vector<16x128xf32> -> vector<16x128xf32>
    %405 = arith.addf %400, %404 : vector<16x128xf32>
    %c1_i32_295 = arith.constant 1 : i32
    %406 = arith.addi %384, %c1_i32_295 : i32
    %c0_296 = arith.constant 0 : index
    %407 = arith.index_cast %406 : i32 to index
    %c0_297 = arith.constant 0 : index
    %c0_298 = arith.constant 0 : index
    %408 = vector.load %arg2[%c0_296, %407, %c0_297, %c0_298] : memref<1x18x18x4xf32, #tpu.memory_space<vmem>>, vector<1x1x18x4xf32>
    %409 = vector.shape_cast %408 : vector<1x1x18x4xf32> to vector<1x18x4xf32>
    %410 = vector.shape_cast %409 : vector<1x18x4xf32> to vector<18x4xf32>
    %411 = vector.extract_strided_slice %410 {offsets = [0, 0], sizes = [16, 4], strides = [1, 1]} : vector<18x4xf32> to vector<16x4xf32>
    %c3_299 = arith.constant 3 : index
    %c0_300 = arith.constant 0 : index
    %c0_301 = arith.constant 0 : index
    %412 = vector.load %arg3[%c3_299, %c0_300, %c0_301] : memref<9x4x128xf32, #tpu.memory_space<vmem>>, vector<1x4x128xf32>
    %413 = vector.shape_cast %412 : vector<1x4x128xf32> to vector<4x128xf32>
    %cst_302 = arith.constant dense<0.000000e+00> : vector<16x128xf32>
    %414 = tpu.matmul %411, %413, %cst_302 {dimension_numbers = #tpu.dot_dimension_numbers<[1], [0], [0], [1], [0, 0, 1, 1], [], []>} : vector<16x4xf32>, vector<4x128xf32>, vector<16x128xf32> -> vector<16x128xf32>
    %415 = arith.addf %405, %414 : vector<16x128xf32>
    %416 = vector.extract_strided_slice %410 {offsets = [1, 0], sizes = [16, 4], strides = [1, 1]} : vector<18x4xf32> to vector<16x4xf32>
    %c4_303 = arith.constant 4 : index
    %c0_304 = arith.constant 0 : index
    %c0_305 = arith.constant 0 : index
    %417 = vector.load %arg3[%c4_303, %c0_304, %c0_305] : memref<9x4x128xf32, #tpu.memory_space<vmem>>, vector<1x4x128xf32>
    %418 = vector.shape_cast %417 : vector<1x4x128xf32> to vector<4x128xf32>
    %cst_306 = arith.constant dense<0.000000e+00> : vector<16x128xf32>
    %419 = tpu.matmul %416, %418, %cst_306 {dimension_numbers = #tpu.dot_dimension_numbers<[1], [0], [0], [1], [0, 0, 1, 1], [], []>} : vector<16x4xf32>, vector<4x128xf32>, vector<16x128xf32> -> vector<16x128xf32>
    %420 = arith.addf %415, %419 : vector<16x128xf32>
    %421 = vector.extract_strided_slice %410 {offsets = [2, 0], sizes = [16, 4], strides = [1, 1]} : vector<18x4xf32> to vector<16x4xf32>
    %c5_307 = arith.constant 5 : index
    %c0_308 = arith.constant 0 : index
    %c0_309 = arith.constant 0 : index
    %422 = vector.load %arg3[%c5_307, %c0_308, %c0_309] : memref<9x4x128xf32, #tpu.memory_space<vmem>>, vector<1x4x128xf32>
    %423 = vector.shape_cast %422 : vector<1x4x128xf32> to vector<4x128xf32>
    %cst_310 = arith.constant dense<0.000000e+00> : vector<16x128xf32>
    %424 = tpu.matmul %421, %423, %cst_310 {dimension_numbers = #tpu.dot_dimension_numbers<[1], [0], [0], [1], [0, 0, 1, 1], [], []>} : vector<16x4xf32>, vector<4x128xf32>, vector<16x128xf32> -> vector<16x128xf32>
    %425 = arith.addf %420, %424 : vector<16x128xf32>
    %c2_i32_311 = arith.constant 2 : i32
    %426 = arith.addi %384, %c2_i32_311 : i32
    %c0_312 = arith.constant 0 : index
    %427 = arith.index_cast %426 : i32 to index
    %c0_313 = arith.constant 0 : index
    %c0_314 = arith.constant 0 : index
    %428 = vector.load %arg2[%c0_312, %427, %c0_313, %c0_314] : memref<1x18x18x4xf32, #tpu.memory_space<vmem>>, vector<1x1x18x4xf32>
    %429 = vector.shape_cast %428 : vector<1x1x18x4xf32> to vector<1x18x4xf32>
    %430 = vector.shape_cast %429 : vector<1x18x4xf32> to vector<18x4xf32>
    %431 = vector.extract_strided_slice %430 {offsets = [0, 0], sizes = [16, 4], strides = [1, 1]} : vector<18x4xf32> to vector<16x4xf32>
    %c6_315 = arith.constant 6 : index
    %c0_316 = arith.constant 0 : index
    %c0_317 = arith.constant 0 : index
    %432 = vector.load %arg3[%c6_315, %c0_316, %c0_317] : memref<9x4x128xf32, #tpu.memory_space<vmem>>, vector<1x4x128xf32>
    %433 = vector.shape_cast %432 : vector<1x4x128xf32> to vector<4x128xf32>
    %cst_318 = arith.constant dense<0.000000e+00> : vector<16x128xf32>
    %434 = tpu.matmul %431, %433, %cst_318 {dimension_numbers = #tpu.dot_dimension_numbers<[1], [0], [0], [1], [0, 0, 1, 1], [], []>} : vector<16x4xf32>, vector<4x128xf32>, vector<16x128xf32> -> vector<16x128xf32>
    %435 = arith.addf %425, %434 : vector<16x128xf32>
    %436 = vector.extract_strided_slice %430 {offsets = [1, 0], sizes = [16, 4], strides = [1, 1]} : vector<18x4xf32> to vector<16x4xf32>
    %c7_319 = arith.constant 7 : index
    %c0_320 = arith.constant 0 : index
    %c0_321 = arith.constant 0 : index
    %437 = vector.load %arg3[%c7_319, %c0_320, %c0_321] : memref<9x4x128xf32, #tpu.memory_space<vmem>>, vector<1x4x128xf32>
    %438 = vector.shape_cast %437 : vector<1x4x128xf32> to vector<4x128xf32>
    %cst_322 = arith.constant dense<0.000000e+00> : vector<16x128xf32>
    %439 = tpu.matmul %436, %438, %cst_322 {dimension_numbers = #tpu.dot_dimension_numbers<[1], [0], [0], [1], [0, 0, 1, 1], [], []>} : vector<16x4xf32>, vector<4x128xf32>, vector<16x128xf32> -> vector<16x128xf32>
    %440 = arith.addf %435, %439 : vector<16x128xf32>
    %441 = vector.extract_strided_slice %430 {offsets = [2, 0], sizes = [16, 4], strides = [1, 1]} : vector<18x4xf32> to vector<16x4xf32>
    %c8_323 = arith.constant 8 : index
    %c0_324 = arith.constant 0 : index
    %c0_325 = arith.constant 0 : index
    %442 = vector.load %arg3[%c8_323, %c0_324, %c0_325] : memref<9x4x128xf32, #tpu.memory_space<vmem>>, vector<1x4x128xf32>
    %443 = vector.shape_cast %442 : vector<1x4x128xf32> to vector<4x128xf32>
    %cst_326 = arith.constant dense<0.000000e+00> : vector<16x128xf32>
    %444 = tpu.matmul %441, %443, %cst_326 {dimension_numbers = #tpu.dot_dimension_numbers<[1], [0], [0], [1], [0, 0, 1, 1], [], []>} : vector<16x4xf32>, vector<4x128xf32>, vector<16x128xf32> -> vector<16x128xf32>
    %445 = arith.addf %440, %444 : vector<16x128xf32>
    %c0_327 = arith.constant 0 : index
    %c5_328 = arith.constant 5 : index
    %c0_329 = arith.constant 0 : index
    %c0_330 = arith.constant 0 : index
    %446 = vector.load %arg4[%c0_327, %c5_328, %c0_329, %c0_330] : memref<1x8x16x128xf32, #tpu.memory_space<vmem>>, vector<1x1x16x128xf32>
    %447 = vector.shape_cast %446 : vector<1x1x16x128xf32> to vector<16x128xf32>
    %448 = vector.shape_cast %445 : vector<16x128xf32> to vector<1x1x16x128xf32>
    tpu.vector_store %arg4[%c0_327, %c5_328, %c0_329, %c0_330], %448 {strides = array<i32>} : memref<1x8x16x128xf32, #tpu.memory_space<vmem>>, vector<1x1x16x128xf32>,
    %cst_331 = arith.constant dense<0.000000e+00> : vector<128xf32>
    %449 = vector.multi_reduction <add>, %445, %cst_331 [0] : vector<16x128xf32> to vector<128xf32>
    %450 = vector.shape_cast %449 : vector<128xf32> to vector<1x128xf32>
    %451 = vector.shape_cast %450 : vector<1x128xf32> to vector<1x1x128xf32>
    %452 = arith.addf %376, %451 : vector<1x1x128xf32>
    %453 = arith.mulf %445, %445 : vector<16x128xf32>
    %cst_332 = arith.constant dense<0.000000e+00> : vector<128xf32>
    %454 = vector.multi_reduction <add>, %453, %cst_332 [0] : vector<16x128xf32> to vector<128xf32>
    %455 = vector.shape_cast %454 : vector<128xf32> to vector<1x128xf32>
    %456 = vector.shape_cast %455 : vector<1x128xf32> to vector<1x1x128xf32>
    %457 = arith.addf %381, %456 : vector<1x1x128xf32>
    %c8_i32_333 = arith.constant 8 : i32
    %458 = arith.muli %arg1, %c8_i32_333 : i32
    %c6_i32 = arith.constant 6 : i32
    %459 = arith.addi %458, %c6_i32 : i32
    %c1_i32_334 = arith.constant 1 : i32
    %460 = arith.muli %459, %c1_i32_334 : i32
    %cst_335 = arith.constant 0.000000e+00 : f32
    %461 = vector.broadcast %cst_335 : f32 to vector<16x128xf32>
    %c0_i32_336 = arith.constant 0 : i32
    %462 = arith.addi %460, %c0_i32_336 : i32
    %c0_337 = arith.constant 0 : index
    %463 = arith.index_cast %462 : i32 to index
    %c0_338 = arith.constant 0 : index
    %c0_339 = arith.constant 0 : index
    %464 = vector.load %arg2[%c0_337, %463, %c0_338, %c0_339] : memref<1x18x18x4xf32, #tpu.memory_space<vmem>>, vector<1x1x18x4xf32>
    %465 = vector.shape_cast %464 : vector<1x1x18x4xf32> to vector<1x18x4xf32>
    %466 = vector.shape_cast %465 : vector<1x18x4xf32> to vector<18x4xf32>
    %467 = vector.extract_strided_slice %466 {offsets = [0, 0], sizes = [16, 4], strides = [1, 1]} : vector<18x4xf32> to vector<16x4xf32>
    %c0_340 = arith.constant 0 : index
    %c0_341 = arith.constant 0 : index
    %c0_342 = arith.constant 0 : index
    %468 = vector.load %arg3[%c0_340, %c0_341, %c0_342] : memref<9x4x128xf32, #tpu.memory_space<vmem>>, vector<1x4x128xf32>
    %469 = vector.shape_cast %468 : vector<1x4x128xf32> to vector<4x128xf32>
    %cst_343 = arith.constant dense<0.000000e+00> : vector<16x128xf32>
    %470 = tpu.matmul %467, %469, %cst_343 {dimension_numbers = #tpu.dot_dimension_numbers<[1], [0], [0], [1], [0, 0, 1, 1], [], []>} : vector<16x4xf32>, vector<4x128xf32>, vector<16x128xf32> -> vector<16x128xf32>
    %471 = arith.addf %461, %470 : vector<16x128xf32>
    %472 = vector.extract_strided_slice %466 {offsets = [1, 0], sizes = [16, 4], strides = [1, 1]} : vector<18x4xf32> to vector<16x4xf32>
    %c1_344 = arith.constant 1 : index
    %c0_345 = arith.constant 0 : index
    %c0_346 = arith.constant 0 : index
    %473 = vector.load %arg3[%c1_344, %c0_345, %c0_346] : memref<9x4x128xf32, #tpu.memory_space<vmem>>, vector<1x4x128xf32>
    %474 = vector.shape_cast %473 : vector<1x4x128xf32> to vector<4x128xf32>
    %cst_347 = arith.constant dense<0.000000e+00> : vector<16x128xf32>
    %475 = tpu.matmul %472, %474, %cst_347 {dimension_numbers = #tpu.dot_dimension_numbers<[1], [0], [0], [1], [0, 0, 1, 1], [], []>} : vector<16x4xf32>, vector<4x128xf32>, vector<16x128xf32> -> vector<16x128xf32>
    %476 = arith.addf %471, %475 : vector<16x128xf32>
    %477 = vector.extract_strided_slice %466 {offsets = [2, 0], sizes = [16, 4], strides = [1, 1]} : vector<18x4xf32> to vector<16x4xf32>
    %c2_348 = arith.constant 2 : index
    %c0_349 = arith.constant 0 : index
    %c0_350 = arith.constant 0 : index
    %478 = vector.load %arg3[%c2_348, %c0_349, %c0_350] : memref<9x4x128xf32, #tpu.memory_space<vmem>>, vector<1x4x128xf32>
    %479 = vector.shape_cast %478 : vector<1x4x128xf32> to vector<4x128xf32>
    %cst_351 = arith.constant dense<0.000000e+00> : vector<16x128xf32>
    %480 = tpu.matmul %477, %479, %cst_351 {dimension_numbers = #tpu.dot_dimension_numbers<[1], [0], [0], [1], [0, 0, 1, 1], [], []>} : vector<16x4xf32>, vector<4x128xf32>, vector<16x128xf32> -> vector<16x128xf32>
    %481 = arith.addf %476, %480 : vector<16x128xf32>
    %c1_i32_352 = arith.constant 1 : i32
    %482 = arith.addi %460, %c1_i32_352 : i32
    %c0_353 = arith.constant 0 : index
    %483 = arith.index_cast %482 : i32 to index
    %c0_354 = arith.constant 0 : index
    %c0_355 = arith.constant 0 : index
    %484 = vector.load %arg2[%c0_353, %483, %c0_354, %c0_355] : memref<1x18x18x4xf32, #tpu.memory_space<vmem>>, vector<1x1x18x4xf32>
    %485 = vector.shape_cast %484 : vector<1x1x18x4xf32> to vector<1x18x4xf32>
    %486 = vector.shape_cast %485 : vector<1x18x4xf32> to vector<18x4xf32>
    %487 = vector.extract_strided_slice %486 {offsets = [0, 0], sizes = [16, 4], strides = [1, 1]} : vector<18x4xf32> to vector<16x4xf32>
    %c3_356 = arith.constant 3 : index
    %c0_357 = arith.constant 0 : index
    %c0_358 = arith.constant 0 : index
    %488 = vector.load %arg3[%c3_356, %c0_357, %c0_358] : memref<9x4x128xf32, #tpu.memory_space<vmem>>, vector<1x4x128xf32>
    %489 = vector.shape_cast %488 : vector<1x4x128xf32> to vector<4x128xf32>
    %cst_359 = arith.constant dense<0.000000e+00> : vector<16x128xf32>
    %490 = tpu.matmul %487, %489, %cst_359 {dimension_numbers = #tpu.dot_dimension_numbers<[1], [0], [0], [1], [0, 0, 1, 1], [], []>} : vector<16x4xf32>, vector<4x128xf32>, vector<16x128xf32> -> vector<16x128xf32>
    %491 = arith.addf %481, %490 : vector<16x128xf32>
    %492 = vector.extract_strided_slice %486 {offsets = [1, 0], sizes = [16, 4], strides = [1, 1]} : vector<18x4xf32> to vector<16x4xf32>
    %c4_360 = arith.constant 4 : index
    %c0_361 = arith.constant 0 : index
    %c0_362 = arith.constant 0 : index
    %493 = vector.load %arg3[%c4_360, %c0_361, %c0_362] : memref<9x4x128xf32, #tpu.memory_space<vmem>>, vector<1x4x128xf32>
    %494 = vector.shape_cast %493 : vector<1x4x128xf32> to vector<4x128xf32>
    %cst_363 = arith.constant dense<0.000000e+00> : vector<16x128xf32>
    %495 = tpu.matmul %492, %494, %cst_363 {dimension_numbers = #tpu.dot_dimension_numbers<[1], [0], [0], [1], [0, 0, 1, 1], [], []>} : vector<16x4xf32>, vector<4x128xf32>, vector<16x128xf32> -> vector<16x128xf32>
    %496 = arith.addf %491, %495 : vector<16x128xf32>
    %497 = vector.extract_strided_slice %486 {offsets = [2, 0], sizes = [16, 4], strides = [1, 1]} : vector<18x4xf32> to vector<16x4xf32>
    %c5_364 = arith.constant 5 : index
    %c0_365 = arith.constant 0 : index
    %c0_366 = arith.constant 0 : index
    %498 = vector.load %arg3[%c5_364, %c0_365, %c0_366] : memref<9x4x128xf32, #tpu.memory_space<vmem>>, vector<1x4x128xf32>
    %499 = vector.shape_cast %498 : vector<1x4x128xf32> to vector<4x128xf32>
    %cst_367 = arith.constant dense<0.000000e+00> : vector<16x128xf32>
    %500 = tpu.matmul %497, %499, %cst_367 {dimension_numbers = #tpu.dot_dimension_numbers<[1], [0], [0], [1], [0, 0, 1, 1], [], []>} : vector<16x4xf32>, vector<4x128xf32>, vector<16x128xf32> -> vector<16x128xf32>
    %501 = arith.addf %496, %500 : vector<16x128xf32>
    %c2_i32_368 = arith.constant 2 : i32
    %502 = arith.addi %460, %c2_i32_368 : i32
    %c0_369 = arith.constant 0 : index
    %503 = arith.index_cast %502 : i32 to index
    %c0_370 = arith.constant 0 : index
    %c0_371 = arith.constant 0 : index
    %504 = vector.load %arg2[%c0_369, %503, %c0_370, %c0_371] : memref<1x18x18x4xf32, #tpu.memory_space<vmem>>, vector<1x1x18x4xf32>
    %505 = vector.shape_cast %504 : vector<1x1x18x4xf32> to vector<1x18x4xf32>
    %506 = vector.shape_cast %505 : vector<1x18x4xf32> to vector<18x4xf32>
    %507 = vector.extract_strided_slice %506 {offsets = [0, 0], sizes = [16, 4], strides = [1, 1]} : vector<18x4xf32> to vector<16x4xf32>
    %c6_372 = arith.constant 6 : index
    %c0_373 = arith.constant 0 : index
    %c0_374 = arith.constant 0 : index
    %508 = vector.load %arg3[%c6_372, %c0_373, %c0_374] : memref<9x4x128xf32, #tpu.memory_space<vmem>>, vector<1x4x128xf32>
    %509 = vector.shape_cast %508 : vector<1x4x128xf32> to vector<4x128xf32>
    %cst_375 = arith.constant dense<0.000000e+00> : vector<16x128xf32>
    %510 = tpu.matmul %507, %509, %cst_375 {dimension_numbers = #tpu.dot_dimension_numbers<[1], [0], [0], [1], [0, 0, 1, 1], [], []>} : vector<16x4xf32>, vector<4x128xf32>, vector<16x128xf32> -> vector<16x128xf32>
    %511 = arith.addf %501, %510 : vector<16x128xf32>
    %512 = vector.extract_strided_slice %506 {offsets = [1, 0], sizes = [16, 4], strides = [1, 1]} : vector<18x4xf32> to vector<16x4xf32>
    %c7_376 = arith.constant 7 : index
    %c0_377 = arith.constant 0 : index
    %c0_378 = arith.constant 0 : index
    %513 = vector.load %arg3[%c7_376, %c0_377, %c0_378] : memref<9x4x128xf32, #tpu.memory_space<vmem>>, vector<1x4x128xf32>
    %514 = vector.shape_cast %513 : vector<1x4x128xf32> to vector<4x128xf32>
    %cst_379 = arith.constant dense<0.000000e+00> : vector<16x128xf32>
    %515 = tpu.matmul %512, %514, %cst_379 {dimension_numbers = #tpu.dot_dimension_numbers<[1], [0], [0], [1], [0, 0, 1, 1], [], []>} : vector<16x4xf32>, vector<4x128xf32>, vector<16x128xf32> -> vector<16x128xf32>
    %516 = arith.addf %511, %515 : vector<16x128xf32>
    %517 = vector.extract_strided_slice %506 {offsets = [2, 0], sizes = [16, 4], strides = [1, 1]} : vector<18x4xf32> to vector<16x4xf32>
    %c8_380 = arith.constant 8 : index
    %c0_381 = arith.constant 0 : index
    %c0_382 = arith.constant 0 : index
    %518 = vector.load %arg3[%c8_380, %c0_381, %c0_382] : memref<9x4x128xf32, #tpu.memory_space<vmem>>, vector<1x4x128xf32>
    %519 = vector.shape_cast %518 : vector<1x4x128xf32> to vector<4x128xf32>
    %cst_383 = arith.constant dense<0.000000e+00> : vector<16x128xf32>
    %520 = tpu.matmul %517, %519, %cst_383 {dimension_numbers = #tpu.dot_dimension_numbers<[1], [0], [0], [1], [0, 0, 1, 1], [], []>} : vector<16x4xf32>, vector<4x128xf32>, vector<16x128xf32> -> vector<16x128xf32>
    %521 = arith.addf %516, %520 : vector<16x128xf32>
    %c0_384 = arith.constant 0 : index
    %c6_385 = arith.constant 6 : index
    %c0_386 = arith.constant 0 : index
    %c0_387 = arith.constant 0 : index
    %522 = vector.load %arg4[%c0_384, %c6_385, %c0_386, %c0_387] : memref<1x8x16x128xf32, #tpu.memory_space<vmem>>, vector<1x1x16x128xf32>
    %523 = vector.shape_cast %522 : vector<1x1x16x128xf32> to vector<16x128xf32>
    %524 = vector.shape_cast %521 : vector<16x128xf32> to vector<1x1x16x128xf32>
    tpu.vector_store %arg4[%c0_384, %c6_385, %c0_386, %c0_387], %524 {strides = array<i32>} : memref<1x8x16x128xf32, #tpu.memory_space<vmem>>, vector<1x1x16x128xf32>,
    %cst_388 = arith.constant dense<0.000000e+00> : vector<128xf32>
    %525 = vector.multi_reduction <add>, %521, %cst_388 [0] : vector<16x128xf32> to vector<128xf32>
    %526 = vector.shape_cast %525 : vector<128xf32> to vector<1x128xf32>
    %527 = vector.shape_cast %526 : vector<1x128xf32> to vector<1x1x128xf32>
    %528 = arith.addf %452, %527 : vector<1x1x128xf32>
    %529 = arith.mulf %521, %521 : vector<16x128xf32>
    %cst_389 = arith.constant dense<0.000000e+00> : vector<128xf32>
    %530 = vector.multi_reduction <add>, %529, %cst_389 [0] : vector<16x128xf32> to vector<128xf32>
    %531 = vector.shape_cast %530 : vector<128xf32> to vector<1x128xf32>
    %532 = vector.shape_cast %531 : vector<1x128xf32> to vector<1x1x128xf32>
    %533 = arith.addf %457, %532 : vector<1x1x128xf32>
    %c8_i32_390 = arith.constant 8 : i32
    %534 = arith.muli %arg1, %c8_i32_390 : i32
    %c7_i32 = arith.constant 7 : i32
    %535 = arith.addi %534, %c7_i32 : i32
    %c1_i32_391 = arith.constant 1 : i32
    %536 = arith.muli %535, %c1_i32_391 : i32
    %cst_392 = arith.constant 0.000000e+00 : f32
    %537 = vector.broadcast %cst_392 : f32 to vector<16x128xf32>
    %c0_i32_393 = arith.constant 0 : i32
    %538 = arith.addi %536, %c0_i32_393 : i32
    %c0_394 = arith.constant 0 : index
    %539 = arith.index_cast %538 : i32 to index
    %c0_395 = arith.constant 0 : index
    %c0_396 = arith.constant 0 : index
    %540 = vector.load %arg2[%c0_394, %539, %c0_395, %c0_396] : memref<1x18x18x4xf32, #tpu.memory_space<vmem>>, vector<1x1x18x4xf32>
    %541 = vector.shape_cast %540 : vector<1x1x18x4xf32> to vector<1x18x4xf32>
    %542 = vector.shape_cast %541 : vector<1x18x4xf32> to vector<18x4xf32>
    %543 = vector.extract_strided_slice %542 {offsets = [0, 0], sizes = [16, 4], strides = [1, 1]} : vector<18x4xf32> to vector<16x4xf32>
    %c0_397 = arith.constant 0 : index
    %c0_398 = arith.constant 0 : index
    %c0_399 = arith.constant 0 : index
    %544 = vector.load %arg3[%c0_397, %c0_398, %c0_399] : memref<9x4x128xf32, #tpu.memory_space<vmem>>, vector<1x4x128xf32>
    %545 = vector.shape_cast %544 : vector<1x4x128xf32> to vector<4x128xf32>
    %cst_400 = arith.constant dense<0.000000e+00> : vector<16x128xf32>
    %546 = tpu.matmul %543, %545, %cst_400 {dimension_numbers = #tpu.dot_dimension_numbers<[1], [0], [0], [1], [0, 0, 1, 1], [], []>} : vector<16x4xf32>, vector<4x128xf32>, vector<16x128xf32> -> vector<16x128xf32>
    %547 = arith.addf %537, %546 : vector<16x128xf32>
    %548 = vector.extract_strided_slice %542 {offsets = [1, 0], sizes = [16, 4], strides = [1, 1]} : vector<18x4xf32> to vector<16x4xf32>
    %c1_401 = arith.constant 1 : index
    %c0_402 = arith.constant 0 : index
    %c0_403 = arith.constant 0 : index
    %549 = vector.load %arg3[%c1_401, %c0_402, %c0_403] : memref<9x4x128xf32, #tpu.memory_space<vmem>>, vector<1x4x128xf32>
    %550 = vector.shape_cast %549 : vector<1x4x128xf32> to vector<4x128xf32>
    %cst_404 = arith.constant dense<0.000000e+00> : vector<16x128xf32>
    %551 = tpu.matmul %548, %550, %cst_404 {dimension_numbers = #tpu.dot_dimension_numbers<[1], [0], [0], [1], [0, 0, 1, 1], [], []>} : vector<16x4xf32>, vector<4x128xf32>, vector<16x128xf32> -> vector<16x128xf32>
    %552 = arith.addf %547, %551 : vector<16x128xf32>
    %553 = vector.extract_strided_slice %542 {offsets = [2, 0], sizes = [16, 4], strides = [1, 1]} : vector<18x4xf32> to vector<16x4xf32>
    %c2_405 = arith.constant 2 : index
    %c0_406 = arith.constant 0 : index
    %c0_407 = arith.constant 0 : index
    %554 = vector.load %arg3[%c2_405, %c0_406, %c0_407] : memref<9x4x128xf32, #tpu.memory_space<vmem>>, vector<1x4x128xf32>
    %555 = vector.shape_cast %554 : vector<1x4x128xf32> to vector<4x128xf32>
    %cst_408 = arith.constant dense<0.000000e+00> : vector<16x128xf32>
    %556 = tpu.matmul %553, %555, %cst_408 {dimension_numbers = #tpu.dot_dimension_numbers<[1], [0], [0], [1], [0, 0, 1, 1], [], []>} : vector<16x4xf32>, vector<4x128xf32>, vector<16x128xf32> -> vector<16x128xf32>
    %557 = arith.addf %552, %556 : vector<16x128xf32>
    %c1_i32_409 = arith.constant 1 : i32
    %558 = arith.addi %536, %c1_i32_409 : i32
    %c0_410 = arith.constant 0 : index
    %559 = arith.index_cast %558 : i32 to index
    %c0_411 = arith.constant 0 : index
    %c0_412 = arith.constant 0 : index
    %560 = vector.load %arg2[%c0_410, %559, %c0_411, %c0_412] : memref<1x18x18x4xf32, #tpu.memory_space<vmem>>, vector<1x1x18x4xf32>
    %561 = vector.shape_cast %560 : vector<1x1x18x4xf32> to vector<1x18x4xf32>
    %562 = vector.shape_cast %561 : vector<1x18x4xf32> to vector<18x4xf32>
    %563 = vector.extract_strided_slice %562 {offsets = [0, 0], sizes = [16, 4], strides = [1, 1]} : vector<18x4xf32> to vector<16x4xf32>
    %c3_413 = arith.constant 3 : index
    %c0_414 = arith.constant 0 : index
    %c0_415 = arith.constant 0 : index
    %564 = vector.load %arg3[%c3_413, %c0_414, %c0_415] : memref<9x4x128xf32, #tpu.memory_space<vmem>>, vector<1x4x128xf32>
    %565 = vector.shape_cast %564 : vector<1x4x128xf32> to vector<4x128xf32>
    %cst_416 = arith.constant dense<0.000000e+00> : vector<16x128xf32>
    %566 = tpu.matmul %563, %565, %cst_416 {dimension_numbers = #tpu.dot_dimension_numbers<[1], [0], [0], [1], [0, 0, 1, 1], [], []>} : vector<16x4xf32>, vector<4x128xf32>, vector<16x128xf32> -> vector<16x128xf32>
    %567 = arith.addf %557, %566 : vector<16x128xf32>
    %568 = vector.extract_strided_slice %562 {offsets = [1, 0], sizes = [16, 4], strides = [1, 1]} : vector<18x4xf32> to vector<16x4xf32>
    %c4_417 = arith.constant 4 : index
    %c0_418 = arith.constant 0 : index
    %c0_419 = arith.constant 0 : index
    %569 = vector.load %arg3[%c4_417, %c0_418, %c0_419] : memref<9x4x128xf32, #tpu.memory_space<vmem>>, vector<1x4x128xf32>
    %570 = vector.shape_cast %569 : vector<1x4x128xf32> to vector<4x128xf32>
    %cst_420 = arith.constant dense<0.000000e+00> : vector<16x128xf32>
    %571 = tpu.matmul %568, %570, %cst_420 {dimension_numbers = #tpu.dot_dimension_numbers<[1], [0], [0], [1], [0, 0, 1, 1], [], []>} : vector<16x4xf32>, vector<4x128xf32>, vector<16x128xf32> -> vector<16x128xf32>
    %572 = arith.addf %567, %571 : vector<16x128xf32>
    %573 = vector.extract_strided_slice %562 {offsets = [2, 0], sizes = [16, 4], strides = [1, 1]} : vector<18x4xf32> to vector<16x4xf32>
    %c5_421 = arith.constant 5 : index
    %c0_422 = arith.constant 0 : index
    %c0_423 = arith.constant 0 : index
    %574 = vector.load %arg3[%c5_421, %c0_422, %c0_423] : memref<9x4x128xf32, #tpu.memory_space<vmem>>, vector<1x4x128xf32>
    %575 = vector.shape_cast %574 : vector<1x4x128xf32> to vector<4x128xf32>
    %cst_424 = arith.constant dense<0.000000e+00> : vector<16x128xf32>
    %576 = tpu.matmul %573, %575, %cst_424 {dimension_numbers = #tpu.dot_dimension_numbers<[1], [0], [0], [1], [0, 0, 1, 1], [], []>} : vector<16x4xf32>, vector<4x128xf32>, vector<16x128xf32> -> vector<16x128xf32>
    %577 = arith.addf %572, %576 : vector<16x128xf32>
    %c2_i32_425 = arith.constant 2 : i32
    %578 = arith.addi %536, %c2_i32_425 : i32
    %c0_426 = arith.constant 0 : index
    %579 = arith.index_cast %578 : i32 to index
    %c0_427 = arith.constant 0 : index
    %c0_428 = arith.constant 0 : index
    %580 = vector.load %arg2[%c0_426, %579, %c0_427, %c0_428] : memref<1x18x18x4xf32, #tpu.memory_space<vmem>>, vector<1x1x18x4xf32>
    %581 = vector.shape_cast %580 : vector<1x1x18x4xf32> to vector<1x18x4xf32>
    %582 = vector.shape_cast %581 : vector<1x18x4xf32> to vector<18x4xf32>
    %583 = vector.extract_strided_slice %582 {offsets = [0, 0], sizes = [16, 4], strides = [1, 1]} : vector<18x4xf32> to vector<16x4xf32>
    %c6_429 = arith.constant 6 : index
    %c0_430 = arith.constant 0 : index
    %c0_431 = arith.constant 0 : index
    %584 = vector.load %arg3[%c6_429, %c0_430, %c0_431] : memref<9x4x128xf32, #tpu.memory_space<vmem>>, vector<1x4x128xf32>
    %585 = vector.shape_cast %584 : vector<1x4x128xf32> to vector<4x128xf32>
    %cst_432 = arith.constant dense<0.000000e+00> : vector<16x128xf32>
    %586 = tpu.matmul %583, %585, %cst_432 {dimension_numbers = #tpu.dot_dimension_numbers<[1], [0], [0], [1], [0, 0, 1, 1], [], []>} : vector<16x4xf32>, vector<4x128xf32>, vector<16x128xf32> -> vector<16x128xf32>
    %587 = arith.addf %577, %586 : vector<16x128xf32>
    %588 = vector.extract_strided_slice %582 {offsets = [1, 0], sizes = [16, 4], strides = [1, 1]} : vector<18x4xf32> to vector<16x4xf32>
    %c7_433 = arith.constant 7 : index
    %c0_434 = arith.constant 0 : index
    %c0_435 = arith.constant 0 : index
    %589 = vector.load %arg3[%c7_433, %c0_434, %c0_435] : memref<9x4x128xf32, #tpu.memory_space<vmem>>, vector<1x4x128xf32>
    %590 = vector.shape_cast %589 : vector<1x4x128xf32> to vector<4x128xf32>
    %cst_436 = arith.constant dense<0.000000e+00> : vector<16x128xf32>
    %591 = tpu.matmul %588, %590, %cst_436 {dimension_numbers = #tpu.dot_dimension_numbers<[1], [0], [0], [1], [0, 0, 1, 1], [], []>} : vector<16x4xf32>, vector<4x128xf32>, vector<16x128xf32> -> vector<16x128xf32>
    %592 = arith.addf %587, %591 : vector<16x128xf32>
    %593 = vector.extract_strided_slice %582 {offsets = [2, 0], sizes = [16, 4], strides = [1, 1]} : vector<18x4xf32> to vector<16x4xf32>
    %c8_437 = arith.constant 8 : index
    %c0_438 = arith.constant 0 : index
    %c0_439 = arith.constant 0 : index
    %594 = vector.load %arg3[%c8_437, %c0_438, %c0_439] : memref<9x4x128xf32, #tpu.memory_space<vmem>>, vector<1x4x128xf32>
    %595 = vector.shape_cast %594 : vector<1x4x128xf32> to vector<4x128xf32>
    %cst_440 = arith.constant dense<0.000000e+00> : vector<16x128xf32>
    %596 = tpu.matmul %593, %595, %cst_440 {dimension_numbers = #tpu.dot_dimension_numbers<[1], [0], [0], [1], [0, 0, 1, 1], [], []>} : vector<16x4xf32>, vector<4x128xf32>, vector<16x128xf32> -> vector<16x128xf32>
    %597 = arith.addf %592, %596 : vector<16x128xf32>
    %c0_441 = arith.constant 0 : index
    %c7_442 = arith.constant 7 : index
    %c0_443 = arith.constant 0 : index
    %c0_444 = arith.constant 0 : index
    %598 = vector.load %arg4[%c0_441, %c7_442, %c0_443, %c0_444] : memref<1x8x16x128xf32, #tpu.memory_space<vmem>>, vector<1x1x16x128xf32>
    %599 = vector.shape_cast %598 : vector<1x1x16x128xf32> to vector<16x128xf32>
    %600 = vector.shape_cast %597 : vector<16x128xf32> to vector<1x1x16x128xf32>
    tpu.vector_store %arg4[%c0_441, %c7_442, %c0_443, %c0_444], %600 {strides = array<i32>} : memref<1x8x16x128xf32, #tpu.memory_space<vmem>>, vector<1x1x16x128xf32>,
    %cst_445 = arith.constant dense<0.000000e+00> : vector<128xf32>
    %601 = vector.multi_reduction <add>, %597, %cst_445 [0] : vector<16x128xf32> to vector<128xf32>
    %602 = vector.shape_cast %601 : vector<128xf32> to vector<1x128xf32>
    %603 = vector.shape_cast %602 : vector<1x128xf32> to vector<1x1x128xf32>
    %604 = arith.addf %528, %603 : vector<1x1x128xf32>
    %605 = arith.mulf %597, %597 : vector<16x128xf32>
    %cst_446 = arith.constant dense<0.000000e+00> : vector<128xf32>
    %606 = vector.multi_reduction <add>, %605, %cst_446 [0] : vector<16x128xf32> to vector<128xf32>
    %607 = vector.shape_cast %606 : vector<128xf32> to vector<1x128xf32>
    %608 = vector.shape_cast %607 : vector<1x128xf32> to vector<1x1x128xf32>
    %609 = arith.addf %533, %608 : vector<1x1x128xf32>
    %c0_i32_447 = arith.constant 0 : i32
    %610 = arith.cmpi eq, %arg1, %c0_i32_447 : i32
    %611 = arith.extui %610 : i1 to i32
    %c0_i32_448 = arith.constant 0 : i32
    %612 = arith.cmpi ne, %611, %c0_i32_448 : i32
    scf.if %612 {
      %c0_451 = arith.constant 0 : index
      %c0_452 = arith.constant 0 : index
      %c0_453 = arith.constant 0 : index
      %616 = vector.load %arg5[%c0_451, %c0_452, %c0_453] : memref<1x1x128xf32, #tpu.memory_space<vmem>>, vector<1x1x128xf32>
      tpu.vector_store %arg5[%c0_451, %c0_452, %c0_453], %604 {strides = array<i32>} : memref<1x1x128xf32, #tpu.memory_space<vmem>>, vector<1x1x128xf32>,
      %c0_454 = arith.constant 0 : index
      %c0_455 = arith.constant 0 : index
      %c0_456 = arith.constant 0 : index
      %617 = vector.load %arg6[%c0_454, %c0_455, %c0_456] : memref<1x1x128xf32, #tpu.memory_space<vmem>>, vector<1x1x128xf32>
      tpu.vector_store %arg6[%c0_454, %c0_455, %c0_456], %609 {strides = array<i32>} : memref<1x1x128xf32, #tpu.memory_space<vmem>>, vector<1x1x128xf32>,
    } else {
    }
    %c0_i32_449 = arith.constant 0 : i32
    %613 = arith.cmpi sgt, %arg1, %c0_i32_449 : i32
    %614 = arith.extui %613 : i1 to i32
    %c0_i32_450 = arith.constant 0 : i32
    %615 = arith.cmpi ne, %614, %c0_i32_450 : i32
    scf.if %615 {
      %c0_451 = arith.constant 0 : index
      %c0_452 = arith.constant 0 : index
      %c0_453 = arith.constant 0 : index
      %616 = vector.load %arg5[%c0_451, %c0_452, %c0_453] : memref<1x1x128xf32, #tpu.memory_space<vmem>>, vector<1x1x128xf32>
      %617 = arith.addf %616, %604 : vector<1x1x128xf32>
      %c0_454 = arith.constant 0 : index
      %c0_455 = arith.constant 0 : index
      %c0_456 = arith.constant 0 : index
      %618 = vector.load %arg5[%c0_454, %c0_455, %c0_456] : memref<1x1x128xf32, #tpu.memory_space<vmem>>, vector<1x1x128xf32>
      tpu.vector_store %arg5[%c0_454, %c0_455, %c0_456], %617 {strides = array<i32>} : memref<1x1x128xf32, #tpu.memory_space<vmem>>, vector<1x1x128xf32>,
      %c0_457 = arith.constant 0 : index
      %c0_458 = arith.constant 0 : index
      %c0_459 = arith.constant 0 : index
      %619 = vector.load %arg6[%c0_457, %c0_458, %c0_459] : memref<1x1x128xf32, #tpu.memory_space<vmem>>, vector<1x1x128xf32>
      %620 = arith.addf %619, %609 : vector<1x1x128xf32>
      %c0_460 = arith.constant 0 : index
      %c0_461 = arith.constant 0 : index
      %c0_462 = arith.constant 0 : index
      %621 = vector.load %arg6[%c0_460, %c0_461, %c0_462] : memref<1x1x128xf32, #tpu.memory_space<vmem>>, vector<1x1x128xf32>
      tpu.vector_store %arg6[%c0_460, %c0_461, %c0_462], %620 {strides = array<i32>} : memref<1x1x128xf32, #tpu.memory_space<vmem>>, vector<1x1x128xf32>,
    } else {
    }
    return
  }
  func.func @transform_0(%arg0: i32, %arg1: i32) -> (i32, i32, i32, i32) {
    %c0_i32 = arith.constant 0 : i32
    %c0_i32_0 = arith.constant 0 : i32
    %c0_i32_1 = arith.constant 0 : i32
    %c0_i32_2 = arith.constant 0 : i32
    return %arg0, %c0_i32, %c0_i32_0, %c0_i32_1 : i32, i32, i32, i32
  }
  func.func @transform_1(%arg0: i32, %arg1: i32) -> (i32, i32, i32) {
    %c0_i32 = arith.constant 0 : i32
    %c0_i32_0 = arith.constant 0 : i32
    %c0_i32_1 = arith.constant 0 : i32
    %c0_i32_2 = arith.constant 0 : i32
    return %c0_i32, %c0_i32_0, %c0_i32_1 : i32, i32, i32
  }
  func.func @transform_2(%arg0: i32, %arg1: i32) -> (i32, i32, i32, i32) {
    %c0_i32 = arith.constant 0 : i32
    %c0_i32_0 = arith.constant 0 : i32
    %c0_i32_1 = arith.constant 0 : i32
    return %arg0, %arg1, %c0_i32, %c0_i32_0 : i32, i32, i32, i32
  }
  func.func @transform_3(%arg0: i32, %arg1: i32) -> (i32, i32, i32) {
    %c0_i32 = arith.constant 0 : i32
    %c0_i32_0 = arith.constant 0 : i32
    %c0_i32_1 = arith.constant 0 : i32
    return %arg0, %c0_i32, %c0_i32_0 : i32, i32, i32
  }
  func.func @transform_4(%arg0: i32, %arg1: i32) -> (i32, i32, i32) {
    %c0_i32 = arith.constant 0 : i32
    %c0_i32_0 = arith.constant 0 : i32
    %c0_i32_1 = arith.constant 0 : i32
    return %arg0, %c0_i32, %c0_i32_0 : i32, i32, i32
  }
}

module attributes {stable_mosaic.version = 11 : i64} {
  func.func @bn_relu_kernel(%arg0: i32, %arg1: memref<256x128xf32, #tpu.memory_space<vmem>>, %arg2: memref<1x128xf32, #tpu.memory_space<vmem>>, %arg3: memref<1x128xf32, #tpu.memory_space<vmem>>, %arg4: memref<256x128xf32, #tpu.memory_space<vmem>>) attributes {dimension_semantics = [#tpu.dimension_semantics<parallel>], iteration_bounds = array<i64: 2>, scalar_prefetch = 0 : i64, scratch_operands = 0 : i64, tpu.core_type = #tpu.core_type<tc>, window_params = [{transform_indices = @transform_0, window_bounds = array<i64: 256, 128>}, {pipeline_mode = #tpu.pipeline_mode<synchronous>, transform_indices = @transform_1, window_bounds = array<i64: 1, 128>}, {pipeline_mode = #tpu.pipeline_mode<synchronous>, transform_indices = @transform_2, window_bounds = array<i64: 1, 128>}, {transform_indices = @transform_3, window_bounds = array<i64: 256, 128>}]} {
    %c0 = arith.constant 0 : index
    %c0_0 = arith.constant 0 : index
    %0 = vector.load %arg1[%c0, %c0_0] : memref<256x128xf32, #tpu.memory_space<vmem>>, vector<256x128xf32>
    %c0_1 = arith.constant 0 : index
    %c0_2 = arith.constant 0 : index
    %1 = vector.load %arg2[%c0_1, %c0_2] : memref<1x128xf32, #tpu.memory_space<vmem>>, vector<1x128xf32>
    %2 = vector.broadcast %1 : vector<1x128xf32> to vector<256x128xf32>
    %3 = arith.mulf %0, %2 : vector<256x128xf32>
    %c0_3 = arith.constant 0 : index
    %c0_4 = arith.constant 0 : index
    %4 = vector.load %arg3[%c0_3, %c0_4] : memref<1x128xf32, #tpu.memory_space<vmem>>, vector<1x128xf32>
    %5 = vector.broadcast %4 : vector<1x128xf32> to vector<256x128xf32>
    %6 = arith.addf %3, %5 : vector<256x128xf32>
    %cst = arith.constant 0.000000e+00 : f32
    %7 = vector.broadcast %cst : f32 to vector<256x128xf32>
    %8 = arith.maximumf %6, %7 : vector<256x128xf32>
    %c0_5 = arith.constant 0 : index
    %c0_6 = arith.constant 0 : index
    %9 = vector.load %arg4[%c0_5, %c0_6] : memref<256x128xf32, #tpu.memory_space<vmem>>, vector<256x128xf32>
    tpu.vector_store %arg4[%c0_5, %c0_6], %8 {strides = array<i32>} : memref<256x128xf32, #tpu.memory_space<vmem>>, vector<256x128xf32>,
    return
  }
  func.func @transform_0(%arg0: i32) -> (i32, i32) {
    %c0_i32 = arith.constant 0 : i32
    %c0_i32_0 = arith.constant 0 : i32
    return %arg0, %c0_i32 : i32, i32
  }
  func.func @transform_1(%arg0: i32) -> (i32, i32) {
    %c0_i32 = arith.constant 0 : i32
    %c0_i32_0 = arith.constant 0 : i32
    %c0_i32_1 = arith.constant 0 : i32
    return %c0_i32, %c0_i32_0 : i32, i32
  }
  func.func @transform_2(%arg0: i32) -> (i32, i32) {
    %c0_i32 = arith.constant 0 : i32
    %c0_i32_0 = arith.constant 0 : i32
    %c0_i32_1 = arith.constant 0 : i32
    return %c0_i32, %c0_i32_0 : i32, i32
  }
  func.func @transform_3(%arg0: i32) -> (i32, i32) {
    %c0_i32 = arith.constant 0 : i32
    %c0_i32_0 = arith.constant 0 : i32
    return %arg0, %c0_i32 : i32, i32
  }
}

</mosaic_0001>

<llo_original>
// kernel: layer_forward.3
$region0: #{layer_forward.3}
  #allocation0 [shape = 'u32[]', space=smem, size = 0x4, offset = 0x4, fixed_abs, tag = 'smem constant byte address 0x4 - core index']
  #allocation1 [shape = 'u32[144,128]{1,0:T(1,128)}', space=vmem, size = 0x12000, scoped, tag = 'internal scratch']
  %s0 = inlined_call_operand.vmem [shape: f32[512,128], index: 0, kind: input, shape index: {}]
  %s1 = inlined_call_operand.vmem [shape: f32[1,128], index: 1, kind: input, shape index: {}]
  %s2 = inlined_call_operand.vmem [shape: f32[1,128], index: 2, kind: input, shape index: {}]
  %s3 = inlined_call_operand.vmem [shape: f32[512,128], index: 3, kind: output, shape index: {}]
  %s4 = sld [smem:[#allocation0]]
  $region45: #{layer_forward.3} parent=0
    _
  %s6 = ssub.s32 1, %s4
  %s7 = scalar_select 0, %s6, %s4
  loop: start=0, step=1, limit=4
  $region2: #{layer_forward.3} parent=0 // loop_pre_header
    _
  $region3: #{layer_forward.3} parent=0 // loop_header
    %s9 = sphi 0, %s13
    %p10 = scmp.ge.s32.totalorder %s9, 4
    %s19 = sphi 0, %s21
    %s22 = sphi 0, %s19
    %s23 = sphi 0, %s22
    %s39 = sphi 0, %s23
    %s43 = sphi 0, %s43
    %s45 = sphi 0, %s43
    %s46 = sphi 0, %s45
    %s60 = sphi 0, %s46
    %s64 = sphi 0, %s64
    %s66 = sphi 0, %s64
    %s67 = sphi 0, %s66
    %s81 = sphi 0, %s67
    %s87 = sphi 0, %s89
    %s90 = sphi 0, %s87
    %s91 = sphi 0, %s90
    %s107 = sphi 0, %s91
  $region4: #{layer_forward.3} parent=0 // loop_header_branch
    %12 = sbr.rel (%p10) target = $region8
  $region5: #{layer_forward.3} parent=0 // loop_body
    %s14 = ssub.s32 %s9, 1
    %s15 = ssub.s32 %s9, 2
    %s16 = sadd.s32 %s9, 1
    %s17 = ssub.s32 %s9, %s16
    %p18 = scmp.eq.s32.totalorder %s17, 0
    %s20 = sadd.s32 %s19, 1
    %s21 = scalar_select %p18, %s19, %s20
    %p24 = pneg %p18
    %p25 = scmp.eq.s32.totalorder %s9, 1
    %p26 = por %p24, %p25
    %p27 = scmp.ne.s32.totalorder %s19, %s22
    %p28 = scmp.eq.s32.totalorder %s9, 0
    %p29 = por %p27, %p28
    %p30 = scmp.ne.s32.totalorder %s19, %s22
    %p31 = scmp.eq.s32.totalorder %s14, 1
    %p32 = por %p30, %p31
    %p33 = scmp.ne.s32.totalorder %s22, %s23
    %p34 = scmp.eq.s32.totalorder %s14, 0
    %p35 = por %p33, %p34
    %p36 = scmp.ne.s32.totalorder %s22, %s23
    %p37 = scmp.eq.s32.totalorder %s15, 1
    %p38 = por %p36, %p37
    %p40 = scmp.ne.s32.totalorder %s23, %s39
    %p41 = scmp.eq.s32.totalorder %s15, 0
    %p42 = por %p40, %p41
    %s44 = sadd.s32 %s43, 1
    %p47 = scmp.eq.s32.totalorder %s9, 1
    %p48 = scmp.ne.s32.totalorder %s43, %s45
    %p49 = scmp.eq.s32.totalorder %s9, 0
    %p50 = por %p48, %p49
    %p51 = scmp.ne.s32.totalorder %s43, %s45
    %p52 = scmp.eq.s32.totalorder %s14, 1
    %p53 = por %p51, %p52
    %p54 = scmp.ne.s32.totalorder %s45, %s46
    %p55 = scmp.eq.s32.totalorder %s14, 0
    %p56 = por %p54, %p55
    %p57 = scmp.ne.s32.totalorder %s45, %s46
    %p58 = scmp.eq.s32.totalorder %s15, 1
    %p59 = por %p57, %p58
    %p61 = scmp.ne.s32.totalorder %s46, %s60
    %p62 = scmp.eq.s32.totalorder %s15, 0
    %p63 = por %p61, %p62
    %s65 = sadd.s32 %s64, 1
    %p68 = scmp.eq.s32.totalorder %s9, 1
    %p69 = scmp.ne.s32.totalorder %s64, %s66
    %p70 = scmp.eq.s32.totalorder %s9, 0
    %p71 = por %p69, %p70
    %p72 = scmp.ne.s32.totalorder %s64, %s66
    %p73 = scmp.eq.s32.totalorder %s14, 1
    %p74 = por %p72, %p73
    %p75 = scmp.ne.s32.totalorder %s66, %s67
    %p76 = scmp.eq.s32.totalorder %s14, 0
    %p77 = por %p75, %p76
    %p78 = scmp.ne.s32.totalorder %s66, %s67
    %p79 = scmp.eq.s32.totalorder %s15, 1
    %p80 = por %p78, %p79
    %p82 = scmp.ne.s32.totalorder %s67, %s81
    %p83 = scmp.eq.s32.totalorder %s15, 0
    %p84 = por %p82, %p83
    %s85 = ssub.s32 %s9, %s16
    %p86 = scmp.eq.s32.totalorder %s85, 0
    %s88 = sadd.s32 %s87, 1
    %s89 = scalar_select %p86, %s87, %s88
    %p92 = pneg %p86
    %p93 = scmp.eq.s32.totalorder %s9, 1
    %p94 = por %p92, %p93
    %p95 = scmp.ne.s32.totalorder %s87, %s90
    %p96 = scmp.eq.s32.totalorder %s9, 0
    %p97 = por %p95, %p96
    %p98 = scmp.ne.s32.totalorder %s87, %s90
    %p99 = scmp.eq.s32.totalorder %s14, 1
    %p100 = por %p98, %p99
    %p101 = scmp.ne.s32.totalorder %s90, %s91
    %p102 = scmp.eq.s32.totalorder %s14, 0
    %p103 = por %p101, %p102
    %p104 = scmp.ne.s32.totalorder %s90, %s91
    %p105 = scmp.eq.s32.totalorder %s15, 1
    %p106 = por %p104, %p105
    %p108 = scmp.ne.s32.totalorder %s91, %s107
    %p109 = scmp.eq.s32.totalorder %s15, 0
    %p110 = por %p108, %p109
    %p111 = scmp.le.s32.totalorder 1, %s9
    %p112 = scmp.lt.s32.totalorder %s9, 3
    %p113 = pnand %p111, %p112
    %p114 = pneg %p113
    // Predicated region
    $region9: #{layer_forward.3} parent=5 // pred_check
      _
    $region10: #{layer_forward.3} parent=5 // pred_check_branch
      %116 = sbr.rel (%p113) target = $region12
    $region11: #{layer_forward.3} parent=5 // pred_region
      %s117 = ssub.s32 %s9, 1
      // Predicated region
      $region13: #{layer_forward.3} parent=11 // pred_check
        %p118 = pneg %p56
      $region14: #{layer_forward.3} parent=11 // pred_check_branch
        %120 = sbr.rel (%p118) target = $region16
      $region15: #{layer_forward.3} parent=11 // pred_region
        _
      $region16: #{layer_forward.3} parent=11 // pred_fallthru
        _
      // Predicated region
      $region17: #{layer_forward.3} parent=11 // pred_check
        %p121 = pneg %p77
      $region18: #{layer_forward.3} parent=11 // pred_check_branch
        %123 = sbr.rel (%p121) target = $region20
      $region19: #{layer_forward.3} parent=11 // pred_region
        _
      $region20: #{layer_forward.3} parent=11 // pred_fallthru
        _
    $region12: #{layer_forward.3} parent=5 // pred_fallthru
      _
    %p124 = scmp.lt.s32.totalorder %s9, 2
    // Predicated region
    $region21: #{layer_forward.3} parent=5 // pred_check
      %p125 = pneg %p124
    $region22: #{layer_forward.3} parent=5 // pred_check_branch
      %127 = sbr.rel (%p125) target = $region24
    $region23: #{layer_forward.3} parent=5 // pred_region
      // Predicated region
      $region25: #{layer_forward.3} parent=23 // pred_check
        %p128 = pneg %p29
      $region26: #{layer_forward.3} parent=23 // pred_check_branch
        %130 = sbr.rel (%p128) target = $region28
      $region27: #{layer_forward.3} parent=23 // pred_region
        %s131 = smul.u32 32, %s9
        %p132 = scmp.lt.s32.totalorder %s131, 63
        %s133 = scalar_select %p132, %s131, 63
        %s134 = smul.addr %s133, 8
        %s135 = scalar_lea.vmem %s0, %s134
        %s136 = smul.u32 32, %s9
      $region28: #{layer_forward.3} parent=23 // pred_fallthru
        _
    $region24: #{layer_forward.3} parent=5 // pred_fallthru
      _
    %p137 = scmp.le.s32.totalorder 1, %s9
    %p138 = scmp.lt.s32.totalorder %s9, 3
    %p139 = pnand %p137, %p138
    %p140 = pneg %p139
    // Predicated region
    $region29: #{layer_forward.3} parent=5 // pred_check
      _
    $region30: #{layer_forward.3} parent=5 // pred_check_branch
      %142 = sbr.rel (%p139) target = $region32
    $region31: #{layer_forward.3} parent=5 // pred_region
      %s143 = ssub.s32 %s9, 1
      %s144 = smul.u32 32, %s14
      %p145 = scmp.lt.s32.totalorder %s144, 63
      %s146 = scalar_select %p145, %s144, 63
      %s147 = smul.addr %s146, 8
      %s148 = scalar_lea.vmem %s0, %s147
      %p149 = pneg %p35
      %p150 = pneg %p32
      %p151 = pneg %p56
      %p152 = pneg %p53
      %p153 = pneg %p77
      %p154 = pneg %p74
      %p155 = pneg %p103
      %p156 = pneg %p100
      %s157 = smul.u32 32, %s14
      %p158 = scmp.lt.s32.totalorder %s157, 63
      %s159 = scalar_select %p158, %s157, 63
      %s160 = smul.addr %s159, 8
      %s161 = scalar_lea.vmem %s3, %s160
      %s162 = smul.u32 32, %s14
      %p163 = scmp.lt.s32.totalorder %s162, 63
      %s164 = scalar_select %p163, %s162, 63
      %s165 = smul.addr %s164, 8
      %s166 = scalar_lea.vmem %s0, %s165
      %s167 = smul.u32 32, %s14
      %s168 = smul.u32 32, %s14
      %p169 = scmp.lt.s32.totalorder %s168, 63
      %s170 = scalar_select %p169, %s168, 63
      %s171 = smul.addr %s170, 8
      %s172 = scalar_lea.vmem %s3, %s171
      %s173 = smul.u32 32, %s14
      %v174 = vld [vmem:[%s166] sm:$0xff]
      %v175 = vld [vmem:[%s166 + $0x8] sm:$0xff]
      %v176 = vld [vmem:[%s166 + $0x10] sm:$0xff]
      %v177 = vld [vmem:[%s166 + $0x18] sm:$0xff]
      %v178 = vld [vmem:[%s166 + $0x20] sm:$0xff]
      %v179 = vld [vmem:[%s166 + $0x28] sm:$0xff]
      %v180 = vld [vmem:[%s166 + $0x30] sm:$0xff]
      %v181 = vld [vmem:[%s166 + $0x38] sm:$0xff]
      %v182 = vld [vmem:[%s166 + $0x40] sm:$0xff]
      %v183 = vld [vmem:[%s166 + $0x48] sm:$0xff]
      %v184 = vld [vmem:[%s166 + $0x50] sm:$0xff]
      %v185 = vld [vmem:[%s166 + $0x58] sm:$0xff]
      %v186 = vld [vmem:[%s166 + $0x60] sm:$0xff]
      %v187 = vld [vmem:[%s166 + $0x68] sm:$0xff]
      %v188 = vld [vmem:[%s166 + $0x70] sm:$0xff]
      %v189 = vld [vmem:[%s166 + $0x78] sm:$0xff]
      %v190 = vld [vmem:[%s166 + $0x80] sm:$0xff]
      %v191 = vld [vmem:[%s166 + $0x88] sm:$0xff]
      %v192 = vld [vmem:[%s166 + $0x90] sm:$0xff]
      %v193 = vld [vmem:[%s166 + $0x98] sm:$0xff]
      %v194 = vld [vmem:[%s166 + $0xa0] sm:$0xff]
      %v195 = vld [vmem:[%s166 + $0xa8] sm:$0xff]
      %v196 = vld [vmem:[%s166 + $0xb0] sm:$0xff]
      %v197 = vld [vmem:[%s166 + $0xb8] sm:$0xff]
      %v198 = vld [vmem:[%s166 + $0xc0] sm:$0xff]
      %v199 = vld [vmem:[%s166 + $0xc8] sm:$0xff]
      %v200 = vld [vmem:[%s166 + $0xd0] sm:$0xff]
      %v201 = vld [vmem:[%s166 + $0xd8] sm:$0xff]
      %v202 = vld [vmem:[%s166 + $0xe0] sm:$0xff]
      %v203 = vld [vmem:[%s166 + $0xe8] sm:$0xff]
      %v204 = vld [vmem:[%s166 + $0xf0] sm:$0xff]
      %v205 = vld [vmem:[%s166 + $0xf8] sm:$0xff]
      %v206 = vld [vmem:[%s1] sm:$0x1]
      %v208 = vlaneseq
      %v209 = vshrl.u32 %v208, 7
      %v210 = vsub.s32 0, %v209
      %v211 = vrot.slane %v206, %v210
      %v213 = vmul.f32 %v174, %v211
      %v214 = vmul.f32 %v175, %v211
      %v215 = vmul.f32 %v176, %v211
      %v216 = vmul.f32 %v177, %v211
      %v217 = vmul.f32 %v178, %v211
      %v218 = vmul.f32 %v179, %v211
      %v219 = vmul.f32 %v180, %v211
      %v220 = vmul.f32 %v181, %v211
      %v221 = vmul.f32 %v182, %v211
      %v222 = vmul.f32 %v183, %v211
      %v223 = vmul.f32 %v184, %v211
      %v224 = vmul.f32 %v185, %v211
      %v225 = vmul.f32 %v186, %v211
      %v226 = vmul.f32 %v187, %v211
      %v227 = vmul.f32 %v188, %v211
      %v228 = vmul.f32 %v189, %v211
      %v229 = vmul.f32 %v190, %v211
      %v230 = vmul.f32 %v191, %v211
      %v231 = vmul.f32 %v192, %v211
      %v232 = vmul.f32 %v193, %v211
      %v233 = vmul.f32 %v194, %v211
      %v234 = vmul.f32 %v195, %v211
      %v235 = vmul.f32 %v196, %v211
      %v236 = vmul.f32 %v197, %v211
      %v237 = vmul.f32 %v198, %v211
      %v238 = vmul.f32 %v199, %v211
      %v239 = vmul.f32 %v200, %v211
      %v240 = vmul.f32 %v201, %v211
      %v241 = vmul.f32 %v202, %v211
      %v242 = vmul.f32 %v203, %v211
      %v243 = vmul.f32 %v204, %v211
      %v244 = vmul.f32 %v205, %v211
      %v245 = vld [vmem:[%s2] sm:$0x1]
      %v247 = vlaneseq
      %v248 = vshrl.u32 %v247, 7
      %v249 = vsub.s32 0, %v248
      %v250 = vrot.slane %v245, %v249
      %v252 = vadd.f32 %v213, %v250
      %v253 = vadd.f32 %v214, %v250
      %v254 = vadd.f32 %v215, %v250
      %v255 = vadd.f32 %v216, %v250
      %v256 = vadd.f32 %v217, %v250
      %v257 = vadd.f32 %v218, %v250
      %v258 = vadd.f32 %v219, %v250
      %v259 = vadd.f32 %v220, %v250
      %v260 = vadd.f32 %v221, %v250
      %v261 = vadd.f32 %v222, %v250
      %v262 = vadd.f32 %v223, %v250
      %v263 = vadd.f32 %v224, %v250
      %v264 = vadd.f32 %v225, %v250
      %v265 = vadd.f32 %v226, %v250
      %v266 = vadd.f32 %v227, %v250
      %v267 = vadd.f32 %v228, %v250
      %v268 = vadd.f32 %v229, %v250
      %v269 = vadd.f32 %v230, %v250
      %v270 = vadd.f32 %v231, %v250
      %v271 = vadd.f32 %v232, %v250
      %v272 = vadd.f32 %v233, %v250
      %v273 = vadd.f32 %v234, %v250
      %v274 = vadd.f32 %v235, %v250
      %v275 = vadd.f32 %v236, %v250
      %v276 = vadd.f32 %v237, %v250
      %v277 = vadd.f32 %v238, %v250
      %v278 = vadd.f32 %v239, %v250
      %v279 = vadd.f32 %v240, %v250
      %v280 = vadd.f32 %v241, %v250
      %v281 = vadd.f32 %v242, %v250
      %v282 = vadd.f32 %v243, %v250
      %v283 = vadd.f32 %v244, %v250
      %v284 = vmax.f32 %v252, 0.0
      %v285 = vmax.f32 %v253, 0.0
      %v286 = vmax.f32 %v254, 0.0
      %v287 = vmax.f32 %v255, 0.0
      %v288 = vmax.f32 %v256, 0.0
      %v289 = vmax.f32 %v257, 0.0
      %v290 = vmax.f32 %v258, 0.0
      %v291 = vmax.f32 %v259, 0.0
      %v292 = vmax.f32 %v260, 0.0
      %v293 = vmax.f32 %v261, 0.0
      %v294 = vmax.f32 %v262, 0.0
      %v295 = vmax.f32 %v263, 0.0
      %v296 = vmax.f32 %v264, 0.0
      %v297 = vmax.f32 %v265, 0.0
      %v298 = vmax.f32 %v266, 0.0
      %v299 = vmax.f32 %v267, 0.0
      %v300 = vmax.f32 %v268, 0.0
      %v301 = vmax.f32 %v269, 0.0
      %v302 = vmax.f32 %v270, 0.0
      %v303 = vmax.f32 %v271, 0.0
      %v304 = vmax.f32 %v272, 0.0
      %v305 = vmax.f32 %v273, 0.0
      %v306 = vmax.f32 %v274, 0.0
      %v307 = vmax.f32 %v275, 0.0
      %v308 = vmax.f32 %v276, 0.0
      %v309 = vmax.f32 %v277, 0.0
      %v310 = vmax.f32 %v278, 0.0
      %v311 = vmax.f32 %v279, 0.0
      %v312 = vmax.f32 %v280, 0.0
      %v313 = vmax.f32 %v281, 0.0
      %v314 = vmax.f32 %v282, 0.0
      %v315 = vmax.f32 %v283, 0.0
      %316 = vst [vmem:[%s172] sm:$0xff] %v284
      %317 = vst [vmem:[%s172 + $0x8] sm:$0xff] %v285
      %318 = vst [vmem:[%s172 + $0x10] sm:$0xff] %v286
      %319 = vst [vmem:[%s172 + $0x18] sm:$0xff] %v287
      %320 = vst [vmem:[%s172 + $0x20] sm:$0xff] %v288
      %321 = vst [vmem:[%s172 + $0x28] sm:$0xff] %v289
      %322 = vst [vmem:[%s172 + $0x30] sm:$0xff] %v290
      %323 = vst [vmem:[%s172 + $0x38] sm:$0xff] %v291
      %324 = vst [vmem:[%s172 + $0x40] sm:$0xff] %v292
      %325 = vst [vmem:[%s172 + $0x48] sm:$0xff] %v293
      %326 = vst [vmem:[%s172 + $0x50] sm:$0xff] %v294
      %327 = vst [vmem:[%s172 + $0x58] sm:$0xff] %v295
      %328 = vst [vmem:[%s172 + $0x60] sm:$0xff] %v296
      %329 = vst [vmem:[%s172 + $0x68] sm:$0xff] %v297
      %330 = vst [vmem:[%s172 + $0x70] sm:$0xff] %v298
      %331 = vst [vmem:[%s172 + $0x78] sm:$0xff] %v299
      %332 = vst [vmem:[%s172 + $0x80] sm:$0xff] %v300
      %333 = vst [vmem:[%s172 + $0x88] sm:$0xff] %v301
      %334 = vst [vmem:[%s172 + $0x90] sm:$0xff] %v302
      %335 = vst [vmem:[%s172 + $0x98] sm:$0xff] %v303
      %336 = vst [vmem:[%s172 + $0xa0] sm:$0xff] %v304
      %337 = vst [vmem:[%s172 + $0xa8] sm:$0xff] %v305
      %338 = vst [vmem:[%s172 + $0xb0] sm:$0xff] %v306
      %339 = vst [vmem:[%s172 + $0xb8] sm:$0xff] %v307
      %340 = vst [vmem:[%s172 + $0xc0] sm:$0xff] %v308
      %341 = vst [vmem:[%s172 + $0xc8] sm:$0xff] %v309
      %342 = vst [vmem:[%s172 + $0xd0] sm:$0xff] %v310
      %343 = vst [vmem:[%s172 + $0xd8] sm:$0xff] %v311
      %344 = vst [vmem:[%s172 + $0xe0] sm:$0xff] %v312
      %345 = vst [vmem:[%s172 + $0xe8] sm:$0xff] %v313
      %346 = vst [vmem:[%s172 + $0xf0] sm:$0xff] %v314
      %347 = vst [vmem:[%s172 + $0xf8] sm:$0xff] %v315
      %s348 = smul.u32 32, %s14
      %p349 = scmp.lt.s32.totalorder %s348, 63
      %s350 = scalar_select %p349, %s348, 63
      %s351 = smul.addr %s350, 8
      %s352 = scalar_lea.vmem %s3, %s351
      // Predicated region
      $region33: #{layer_forward.3} parent=31 // pred_check
        %p353 = pneg %p100
      $region34: #{layer_forward.3} parent=31 // pred_check_branch
        %355 = sbr.rel (%p353) target = $region36
      $region35: #{layer_forward.3} parent=31 // pred_region
        %s356 = smul.u32 32, %s14
      $region36: #{layer_forward.3} parent=31 // pred_fallthru
        _
    $region32: #{layer_forward.3} parent=5 // pred_fallthru
      _
    %p357 = scmp.le.s32.totalorder 2, %s9
    // Predicated region
    $region37: #{layer_forward.3} parent=5 // pred_check
      %p358 = pneg %p357
    $region38: #{layer_forward.3} parent=5 // pred_check_branch
      %360 = sbr.rel (%p358) target = $region40
    $region39: #{layer_forward.3} parent=5 // pred_region
      %s361 = ssub.s32 %s9, 2
      // Predicated region
      $region41: #{layer_forward.3} parent=39 // pred_check
        %p362 = pneg %p106
      $region42: #{layer_forward.3} parent=39 // pred_check_branch
        %364 = sbr.rel (%p362) target = $region44
      $region43: #{layer_forward.3} parent=39 // pred_region
        %s365 = smul.u32 32, %s15
        %p366 = scmp.lt.s32.totalorder %s365, 63
        %s367 = scalar_select %p366, %s365, 63
        %s368 = smul.addr %s367, 8
        %s369 = scalar_lea.vmem %s3, %s368
      $region44: #{layer_forward.3} parent=39 // pred_fallthru
        _
    $region40: #{layer_forward.3} parent=5 // pred_fallthru
      _
  $region6: #{layer_forward.3} parent=0 // loop_footer
    %s13 = sadd.s32 1, %s9
  $region7: #{layer_forward.3} parent=0 // loop_footer_branch
    %8 = sbr.rel target = $region3
  $region8: #{layer_forward.3} parent=0 // loop_exit
    _

// kernel: layer_forward.2
$region0: #{layer_forward.2}
  #allocation0 [shape = 'u32[]', space=smem, size = 0x4, offset = 0x4, fixed_abs, tag = 'smem constant byte address 0x4 - core index']
  #allocation1 [shape = 'u32[144,128]{1,0:T(1,128)}', space=vmem, size = 0x12000, scoped, tag = 'internal scratch']
  %s0 = inlined_call_operand.vmem [shape: f32[2,18,18,4], index: 0, kind: input, shape index: {}]
  %s1 = inlined_call_operand.vmem [shape: f32[9,4,128], index: 1, kind: input, shape index: {}]
  %s2 = inlined_call_operand.vmem [shape: f32[2,16,16,128], index: 2, kind: output, shape index: {0}]
  %s3 = inlined_call_operand.vmem [shape: f32[2,1,128], index: 3, kind: output, shape index: {1}]
  %s4 = inlined_call_operand.vmem [shape: f32[2,1,128], index: 4, kind: output, shape index: {2}]
  %5 = xla_tuple %s2, %s3, %s4
  %s6 = sld [smem:[#allocation0]]
  $region65: #{layer_forward.2} parent=0
    _
  %s8 = ssub.s32 1, %s6
  %s9 = scalar_select 0, %s8, %s6
  loop: start=0, step=1, limit=6
  $region2: #{layer_forward.2} parent=0 // loop_pre_header
    _
  $region3: #{layer_forward.2} parent=0 // loop_header
    %s11 = sphi 0, %s15
    %p12 = scmp.ge.s32.totalorder %s11, 6
    %s18 = sphi 0, %s30
    %s19 = sphi 0, %s26
    %s20 = sphi 0, %s18
    %s21 = sphi 0, %s19
    %s22 = sphi 0, %s20
    %s23 = sphi 0, %s21
    %s33 = sphi 0, %s35
    %s36 = sphi 0, %s33
    %s37 = sphi 0, %s36
    %s53 = sphi 0, %s37
    %s57 = sphi 0, %s57
    %s59 = sphi 0, %s57
    %s60 = sphi 0, %s59
    %s74 = sphi 0, %s60
    %s82 = sphi 0, %s84
    %s85 = sphi 0, %s82
    %s86 = sphi 0, %s85
    %s102 = sphi 0, %s86
    %s108 = sphi 0, %s110
    %s111 = sphi 0, %s108
    %s112 = sphi 0, %s111
    %s128 = sphi 0, %s112
    %s134 = sphi 0, %s136
    %s137 = sphi 0, %s134
    %s138 = sphi 0, %s137
    %s154 = sphi 0, %s138
  $region4: #{layer_forward.2} parent=0 // loop_header_branch
    %14 = sbr.rel (%p12) target = $region8
  $region5: #{layer_forward.2} parent=0 // loop_body
    %s16 = ssub.s32 %s11, 1
    %s17 = ssub.s32 %s11, 2
    %s24 = sadd.s32 1, %s19
    %p25 = scmp.ge.s32.totalorder %s24, 2
    %s26 = scalar_select %p25, 0, %s24
    %s27 = sadd.s32 1, %s18
    %s28 = scalar_select %p25, %s27, %s18
    %p29 = scmp.ge.s32.totalorder %s28, 2
    %s30 = scalar_select %p29, 0, %s28
    %s31 = ssub.s32 %s18, %s30
    %p32 = scmp.eq.s32.totalorder %s31, 0
    %s34 = sadd.s32 %s33, 1
    %s35 = scalar_select %p32, %s33, %s34
    %p38 = pneg %p32
    %p39 = scmp.eq.s32.totalorder %s11, 3
    %p40 = por %p38, %p39
    %p41 = scmp.ne.s32.totalorder %s33, %s36
    %p42 = scmp.eq.s32.totalorder %s11, 0
    %p43 = por %p41, %p42
    %p44 = scmp.ne.s32.totalorder %s33, %s36
    %p45 = scmp.eq.s32.totalorder %s16, 3
    %p46 = por %p44, %p45
    %p47 = scmp.ne.s32.totalorder %s36, %s37
    %p48 = scmp.eq.s32.totalorder %s16, 0
    %p49 = por %p47, %p48
    %p50 = scmp.ne.s32.totalorder %s36, %s37
    %p51 = scmp.eq.s32.totalorder %s17, 3
    %p52 = por %p50, %p51
    %p54 = scmp.ne.s32.totalorder %s37, %s53
    %p55 = scmp.eq.s32.totalorder %s17, 0
    %p56 = por %p54, %p55
    %s58 = sadd.s32 %s57, 1
    %p61 = scmp.eq.s32.totalorder %s11, 3
    %p62 = scmp.ne.s32.totalorder %s57, %s59
    %p63 = scmp.eq.s32.totalorder %s11, 0
    %p64 = por %p62, %p63
    %p65 = scmp.ne.s32.totalorder %s57, %s59
    %p66 = scmp.eq.s32.totalorder %s16, 3
    %p67 = por %p65, %p66
    %p68 = scmp.ne.s32.totalorder %s59, %s60
    %p69 = scmp.eq.s32.totalorder %s16, 0
    %p70 = por %p68, %p69
    %p71 = scmp.ne.s32.totalorder %s59, %s60
    %p72 = scmp.eq.s32.totalorder %s17, 3
    %p73 = por %p71, %p72
    %p75 = scmp.ne.s32.totalorder %s60, %s74
    %p76 = scmp.eq.s32.totalorder %s17, 0
    %p77 = por %p75, %p76
    %s78 = ssub.s32 %s18, %s30
    %s79 = ssub.s32 %s19, %s26
    %s80 = sor.u32 %s78, %s79
    %p81 = scmp.eq.s32.totalorder %s80, 0
    %s83 = sadd.s32 %s82, 1
    %s84 = scalar_select %p81, %s82, %s83
    %p87 = pneg %p81
    %p88 = scmp.eq.s32.totalorder %s11, 3
    %p89 = por %p87, %p88
    %p90 = scmp.ne.s32.totalorder %s82, %s85
    %p91 = scmp.eq.s32.totalorder %s11, 0
    %p92 = por %p90, %p91
    %p93 = scmp.ne.s32.totalorder %s82, %s85
    %p94 = scmp.eq.s32.totalorder %s16, 3
    %p95 = por %p93, %p94
    %p96 = scmp.ne.s32.totalorder %s85, %s86
    %p97 = scmp.eq.s32.totalorder %s16, 0
    %p98 = por %p96, %p97
    %p99 = scmp.ne.s32.totalorder %s85, %s86
    %p100 = scmp.eq.s32.totalorder %s17, 3
    %p101 = por %p99, %p100
    %p103 = scmp.ne.s32.totalorder %s86, %s102
    %p104 = scmp.eq.s32.totalorder %s17, 0
    %p105 = por %p103, %p104
    %s106 = ssub.s32 %s18, %s30
    %p107 = scmp.eq.s32.totalorder %s106, 0
    %s109 = sadd.s32 %s108, 1
    %s110 = scalar_select %p107, %s108, %s109
    %p113 = pneg %p107
    %p114 = scmp.eq.s32.totalorder %s11, 3
    %p115 = por %p113, %p114
    %p116 = scmp.ne.s32.totalorder %s108, %s111
    %p117 = scmp.eq.s32.totalorder %s11, 0
    %p118 = por %p116, %p117
    %p119 = scmp.ne.s32.totalorder %s108, %s111
    %p120 = scmp.eq.s32.totalorder %s16, 3
    %p121 = por %p119, %p120
    %p122 = scmp.ne.s32.totalorder %s111, %s112
    %p123 = scmp.eq.s32.totalorder %s16, 0
    %p124 = por %p122, %p123
    %p125 = scmp.ne.s32.totalorder %s111, %s112
    %p126 = scmp.eq.s32.totalorder %s17, 3
    %p127 = por %p125, %p126
    %p129 = scmp.ne.s32.totalorder %s112, %s128
    %p130 = scmp.eq.s32.totalorder %s17, 0
    %p131 = por %p129, %p130
    %s132 = ssub.s32 %s18, %s30
    %p133 = scmp.eq.s32.totalorder %s132, 0
    %s135 = sadd.s32 %s134, 1
    %s136 = scalar_select %p133, %s134, %s135
    %p139 = pneg %p133
    %p140 = scmp.eq.s32.totalorder %s11, 3
    %p141 = por %p139, %p140
    %p142 = scmp.ne.s32.totalorder %s134, %s137
    %p143 = scmp.eq.s32.totalorder %s11, 0
    %p144 = por %p142, %p143
    %p145 = scmp.ne.s32.totalorder %s134, %s137
    %p146 = scmp.eq.s32.totalorder %s16, 3
    %p147 = por %p145, %p146
    %p148 = scmp.ne.s32.totalorder %s137, %s138
    %p149 = scmp.eq.s32.totalorder %s16, 0
    %p150 = por %p148, %p149
    %p151 = scmp.ne.s32.totalorder %s137, %s138
    %p152 = scmp.eq.s32.totalorder %s17, 3
    %p153 = por %p151, %p152
    %p155 = scmp.ne.s32.totalorder %s138, %s154
    %p156 = scmp.eq.s32.totalorder %s17, 0
    %p157 = por %p155, %p156
    %p158 = scmp.le.s32.totalorder 1, %s11
    %p159 = scmp.lt.s32.totalorder %s11, 5
    %p160 = pnand %p158, %p159
    %p161 = pneg %p160
    // Predicated region
    $region9: #{layer_forward.2} parent=5 // pred_check
      _
    $region10: #{layer_forward.2} parent=5 // pred_check_branch
      %163 = sbr.rel (%p160) target = $region12
    $region11: #{layer_forward.2} parent=5 // pred_region
      %s164 = ssub.s32 %s11, 1
      // Predicated region
      $region13: #{layer_forward.2} parent=11 // pred_check
        %p165 = pneg %p70
      $region14: #{layer_forward.2} parent=11 // pred_check_branch
        %167 = sbr.rel (%p165) target = $region16
      $region15: #{layer_forward.2} parent=11 // pred_region
        _
      $region16: #{layer_forward.2} parent=11 // pred_fallthru
        _
    $region12: #{layer_forward.2} parent=5 // pred_fallthru
      _
    %p168 = scmp.lt.s32.totalorder %s11, 4
    // Predicated region
    $region17: #{layer_forward.2} parent=5 // pred_check
      %p169 = pneg %p168
    $region18: #{layer_forward.2} parent=5 // pred_check_branch
      %171 = sbr.rel (%p169) target = $region20
    $region19: #{layer_forward.2} parent=5 // pred_region
      // Predicated region
      $region21: #{layer_forward.2} parent=19 // pred_check
        %p172 = pneg %p43
      $region22: #{layer_forward.2} parent=19 // pred_check_branch
        %174 = sbr.rel (%p172) target = $region24
      $region23: #{layer_forward.2} parent=19 // pred_region
        %p175 = scmp.lt.s32.totalorder %s18, 1
        %s176 = scalar_select %p175, %s18, 1
        %s177 = smul.addr %s176, 54
        %s178 = smul.addr %s177, 8
        %s179 = scalar_lea.vmem %s0, %s178
      $region24: #{layer_forward.2} parent=19 // pred_fallthru
        _
    $region20: #{layer_forward.2} parent=5 // pred_fallthru
      _
    %p180 = scmp.le.s32.totalorder 1, %s11
    %p181 = scmp.lt.s32.totalorder %s11, 5
    %p182 = pnand %p180, %p181
    %p183 = pneg %p182
    // Predicated region
    $region25: #{layer_forward.2} parent=5 // pred_check
      _
    $region26: #{layer_forward.2} parent=5 // pred_check_branch
      %185 = sbr.rel (%p182) target = $region28
    $region27: #{layer_forward.2} parent=5 // pred_region
      %s186 = ssub.s32 %s11, 1
      %p187 = scmp.lt.s32.totalorder %s20, 1
      %s188 = scalar_select %p187, %s20, 1
      %s189 = smul.addr %s188, 54
      %s190 = smul.addr %s189, 8
      %s191 = scalar_lea.vmem %s0, %s190
      %p192 = pneg %p49
      %p193 = pneg %p46
      %p194 = pneg %p70
      %p195 = pneg %p67
      %p196 = pneg %p98
      %p197 = pneg %p95
      %s198 = smul.u32 8, %s21
      %p199 = scmp.lt.s32.totalorder %s20, 1
      %s200 = scalar_select %p199, %s20, 1
      %p201 = scmp.lt.s32.totalorder %s198, 15
      %s202 = scalar_select %p201, %s198, 15
      %s203 = smul.addr %s202, 2
      %s204 = smul.addr %s200, 32
      %s205 = sadd.s32 %s203, %s204
      %s206 = smul.addr %s205, 8
      %s207 = scalar_lea.vmem %s2, %s206
      %p208 = pneg %p124
      %p209 = pneg %p121
      %p210 = scmp.lt.s32.totalorder %s20, 1
      %s211 = scalar_select %p210, %s20, 1
      %s212 = scalar_lea.vmem %s3, %s211
      %p213 = pneg %p150
      %p214 = pneg %p147
      %p215 = scmp.lt.s32.totalorder %s20, 1
      %s216 = scalar_select %p215, %s20, 1
      %s217 = scalar_lea.vmem %s4, %s216
      %p218 = scmp.lt.s32.totalorder %s20, 1
      %s219 = scalar_select %p218, %s20, 1
      %s220 = smul.addr %s219, 54
      %s221 = smul.addr %s220, 8
      %s222 = scalar_lea.vmem %s0, %s221
      %s223 = smul.u32 8, %s21
      %p224 = scmp.lt.s32.totalorder %s20, 1
      %s225 = scalar_select %p224, %s20, 1
      %p226 = scmp.lt.s32.totalorder %s223, 15
      %s227 = scalar_select %p226, %s223, 15
      %s228 = smul.addr %s227, 2
      %s229 = smul.addr %s225, 32
      %s230 = sadd.s32 %s228, %s229
      %s231 = smul.addr %s230, 8
      %s232 = scalar_lea.vmem %s2, %s231
      %s233 = smul.u32 8, %s21
      %p234 = scmp.lt.s32.totalorder %s20, 1
      %s235 = scalar_select %p234, %s20, 1
      %s236 = scalar_lea.vmem %s3, %s235
      %p237 = scmp.lt.s32.totalorder %s20, 1
      %s238 = scalar_select %p237, %s20, 1
      %s239 = scalar_lea.vmem %s4, %s238
      %s240 = smul.u32 %s21, 8
      %s241 = smul.u32 %s240, 24
      %s242 = scalar_lea.vmem %s222, %s241
      %v243 = vld [vmem:[%s242] sm:$0xff]
      %v244 = vld [vmem:[%s242 + $0x8] sm:$0xff]
      %v245 = vld [vmem:[%s242 + $0x10] sm:$0x3]
      %v246 = vld [vmem:[%s1] sm:$0xf]
      %s247 = scalar_lea.vmem %s1, 4
      %v248 = vld [vmem:[%s247] sm:$0xf]
      %vm252 = vcmask 1046528
      %v253 = vrot.slane %v243, 1
      %v254 = vrot.slane %v244, 1
      %v255 = vsel %vm252, %v253, %v254
      %v256 = vrot.slane %v245, 1
      %v257 = vsel %vm252, %v254, %v256
      %vm258 = vcmask 31744
      %v259 = vsel %vm258, %v255, 0
      %v261 = vsel %vm258, %v257, 0
      %vm263 = vcmask 1043456
      %v265 = vsel %vm263, %v248, 0
      %267 = vmatprep.subr.mxu0 0.0
      %268 = vmatpush1.msra.mxu0 0.0
      %269 = vmatprep.subr.mxu0 0.0
      %270 = vmatpush1.msra.mxu0 0.0
      %271 = vmatprep.subr.mxu0 0.0
      %272 = vmatpush1.msra.mxu0 0.0
      %273 = vmatprep.subr.mxu0 0.0
      %274 = vmatpush1.msra.mxu0 0.0
      %275 = vmatprep.subr.mxu0 0.0
      %276 = vmatpush1.msra.mxu0 0.0
      %277 = vmatprep.subr.mxu0 0.0
      %278 = vmatpush1.msra.mxu0 0.0
      %279 = vmatprep.subr.mxu0 0.0
      %280 = vmatpush1.msra.mxu0 0.0
      %281 = vmatprep.subr.mxu0 0.0
      %282 = vmatpush1.msra.mxu0 0.0
      %283 = vmatprep.subr.mxu0 0.0
      %284 = vmatpush1.msra.mxu0 0.0
      %285 = vmatprep.subr.mxu0 0.0
      %286 = vmatpush1.msra.mxu0 0.0
      %287 = vmatprep.subr.mxu0 0.0
      %288 = vmatpush1.msra.mxu0 0.0
      %289 = vmatprep.subr.mxu0 0.0
      %290 = vmatpush1.msra.mxu0 0.0
      %291 = vmatprep.subr.mxu0 0.0
      %292 = vmatpush1.msra.mxu0 0.0
      %293 = vmatprep.subr.mxu0 0.0
      %294 = vmatpush1.msra.mxu0 0.0
      %295 = vmatprep.subr.mxu0 0.0
      %296 = vmatpush1.msra.mxu0 0.0
      %297 = vmatprep.subr.mxu0 0.0
      %298 = vmatpush1.msra.mxu0 %v265
      %299 = vmatprep.subr.mxu0 0.0
      %300 = vmatpush2.msra.mxu0 0.0
      %301 = vmatprep.subr.mxu0 0.0
      %302 = vmatpush2.msra.mxu0 0.0
      %303 = vmatprep.subr.mxu0 0.0
      %304 = vmatpush2.msra.mxu0 0.0
      %305 = vmatprep.subr.mxu0 0.0
      %306 = vmatpush2.msra.mxu0 0.0
      %307 = vmatprep.subr.mxu0 0.0
      %308 = vmatpush2.msra.mxu0 0.0
      %309 = vmatprep.subr.mxu0 0.0
      %310 = vmatpush2.msra.mxu0 0.0
      %311 = vmatprep.subr.mxu0 0.0
      %312 = vmatpush2.msra.mxu0 0.0
      %313 = vmatprep.subr.mxu0 0.0
      %314 = vmatpush2.msra.mxu0 0.0
      %315 = vmatprep.subr.mxu0 0.0
      %316 = vmatpush2.msra.mxu0 0.0
      %317 = vmatprep.subr.mxu0 0.0
      %318 = vmatpush2.msra.mxu0 0.0
      %319 = vmatprep.subr.mxu0 0.0
      %320 = vmatpush2.msra.mxu0 0.0
      %321 = vmatprep.subr.mxu0 0.0
      %322 = vmatpush2.msra.mxu0 0.0
      %323 = vmatprep.subr.mxu0 0.0
      %324 = vmatpush2.msra.mxu0 0.0
      %325 = vmatprep.subr.mxu0 0.0
      %326 = vmatpush2.msra.mxu0 0.0
      %327 = vmatprep.subr.mxu0 0.0
      %328 = vmatpush2.msra.mxu0 0.0
      %329 = vmatprep.subr.mxu0 0.0
      %330 = vmatpush2.msra.mxu0 0.0
      %331 = vmatprep.mubr.f32.mxu0 0.0
      %332 = vmatmul.mubr.f32.gmra.mxu0 %v259
      %v333 = vpop.f32.mrf.mxu0
      %v334 = vadd.f32 0.0, %v333
      %v335 = vpop.f32.mrf.mxu0
      %336 = vmatprep.mubr.f32.mxu0 0.0
      %337 = vmatmul.mubr.f32.gmra.mxu0 %v261
      %v338 = vpop.f32.mrf.mxu0
      %v339 = vadd.f32 0.0, %v338
      %v340 = vpop.f32.mrf.mxu0
      %341 = vdwg.mxu0
      %v342 = vsel %vm258, %v243, 0
      %v344 = vsel %vm258, %v244, 0
      %v347 = vsel %vm263, %v246, 0
      %349 = vmatprep.subr.mxu0 0.0
      %350 = vmatpush1.msra.mxu0 0.0
      %351 = vmatprep.subr.mxu0 0.0
      %352 = vmatpush1.msra.mxu0 0.0
      %353 = vmatprep.subr.mxu0 0.0
      %354 = vmatpush1.msra.mxu0 0.0
      %355 = vmatprep.subr.mxu0 0.0
      %356 = vmatpush1.msra.mxu0 0.0
      %357 = vmatprep.subr.mxu0 0.0
      %358 = vmatpush1.msra.mxu0 0.0
      %359 = vmatprep.subr.mxu0 0.0
      %360 = vmatpush1.msra.mxu0 0.0
      %361 = vmatprep.subr.mxu0 0.0
      %362 = vmatpush1.msra.mxu0 0.0
      %363 = vmatprep.subr.mxu0 0.0
      %364 = vmatpush1.msra.mxu0 0.0
      %365 = vmatprep.subr.mxu0 0.0
      %366 = vmatpush1.msra.mxu0 0.0
      %367 = vmatprep.subr.mxu0 0.0
      %368 = vmatpush1.msra.mxu0 0.0
      %369 = vmatprep.subr.mxu0 0.0
      %370 = vmatpush1.msra.mxu0 0.0
      %371 = vmatprep.subr.mxu0 0.0
      %372 = vmatpush1.msra.mxu0 0.0
      %373 = vmatprep.subr.mxu0 0.0
      %374 = vmatpush1.msra.mxu0 0.0
      %375 = vmatprep.subr.mxu0 0.0
      %376 = vmatpush1.msra.mxu0 0.0
      %377 = vmatprep.subr.mxu0 0.0
      %378 = vmatpush1.msra.mxu0 0.0
      %379 = vmatprep.subr.mxu0 0.0
      %380 = vmatpush1.msra.mxu0 %v347
      %381 = vmatprep.subr.mxu0 0.0
      %382 = vmatpush2.msra.mxu0 0.0
      %383 = vmatprep.subr.mxu0 0.0
      %384 = vmatpush2.msra.mxu0 0.0
      %385 = vmatprep.subr.mxu0 0.0
      %386 = vmatpush2.msra.mxu0 0.0
      %387 = vmatprep.subr.mxu0 0.0
      %388 = vmatpush2.msra.mxu0 0.0
      %389 = vmatprep.subr.mxu0 0.0
      %390 = vmatpush2.msra.mxu0 0.0
      %391 = vmatprep.subr.mxu0 0.0
      %392 = vmatpush2.msra.mxu0 0.0
      %393 = vmatprep.subr.mxu0 0.0
      %394 = vmatpush2.msra.mxu0 0.0
      %395 = vmatprep.subr.mxu0 0.0
      %396 = vmatpush2.msra.mxu0 0.0
      %397 = vmatprep.subr.mxu0 0.0
      %398 = vmatpush2.msra.mxu0 0.0
      %399 = vmatprep.subr.mxu0 0.0
      %400 = vmatpush2.msra.mxu0 0.0
      %401 = vmatprep.subr.mxu0 0.0
      %402 = vmatpush2.msra.mxu0 0.0
      %403 = vmatprep.subr.mxu0 0.0
      %404 = vmatpush2.msra.mxu0 0.0
      %405 = vmatprep.subr.mxu0 0.0
      %406 = vmatpush2.msra.mxu0 0.0
      %407 = vmatprep.subr.mxu0 0.0
      %408 = vmatpush2.msra.mxu0 0.0
      %409 = vmatprep.subr.mxu0 0.0
      %410 = vmatpush2.msra.mxu0 0.0
      %411 = vmatprep.subr.mxu0 0.0
      %412 = vmatpush2.msra.mxu0 0.0
      %413 = vmatprep.mubr.f32.mxu0 0.0
      %414 = vmatmul.mubr.f32.gmra.mxu0 %v342
      %v415 = vpop.f32.mrf.mxu0
      %v416 = vadd.f32 %v334, %v415
      %v417 = vpop.f32.mrf.mxu0
      %418 = vmatprep.mubr.f32.mxu0 0.0
      %419 = vmatmul.mubr.f32.gmra.mxu0 %v344
      %v420 = vpop.f32.mrf.mxu0
      %v421 = vadd.f32 %v339, %v420
      %v422 = vpop.f32.mrf.mxu0
      %423 = vdwg.mxu0
      %s424 = scalar_lea.vmem %s1, 8
      %v425 = vld [vmem:[%s424] sm:$0xf]
      %vm426 = vcmask 1045504
      %v427 = vrot.slane %v243, 2
      %v428 = vrot.slane %v244, 2
      %v429 = vsel %vm426, %v427, %v428
      %v430 = vrot.slane %v245, 2
      %v431 = vsel %vm426, %v428, %v430
      %v432 = vsel %vm258, %v429, 0
      %v434 = vsel %vm258, %v431, 0
      %v437 = vsel %vm263, %v425, 0
      %439 = vmatprep.subr.mxu0 0.0
      %440 = vmatpush1.msra.mxu0 0.0
      %441 = vmatprep.subr.mxu0 0.0
      %442 = vmatpush1.msra.mxu0 0.0
      %443 = vmatprep.subr.mxu0 0.0
      %444 = vmatpush1.msra.mxu0 0.0
      %445 = vmatprep.subr.mxu0 0.0
      %446 = vmatpush1.msra.mxu0 0.0
      %447 = vmatprep.subr.mxu0 0.0
      %448 = vmatpush1.msra.mxu0 0.0
      %449 = vmatprep.subr.mxu0 0.0
      %450 = vmatpush1.msra.mxu0 0.0
      %451 = vmatprep.subr.mxu0 0.0
      %452 = vmatpush1.msra.mxu0 0.0
      %453 = vmatprep.subr.mxu0 0.0
      %454 = vmatpush1.msra.mxu0 0.0
      %455 = vmatprep.subr.mxu0 0.0
      %456 = vmatpush1.msra.mxu0 0.0
      %457 = vmatprep.subr.mxu0 0.0
      %458 = vmatpush1.msra.mxu0 0.0
      %459 = vmatprep.subr.mxu0 0.0
      %460 = vmatpush1.msra.mxu0 0.0
      %461 = vmatprep.subr.mxu0 0.0
      %462 = vmatpush1.msra.mxu0 0.0
      %463 = vmatprep.subr.mxu0 0.0
      %464 = vmatpush1.msra.mxu0 0.0
      %465 = vmatprep.subr.mxu0 0.0
      %466 = vmatpush1.msra.mxu0 0.0
      %467 = vmatprep.subr.mxu0 0.0
      %468 = vmatpush1.msra.mxu0 0.0
      %469 = vmatprep.subr.mxu0 0.0
      %470 = vmatpush1.msra.mxu0 %v437
      %471 = vmatprep.subr.mxu0 0.0
      %472 = vmatpush2.msra.mxu0 0.0
      %473 = vmatprep.subr.mxu0 0.0
      %474 = vmatpush2.msra.mxu0 0.0
      %475 = vmatprep.subr.mxu0 0.0
      %476 = vmatpush2.msra.mxu0 0.0
      %477 = vmatprep.subr.mxu0 0.0
      %478 = vmatpush2.msra.mxu0 0.0
      %479 = vmatprep.subr.mxu0 0.0
      %480 = vmatpush2.msra.mxu0 0.0
      %481 = vmatprep.subr.mxu0 0.0
      %482 = vmatpush2.msra.mxu0 0.0
      %483 = vmatprep.subr.mxu0 0.0
      %484 = vmatpush2.msra.mxu0 0.0
      %485 = vmatprep.subr.mxu0 0.0
      %486 = vmatpush2.msra.mxu0 0.0
      %487 = vmatprep.subr.mxu0 0.0
      %488 = vmatpush2.msra.mxu0 0.0
      %489 = vmatprep.subr.mxu0 0.0
      %490 = vmatpush2.msra.mxu0 0.0
      %491 = vmatprep.subr.mxu0 0.0
      %492 = vmatpush2.msra.mxu0 0.0
      %493 = vmatprep.subr.mxu0 0.0
      %494 = vmatpush2.msra.mxu0 0.0
      %495 = vmatprep.subr.mxu0 0.0
      %496 = vmatpush2.msra.mxu0 0.0
      %497 = vmatprep.subr.mxu0 0.0
      %498 = vmatpush2.msra.mxu0 0.0
      %499 = vmatprep.subr.mxu0 0.0
      %500 = vmatpush2.msra.mxu0 0.0
      %501 = vmatprep.subr.mxu0 0.0
      %502 = vmatpush2.msra.mxu0 0.0
      %503 = vmatprep.mubr.f32.mxu0 0.0
      %504 = vmatmul.mubr.f32.gmra.mxu0 %v432
      %v505 = vpop.f32.mrf.mxu0
      %v506 = vadd.f32 0.0, %v505
      %v507 = vpop.f32.mrf.mxu0
      %508 = vmatprep.mubr.f32.mxu0 0.0
      %509 = vmatmul.mubr.f32.gmra.mxu0 %v434
      %v510 = vpop.f32.mrf.mxu0
      %v511 = vadd.f32 0.0, %v510
      %v512 = vpop.f32.mrf.mxu0
      %513 = vdwg.mxu0
      %v514 = vadd.f32 %v416, %v506
      %v515 = vadd.f32 %v421, %v511
      %s516 = sadd.s32 %s240, 1
      %s517 = smul.u32 %s516, 24
      %s518 = scalar_lea.vmem %s222, %s517
      %v519 = vld [vmem:[%s518] sm:$0xff]
      %v520 = vld [vmem:[%s518 + $0x8] sm:$0xff]
      %v521 = vld [vmem:[%s518 + $0x10] sm:$0x3]
      %s522 = scalar_lea.vmem %s1, 12
      %v523 = vld [vmem:[%s522] sm:$0xf]
      %v525 = vsel %vm258, %v519, 0
      %v528 = vsel %vm258, %v520, 0
      %v531 = vsel %vm263, %v523, 0
      %533 = vmatprep.subr.mxu0 0.0
      %534 = vmatpush1.msra.mxu0 0.0
      %535 = vmatprep.subr.mxu0 0.0
      %536 = vmatpush1.msra.mxu0 0.0
      %537 = vmatprep.subr.mxu0 0.0
      %538 = vmatpush1.msra.mxu0 0.0
      %539 = vmatprep.subr.mxu0 0.0
      %540 = vmatpush1.msra.mxu0 0.0
      %541 = vmatprep.subr.mxu0 0.0
      %542 = vmatpush1.msra.mxu0 0.0
      %543 = vmatprep.subr.mxu0 0.0
      %544 = vmatpush1.msra.mxu0 0.0
      %545 = vmatprep.subr.mxu0 0.0
      %546 = vmatpush1.msra.mxu0 0.0
      %547 = vmatprep.subr.mxu0 0.0
      %548 = vmatpush1.msra.mxu0 0.0
      %549 = vmatprep.subr.mxu0 0.0
      %550 = vmatpush1.msra.mxu0 0.0
      %551 = vmatprep.subr.mxu0 0.0
      %552 = vmatpush1.msra.mxu0 0.0
      %553 = vmatprep.subr.mxu0 0.0
      %554 = vmatpush1.msra.mxu0 0.0
      %555 = vmatprep.subr.mxu0 0.0
      %556 = vmatpush1.msra.mxu0 0.0
      %557 = vmatprep.subr.mxu0 0.0
      %558 = vmatpush1.msra.mxu0 0.0
      %559 = vmatprep.subr.mxu0 0.0
      %560 = vmatpush1.msra.mxu0 0.0
      %561 = vmatprep.subr.mxu0 0.0
      %562 = vmatpush1.msra.mxu0 0.0
      %563 = vmatprep.subr.mxu0 0.0
      %564 = vmatpush1.msra.mxu0 %v531
      %565 = vmatprep.subr.mxu0 0.0
      %566 = vmatpush2.msra.mxu0 0.0
      %567 = vmatprep.subr.mxu0 0.0
      %568 = vmatpush2.msra.mxu0 0.0
      %569 = vmatprep.subr.mxu0 0.0
      %570 = vmatpush2.msra.mxu0 0.0
      %571 = vmatprep.subr.mxu0 0.0
      %572 = vmatpush2.msra.mxu0 0.0
      %573 = vmatprep.subr.mxu0 0.0
      %574 = vmatpush2.msra.mxu0 0.0
      %575 = vmatprep.subr.mxu0 0.0
      %576 = vmatpush2.msra.mxu0 0.0
      %577 = vmatprep.subr.mxu0 0.0
      %578 = vmatpush2.msra.mxu0 0.0
      %579 = vmatprep.subr.mxu0 0.0
      %580 = vmatpush2.msra.mxu0 0.0
      %581 = vmatprep.subr.mxu0 0.0
      %582 = vmatpush2.msra.mxu0 0.0
      %583 = vmatprep.subr.mxu0 0.0
      %584 = vmatpush2.msra.mxu0 0.0
      %585 = vmatprep.subr.mxu0 0.0
      %586 = vmatpush2.msra.mxu0 0.0
      %587 = vmatprep.subr.mxu0 0.0
      %588 = vmatpush2.msra.mxu0 0.0
      %589 = vmatprep.subr.mxu0 0.0
      %590 = vmatpush2.msra.mxu0 0.0
      %591 = vmatprep.subr.mxu0 0.0
      %592 = vmatpush2.msra.mxu0 0.0
      %593 = vmatprep.subr.mxu0 0.0
      %594 = vmatpush2.msra.mxu0 0.0
      %595 = vmatprep.subr.mxu0 0.0
      %596 = vmatpush2.msra.mxu0 0.0
      %597 = vmatprep.mubr.f32.mxu0 0.0
      %598 = vmatmul.mubr.f32.gmra.mxu0 %v525
      %v599 = vpop.f32.mrf.mxu0
      %v600 = vadd.f32 0.0, %v599
      %v601 = vpop.f32.mrf.mxu0
      %602 = vmatprep.mubr.f32.mxu0 0.0
      %603 = vmatmul.mubr.f32.gmra.mxu0 %v528
      %v604 = vpop.f32.mrf.mxu0
      %v605 = vadd.f32 0.0, %v604
      %v606 = vpop.f32.mrf.mxu0
      %607 = vdwg.mxu0
      %v608 = vadd.f32 %v514, %v600
      %v609 = vadd.f32 %v515, %v605
      %s610 = scalar_lea.vmem %s1, 16
      %v611 = vld [vmem:[%s610] sm:$0xf]
      %v613 = vrot.slane %v519, 1
      %v614 = vrot.slane %v520, 1
      %v615 = vsel %vm252, %v613, %v614
      %v616 = vrot.slane %v521, 1
      %v617 = vsel %vm252, %v614, %v616
      %v618 = vsel %vm258, %v615, 0
      %v620 = vsel %vm258, %v617, 0
      %v623 = vsel %vm263, %v611, 0
      %625 = vmatprep.subr.mxu0 0.0
      %626 = vmatpush1.msra.mxu0 0.0
      %627 = vmatprep.subr.mxu0 0.0
      %628 = vmatpush1.msra.mxu0 0.0
      %629 = vmatprep.subr.mxu0 0.0
      %630 = vmatpush1.msra.mxu0 0.0
      %631 = vmatprep.subr.mxu0 0.0
      %632 = vmatpush1.msra.mxu0 0.0
      %633 = vmatprep.subr.mxu0 0.0
      %634 = vmatpush1.msra.mxu0 0.0
      %635 = vmatprep.subr.mxu0 0.0
      %636 = vmatpush1.msra.mxu0 0.0
      %637 = vmatprep.subr.mxu0 0.0
      %638 = vmatpush1.msra.mxu0 0.0
      %639 = vmatprep.subr.mxu0 0.0
      %640 = vmatpush1.msra.mxu0 0.0
      %641 = vmatprep.subr.mxu0 0.0
      %642 = vmatpush1.msra.mxu0 0.0
      %643 = vmatprep.subr.mxu0 0.0
      %644 = vmatpush1.msra.mxu0 0.0
      %645 = vmatprep.subr.mxu0 0.0
      %646 = vmatpush1.msra.mxu0 0.0
      %647 = vmatprep.subr.mxu0 0.0
      %648 = vmatpush1.msra.mxu0 0.0
      %649 = vmatprep.subr.mxu0 0.0
      %650 = vmatpush1.msra.mxu0 0.0
      %651 = vmatprep.subr.mxu0 0.0
      %652 = vmatpush1.msra.mxu0 0.0
      %653 = vmatprep.subr.mxu0 0.0
      %654 = vmatpush1.msra.mxu0 0.0
      %655 = vmatprep.subr.mxu0 0.0
      %656 = vmatpush1.msra.mxu0 %v623
      %657 = vmatprep.subr.mxu0 0.0
      %658 = vmatpush2.msra.mxu0 0.0
      %659 = vmatprep.subr.mxu0 0.0
      %660 = vmatpush2.msra.mxu0 0.0
      %661 = vmatprep.subr.mxu0 0.0
      %662 = vmatpush2.msra.mxu0 0.0
      %663 = vmatprep.subr.mxu0 0.0
      %664 = vmatpush2.msra.mxu0 0.0
      %665 = vmatprep.subr.mxu0 0.0
      %666 = vmatpush2.msra.mxu0 0.0
      %667 = vmatprep.subr.mxu0 0.0
      %668 = vmatpush2.msra.mxu0 0.0
      %669 = vmatprep.subr.mxu0 0.0
      %670 = vmatpush2.msra.mxu0 0.0
      %671 = vmatprep.subr.mxu0 0.0
      %672 = vmatpush2.msra.mxu0 0.0
      %673 = vmatprep.subr.mxu0 0.0
      %674 = vmatpush2.msra.mxu0 0.0
      %675 = vmatprep.subr.mxu0 0.0
      %676 = vmatpush2.msra.mxu0 0.0
      %677 = vmatprep.subr.mxu0 0.0
      %678 = vmatpush2.msra.mxu0 0.0
      %679 = vmatprep.subr.mxu0 0.0
      %680 = vmatpush2.msra.mxu0 0.0
      %681 = vmatprep.subr.mxu0 0.0
      %682 = vmatpush2.msra.mxu0 0.0
      %683 = vmatprep.subr.mxu0 0.0
      %684 = vmatpush2.msra.mxu0 0.0
      %685 = vmatprep.subr.mxu0 0.0
      %686 = vmatpush2.msra.mxu0 0.0
      %687 = vmatprep.subr.mxu0 0.0
      %688 = vmatpush2.msra.mxu0 0.0
      %689 = vmatprep.mubr.f32.mxu0 0.0
      %690 = vmatmul.mubr.f32.gmra.mxu0 %v618
      %v691 = vpop.f32.mrf.mxu0
      %v692 = vadd.f32 0.0, %v691
      %v693 = vpop.f32.mrf.mxu0
      %694 = vmatprep.mubr.f32.mxu0 0.0
      %695 = vmatmul.mubr.f32.gmra.mxu0 %v620
      %v696 = vpop.f32.mrf.mxu0
      %v697 = vadd.f32 0.0, %v696
      %v698 = vpop.f32.mrf.mxu0
      %699 = vdwg.mxu0
      %v700 = vadd.f32 %v608, %v692
      %v701 = vadd.f32 %v609, %v697
      %s702 = scalar_lea.vmem %s1, 20
      %v703 = vld [vmem:[%s702] sm:$0xf]
      %v704 = vrot.slane %v519, 2
      %v705 = vrot.slane %v520, 2
      %v706 = vsel %vm426, %v704, %v705
      %v707 = vrot.slane %v521, 2
      %v708 = vsel %vm426, %v705, %v707
      %v709 = vsel %vm258, %v706, 0
      %v711 = vsel %vm258, %v708, 0
      %v714 = vsel %vm263, %v703, 0
      %716 = vmatprep.subr.mxu0 0.0
      %717 = vmatpush1.msra.mxu0 0.0
      %718 = vmatprep.subr.mxu0 0.0
      %719 = vmatpush1.msra.mxu0 0.0
      %720 = vmatprep.subr.mxu0 0.0
      %721 = vmatpush1.msra.mxu0 0.0
      %722 = vmatprep.subr.mxu0 0.0
      %723 = vmatpush1.msra.mxu0 0.0
      %724 = vmatprep.subr.mxu0 0.0
      %725 = vmatpush1.msra.mxu0 0.0
      %726 = vmatprep.subr.mxu0 0.0
      %727 = vmatpush1.msra.mxu0 0.0
      %728 = vmatprep.subr.mxu0 0.0
      %729 = vmatpush1.msra.mxu0 0.0
      %730 = vmatprep.subr.mxu0 0.0
      %731 = vmatpush1.msra.mxu0 0.0
      %732 = vmatprep.subr.mxu0 0.0
      %733 = vmatpush1.msra.mxu0 0.0
      %734 = vmatprep.subr.mxu0 0.0
      %735 = vmatpush1.msra.mxu0 0.0
      %736 = vmatprep.subr.mxu0 0.0
      %737 = vmatpush1.msra.mxu0 0.0
      %738 = vmatprep.subr.mxu0 0.0
      %739 = vmatpush1.msra.mxu0 0.0
      %740 = vmatprep.subr.mxu0 0.0
      %741 = vmatpush1.msra.mxu0 0.0
      %742 = vmatprep.subr.mxu0 0.0
      %743 = vmatpush1.msra.mxu0 0.0
      %744 = vmatprep.subr.mxu0 0.0
      %745 = vmatpush1.msra.mxu0 0.0
      %746 = vmatprep.subr.mxu0 0.0
      %747 = vmatpush1.msra.mxu0 %v714
      %748 = vmatprep.subr.mxu0 0.0
      %749 = vmatpush2.msra.mxu0 0.0
      %750 = vmatprep.subr.mxu0 0.0
      %751 = vmatpush2.msra.mxu0 0.0
      %752 = vmatprep.subr.mxu0 0.0
      %753 = vmatpush2.msra.mxu0 0.0
      %754 = vmatprep.subr.mxu0 0.0
      %755 = vmatpush2.msra.mxu0 0.0
      %756 = vmatprep.subr.mxu0 0.0
      %757 = vmatpush2.msra.mxu0 0.0
      %758 = vmatprep.subr.mxu0 0.0
      %759 = vmatpush2.msra.mxu0 0.0
      %760 = vmatprep.subr.mxu0 0.0
      %761 = vmatpush2.msra.mxu0 0.0
      %762 = vmatprep.subr.mxu0 0.0
      %763 = vmatpush2.msra.mxu0 0.0
      %764 = vmatprep.subr.mxu0 0.0
      %765 = vmatpush2.msra.mxu0 0.0
      %766 = vmatprep.subr.mxu0 0.0
      %767 = vmatpush2.msra.mxu0 0.0
      %768 = vmatprep.subr.mxu0 0.0
      %769 = vmatpush2.msra.mxu0 0.0
      %770 = vmatprep.subr.mxu0 0.0
      %771 = vmatpush2.msra.mxu0 0.0
      %772 = vmatprep.subr.mxu0 0.0
      %773 = vmatpush2.msra.mxu0 0.0
      %774 = vmatprep.subr.mxu0 0.0
      %775 = vmatpush2.msra.mxu0 0.0
      %776 = vmatprep.subr.mxu0 0.0
      %777 = vmatpush2.msra.mxu0 0.0
      %778 = vmatprep.subr.mxu0 0.0
      %779 = vmatpush2.msra.mxu0 0.0
      %780 = vmatprep.mubr.f32.mxu0 0.0
      %781 = vmatmul.mubr.f32.gmra.mxu0 %v709
      %v782 = vpop.f32.mrf.mxu0
      %v783 = vadd.f32 0.0, %v782
      %v784 = vpop.f32.mrf.mxu0
      %785 = vmatprep.mubr.f32.mxu0 0.0
      %786 = vmatmul.mubr.f32.gmra.mxu0 %v711
      %v787 = vpop.f32.mrf.mxu0
      %v788 = vadd.f32 0.0, %v787
      %v789 = vpop.f32.mrf.mxu0
      %790 = vdwg.mxu0
      %v791 = vadd.f32 %v700, %v783
      %v792 = vadd.f32 %v701, %v788
      %s793 = sadd.s32 %s240, 2
      %s794 = smul.u32 %s793, 24
      %s795 = scalar_lea.vmem %s222, %s794
      %v796 = vld [vmem:[%s795] sm:$0xff]
      %v797 = vld [vmem:[%s795 + $0x8] sm:$0xff]
      %v798 = vld [vmem:[%s795 + $0x10] sm:$0x3]
      %s799 = scalar_lea.vmem %s1, 24
      %v800 = vld [vmem:[%s799] sm:$0xf]
      %v802 = vsel %vm258, %v796, 0
      %v805 = vsel %vm258, %v797, 0
      %v808 = vsel %vm263, %v800, 0
      %810 = vmatprep.subr.mxu0 0.0
      %811 = vmatpush1.msra.mxu0 0.0
      %812 = vmatprep.subr.mxu0 0.0
      %813 = vmatpush1.msra.mxu0 0.0
      %814 = vmatprep.subr.mxu0 0.0
      %815 = vmatpush1.msra.mxu0 0.0
      %816 = vmatprep.subr.mxu0 0.0
      %817 = vmatpush1.msra.mxu0 0.0
      %818 = vmatprep.subr.mxu0 0.0
      %819 = vmatpush1.msra.mxu0 0.0
      %820 = vmatprep.subr.mxu0 0.0
      %821 = vmatpush1.msra.mxu0 0.0
      %822 = vmatprep.subr.mxu0 0.0
      %823 = vmatpush1.msra.mxu0 0.0
      %824 = vmatprep.subr.mxu0 0.0
      %825 = vmatpush1.msra.mxu0 0.0
      %826 = vmatprep.subr.mxu0 0.0
      %827 = vmatpush1.msra.mxu0 0.0
      %828 = vmatprep.subr.mxu0 0.0
      %829 = vmatpush1.msra.mxu0 0.0
      %830 = vmatprep.subr.mxu0 0.0
      %831 = vmatpush1.msra.mxu0 0.0
      %832 = vmatprep.subr.mxu0 0.0
      %833 = vmatpush1.msra.mxu0 0.0
      %834 = vmatprep.subr.mxu0 0.0
      %835 = vmatpush1.msra.mxu0 0.0
      %836 = vmatprep.subr.mxu0 0.0
      %837 = vmatpush1.msra.mxu0 0.0
      %838 = vmatprep.subr.mxu0 0.0
      %839 = vmatpush1.msra.mxu0 0.0
      %840 = vmatprep.subr.mxu0 0.0
      %841 = vmatpush1.msra.mxu0 %v808
      %842 = vmatprep.subr.mxu0 0.0
      %843 = vmatpush2.msra.mxu0 0.0
      %844 = vmatprep.subr.mxu0 0.0
      %845 = vmatpush2.msra.mxu0 0.0
      %846 = vmatprep.subr.mxu0 0.0
      %847 = vmatpush2.msra.mxu0 0.0
      %848 = vmatprep.subr.mxu0 0.0
      %849 = vmatpush2.msra.mxu0 0.0
      %850 = vmatprep.subr.mxu0 0.0
      %851 = vmatpush2.msra.mxu0 0.0
      %852 = vmatprep.subr.mxu0 0.0
      %853 = vmatpush2.msra.mxu0 0.0
      %854 = vmatprep.subr.mxu0 0.0
      %855 = vmatpush2.msra.mxu0 0.0
      %856 = vmatprep.subr.mxu0 0.0
      %857 = vmatpush2.msra.mxu0 0.0
      %858 = vmatprep.subr.mxu0 0.0
      %859 = vmatpush2.msra.mxu0 0.0
      %860 = vmatprep.subr.mxu0 0.0
      %861 = vmatpush2.msra.mxu0 0.0
      %862 = vmatprep.subr.mxu0 0.0
      %863 = vmatpush2.msra.mxu0 0.0
      %864 = vmatprep.subr.mxu0 0.0
      %865 = vmatpush2.msra.mxu0 0.0
      %866 = vmatprep.subr.mxu0 0.0
      %867 = vmatpush2.msra.mxu0 0.0
      %868 = vmatprep.subr.mxu0 0.0
      %869 = vmatpush2.msra.mxu0 0.0
      %870 = vmatprep.subr.mxu0 0.0
      %871 = vmatpush2.msra.mxu0 0.0
      %872 = vmatprep.subr.mxu0 0.0
      %873 = vmatpush2.msra.mxu0 0.0
      %874 = vmatprep.mubr.f32.mxu0 0.0
      %875 = vmatmul.mubr.f32.gmra.mxu0 %v802
      %v876 = vpop.f32.mrf.mxu0
      %v877 = vadd.f32 0.0, %v876
      %v878 = vpop.f32.mrf.mxu0
      %879 = vmatprep.mubr.f32.mxu0 0.0
      %880 = vmatmul.mubr.f32.gmra.mxu0 %v805
      %v881 = vpop.f32.mrf.mxu0
      %v882 = vadd.f32 0.0, %v881
      %v883 = vpop.f32.mrf.mxu0
      %884 = vdwg.mxu0
      %v885 = vadd.f32 %v791, %v877
      %v886 = vadd.f32 %v792, %v882
      %s887 = scalar_lea.vmem %s1, 28
      %v888 = vld [vmem:[%s887] sm:$0xf]
      %v890 = vrot.slane %v796, 1
      %v891 = vrot.slane %v797, 1
      %v892 = vsel %vm252, %v890, %v891
      %v893 = vrot.slane %v798, 1
      %v894 = vsel %vm252, %v891, %v893
      %v895 = vsel %vm258, %v892, 0
      %v897 = vsel %vm258, %v894, 0
      %v900 = vsel %vm263, %v888, 0
      %902 = vmatprep.subr.mxu0 0.0
      %903 = vmatpush1.msra.mxu0 0.0
      %904 = vmatprep.subr.mxu0 0.0
      %905 = vmatpush1.msra.mxu0 0.0
      %906 = vmatprep.subr.mxu0 0.0
      %907 = vmatpush1.msra.mxu0 0.0
      %908 = vmatprep.subr.mxu0 0.0
      %909 = vmatpush1.msra.mxu0 0.0
      %910 = vmatprep.subr.mxu0 0.0
      %911 = vmatpush1.msra.mxu0 0.0
      %912 = vmatprep.subr.mxu0 0.0
      %913 = vmatpush1.msra.mxu0 0.0
      %914 = vmatprep.subr.mxu0 0.0
      %915 = vmatpush1.msra.mxu0 0.0
      %916 = vmatprep.subr.mxu0 0.0
      %917 = vmatpush1.msra.mxu0 0.0
      %918 = vmatprep.subr.mxu0 0.0
      %919 = vmatpush1.msra.mxu0 0.0
      %920 = vmatprep.subr.mxu0 0.0
      %921 = vmatpush1.msra.mxu0 0.0
      %922 = vmatprep.subr.mxu0 0.0
      %923 = vmatpush1.msra.mxu0 0.0
      %924 = vmatprep.subr.mxu0 0.0
      %925 = vmatpush1.msra.mxu0 0.0
      %926 = vmatprep.subr.mxu0 0.0
      %927 = vmatpush1.msra.mxu0 0.0
      %928 = vmatprep.subr.mxu0 0.0
      %929 = vmatpush1.msra.mxu0 0.0
      %930 = vmatprep.subr.mxu0 0.0
      %931 = vmatpush1.msra.mxu0 0.0
      %932 = vmatprep.subr.mxu0 0.0
      %933 = vmatpush1.msra.mxu0 %v900
      %934 = vmatprep.subr.mxu0 0.0
      %935 = vmatpush2.msra.mxu0 0.0
      %936 = vmatprep.subr.mxu0 0.0
      %937 = vmatpush2.msra.mxu0 0.0
      %938 = vmatprep.subr.mxu0 0.0
      %939 = vmatpush2.msra.mxu0 0.0
      %940 = vmatprep.subr.mxu0 0.0
      %941 = vmatpush2.msra.mxu0 0.0
      %942 = vmatprep.subr.mxu0 0.0
      %943 = vmatpush2.msra.mxu0 0.0
      %944 = vmatprep.subr.mxu0 0.0
      %945 = vmatpush2.msra.mxu0 0.0
      %946 = vmatprep.subr.mxu0 0.0
      %947 = vmatpush2.msra.mxu0 0.0
      %948 = vmatprep.subr.mxu0 0.0
      %949 = vmatpush2.msra.mxu0 0.0
      %950 = vmatprep.subr.mxu0 0.0
      %951 = vmatpush2.msra.mxu0 0.0
      %952 = vmatprep.subr.mxu0 0.0
      %953 = vmatpush2.msra.mxu0 0.0
      %954 = vmatprep.subr.mxu0 0.0
      %955 = vmatpush2.msra.mxu0 0.0
      %956 = vmatprep.subr.mxu0 0.0
      %957 = vmatpush2.msra.mxu0 0.0
      %958 = vmatprep.subr.mxu0 0.0
      %959 = vmatpush2.msra.mxu0 0.0
      %960 = vmatprep.subr.mxu0 0.0
      %961 = vmatpush2.msra.mxu0 0.0
      %962 = vmatprep.subr.mxu0 0.0
      %963 = vmatpush2.msra.mxu0 0.0
      %964 = vmatprep.subr.mxu0 0.0
      %965 = vmatpush2.msra.mxu0 0.0
      %966 = vmatprep.mubr.f32.mxu0 0.0
      %967 = vmatmul.mubr.f32.gmra.mxu0 %v895
      %v968 = vpop.f32.mrf.mxu0
      %v969 = vadd.f32 0.0, %v968
      %v970 = vpop.f32.mrf.mxu0
      %971 = vmatprep.mubr.f32.mxu0 0.0
      %972 = vmatmul.mubr.f32.gmra.mxu0 %v897
      %v973 = vpop.f32.mrf.mxu0
      %v974 = vadd.f32 0.0, %v973
      %v975 = vpop.f32.mrf.mxu0
      %976 = vdwg.mxu0
      %v977 = vadd.f32 %v885, %v969
      %v978 = vadd.f32 %v886, %v974
      %s979 = scalar_lea.vmem %s1, 32
      %v980 = vld [vmem:[%s979] sm:$0xf]
      %v981 = vrot.slane %v796, 2
      %v982 = vrot.slane %v797, 2
      %v983 = vsel %vm426, %v981, %v982
      %v984 = vrot.slane %v798, 2
      %v985 = vsel %vm426, %v982, %v984
      %v986 = vsel %vm258, %v983, 0
      %v988 = vsel %vm258, %v985, 0
      %v991 = vsel %vm263, %v980, 0
      %993 = vmatprep.subr.mxu0 0.0
      %994 = vmatpush1.msra.mxu0 0.0
      %995 = vmatprep.subr.mxu0 0.0
      %996 = vmatpush1.msra.mxu0 0.0
      %997 = vmatprep.subr.mxu0 0.0
      %998 = vmatpush1.msra.mxu0 0.0
      %999 = vmatprep.subr.mxu0 0.0
      %1000 = vmatpush1.msra.mxu0 0.0
      %1001 = vmatprep.subr.mxu0 0.0
      %1002 = vmatpush1.msra.mxu0 0.0
      %1003 = vmatprep.subr.mxu0 0.0
      %1004 = vmatpush1.msra.mxu0 0.0
      %1005 = vmatprep.subr.mxu0 0.0
      %1006 = vmatpush1.msra.mxu0 0.0
      %1007 = vmatprep.subr.mxu0 0.0
      %1008 = vmatpush1.msra.mxu0 0.0
      %1009 = vmatprep.subr.mxu0 0.0
      %1010 = vmatpush1.msra.mxu0 0.0
      %1011 = vmatprep.subr.mxu0 0.0
      %1012 = vmatpush1.msra.mxu0 0.0
      %1013 = vmatprep.subr.mxu0 0.0
      %1014 = vmatpush1.msra.mxu0 0.0
      %1015 = vmatprep.subr.mxu0 0.0
      %1016 = vmatpush1.msra.mxu0 0.0
      %1017 = vmatprep.subr.mxu0 0.0
      %1018 = vmatpush1.msra.mxu0 0.0
      %1019 = vmatprep.subr.mxu0 0.0
      %1020 = vmatpush1.msra.mxu0 0.0
      %1021 = vmatprep.subr.mxu0 0.0
      %1022 = vmatpush1.msra.mxu0 0.0
      %1023 = vmatprep.subr.mxu0 0.0
      %1024 = vmatpush1.msra.mxu0 %v991
      %1025 = vmatprep.subr.mxu0 0.0
      %1026 = vmatpush2.msra.mxu0 0.0
      %1027 = vmatprep.subr.mxu0 0.0
      %1028 = vmatpush2.msra.mxu0 0.0
      %1029 = vmatprep.subr.mxu0 0.0
      %1030 = vmatpush2.msra.mxu0 0.0
      %1031 = vmatprep.subr.mxu0 0.0
      %1032 = vmatpush2.msra.mxu0 0.0
      %1033 = vmatprep.subr.mxu0 0.0
      %1034 = vmatpush2.msra.mxu0 0.0
      %1035 = vmatprep.subr.mxu0 0.0
      %1036 = vmatpush2.msra.mxu0 0.0
      %1037 = vmatprep.subr.mxu0 0.0
      %1038 = vmatpush2.msra.mxu0 0.0
      %1039 = vmatprep.subr.mxu0 0.0
      %1040 = vmatpush2.msra.mxu0 0.0
      %1041 = vmatprep.subr.mxu0 0.0
      %1042 = vmatpush2.msra.mxu0 0.0
      %1043 = vmatprep.subr.mxu0 0.0
      %1044 = vmatpush2.msra.mxu0 0.0
      %1045 = vmatprep.subr.mxu0 0.0
      %1046 = vmatpush2.msra.mxu0 0.0
      %1047 = vmatprep.subr.mxu0 0.0
      %1048 = vmatpush2.msra.mxu0 0.0
      %1049 = vmatprep.subr.mxu0 0.0
      %1050 = vmatpush2.msra.mxu0 0.0
      %1051 = vmatprep.subr.mxu0 0.0
      %1052 = vmatpush2.msra.mxu0 0.0
      %1053 = vmatprep.subr.mxu0 0.0
      %1054 = vmatpush2.msra.mxu0 0.0
      %1055 = vmatprep.subr.mxu0 0.0
      %1056 = vmatpush2.msra.mxu0 0.0
      %1057 = vmatprep.mubr.f32.mxu0 0.0
      %1058 = vmatmul.mubr.f32.gmra.mxu0 %v986
      %v1059 = vpop.f32.mrf.mxu0
      %v1060 = vadd.f32 0.0, %v1059
      %v1061 = vpop.f32.mrf.mxu0
      %1062 = vmatprep.mubr.f32.mxu0 0.0
      %1063 = vmatmul.mubr.f32.gmra.mxu0 %v988
      %v1064 = vpop.f32.mrf.mxu0
      %v1065 = vadd.f32 0.0, %v1064
      %v1066 = vpop.f32.mrf.mxu0
      %1067 = vdwg.mxu0
      %v1068 = vadd.f32 %v977, %v1060
      %v1069 = vadd.f32 %v978, %v1065
      %1070 = vst [vmem:[%s232] sm:$0xff] %v1068
      %1071 = vst [vmem:[%s232 + $0x8] sm:$0xff] %v1069
      %v1072 = vadd.f32 %v1068, %v1069
      %v1073 = vrot.slane %v1072, 4
      %v1074 = vadd.f32 %v1072, %v1073
      %v1075 = vrot.slane %v1074, 2
      %v1076 = vadd.f32 %v1074, %v1075
      %v1077 = vrot.slane %v1076, 1
      %v1078 = vadd.f32 %v1076, %v1077
      %v1079 = vadd.f32 %v1078, 0.0
      %v1080 = vmul.f32 %v1068, %v1068
      %v1081 = vmul.f32 %v1069, %v1069
      %v1082 = vadd.f32 %v1080, %v1081
      %v1083 = vrot.slane %v1082, 4
      %v1084 = vadd.f32 %v1082, %v1083
      %v1085 = vrot.slane %v1084, 2
      %v1086 = vadd.f32 %v1084, %v1085
      %v1087 = vrot.slane %v1086, 1
      %v1088 = vadd.f32 %v1086, %v1087
      %v1089 = vadd.f32 %v1088, 0.0
      %v1090 = vld [vmem:[%s518] sm:$0xff]
      %v1091 = vld [vmem:[%s518 + $0x8] sm:$0xff]
      %v1092 = vld [vmem:[%s518 + $0x10] sm:$0x3]
      %v1093 = vld [vmem:[%s1] sm:$0xf]
      %v1094 = vld [vmem:[%s247] sm:$0xf]
      %v1098 = vrot.slane %v1090, 1
      %v1099 = vrot.slane %v1091, 1
      %v1100 = vsel %vm252, %v1098, %v1099
      %v1101 = vrot.slane %v1092, 1
      %v1102 = vsel %vm252, %v1099, %v1101
      %v1103 = vsel %vm258, %v1100, 0
      %v1105 = vsel %vm258, %v1102, 0
      %v1108 = vsel %vm263, %v1094, 0
      %1110 = vmatprep.subr.mxu0 0.0
      %1111 = vmatpush1.msra.mxu0 0.0
      %1112 = vmatprep.subr.mxu0 0.0
      %1113 = vmatpush1.msra.mxu0 0.0
      %1114 = vmatprep.subr.mxu0 0.0
      %1115 = vmatpush1.msra.mxu0 0.0
      %1116 = vmatprep.subr.mxu0 0.0
      %1117 = vmatpush1.msra.mxu0 0.0
      %1118 = vmatprep.subr.mxu0 0.0
      %1119 = vmatpush1.msra.mxu0 0.0
      %1120 = vmatprep.subr.mxu0 0.0
      %1121 = vmatpush1.msra.mxu0 0.0
      %1122 = vmatprep.subr.mxu0 0.0
      %1123 = vmatpush1.msra.mxu0 0.0
      %1124 = vmatprep.subr.mxu0 0.0
      %1125 = vmatpush1.msra.mxu0 0.0
      %1126 = vmatprep.subr.mxu0 0.0
      %1127 = vmatpush1.msra.mxu0 0.0
      %1128 = vmatprep.subr.mxu0 0.0
      %1129 = vmatpush1.msra.mxu0 0.0
      %1130 = vmatprep.subr.mxu0 0.0
      %1131 = vmatpush1.msra.mxu0 0.0
      %1132 = vmatprep.subr.mxu0 0.0
      %1133 = vmatpush1.msra.mxu0 0.0
      %1134 = vmatprep.subr.mxu0 0.0
      %1135 = vmatpush1.msra.mxu0 0.0
      %1136 = vmatprep.subr.mxu0 0.0
      %1137 = vmatpush1.msra.mxu0 0.0
      %1138 = vmatprep.subr.mxu0 0.0
      %1139 = vmatpush1.msra.mxu0 0.0
      %1140 = vmatprep.subr.mxu0 0.0
      %1141 = vmatpush1.msra.mxu0 %v1108
      %1142 = vmatprep.subr.mxu0 0.0
      %1143 = vmatpush2.msra.mxu0 0.0
      %1144 = vmatprep.subr.mxu0 0.0
      %1145 = vmatpush2.msra.mxu0 0.0
      %1146 = vmatprep.subr.mxu0 0.0
      %1147 = vmatpush2.msra.mxu0 0.0
      %1148 = vmatprep.subr.mxu0 0.0
      %1149 = vmatpush2.msra.mxu0 0.0
      %1150 = vmatprep.subr.mxu0 0.0
      %1151 = vmatpush2.msra.mxu0 0.0
      %1152 = vmatprep.subr.mxu0 0.0
      %1153 = vmatpush2.msra.mxu0 0.0
      %1154 = vmatprep.subr.mxu0 0.0
      %1155 = vmatpush2.msra.mxu0 0.0
      %1156 = vmatprep.subr.mxu0 0.0
      %1157 = vmatpush2.msra.mxu0 0.0
      %1158 = vmatprep.subr.mxu0 0.0
      %1159 = vmatpush2.msra.mxu0 0.0
      %1160 = vmatprep.subr.mxu0 0.0
      %1161 = vmatpush2.msra.mxu0 0.0
      %1162 = vmatprep.subr.mxu0 0.0
      %1163 = vmatpush2.msra.mxu0 0.0
      %1164 = vmatprep.subr.mxu0 0.0
      %1165 = vmatpush2.msra.mxu0 0.0
      %1166 = vmatprep.subr.mxu0 0.0
      %1167 = vmatpush2.msra.mxu0 0.0
      %1168 = vmatprep.subr.mxu0 0.0
      %1169 = vmatpush2.msra.mxu0 0.0
      %1170 = vmatprep.subr.mxu0 0.0
      %1171 = vmatpush2.msra.mxu0 0.0
      %1172 = vmatprep.subr.mxu0 0.0
      %1173 = vmatpush2.msra.mxu0 0.0
      %1174 = vmatprep.mubr.f32.mxu0 0.0
      %1175 = vmatmul.mubr.f32.gmra.mxu0 %v1103
      %v1176 = vpop.f32.mrf.mxu0
      %v1177 = vadd.f32 0.0, %v1176
      %v1178 = vpop.f32.mrf.mxu0
      %1179 = vmatprep.mubr.f32.mxu0 0.0
      %1180 = vmatmul.mubr.f32.gmra.mxu0 %v1105
      %v1181 = vpop.f32.mrf.mxu0
      %v1182 = vadd.f32 0.0, %v1181
      %v1183 = vpop.f32.mrf.mxu0
      %1184 = vdwg.mxu0
      %v1185 = vsel %vm258, %v1090, 0
      %v1187 = vsel %vm258, %v1091, 0
      %v1190 = vsel %vm263, %v1093, 0
      %1192 = vmatprep.subr.mxu0 0.0
      %1193 = vmatpush1.msra.mxu0 0.0
      %1194 = vmatprep.subr.mxu0 0.0
      %1195 = vmatpush1.msra.mxu0 0.0
      %1196 = vmatprep.subr.mxu0 0.0
      %1197 = vmatpush1.msra.mxu0 0.0
      %1198 = vmatprep.subr.mxu0 0.0
      %1199 = vmatpush1.msra.mxu0 0.0
      %1200 = vmatprep.subr.mxu0 0.0
      %1201 = vmatpush1.msra.mxu0 0.0
      %1202 = vmatprep.subr.mxu0 0.0
      %1203 = vmatpush1.msra.mxu0 0.0
      %1204 = vmatprep.subr.mxu0 0.0
      %1205 = vmatpush1.msra.mxu0 0.0
      %1206 = vmatprep.subr.mxu0 0.0
      %1207 = vmatpush1.msra.mxu0 0.0
      %1208 = vmatprep.subr.mxu0 0.0
      %1209 = vmatpush1.msra.mxu0 0.0
      %1210 = vmatprep.subr.mxu0 0.0
      %1211 = vmatpush1.msra.mxu0 0.0
      %1212 = vmatprep.subr.mxu0 0.0
      %1213 = vmatpush1.msra.mxu0 0.0
      %1214 = vmatprep.subr.mxu0 0.0
      %1215 = vmatpush1.msra.mxu0 0.0
      %1216 = vmatprep.subr.mxu0 0.0
      %1217 = vmatpush1.msra.mxu0 0.0
      %1218 = vmatprep.subr.mxu0 0.0
      %1219 = vmatpush1.msra.mxu0 0.0
      %1220 = vmatprep.subr.mxu0 0.0
      %1221 = vmatpush1.msra.mxu0 0.0
      %1222 = vmatprep.subr.mxu0 0.0
      %1223 = vmatpush1.msra.mxu0 %v1190
      %1224 = vmatprep.subr.mxu0 0.0
      %1225 = vmatpush2.msra.mxu0 0.0
      %1226 = vmatprep.subr.mxu0 0.0
      %1227 = vmatpush2.msra.mxu0 0.0
      %1228 = vmatprep.subr.mxu0 0.0
      %1229 = vmatpush2.msra.mxu0 0.0
      %1230 = vmatprep.subr.mxu0 0.0
      %1231 = vmatpush2.msra.mxu0 0.0
      %1232 = vmatprep.subr.mxu0 0.0
      %1233 = vmatpush2.msra.mxu0 0.0
      %1234 = vmatprep.subr.mxu0 0.0
      %1235 = vmatpush2.msra.mxu0 0.0
      %1236 = vmatprep.subr.mxu0 0.0
      %1237 = vmatpush2.msra.mxu0 0.0
      %1238 = vmatprep.subr.mxu0 0.0
      %1239 = vmatpush2.msra.mxu0 0.0
      %1240 = vmatprep.subr.mxu0 0.0
      %1241 = vmatpush2.msra.mxu0 0.0
      %1242 = vmatprep.subr.mxu0 0.0
      %1243 = vmatpush2.msra.mxu0 0.0
      %1244 = vmatprep.subr.mxu0 0.0
      %1245 = vmatpush2.msra.mxu0 0.0
      %1246 = vmatprep.subr.mxu0 0.0
      %1247 = vmatpush2.msra.mxu0 0.0
      %1248 = vmatprep.subr.mxu0 0.0
      %1249 = vmatpush2.msra.mxu0 0.0
      %1250 = vmatprep.subr.mxu0 0.0
      %1251 = vmatpush2.msra.mxu0 0.0
      %1252 = vmatprep.subr.mxu0 0.0
      %1253 = vmatpush2.msra.mxu0 0.0
      %1254 = vmatprep.subr.mxu0 0.0
      %1255 = vmatpush2.msra.mxu0 0.0
      %1256 = vmatprep.mubr.f32.mxu0 0.0
      %1257 = vmatmul.mubr.f32.gmra.mxu0 %v1185
      %v1258 = vpop.f32.mrf.mxu0
      %v1259 = vadd.f32 %v1177, %v1258
      %v1260 = vpop.f32.mrf.mxu0
      %1261 = vmatprep.mubr.f32.mxu0 0.0
      %1262 = vmatmul.mubr.f32.gmra.mxu0 %v1187
      %v1263 = vpop.f32.mrf.mxu0
      %v1264 = vadd.f32 %v1182, %v1263
      %v1265 = vpop.f32.mrf.mxu0
      %1266 = vdwg.mxu0
      %v1267 = vld [vmem:[%s424] sm:$0xf]
      %v1268 = vrot.slane %v1090, 2
      %v1269 = vrot.slane %v1091, 2
      %v1270 = vsel %vm426, %v1268, %v1269
      %v1271 = vrot.slane %v1092, 2
      %v1272 = vsel %vm426, %v1269, %v1271
      %v1273 = vsel %vm258, %v1270, 0
      %v1275 = vsel %vm258, %v1272, 0
      %v1278 = vsel %vm263, %v1267, 0
      %1280 = vmatprep.subr.mxu0 0.0
      %1281 = vmatpush1.msra.mxu0 0.0
      %1282 = vmatprep.subr.mxu0 0.0
      %1283 = vmatpush1.msra.mxu0 0.0
      %1284 = vmatprep.subr.mxu0 0.0
      %1285 = vmatpush1.msra.mxu0 0.0
      %1286 = vmatprep.subr.mxu0 0.0
      %1287 = vmatpush1.msra.mxu0 0.0
      %1288 = vmatprep.subr.mxu0 0.0
      %1289 = vmatpush1.msra.mxu0 0.0
      %1290 = vmatprep.subr.mxu0 0.0
      %1291 = vmatpush1.msra.mxu0 0.0
      %1292 = vmatprep.subr.mxu0 0.0
      %1293 = vmatpush1.msra.mxu0 0.0
      %1294 = vmatprep.subr.mxu0 0.0
      %1295 = vmatpush1.msra.mxu0 0.0
      %1296 = vmatprep.subr.mxu0 0.0
      %1297 = vmatpush1.msra.mxu0 0.0
      %1298 = vmatprep.subr.mxu0 0.0
      %1299 = vmatpush1.msra.mxu0 0.0
      %1300 = vmatprep.subr.mxu0 0.0
      %1301 = vmatpush1.msra.mxu0 0.0
      %1302 = vmatprep.subr.mxu0 0.0
      %1303 = vmatpush1.msra.mxu0 0.0
      %1304 = vmatprep.subr.mxu0 0.0
      %1305 = vmatpush1.msra.mxu0 0.0
      %1306 = vmatprep.subr.mxu0 0.0
      %1307 = vmatpush1.msra.mxu0 0.0
      %1308 = vmatprep.subr.mxu0 0.0
      %1309 = vmatpush1.msra.mxu0 0.0
      %1310 = vmatprep.subr.mxu0 0.0
      %1311 = vmatpush1.msra.mxu0 %v1278
      %1312 = vmatprep.subr.mxu0 0.0
      %1313 = vmatpush2.msra.mxu0 0.0
      %1314 = vmatprep.subr.mxu0 0.0
      %1315 = vmatpush2.msra.mxu0 0.0
      %1316 = vmatprep.subr.mxu0 0.0
      %1317 = vmatpush2.msra.mxu0 0.0
      %1318 = vmatprep.subr.mxu0 0.0
      %1319 = vmatpush2.msra.mxu0 0.0
      %1320 = vmatprep.subr.mxu0 0.0
      %1321 = vmatpush2.msra.mxu0 0.0
      %1322 = vmatprep.subr.mxu0 0.0
      %1323 = vmatpush2.msra.mxu0 0.0
      %1324 = vmatprep.subr.mxu0 0.0
      %1325 = vmatpush2.msra.mxu0 0.0
      %1326 = vmatprep.subr.mxu0 0.0
      %1327 = vmatpush2.msra.mxu0 0.0
      %1328 = vmatprep.subr.mxu0 0.0
      %1329 = vmatpush2.msra.mxu0 0.0
      %1330 = vmatprep.subr.mxu0 0.0
      %1331 = vmatpush2.msra.mxu0 0.0
      %1332 = vmatprep.subr.mxu0 0.0
      %1333 = vmatpush2.msra.mxu0 0.0
      %1334 = vmatprep.subr.mxu0 0.0
      %1335 = vmatpush2.msra.mxu0 0.0
      %1336 = vmatprep.subr.mxu0 0.0
      %1337 = vmatpush2.msra.mxu0 0.0
      %1338 = vmatprep.subr.mxu0 0.0
      %1339 = vmatpush2.msra.mxu0 0.0
      %1340 = vmatprep.subr.mxu0 0.0
      %1341 = vmatpush2.msra.mxu0 0.0
      %1342 = vmatprep.subr.mxu0 0.0
      %1343 = vmatpush2.msra.mxu0 0.0
      %1344 = vmatprep.mubr.f32.mxu0 0.0
      %1345 = vmatmul.mubr.f32.gmra.mxu0 %v1273
      %v1346 = vpop.f32.mrf.mxu0
      %v1347 = vadd.f32 0.0, %v1346
      %v1348 = vpop.f32.mrf.mxu0
      %1349 = vmatprep.mubr.f32.mxu0 0.0
      %1350 = vmatmul.mubr.f32.gmra.mxu0 %v1275
      %v1351 = vpop.f32.mrf.mxu0
      %v1352 = vadd.f32 0.0, %v1351
      %v1353 = vpop.f32.mrf.mxu0
      %1354 = vdwg.mxu0
      %v1355 = vadd.f32 %v1259, %v1347
      %v1356 = vadd.f32 %v1264, %v1352
      %v1357 = vld [vmem:[%s795] sm:$0xff]
      %v1358 = vld [vmem:[%s795 + $0x8] sm:$0xff]
      %v1359 = vld [vmem:[%s795 + $0x10] sm:$0x3]
      %v1360 = vld [vmem:[%s522] sm:$0xf]
      %v1362 = vsel %vm258, %v1357, 0
      %v1365 = vsel %vm258, %v1358, 0
      %v1368 = vsel %vm263, %v1360, 0
      %1370 = vmatprep.subr.mxu0 0.0
      %1371 = vmatpush1.msra.mxu0 0.0
      %1372 = vmatprep.subr.mxu0 0.0
      %1373 = vmatpush1.msra.mxu0 0.0
      %1374 = vmatprep.subr.mxu0 0.0
      %1375 = vmatpush1.msra.mxu0 0.0
      %1376 = vmatprep.subr.mxu0 0.0
      %1377 = vmatpush1.msra.mxu0 0.0
      %1378 = vmatprep.subr.mxu0 0.0
      %1379 = vmatpush1.msra.mxu0 0.0
      %1380 = vmatprep.subr.mxu0 0.0
      %1381 = vmatpush1.msra.mxu0 0.0
      %1382 = vmatprep.subr.mxu0 0.0
      %1383 = vmatpush1.msra.mxu0 0.0
      %1384 = vmatprep.subr.mxu0 0.0
      %1385 = vmatpush1.msra.mxu0 0.0
      %1386 = vmatprep.subr.mxu0 0.0
      %1387 = vmatpush1.msra.mxu0 0.0
      %1388 = vmatprep.subr.mxu0 0.0
      %1389 = vmatpush1.msra.mxu0 0.0
      %1390 = vmatprep.subr.mxu0 0.0
      %1391 = vmatpush1.msra.mxu0 0.0
      %1392 = vmatprep.subr.mxu0 0.0
      %1393 = vmatpush1.msra.mxu0 0.0
      %1394 = vmatprep.subr.mxu0 0.0
      %1395 = vmatpush1.msra.mxu0 0.0
      %1396 = vmatprep.subr.mxu0 0.0
      %1397 = vmatpush1.msra.mxu0 0.0
      %1398 = vmatprep.subr.mxu0 0.0
      %1399 = vmatpush1.msra.mxu0 0.0
      %1400 = vmatprep.subr.mxu0 0.0
      %1401 = vmatpush1.msra.mxu0 %v1368
      %1402 = vmatprep.subr.mxu0 0.0
      %1403 = vmatpush2.msra.mxu0 0.0
      %1404 = vmatprep.subr.mxu0 0.0
      %1405 = vmatpush2.msra.mxu0 0.0
      %1406 = vmatprep.subr.mxu0 0.0
      %1407 = vmatpush2.msra.mxu0 0.0
      %1408 = vmatprep.subr.mxu0 0.0
      %1409 = vmatpush2.msra.mxu0 0.0
      %1410 = vmatprep.subr.mxu0 0.0
      %1411 = vmatpush2.msra.mxu0 0.0
      %1412 = vmatprep.subr.mxu0 0.0
      %1413 = vmatpush2.msra.mxu0 0.0
      %1414 = vmatprep.subr.mxu0 0.0
      %1415 = vmatpush2.msra.mxu0 0.0
      %1416 = vmatprep.subr.mxu0 0.0
      %1417 = vmatpush2.msra.mxu0 0.0
      %1418 = vmatprep.subr.mxu0 0.0
      %1419 = vmatpush2.msra.mxu0 0.0
      %1420 = vmatprep.subr.mxu0 0.0
      %1421 = vmatpush2.msra.mxu0 0.0
      %1422 = vmatprep.subr.mxu0 0.0
      %1423 = vmatpush2.msra.mxu0 0.0
      %1424 = vmatprep.subr.mxu0 0.0
      %1425 = vmatpush2.msra.mxu0 0.0
      %1426 = vmatprep.subr.mxu0 0.0
      %1427 = vmatpush2.msra.mxu0 0.0
      %1428 = vmatprep.subr.mxu0 0.0
      %1429 = vmatpush2.msra.mxu0 0.0
      %1430 = vmatprep.subr.mxu0 0.0
      %1431 = vmatpush2.msra.mxu0 0.0
      %1432 = vmatprep.subr.mxu0 0.0
      %1433 = vmatpush2.msra.mxu0 0.0
      %1434 = vmatprep.mubr.f32.mxu0 0.0
      %1435 = vmatmul.mubr.f32.gmra.mxu0 %v1362
      %v1436 = vpop.f32.mrf.mxu0
      %v1437 = vadd.f32 0.0, %v1436
      %v1438 = vpop.f32.mrf.mxu0
      %1439 = vmatprep.mubr.f32.mxu0 0.0
      %1440 = vmatmul.mubr.f32.gmra.mxu0 %v1365
      %v1441 = vpop.f32.mrf.mxu0
      %v1442 = vadd.f32 0.0, %v1441
      %v1443 = vpop.f32.mrf.mxu0
      %1444 = vdwg.mxu0
      %v1445 = vadd.f32 %v1355, %v1437
      %v1446 = vadd.f32 %v1356, %v1442
      %v1447 = vld [vmem:[%s610] sm:$0xf]
      %v1449 = vrot.slane %v1357, 1
      %v1450 = vrot.slane %v1358, 1
      %v1451 = vsel %vm252, %v1449, %v1450
      %v1452 = vrot.slane %v1359, 1
      %v1453 = vsel %vm252, %v1450, %v1452
      %v1454 = vsel %vm258, %v1451, 0
      %v1456 = vsel %vm258, %v1453, 0
      %v1459 = vsel %vm263, %v1447, 0
      %1461 = vmatprep.subr.mxu0 0.0
      %1462 = vmatpush1.msra.mxu0 0.0
      %1463 = vmatprep.subr.mxu0 0.0
      %1464 = vmatpush1.msra.mxu0 0.0
      %1465 = vmatprep.subr.mxu0 0.0
      %1466 = vmatpush1.msra.mxu0 0.0
      %1467 = vmatprep.subr.mxu0 0.0
      %1468 = vmatpush1.msra.mxu0 0.0
      %1469 = vmatprep.subr.mxu0 0.0
      %1470 = vmatpush1.msra.mxu0 0.0
      %1471 = vmatprep.subr.mxu0 0.0
      %1472 = vmatpush1.msra.mxu0 0.0
      %1473 = vmatprep.subr.mxu0 0.0
      %1474 = vmatpush1.msra.mxu0 0.0
      %1475 = vmatprep.subr.mxu0 0.0
      %1476 = vmatpush1.msra.mxu0 0.0
      %1477 = vmatprep.subr.mxu0 0.0
      %1478 = vmatpush1.msra.mxu0 0.0
      %1479 = vmatprep.subr.mxu0 0.0
      %1480 = vmatpush1.msra.mxu0 0.0
      %1481 = vmatprep.subr.mxu0 0.0
      %1482 = vmatpush1.msra.mxu0 0.0
      %1483 = vmatprep.subr.mxu0 0.0
      %1484 = vmatpush1.msra.mxu0 0.0
      %1485 = vmatprep.subr.mxu0 0.0
      %1486 = vmatpush1.msra.mxu0 0.0
      %1487 = vmatprep.subr.mxu0 0.0
      %1488 = vmatpush1.msra.mxu0 0.0
      %1489 = vmatprep.subr.mxu0 0.0
      %1490 = vmatpush1.msra.mxu0 0.0
      %1491 = vmatprep.subr.mxu0 0.0
      %1492 = vmatpush1.msra.mxu0 %v1459
      %1493 = vmatprep.subr.mxu0 0.0
      %1494 = vmatpush2.msra.mxu0 0.0
      %1495 = vmatprep.subr.mxu0 0.0
      %1496 = vmatpush2.msra.mxu0 0.0
      %1497 = vmatprep.subr.mxu0 0.0
      %1498 = vmatpush2.msra.mxu0 0.0
      %1499 = vmatprep.subr.mxu0 0.0
      %1500 = vmatpush2.msra.mxu0 0.0
      %1501 = vmatprep.subr.mxu0 0.0
      %1502 = vmatpush2.msra.mxu0 0.0
      %1503 = vmatprep.subr.mxu0 0.0
      %1504 = vmatpush2.msra.mxu0 0.0
      %1505 = vmatprep.subr.mxu0 0.0
      %1506 = vmatpush2.msra.mxu0 0.0
      %1507 = vmatprep.subr.mxu0 0.0
      %1508 = vmatpush2.msra.mxu0 0.0
      %1509 = vmatprep.subr.mxu0 0.0
      %1510 = vmatpush2.msra.mxu0 0.0
      %1511 = vmatprep.subr.mxu0 0.0
      %1512 = vmatpush2.msra.mxu0 0.0
      %1513 = vmatprep.subr.mxu0 0.0
      %1514 = vmatpush2.msra.mxu0 0.0
      %1515 = vmatprep.subr.mxu0 0.0
      %1516 = vmatpush2.msra.mxu0 0.0
      %1517 = vmatprep.subr.mxu0 0.0
      %1518 = vmatpush2.msra.mxu0 0.0
      %1519 = vmatprep.subr.mxu0 0.0
      %1520 = vmatpush2.msra.mxu0 0.0
      %1521 = vmatprep.subr.mxu0 0.0
      %1522 = vmatpush2.msra.mxu0 0.0
      %1523 = vmatprep.subr.mxu0 0.0
      %1524 = vmatpush2.msra.mxu0 0.0
      %1525 = vmatprep.mubr.f32.mxu0 0.0
      %1526 = vmatmul.mubr.f32.gmra.mxu0 %v1454
      %v1527 = vpop.f32.mrf.mxu0
      %v1528 = vadd.f32 0.0, %v1527
      %v1529 = vpop.f32.mrf.mxu0
      %1530 = vmatprep.mubr.f32.mxu0 0.0
      %1531 = vmatmul.mubr.f32.gmra.mxu0 %v1456
      %v1532 = vpop.f32.mrf.mxu0
      %v1533 = vadd.f32 0.0, %v1532
      %v1534 = vpop.f32.mrf.mxu0
      %1535 = vdwg.mxu0
      %v1536 = vadd.f32 %v1445, %v1528
      %v1537 = vadd.f32 %v1446, %v1533
      %v1538 = vld [vmem:[%s702] sm:$0xf]
      %v1539 = vrot.slane %v1357, 2
      %v1540 = vrot.slane %v1358, 2
      %v1541 = vsel %vm426, %v1539, %v1540
      %v1542 = vrot.slane %v1359, 2
      %v1543 = vsel %vm426, %v1540, %v1542
      %v1544 = vsel %vm258, %v1541, 0
      %v1546 = vsel %vm258, %v1543, 0
      %v1549 = vsel %vm263, %v1538, 0
      %1551 = vmatprep.subr.mxu0 0.0
      %1552 = vmatpush1.msra.mxu0 0.0
      %1553 = vmatprep.subr.mxu0 0.0
      %1554 = vmatpush1.msra.mxu0 0.0
      %1555 = vmatprep.subr.mxu0 0.0
      %1556 = vmatpush1.msra.mxu0 0.0
      %1557 = vmatprep.subr.mxu0 0.0
      %1558 = vmatpush1.msra.mxu0 0.0
      %1559 = vmatprep.subr.mxu0 0.0
      %1560 = vmatpush1.msra.mxu0 0.0
      %1561 = vmatprep.subr.mxu0 0.0
      %1562 = vmatpush1.msra.mxu0 0.0
      %1563 = vmatprep.subr.mxu0 0.0
      %1564 = vmatpush1.msra.mxu0 0.0
      %1565 = vmatprep.subr.mxu0 0.0
      %1566 = vmatpush1.msra.mxu0 0.0
      %1567 = vmatprep.subr.mxu0 0.0
      %1568 = vmatpush1.msra.mxu0 0.0
      %1569 = vmatprep.subr.mxu0 0.0
      %1570 = vmatpush1.msra.mxu0 0.0
      %1571 = vmatprep.subr.mxu0 0.0
      %1572 = vmatpush1.msra.mxu0 0.0
      %1573 = vmatprep.subr.mxu0 0.0
      %1574 = vmatpush1.msra.mxu0 0.0
      %1575 = vmatprep.subr.mxu0 0.0
      %1576 = vmatpush1.msra.mxu0 0.0
      %1577 = vmatprep.subr.mxu0 0.0
      %1578 = vmatpush1.msra.mxu0 0.0
      %1579 = vmatprep.subr.mxu0 0.0
      %1580 = vmatpush1.msra.mxu0 0.0
      %1581 = vmatprep.subr.mxu0 0.0
      %1582 = vmatpush1.msra.mxu0 %v1549
      %1583 = vmatprep.subr.mxu0 0.0
      %1584 = vmatpush2.msra.mxu0 0.0
      %1585 = vmatprep.subr.mxu0 0.0
      %1586 = vmatpush2.msra.mxu0 0.0
      %1587 = vmatprep.subr.mxu0 0.0
      %1588 = vmatpush2.msra.mxu0 0.0
      %1589 = vmatprep.subr.mxu0 0.0
      %1590 = vmatpush2.msra.mxu0 0.0
      %1591 = vmatprep.subr.mxu0 0.0
      %1592 = vmatpush2.msra.mxu0 0.0
      %1593 = vmatprep.subr.mxu0 0.0
      %1594 = vmatpush2.msra.mxu0 0.0
      %1595 = vmatprep.subr.mxu0 0.0
      %1596 = vmatpush2.msra.mxu0 0.0
      %1597 = vmatprep.subr.mxu0 0.0
      %1598 = vmatpush2.msra.mxu0 0.0
      %1599 = vmatprep.subr.mxu0 0.0
      %1600 = vmatpush2.msra.mxu0 0.0
      %1601 = vmatprep.subr.mxu0 0.0
      %1602 = vmatpush2.msra.mxu0 0.0
      %1603 = vmatprep.subr.mxu0 0.0
      %1604 = vmatpush2.msra.mxu0 0.0
      %1605 = vmatprep.subr.mxu0 0.0
      %1606 = vmatpush2.msra.mxu0 0.0
      %1607 = vmatprep.subr.mxu0 0.0
      %1608 = vmatpush2.msra.mxu0 0.0
      %1609 = vmatprep.subr.mxu0 0.0
      %1610 = vmatpush2.msra.mxu0 0.0
      %1611 = vmatprep.subr.mxu0 0.0
      %1612 = vmatpush2.msra.mxu0 0.0
      %1613 = vmatprep.subr.mxu0 0.0
      %1614 = vmatpush2.msra.mxu0 0.0
      %1615 = vmatprep.mubr.f32.mxu0 0.0
      %1616 = vmatmul.mubr.f32.gmra.mxu0 %v1544
      %v1617 = vpop.f32.mrf.mxu0
      %v1618 = vadd.f32 0.0, %v1617
      %v1619 = vpop.f32.mrf.mxu0
      %1620 = vmatprep.mubr.f32.mxu0 0.0
      %1621 = vmatmul.mubr.f32.gmra.mxu0 %v1546
      %v1622 = vpop.f32.mrf.mxu0
      %v1623 = vadd.f32 0.0, %v1622
      %v1624 = vpop.f32.mrf.mxu0
      %1625 = vdwg.mxu0
      %v1626 = vadd.f32 %v1536, %v1618
      %v1627 = vadd.f32 %v1537, %v1623
      %s1628 = sadd.s32 %s240, 3
      %s1629 = smul.u32 %s1628, 24
      %s1630 = scalar_lea.vmem %s222, %s1629
      %v1631 = vld [vmem:[%s1630] sm:$0xff]
      %v1632 = vld [vmem:[%s1630 + $0x8] sm:$0xff]
      %v1633 = vld [vmem:[%s1630 + $0x10] sm:$0x3]
      %v1634 = vld [vmem:[%s799] sm:$0xf]
      %v1636 = vsel %vm258, %v1631, 0
      %v1639 = vsel %vm258, %v1632, 0
      %v1642 = vsel %vm263, %v1634, 0
      %1644 = vmatprep.subr.mxu0 0.0
      %1645 = vmatpush1.msra.mxu0 0.0
      %1646 = vmatprep.subr.mxu0 0.0
      %1647 = vmatpush1.msra.mxu0 0.0
      %1648 = vmatprep.subr.mxu0 0.0
      %1649 = vmatpush1.msra.mxu0 0.0
      %1650 = vmatprep.subr.mxu0 0.0
      %1651 = vmatpush1.msra.mxu0 0.0
      %1652 = vmatprep.subr.mxu0 0.0
      %1653 = vmatpush1.msra.mxu0 0.0
      %1654 = vmatprep.subr.mxu0 0.0
      %1655 = vmatpush1.msra.mxu0 0.0
      %1656 = vmatprep.subr.mxu0 0.0
      %1657 = vmatpush1.msra.mxu0 0.0
      %1658 = vmatprep.subr.mxu0 0.0
      %1659 = vmatpush1.msra.mxu0 0.0
      %1660 = vmatprep.subr.mxu0 0.0
      %1661 = vmatpush1.msra.mxu0 0.0
      %1662 = vmatprep.subr.mxu0 0.0
      %1663 = vmatpush1.msra.mxu0 0.0
      %1664 = vmatprep.subr.mxu0 0.0
      %1665 = vmatpush1.msra.mxu0 0.0
      %1666 = vmatprep.subr.mxu0 0.0
      %1667 = vmatpush1.msra.mxu0 0.0
      %1668 = vmatprep.subr.mxu0 0.0
      %1669 = vmatpush1.msra.mxu0 0.0
      %1670 = vmatprep.subr.mxu0 0.0
      %1671 = vmatpush1.msra.mxu0 0.0
      %1672 = vmatprep.subr.mxu0 0.0
      %1673 = vmatpush1.msra.mxu0 0.0
      %1674 = vmatprep.subr.mxu0 0.0
      %1675 = vmatpush1.msra.mxu0 %v1642
      %1676 = vmatprep.subr.mxu0 0.0
      %1677 = vmatpush2.msra.mxu0 0.0
      %1678 = vmatprep.subr.mxu0 0.0
      %1679 = vmatpush2.msra.mxu0 0.0
      %1680 = vmatprep.subr.mxu0 0.0
      %1681 = vmatpush2.msra.mxu0 0.0
      %1682 = vmatprep.subr.mxu0 0.0
      %1683 = vmatpush2.msra.mxu0 0.0
      %1684 = vmatprep.subr.mxu0 0.0
      %1685 = vmatpush2.msra.mxu0 0.0
      %1686 = vmatprep.subr.mxu0 0.0
      %1687 = vmatpush2.msra.mxu0 0.0
      %1688 = vmatprep.subr.mxu0 0.0
      %1689 = vmatpush2.msra.mxu0 0.0
      %1690 = vmatprep.subr.mxu0 0.0
      %1691 = vmatpush2.msra.mxu0 0.0
      %1692 = vmatprep.subr.mxu0 0.0
      %1693 = vmatpush2.msra.mxu0 0.0
      %1694 = vmatprep.subr.mxu0 0.0
      %1695 = vmatpush2.msra.mxu0 0.0
      %1696 = vmatprep.subr.mxu0 0.0
      %1697 = vmatpush2.msra.mxu0 0.0
      %1698 = vmatprep.subr.mxu0 0.0
      %1699 = vmatpush2.msra.mxu0 0.0
      %1700 = vmatprep.subr.mxu0 0.0
      %1701 = vmatpush2.msra.mxu0 0.0
      %1702 = vmatprep.subr.mxu0 0.0
      %1703 = vmatpush2.msra.mxu0 0.0
      %1704 = vmatprep.subr.mxu0 0.0
      %1705 = vmatpush2.msra.mxu0 0.0
      %1706 = vmatprep.subr.mxu0 0.0
      %1707 = vmatpush2.msra.mxu0 0.0
      %1708 = vmatprep.mubr.f32.mxu0 0.0
      %1709 = vmatmul.mubr.f32.gmra.mxu0 %v1636
      %v1710 = vpop.f32.mrf.mxu0
      %v1711 = vadd.f32 0.0, %v1710
      %v1712 = vpop.f32.mrf.mxu0
      %1713 = vmatprep.mubr.f32.mxu0 0.0
      %1714 = vmatmul.mubr.f32.gmra.mxu0 %v1639
      %v1715 = vpop.f32.mrf.mxu0
      %v1716 = vadd.f32 0.0, %v1715
      %v1717 = vpop.f32.mrf.mxu0
      %1718 = vdwg.mxu0
      %v1719 = vadd.f32 %v1626, %v1711
      %v1720 = vadd.f32 %v1627, %v1716
      %v1721 = vld [vmem:[%s887] sm:$0xf]
      %v1723 = vrot.slane %v1631, 1
      %v1724 = vrot.slane %v1632, 1
      %v1725 = vsel %vm252, %v1723, %v1724
      %v1726 = vrot.slane %v1633, 1
      %v1727 = vsel %vm252, %v1724, %v1726
      %v1728 = vsel %vm258, %v1725, 0
      %v1730 = vsel %vm258, %v1727, 0
      %v1733 = vsel %vm263, %v1721, 0
      %1735 = vmatprep.subr.mxu0 0.0
      %1736 = vmatpush1.msra.mxu0 0.0
      %1737 = vmatprep.subr.mxu0 0.0
      %1738 = vmatpush1.msra.mxu0 0.0
      %1739 = vmatprep.subr.mxu0 0.0
      %1740 = vmatpush1.msra.mxu0 0.0
      %1741 = vmatprep.subr.mxu0 0.0
      %1742 = vmatpush1.msra.mxu0 0.0
      %1743 = vmatprep.subr.mxu0 0.0
      %1744 = vmatpush1.msra.mxu0 0.0
      %1745 = vmatprep.subr.mxu0 0.0
      %1746 = vmatpush1.msra.mxu0 0.0
      %1747 = vmatprep.subr.mxu0 0.0
      %1748 = vmatpush1.msra.mxu0 0.0
      %1749 = vmatprep.subr.mxu0 0.0
      %1750 = vmatpush1.msra.mxu0 0.0
      %1751 = vmatprep.subr.mxu0 0.0
      %1752 = vmatpush1.msra.mxu0 0.0
      %1753 = vmatprep.subr.mxu0 0.0
      %1754 = vmatpush1.msra.mxu0 0.0
      %1755 = vmatprep.subr.mxu0 0.0
      %1756 = vmatpush1.msra.mxu0 0.0
      %1757 = vmatprep.subr.mxu0 0.0
      %1758 = vmatpush1.msra.mxu0 0.0
      %1759 = vmatprep.subr.mxu0 0.0
      %1760 = vmatpush1.msra.mxu0 0.0
      %1761 = vmatprep.subr.mxu0 0.0
      %1762 = vmatpush1.msra.mxu0 0.0
      %1763 = vmatprep.subr.mxu0 0.0
      %1764 = vmatpush1.msra.mxu0 0.0
      %1765 = vmatprep.subr.mxu0 0.0
      %1766 = vmatpush1.msra.mxu0 %v1733
      %1767 = vmatprep.subr.mxu0 0.0
      %1768 = vmatpush2.msra.mxu0 0.0
      %1769 = vmatprep.subr.mxu0 0.0
      %1770 = vmatpush2.msra.mxu0 0.0
      %1771 = vmatprep.subr.mxu0 0.0
      %1772 = vmatpush2.msra.mxu0 0.0
      %1773 = vmatprep.subr.mxu0 0.0
      %1774 = vmatpush2.msra.mxu0 0.0
      %1775 = vmatprep.subr.mxu0 0.0
      %1776 = vmatpush2.msra.mxu0 0.0
      %1777 = vmatprep.subr.mxu0 0.0
      %1778 = vmatpush2.msra.mxu0 0.0
      %1779 = vmatprep.subr.mxu0 0.0
      %1780 = vmatpush2.msra.mxu0 0.0
      %1781 = vmatprep.subr.mxu0 0.0
      %1782 = vmatpush2.msra.mxu0 0.0
      %1783 = vmatprep.subr.mxu0 0.0
      %1784 = vmatpush2.msra.mxu0 0.0
      %1785 = vmatprep.subr.mxu0 0.0
      %1786 = vmatpush2.msra.mxu0 0.0
      %1787 = vmatprep.subr.mxu0 0.0
      %1788 = vmatpush2.msra.mxu0 0.0
      %1789 = vmatprep.subr.mxu0 0.0
      %1790 = vmatpush2.msra.mxu0 0.0
      %1791 = vmatprep.subr.mxu0 0.0
      %1792 = vmatpush2.msra.mxu0 0.0
      %1793 = vmatprep.subr.mxu0 0.0
      %1794 = vmatpush2.msra.mxu0 0.0
      %1795 = vmatprep.subr.mxu0 0.0
      %1796 = vmatpush2.msra.mxu0 0.0
      %1797 = vmatprep.subr.mxu0 0.0
      %1798 = vmatpush2.msra.mxu0 0.0
      %1799 = vmatprep.mubr.f32.mxu0 0.0
      %1800 = vmatmul.mubr.f32.gmra.mxu0 %v1728
      %v1801 = vpop.f32.mrf.mxu0
      %v1802 = vadd.f32 0.0, %v1801
      %v1803 = vpop.f32.mrf.mxu0
      %1804 = vmatprep.mubr.f32.mxu0 0.0
      %1805 = vmatmul.mubr.f32.gmra.mxu0 %v1730
      %v1806 = vpop.f32.mrf.mxu0
      %v1807 = vadd.f32 0.0, %v1806
      %v1808 = vpop.f32.mrf.mxu0
      %1809 = vdwg.mxu0
      %v1810 = vadd.f32 %v1719, %v1802
      %v1811 = vadd.f32 %v1720, %v1807
      %v1812 = vld [vmem:[%s979] sm:$0xf]
      %v1813 = vrot.slane %v1631, 2
      %v1814 = vrot.slane %v1632, 2
      %v1815 = vsel %vm426, %v1813, %v1814
      %v1816 = vrot.slane %v1633, 2
      %v1817 = vsel %vm426, %v1814, %v1816
      %v1818 = vsel %vm258, %v1815, 0
      %v1820 = vsel %vm258, %v1817, 0
      %v1823 = vsel %vm263, %v1812, 0
      %1825 = vmatprep.subr.mxu0 0.0
      %1826 = vmatpush1.msra.mxu0 0.0
      %1827 = vmatprep.subr.mxu0 0.0
      %1828 = vmatpush1.msra.mxu0 0.0
      %1829 = vmatprep.subr.mxu0 0.0
      %1830 = vmatpush1.msra.mxu0 0.0
      %1831 = vmatprep.subr.mxu0 0.0
      %1832 = vmatpush1.msra.mxu0 0.0
      %1833 = vmatprep.subr.mxu0 0.0
      %1834 = vmatpush1.msra.mxu0 0.0
      %1835 = vmatprep.subr.mxu0 0.0
      %1836 = vmatpush1.msra.mxu0 0.0
      %1837 = vmatprep.subr.mxu0 0.0
      %1838 = vmatpush1.msra.mxu0 0.0
      %1839 = vmatprep.subr.mxu0 0.0
      %1840 = vmatpush1.msra.mxu0 0.0
      %1841 = vmatprep.subr.mxu0 0.0
      %1842 = vmatpush1.msra.mxu0 0.0
      %1843 = vmatprep.subr.mxu0 0.0
      %1844 = vmatpush1.msra.mxu0 0.0
      %1845 = vmatprep.subr.mxu0 0.0
      %1846 = vmatpush1.msra.mxu0 0.0
      %1847 = vmatprep.subr.mxu0 0.0
      %1848 = vmatpush1.msra.mxu0 0.0
      %1849 = vmatprep.subr.mxu0 0.0
      %1850 = vmatpush1.msra.mxu0 0.0
      %1851 = vmatprep.subr.mxu0 0.0
      %1852 = vmatpush1.msra.mxu0 0.0
      %1853 = vmatprep.subr.mxu0 0.0
      %1854 = vmatpush1.msra.mxu0 0.0
      %1855 = vmatprep.subr.mxu0 0.0
      %1856 = vmatpush1.msra.mxu0 %v1823
      %1857 = vmatprep.subr.mxu0 0.0
      %1858 = vmatpush2.msra.mxu0 0.0
      %1859 = vmatprep.subr.mxu0 0.0
      %1860 = vmatpush2.msra.mxu0 0.0
      %1861 = vmatprep.subr.mxu0 0.0
      %1862 = vmatpush2.msra.mxu0 0.0
      %1863 = vmatprep.subr.mxu0 0.0
      %1864 = vmatpush2.msra.mxu0 0.0
      %1865 = vmatprep.subr.mxu0 0.0
      %1866 = vmatpush2.msra.mxu0 0.0
      %1867 = vmatprep.subr.mxu0 0.0
      %1868 = vmatpush2.msra.mxu0 0.0
      %1869 = vmatprep.subr.mxu0 0.0
      %1870 = vmatpush2.msra.mxu0 0.0
      %1871 = vmatprep.subr.mxu0 0.0
      %1872 = vmatpush2.msra.mxu0 0.0
      %1873 = vmatprep.subr.mxu0 0.0
      %1874 = vmatpush2.msra.mxu0 0.0
      %1875 = vmatprep.subr.mxu0 0.0
      %1876 = vmatpush2.msra.mxu0 0.0
      %1877 = vmatprep.subr.mxu0 0.0
      %1878 = vmatpush2.msra.mxu0 0.0
      %1879 = vmatprep.subr.mxu0 0.0
      %1880 = vmatpush2.msra.mxu0 0.0
      %1881 = vmatprep.subr.mxu0 0.0
      %1882 = vmatpush2.msra.mxu0 0.0
      %1883 = vmatprep.subr.mxu0 0.0
      %1884 = vmatpush2.msra.mxu0 0.0
      %1885 = vmatprep.subr.mxu0 0.0
      %1886 = vmatpush2.msra.mxu0 0.0
      %1887 = vmatprep.subr.mxu0 0.0
      %1888 = vmatpush2.msra.mxu0 0.0
      %1889 = vmatprep.mubr.f32.mxu0 0.0
      %1890 = vmatmul.mubr.f32.gmra.mxu0 %v1818
      %v1891 = vpop.f32.mrf.mxu0
      %v1892 = vadd.f32 0.0, %v1891
      %v1893 = vpop.f32.mrf.mxu0
      %1894 = vmatprep.mubr.f32.mxu0 0.0
      %1895 = vmatmul.mubr.f32.gmra.mxu0 %v1820
      %v1896 = vpop.f32.mrf.mxu0
      %v1897 = vadd.f32 0.0, %v1896
      %v1898 = vpop.f32.mrf.mxu0
      %1899 = vdwg.mxu0
      %v1900 = vadd.f32 %v1810, %v1892
      %v1901 = vadd.f32 %v1811, %v1897
      %s1902 = scalar_lea.vmem %s232, 16
      %1903 = vst [vmem:[%s1902] sm:$0xff] %v1900
      %1904 = vst [vmem:[%s1902 + $0x8] sm:$0xff] %v1901
      %v1905 = vadd.f32 %v1900, %v1901
      %v1906 = vrot.slane %v1905, 4
      %v1907 = vadd.f32 %v1905, %v1906
      %v1908 = vrot.slane %v1907, 2
      %v1909 = vadd.f32 %v1907, %v1908
      %v1910 = vrot.slane %v1909, 1
      %v1911 = vadd.f32 %v1909, %v1910
      %v1912 = vadd.f32 %v1079, %v1911
      %v1913 = vmul.f32 %v1900, %v1900
      %v1914 = vmul.f32 %v1901, %v1901
      %v1915 = vadd.f32 %v1913, %v1914
      %v1916 = vrot.slane %v1915, 4
      %v1917 = vadd.f32 %v1915, %v1916
      %v1918 = vrot.slane %v1917, 2
      %v1919 = vadd.f32 %v1917, %v1918
      %v1920 = vrot.slane %v1919, 1
      %v1921 = vadd.f32 %v1919, %v1920
      %v1922 = vadd.f32 %v1089, %v1921
      %v1923 = vld [vmem:[%s795] sm:$0xff]
      %v1924 = vld [vmem:[%s795 + $0x8] sm:$0xff]
      %v1925 = vld [vmem:[%s795 + $0x10] sm:$0x3]
      %v1926 = vld [vmem:[%s1] sm:$0xf]
      %v1927 = vld [vmem:[%s247] sm:$0xf]
      %v1931 = vrot.slane %v1923, 1
      %v1932 = vrot.slane %v1924, 1
      %v1933 = vsel %vm252, %v1931, %v1932
      %v1934 = vrot.slane %v1925, 1
      %v1935 = vsel %vm252, %v1932, %v1934
      %v1936 = vsel %vm258, %v1933, 0
      %v1938 = vsel %vm258, %v1935, 0
      %v1941 = vsel %vm263, %v1927, 0
      %1943 = vmatprep.subr.mxu0 0.0
      %1944 = vmatpush1.msra.mxu0 0.0
      %1945 = vmatprep.subr.mxu0 0.0
      %1946 = vmatpush1.msra.mxu0 0.0
      %1947 = vmatprep.subr.mxu0 0.0
      %1948 = vmatpush1.msra.mxu0 0.0
      %1949 = vmatprep.subr.mxu0 0.0
      %1950 = vmatpush1.msra.mxu0 0.0
      %1951 = vmatprep.subr.mxu0 0.0
      %1952 = vmatpush1.msra.mxu0 0.0
      %1953 = vmatprep.subr.mxu0 0.0
      %1954 = vmatpush1.msra.mxu0 0.0
      %1955 = vmatprep.subr.mxu0 0.0
      %1956 = vmatpush1.msra.mxu0 0.0
      %1957 = vmatprep.subr.mxu0 0.0
      %1958 = vmatpush1.msra.mxu0 0.0
      %1959 = vmatprep.subr.mxu0 0.0
      %1960 = vmatpush1.msra.mxu0 0.0
      %1961 = vmatprep.subr.mxu0 0.0
      %1962 = vmatpush1.msra.mxu0 0.0
      %1963 = vmatprep.subr.mxu0 0.0
      %1964 = vmatpush1.msra.mxu0 0.0
      %1965 = vmatprep.subr.mxu0 0.0
      %1966 = vmatpush1.msra.mxu0 0.0
      %1967 = vmatprep.subr.mxu0 0.0
      %1968 = vmatpush1.msra.mxu0 0.0
      %1969 = vmatprep.subr.mxu0 0.0
      %1970 = vmatpush1.msra.mxu0 0.0
      %1971 = vmatprep.subr.mxu0 0.0
      %1972 = vmatpush1.msra.mxu0 0.0
      %1973 = vmatprep.subr.mxu0 0.0
      %1974 = vmatpush1.msra.mxu0 %v1941
      %1975 = vmatprep.subr.mxu0 0.0
      %1976 = vmatpush2.msra.mxu0 0.0
      %1977 = vmatprep.subr.mxu0 0.0
      %1978 = vmatpush2.msra.mxu0 0.0
      %1979 = vmatprep.subr.mxu0 0.0
      %1980 = vmatpush2.msra.mxu0 0.0
      %1981 = vmatprep.subr.mxu0 0.0
      %1982 = vmatpush2.msra.mxu0 0.0
      %1983 = vmatprep.subr.mxu0 0.0
      %1984 = vmatpush2.msra.mxu0 0.0
      %1985 = vmatprep.subr.mxu0 0.0
      %1986 = vmatpush2.msra.mxu0 0.0
      %1987 = vmatprep.subr.mxu0 0.0
      %1988 = vmatpush2.msra.mxu0 0.0
      %1989 = vmatprep.subr.mxu0 0.0
      %1990 = vmatpush2.msra.mxu0 0.0
      %1991 = vmatprep.subr.mxu0 0.0
      %1992 = vmatpush2.msra.mxu0 0.0
      %1993 = vmatprep.subr.mxu0 0.0
      %1994 = vmatpush2.msra.mxu0 0.0
      %1995 = vmatprep.subr.mxu0 0.0
      %1996 = vmatpush2.msra.mxu0 0.0
      %1997 = vmatprep.subr.mxu0 0.0
      %1998 = vmatpush2.msra.mxu0 0.0
      %1999 = vmatprep.subr.mxu0 0.0
      %2000 = vmatpush2.msra.mxu0 0.0
      %2001 = vmatprep.subr.mxu0 0.0
      %2002 = vmatpush2.msra.mxu0 0.0
      %2003 = vmatprep.subr.mxu0 0.0
      %2004 = vmatpush2.msra.mxu0 0.0
      %2005 = vmatprep.subr.mxu0 0.0
      %2006 = vmatpush2.msra.mxu0 0.0
      %2007 = vmatprep.mubr.f32.mxu0 0.0
      %2008 = vmatmul.mubr.f32.gmra.mxu0 %v1936
      %v2009 = vpop.f32.mrf.mxu0
      %v2010 = vadd.f32 0.0, %v2009
      %v2011 = vpop.f32.mrf.mxu0
      %2012 = vmatprep.mubr.f32.mxu0 0.0
      %2013 = vmatmul.mubr.f32.gmra.mxu0 %v1938
      %v2014 = vpop.f32.mrf.mxu0
      %v2015 = vadd.f32 0.0, %v2014
      %v2016 = vpop.f32.mrf.mxu0
      %2017 = vdwg.mxu0
      %v2018 = vsel %vm258, %v1923, 0
      %v2020 = vsel %vm258, %v1924, 0
      %v2023 = vsel %vm263, %v1926, 0
      %2025 = vmatprep.subr.mxu0 0.0
      %2026 = vmatpush1.msra.mxu0 0.0
      %2027 = vmatprep.subr.mxu0 0.0
      %2028 = vmatpush1.msra.mxu0 0.0
      %2029 = vmatprep.subr.mxu0 0.0
      %2030 = vmatpush1.msra.mxu0 0.0
      %2031 = vmatprep.subr.mxu0 0.0
      %2032 = vmatpush1.msra.mxu0 0.0
      %2033 = vmatprep.subr.mxu0 0.0
      %2034 = vmatpush1.msra.mxu0 0.0
      %2035 = vmatprep.subr.mxu0 0.0
      %2036 = vmatpush1.msra.mxu0 0.0
      %2037 = vmatprep.subr.mxu0 0.0
      %2038 = vmatpush1.msra.mxu0 0.0
      %2039 = vmatprep.subr.mxu0 0.0
      %2040 = vmatpush1.msra.mxu0 0.0
      %2041 = vmatprep.subr.mxu0 0.0
      %2042 = vmatpush1.msra.mxu0 0.0
      %2043 = vmatprep.subr.mxu0 0.0
      %2044 = vmatpush1.msra.mxu0 0.0
      %2045 = vmatprep.subr.mxu0 0.0
      %2046 = vmatpush1.msra.mxu0 0.0
      %2047 = vmatprep.subr.mxu0 0.0
      %2048 = vmatpush1.msra.mxu0 0.0
      %2049 = vmatprep.subr.mxu0 0.0
      %2050 = vmatpush1.msra.mxu0 0.0
      %2051 = vmatprep.subr.mxu0 0.0
      %2052 = vmatpush1.msra.mxu0 0.0
      %2053 = vmatprep.subr.mxu0 0.0
      %2054 = vmatpush1.msra.mxu0 0.0
      %2055 = vmatprep.subr.mxu0 0.0
      %2056 = vmatpush1.msra.mxu0 %v2023
      %2057 = vmatprep.subr.mxu0 0.0
      %2058 = vmatpush2.msra.mxu0 0.0
      %2059 = vmatprep.subr.mxu0 0.0
      %2060 = vmatpush2.msra.mxu0 0.0
      %2061 = vmatprep.subr.mxu0 0.0
      %2062 = vmatpush2.msra.mxu0 0.0
      %2063 = vmatprep.subr.mxu0 0.0
      %2064 = vmatpush2.msra.mxu0 0.0
      %2065 = vmatprep.subr.mxu0 0.0
      %2066 = vmatpush2.msra.mxu0 0.0
      %2067 = vmatprep.subr.mxu0 0.0
      %2068 = vmatpush2.msra.mxu0 0.0
      %2069 = vmatprep.subr.mxu0 0.0
      %2070 = vmatpush2.msra.mxu0 0.0
      %2071 = vmatprep.subr.mxu0 0.0
      %2072 = vmatpush2.msra.mxu0 0.0
      %2073 = vmatprep.subr.mxu0 0.0
      %2074 = vmatpush2.msra.mxu0 0.0
      %2075 = vmatprep.subr.mxu0 0.0
      %2076 = vmatpush2.msra.mxu0 0.0
      %2077 = vmatprep.subr.mxu0 0.0
      %2078 = vmatpush2.msra.mxu0 0.0
      %2079 = vmatprep.subr.mxu0 0.0
      %2080 = vmatpush2.msra.mxu0 0.0
      %2081 = vmatprep.subr.mxu0 0.0
      %2082 = vmatpush2.msra.mxu0 0.0
      %2083 = vmatprep.subr.mxu0 0.0
      %2084 = vmatpush2.msra.mxu0 0.0
      %2085 = vmatprep.subr.mxu0 0.0
      %2086 = vmatpush2.msra.mxu0 0.0
      %2087 = vmatprep.subr.mxu0 0.0
      %2088 = vmatpush2.msra.mxu0 0.0
      %2089 = vmatprep.mubr.f32.mxu0 0.0
      %2090 = vmatmul.mubr.f32.gmra.mxu0 %v2018
      %v2091 = vpop.f32.mrf.mxu0
      %v2092 = vadd.f32 %v2010, %v2091
      %v2093 = vpop.f32.mrf.mxu0
      %2094 = vmatprep.mubr.f32.mxu0 0.0
      %2095 = vmatmul.mubr.f32.gmra.mxu0 %v2020
      %v2096 = vpop.f32.mrf.mxu0
      %v2097 = vadd.f32 %v2015, %v2096
      %v2098 = vpop.f32.mrf.mxu0
      %2099 = vdwg.mxu0
      %v2100 = vld [vmem:[%s424] sm:$0xf]
      %v2101 = vrot.slane %v1923, 2
      %v2102 = vrot.slane %v1924, 2
      %v2103 = vsel %vm426, %v2101, %v2102
      %v2104 = vrot.slane %v1925, 2
      %v2105 = vsel %vm426, %v2102, %v2104
      %v2106 = vsel %vm258, %v2103, 0
      %v2108 = vsel %vm258, %v2105, 0
      %v2111 = vsel %vm263, %v2100, 0
      %2113 = vmatprep.subr.mxu0 0.0
      %2114 = vmatpush1.msra.mxu0 0.0
      %2115 = vmatprep.subr.mxu0 0.0
      %2116 = vmatpush1.msra.mxu0 0.0
      %2117 = vmatprep.subr.mxu0 0.0
      %2118 = vmatpush1.msra.mxu0 0.0
      %2119 = vmatprep.subr.mxu0 0.0
      %2120 = vmatpush1.msra.mxu0 0.0
      %2121 = vmatprep.subr.mxu0 0.0
      %2122 = vmatpush1.msra.mxu0 0.0
      %2123 = vmatprep.subr.mxu0 0.0
      %2124 = vmatpush1.msra.mxu0 0.0
      %2125 = vmatprep.subr.mxu0 0.0
      %2126 = vmatpush1.msra.mxu0 0.0
      %2127 = vmatprep.subr.mxu0 0.0
      %2128 = vmatpush1.msra.mxu0 0.0
      %2129 = vmatprep.subr.mxu0 0.0
      %2130 = vmatpush1.msra.mxu0 0.0
      %2131 = vmatprep.subr.mxu0 0.0
      %2132 = vmatpush1.msra.mxu0 0.0
      %2133 = vmatprep.subr.mxu0 0.0
      %2134 = vmatpush1.msra.mxu0 0.0
      %2135 = vmatprep.subr.mxu0 0.0
      %2136 = vmatpush1.msra.mxu0 0.0
      %2137 = vmatprep.subr.mxu0 0.0
      %2138 = vmatpush1.msra.mxu0 0.0
      %2139 = vmatprep.subr.mxu0 0.0
      %2140 = vmatpush1.msra.mxu0 0.0
      %2141 = vmatprep.subr.mxu0 0.0
      %2142 = vmatpush1.msra.mxu0 0.0
      %2143 = vmatprep.subr.mxu0 0.0
      %2144 = vmatpush1.msra.mxu0 %v2111
      %2145 = vmatprep.subr.mxu0 0.0
      %2146 = vmatpush2.msra.mxu0 0.0
      %2147 = vmatprep.subr.mxu0 0.0
      %2148 = vmatpush2.msra.mxu0 0.0
      %2149 = vmatprep.subr.mxu0 0.0
      %2150 = vmatpush2.msra.mxu0 0.0
      %2151 = vmatprep.subr.mxu0 0.0
      %2152 = vmatpush2.msra.mxu0 0.0
      %2153 = vmatprep.subr.mxu0 0.0
      %2154 = vmatpush2.msra.mxu0 0.0
      %2155 = vmatprep.subr.mxu0 0.0
      %2156 = vmatpush2.msra.mxu0 0.0
      %2157 = vmatprep.subr.mxu0 0.0
      %2158 = vmatpush2.msra.mxu0 0.0
      %2159 = vmatprep.subr.mxu0 0.0
      %2160 = vmatpush2.msra.mxu0 0.0
      %2161 = vmatprep.subr.mxu0 0.0
      %2162 = vmatpush2.msra.mxu0 0.0
      %2163 = vmatprep.subr.mxu0 0.0
      %2164 = vmatpush2.msra.mxu0 0.0
      %2165 = vmatprep.subr.mxu0 0.0
      %2166 = vmatpush2.msra.mxu0 0.0
      %2167 = vmatprep.subr.mxu0 0.0
      %2168 = vmatpush2.msra.mxu0 0.0
      %2169 = vmatprep.subr.mxu0 0.0
      %2170 = vmatpush2.msra.mxu0 0.0
      %2171 = vmatprep.subr.mxu0 0.0
      %2172 = vmatpush2.msra.mxu0 0.0
      %2173 = vmatprep.subr.mxu0 0.0
      %2174 = vmatpush2.msra.mxu0 0.0
      %2175 = vmatprep.subr.mxu0 0.0
      %2176 = vmatpush2.msra.mxu0 0.0
      %2177 = vmatprep.mubr.f32.mxu0 0.0
      %2178 = vmatmul.mubr.f32.gmra.mxu0 %v2106
      %v2179 = vpop.f32.mrf.mxu0
      %v2180 = vadd.f32 0.0, %v2179
      %v2181 = vpop.f32.mrf.mxu0
      %2182 = vmatprep.mubr.f32.mxu0 0.0
      %2183 = vmatmul.mubr.f32.gmra.mxu0 %v2108
      %v2184 = vpop.f32.mrf.mxu0
      %v2185 = vadd.f32 0.0, %v2184
      %v2186 = vpop.f32.mrf.mxu0
      %2187 = vdwg.mxu0
      %v2188 = vadd.f32 %v2092, %v2180
      %v2189 = vadd.f32 %v2097, %v2185
      %v2190 = vld [vmem:[%s1630] sm:$0xff]
      %v2191 = vld [vmem:[%s1630 + $0x8] sm:$0xff]
      %v2192 = vld [vmem:[%s1630 + $0x10] sm:$0x3]
      %v2193 = vld [vmem:[%s522] sm:$0xf]
      %v2195 = vsel %vm258, %v2190, 0
      %v2198 = vsel %vm258, %v2191, 0
      %v2201 = vsel %vm263, %v2193, 0
      %2203 = vmatprep.subr.mxu0 0.0
      %2204 = vmatpush1.msra.mxu0 0.0
      %2205 = vmatprep.subr.mxu0 0.0
      %2206 = vmatpush1.msra.mxu0 0.0
      %2207 = vmatprep.subr.mxu0 0.0
      %2208 = vmatpush1.msra.mxu0 0.0
      %2209 = vmatprep.subr.mxu0 0.0
      %2210 = vmatpush1.msra.mxu0 0.0
      %2211 = vmatprep.subr.mxu0 0.0
      %2212 = vmatpush1.msra.mxu0 0.0
      %2213 = vmatprep.subr.mxu0 0.0
      %2214 = vmatpush1.msra.mxu0 0.0
      %2215 = vmatprep.subr.mxu0 0.0
      %2216 = vmatpush1.msra.mxu0 0.0
      %2217 = vmatprep.subr.mxu0 0.0
      %2218 = vmatpush1.msra.mxu0 0.0
      %2219 = vmatprep.subr.mxu0 0.0
      %2220 = vmatpush1.msra.mxu0 0.0
      %2221 = vmatprep.subr.mxu0 0.0
      %2222 = vmatpush1.msra.mxu0 0.0
      %2223 = vmatprep.subr.mxu0 0.0
      %2224 = vmatpush1.msra.mxu0 0.0
      %2225 = vmatprep.subr.mxu0 0.0
      %2226 = vmatpush1.msra.mxu0 0.0
      %2227 = vmatprep.subr.mxu0 0.0
      %2228 = vmatpush1.msra.mxu0 0.0
      %2229 = vmatprep.subr.mxu0 0.0
      %2230 = vmatpush1.msra.mxu0 0.0
      %2231 = vmatprep.subr.mxu0 0.0
      %2232 = vmatpush1.msra.mxu0 0.0
      %2233 = vmatprep.subr.mxu0 0.0
      %2234 = vmatpush1.msra.mxu0 %v2201
      %2235 = vmatprep.subr.mxu0 0.0
      %2236 = vmatpush2.msra.mxu0 0.0
      %2237 = vmatprep.subr.mxu0 0.0
      %2238 = vmatpush2.msra.mxu0 0.0
      %2239 = vmatprep.subr.mxu0 0.0
      %2240 = vmatpush2.msra.mxu0 0.0
      %2241 = vmatprep.subr.mxu0 0.0
      %2242 = vmatpush2.msra.mxu0 0.0
      %2243 = vmatprep.subr.mxu0 0.0
      %2244 = vmatpush2.msra.mxu0 0.0
      %2245 = vmatprep.subr.mxu0 0.0
      %2246 = vmatpush2.msra.mxu0 0.0
      %2247 = vmatprep.subr.mxu0 0.0
      %2248 = vmatpush2.msra.mxu0 0.0
      %2249 = vmatprep.subr.mxu0 0.0
      %2250 = vmatpush2.msra.mxu0 0.0
      %2251 = vmatprep.subr.mxu0 0.0
      %2252 = vmatpush2.msra.mxu0 0.0
      %2253 = vmatprep.subr.mxu0 0.0
      %2254 = vmatpush2.msra.mxu0 0.0
      %2255 = vmatprep.subr.mxu0 0.0
      %2256 = vmatpush2.msra.mxu0 0.0
      %2257 = vmatprep.subr.mxu0 0.0
      %2258 = vmatpush2.msra.mxu0 0.0
      %2259 = vmatprep.subr.mxu0 0.0
      %2260 = vmatpush2.msra.mxu0 0.0
      %2261 = vmatprep.subr.mxu0 0.0
      %2262 = vmatpush2.msra.mxu0 0.0
      %2263 = vmatprep.subr.mxu0 0.0
      %2264 = vmatpush2.msra.mxu0 0.0
      %2265 = vmatprep.subr.mxu0 0.0
      %2266 = vmatpush2.msra.mxu0 0.0
      %2267 = vmatprep.mubr.f32.mxu0 0.0
      %2268 = vmatmul.mubr.f32.gmra.mxu0 %v2195
      %v2269 = vpop.f32.mrf.mxu0
      %v2270 = vadd.f32 0.0, %v2269
      %v2271 = vpop.f32.mrf.mxu0
      %2272 = vmatprep.mubr.f32.mxu0 0.0
      %2273 = vmatmul.mubr.f32.gmra.mxu0 %v2198
      %v2274 = vpop.f32.mrf.mxu0
      %v2275 = vadd.f32 0.0, %v2274
      %v2276 = vpop.f32.mrf.mxu0
      %2277 = vdwg.mxu0
      %v2278 = vadd.f32 %v2188, %v2270
      %v2279 = vadd.f32 %v2189, %v2275
      %v2280 = vld [vmem:[%s610] sm:$0xf]
      %v2282 = vrot.slane %v2190, 1
      %v2283 = vrot.slane %v2191, 1
      %v2284 = vsel %vm252, %v2282, %v2283
      %v2285 = vrot.slane %v2192, 1
      %v2286 = vsel %vm252, %v2283, %v2285
      %v2287 = vsel %vm258, %v2284, 0
      %v2289 = vsel %vm258, %v2286, 0
      %v2292 = vsel %vm263, %v2280, 0
      %2294 = vmatprep.subr.mxu0 0.0
      %2295 = vmatpush1.msra.mxu0 0.0
      %2296 = vmatprep.subr.mxu0 0.0
      %2297 = vmatpush1.msra.mxu0 0.0
      %2298 = vmatprep.subr.mxu0 0.0
      %2299 = vmatpush1.msra.mxu0 0.0
      %2300 = vmatprep.subr.mxu0 0.0
      %2301 = vmatpush1.msra.mxu0 0.0
      %2302 = vmatprep.subr.mxu0 0.0
      %2303 = vmatpush1.msra.mxu0 0.0
      %2304 = vmatprep.subr.mxu0 0.0
      %2305 = vmatpush1.msra.mxu0 0.0
      %2306 = vmatprep.subr.mxu0 0.0
      %2307 = vmatpush1.msra.mxu0 0.0
      %2308 = vmatprep.subr.mxu0 0.0
      %2309 = vmatpush1.msra.mxu0 0.0
      %2310 = vmatprep.subr.mxu0 0.0
      %2311 = vmatpush1.msra.mxu0 0.0
      %2312 = vmatprep.subr.mxu0 0.0
      %2313 = vmatpush1.msra.mxu0 0.0
      %2314 = vmatprep.subr.mxu0 0.0
      %2315 = vmatpush1.msra.mxu0 0.0
      %2316 = vmatprep.subr.mxu0 0.0
      %2317 = vmatpush1.msra.mxu0 0.0
      %2318 = vmatprep.subr.mxu0 0.0
      %2319 = vmatpush1.msra.mxu0 0.0
      %2320 = vmatprep.subr.mxu0 0.0
      %2321 = vmatpush1.msra.mxu0 0.0
      %2322 = vmatprep.subr.mxu0 0.0
      %2323 = vmatpush1.msra.mxu0 0.0
      %2324 = vmatprep.subr.mxu0 0.0
      %2325 = vmatpush1.msra.mxu0 %v2292
      %2326 = vmatprep.subr.mxu0 0.0
      %2327 = vmatpush2.msra.mxu0 0.0
      %2328 = vmatprep.subr.mxu0 0.0
      %2329 = vmatpush2.msra.mxu0 0.0
      %2330 = vmatprep.subr.mxu0 0.0
      %2331 = vmatpush2.msra.mxu0 0.0
      %2332 = vmatprep.subr.mxu0 0.0
      %2333 = vmatpush2.msra.mxu0 0.0
      %2334 = vmatprep.subr.mxu0 0.0
      %2335 = vmatpush2.msra.mxu0 0.0
      %2336 = vmatprep.subr.mxu0 0.0
      %2337 = vmatpush2.msra.mxu0 0.0
      %2338 = vmatprep.subr.mxu0 0.0
      %2339 = vmatpush2.msra.mxu0 0.0
      %2340 = vmatprep.subr.mxu0 0.0
      %2341 = vmatpush2.msra.mxu0 0.0
      %2342 = vmatprep.subr.mxu0 0.0
      %2343 = vmatpush2.msra.mxu0 0.0
      %2344 = vmatprep.subr.mxu0 0.0
      %2345 = vmatpush2.msra.mxu0 0.0
      %2346 = vmatprep.subr.mxu0 0.0
      %2347 = vmatpush2.msra.mxu0 0.0
      %2348 = vmatprep.subr.mxu0 0.0
      %2349 = vmatpush2.msra.mxu0 0.0
      %2350 = vmatprep.subr.mxu0 0.0
      %2351 = vmatpush2.msra.mxu0 0.0
      %2352 = vmatprep.subr.mxu0 0.0
      %2353 = vmatpush2.msra.mxu0 0.0
      %2354 = vmatprep.subr.mxu0 0.0
      %2355 = vmatpush2.msra.mxu0 0.0
      %2356 = vmatprep.subr.mxu0 0.0
      %2357 = vmatpush2.msra.mxu0 0.0
      %2358 = vmatprep.mubr.f32.mxu0 0.0
      %2359 = vmatmul.mubr.f32.gmra.mxu0 %v2287
      %v2360 = vpop.f32.mrf.mxu0
      %v2361 = vadd.f32 0.0, %v2360
      %v2362 = vpop.f32.mrf.mxu0
      %2363 = vmatprep.mubr.f32.mxu0 0.0
      %2364 = vmatmul.mubr.f32.gmra.mxu0 %v2289
      %v2365 = vpop.f32.mrf.mxu0
      %v2366 = vadd.f32 0.0, %v2365
      %v2367 = vpop.f32.mrf.mxu0
      %2368 = vdwg.mxu0
      %v2369 = vadd.f32 %v2278, %v2361
      %v2370 = vadd.f32 %v2279, %v2366
      %v2371 = vld [vmem:[%s702] sm:$0xf]
      %v2372 = vrot.slane %v2190, 2
      %v2373 = vrot.slane %v2191, 2
      %v2374 = vsel %vm426, %v2372, %v2373
      %v2375 = vrot.slane %v2192, 2
      %v2376 = vsel %vm426, %v2373, %v2375
      %v2377 = vsel %vm258, %v2374, 0
      %v2379 = vsel %vm258, %v2376, 0
      %v2382 = vsel %vm263, %v2371, 0
      %2384 = vmatprep.subr.mxu0 0.0
      %2385 = vmatpush1.msra.mxu0 0.0
      %2386 = vmatprep.subr.mxu0 0.0
      %2387 = vmatpush1.msra.mxu0 0.0
      %2388 = vmatprep.subr.mxu0 0.0
      %2389 = vmatpush1.msra.mxu0 0.0
      %2390 = vmatprep.subr.mxu0 0.0
      %2391 = vmatpush1.msra.mxu0 0.0
      %2392 = vmatprep.subr.mxu0 0.0
      %2393 = vmatpush1.msra.mxu0 0.0
      %2394 = vmatprep.subr.mxu0 0.0
      %2395 = vmatpush1.msra.mxu0 0.0
      %2396 = vmatprep.subr.mxu0 0.0
      %2397 = vmatpush1.msra.mxu0 0.0
      %2398 = vmatprep.subr.mxu0 0.0
      %2399 = vmatpush1.msra.mxu0 0.0
      %2400 = vmatprep.subr.mxu0 0.0
      %2401 = vmatpush1.msra.mxu0 0.0
      %2402 = vmatprep.subr.mxu0 0.0
      %2403 = vmatpush1.msra.mxu0 0.0
      %2404 = vmatprep.subr.mxu0 0.0
      %2405 = vmatpush1.msra.mxu0 0.0
      %2406 = vmatprep.subr.mxu0 0.0
      %2407 = vmatpush1.msra.mxu0 0.0
      %2408 = vmatprep.subr.mxu0 0.0
      %2409 = vmatpush1.msra.mxu0 0.0
      %2410 = vmatprep.subr.mxu0 0.0
      %2411 = vmatpush1.msra.mxu0 0.0
      %2412 = vmatprep.subr.mxu0 0.0
      %2413 = vmatpush1.msra.mxu0 0.0
      %2414 = vmatprep.subr.mxu0 0.0
      %2415 = vmatpush1.msra.mxu0 %v2382
      %2416 = vmatprep.subr.mxu0 0.0
      %2417 = vmatpush2.msra.mxu0 0.0
      %2418 = vmatprep.subr.mxu0 0.0
      %2419 = vmatpush2.msra.mxu0 0.0
      %2420 = vmatprep.subr.mxu0 0.0
      %2421 = vmatpush2.msra.mxu0 0.0
      %2422 = vmatprep.subr.mxu0 0.0
      %2423 = vmatpush2.msra.mxu0 0.0
      %2424 = vmatprep.subr.mxu0 0.0
      %2425 = vmatpush2.msra.mxu0 0.0
      %2426 = vmatprep.subr.mxu0 0.0
      %2427 = vmatpush2.msra.mxu0 0.0
      %2428 = vmatprep.subr.mxu0 0.0
      %2429 = vmatpush2.msra.mxu0 0.0
      %2430 = vmatprep.subr.mxu0 0.0
      %2431 = vmatpush2.msra.mxu0 0.0
      %2432 = vmatprep.subr.mxu0 0.0
      %2433 = vmatpush2.msra.mxu0 0.0
      %2434 = vmatprep.subr.mxu0 0.0
      %2435 = vmatpush2.msra.mxu0 0.0
      %2436 = vmatprep.subr.mxu0 0.0
      %2437 = vmatpush2.msra.mxu0 0.0
      %2438 = vmatprep.subr.mxu0 0.0
      %2439 = vmatpush2.msra.mxu0 0.0
      %2440 = vmatprep.subr.mxu0 0.0
      %2441 = vmatpush2.msra.mxu0 0.0
      %2442 = vmatprep.subr.mxu0 0.0
      %2443 = vmatpush2.msra.mxu0 0.0
      %2444 = vmatprep.subr.mxu0 0.0
      %2445 = vmatpush2.msra.mxu0 0.0
      %2446 = vmatprep.subr.mxu0 0.0
      %2447 = vmatpush2.msra.mxu0 0.0
      %2448 = vmatprep.mubr.f32.mxu0 0.0
      %2449 = vmatmul.mubr.f32.gmra.mxu0 %v2377
      %v2450 = vpop.f32.mrf.mxu0
      %v2451 = vadd.f32 0.0, %v2450
      %v2452 = vpop.f32.mrf.mxu0
      %2453 = vmatprep.mubr.f32.mxu0 0.0
      %2454 = vmatmul.mubr.f32.gmra.mxu0 %v2379
      %v2455 = vpop.f32.mrf.mxu0
      %v2456 = vadd.f32 0.0, %v2455
      %v2457 = vpop.f32.mrf.mxu0
      %2458 = vdwg.mxu0
      %v2459 = vadd.f32 %v2369, %v2451
      %v2460 = vadd.f32 %v2370, %v2456
      %s2461 = sadd.s32 %s240, 4
      %s2462 = smul.u32 %s2461, 24
      %s2463 = scalar_lea.vmem %s222, %s2462
      %v2464 = vld [vmem:[%s2463] sm:$0xff]
      %v2465 = vld [vmem:[%s2463 + $0x8] sm:$0xff]
      %v2466 = vld [vmem:[%s2463 + $0x10] sm:$0x3]
      %v2467 = vld [vmem:[%s799] sm:$0xf]
      %v2469 = vsel %vm258, %v2464, 0
      %v2472 = vsel %vm258, %v2465, 0
      %v2475 = vsel %vm263, %v2467, 0
      %2477 = vmatprep.subr.mxu0 0.0
      %2478 = vmatpush1.msra.mxu0 0.0
      %2479 = vmatprep.subr.mxu0 0.0
      %2480 = vmatpush1.msra.mxu0 0.0
      %2481 = vmatprep.subr.mxu0 0.0
      %2482 = vmatpush1.msra.mxu0 0.0
      %2483 = vmatprep.subr.mxu0 0.0
      %2484 = vmatpush1.msra.mxu0 0.0
      %2485 = vmatprep.subr.mxu0 0.0
      %2486 = vmatpush1.msra.mxu0 0.0
      %2487 = vmatprep.subr.mxu0 0.0
      %2488 = vmatpush1.msra.mxu0 0.0
      %2489 = vmatprep.subr.mxu0 0.0
      %2490 = vmatpush1.msra.mxu0 0.0
      %2491 = vmatprep.subr.mxu0 0.0
      %2492 = vmatpush1.msra.mxu0 0.0
      %2493 = vmatprep.subr.mxu0 0.0
      %2494 = vmatpush1.msra.mxu0 0.0
      %2495 = vmatprep.subr.mxu0 0.0
      %2496 = vmatpush1.msra.mxu0 0.0
      %2497 = vmatprep.subr.mxu0 0.0
      %2498 = vmatpush1.msra.mxu0 0.0
      %2499 = vmatprep.subr.mxu0 0.0
      %2500 = vmatpush1.msra.mxu0 0.0
      %2501 = vmatprep.subr.mxu0 0.0
      %2502 = vmatpush1.msra.mxu0 0.0
      %2503 = vmatprep.subr.mxu0 0.0
      %2504 = vmatpush1.msra.mxu0 0.0
      %2505 = vmatprep.subr.mxu0 0.0
      %2506 = vmatpush1.msra.mxu0 0.0
      %2507 = vmatprep.subr.mxu0 0.0
      %2508 = vmatpush1.msra.mxu0 %v2475
      %2509 = vmatprep.subr.mxu0 0.0
      %2510 = vmatpush2.msra.mxu0 0.0
      %2511 = vmatprep.subr.mxu0 0.0
      %2512 = vmatpush2.msra.mxu0 0.0
      %2513 = vmatprep.subr.mxu0 0.0
      %2514 = vmatpush2.msra.mxu0 0.0
      %2515 = vmatprep.subr.mxu0 0.0
      %2516 = vmatpush2.msra.mxu0 0.0
      %2517 = vmatprep.subr.mxu0 0.0
      %2518 = vmatpush2.msra.mxu0 0.0
      %2519 = vmatprep.subr.mxu0 0.0
      %2520 = vmatpush2.msra.mxu0 0.0
      %2521 = vmatprep.subr.mxu0 0.0
      %2522 = vmatpush2.msra.mxu0 0.0
      %2523 = vmatprep.subr.mxu0 0.0
      %2524 = vmatpush2.msra.mxu0 0.0
      %2525 = vmatprep.subr.mxu0 0.0
      %2526 = vmatpush2.msra.mxu0 0.0
      %2527 = vmatprep.subr.mxu0 0.0
      %2528 = vmatpush2.msra.mxu0 0.0
      %2529 = vmatprep.subr.mxu0 0.0
      %2530 = vmatpush2.msra.mxu0 0.0
      %2531 = vmatprep.subr.mxu0 0.0
      %2532 = vmatpush2.msra.mxu0 0.0
      %2533 = vmatprep.subr.mxu0 0.0
      %2534 = vmatpush2.msra.mxu0 0.0
      %2535 = vmatprep.subr.mxu0 0.0
      %2536 = vmatpush2.msra.mxu0 0.0
      %2537 = vmatprep.subr.mxu0 0.0
      %2538 = vmatpush2.msra.mxu0 0.0
      %2539 = vmatprep.subr.mxu0 0.0
      %2540 = vmatpush2.msra.mxu0 0.0
      %2541 = vmatprep.mubr.f32.mxu0 0.0
      %2542 = vmatmul.mubr.f32.gmra.mxu0 %v2469
      %v2543 = vpop.f32.mrf.mxu0
      %v2544 = vadd.f32 0.0, %v2543
      %v2545 = vpop.f32.mrf.mxu0
      %2546 = vmatprep.mubr.f32.mxu0 0.0
      %2547 = vmatmul.mubr.f32.gmra.mxu0 %v2472
      %v2548 = vpop.f32.mrf.mxu0
      %v2549 = vadd.f32 0.0, %v2548
      %v2550 = vpop.f32.mrf.mxu0
      %2551 = vdwg.mxu0
      %v2552 = vadd.f32 %v2459, %v2544
      %v2553 = vadd.f32 %v2460, %v2549
      %v2554 = vld [vmem:[%s887] sm:$0xf]
      %v2556 = vrot.slane %v2464, 1
      %v2557 = vrot.slane %v2465, 1
      %v2558 = vsel %vm252, %v2556, %v2557
      %v2559 = vrot.slane %v2466, 1
      %v2560 = vsel %vm252, %v2557, %v2559
      %v2561 = vsel %vm258, %v2558, 0
      %v2563 = vsel %vm258, %v2560, 0
      %v2566 = vsel %vm263, %v2554, 0
      %2568 = vmatprep.subr.mxu0 0.0
      %2569 = vmatpush1.msra.mxu0 0.0
      %2570 = vmatprep.subr.mxu0 0.0
      %2571 = vmatpush1.msra.mxu0 0.0
      %2572 = vmatprep.subr.mxu0 0.0
      %2573 = vmatpush1.msra.mxu0 0.0
      %2574 = vmatprep.subr.mxu0 0.0
      %2575 = vmatpush1.msra.mxu0 0.0
      %2576 = vmatprep.subr.mxu0 0.0
      %2577 = vmatpush1.msra.mxu0 0.0
      %2578 = vmatprep.subr.mxu0 0.0
      %2579 = vmatpush1.msra.mxu0 0.0
      %2580 = vmatprep.subr.mxu0 0.0
      %2581 = vmatpush1.msra.mxu0 0.0
      %2582 = vmatprep.subr.mxu0 0.0
      %2583 = vmatpush1.msra.mxu0 0.0
      %2584 = vmatprep.subr.mxu0 0.0
      %2585 = vmatpush1.msra.mxu0 0.0
      %2586 = vmatprep.subr.mxu0 0.0
      %2587 = vmatpush1.msra.mxu0 0.0
      %2588 = vmatprep.subr.mxu0 0.0
      %2589 = vmatpush1.msra.mxu0 0.0
      %2590 = vmatprep.subr.mxu0 0.0
      %2591 = vmatpush1.msra.mxu0 0.0
      %2592 = vmatprep.subr.mxu0 0.0
      %2593 = vmatpush1.msra.mxu0 0.0
      %2594 = vmatprep.subr.mxu0 0.0
      %2595 = vmatpush1.msra.mxu0 0.0
      %2596 = vmatprep.subr.mxu0 0.0
      %2597 = vmatpush1.msra.mxu0 0.0
      %2598 = vmatprep.subr.mxu0 0.0
      %2599 = vmatpush1.msra.mxu0 %v2566
      %2600 = vmatprep.subr.mxu0 0.0
      %2601 = vmatpush2.msra.mxu0 0.0
      %2602 = vmatprep.subr.mxu0 0.0
      %2603 = vmatpush2.msra.mxu0 0.0
      %2604 = vmatprep.subr.mxu0 0.0
      %2605 = vmatpush2.msra.mxu0 0.0
      %2606 = vmatprep.subr.mxu0 0.0
      %2607 = vmatpush2.msra.mxu0 0.0
      %2608 = vmatprep.subr.mxu0 0.0
      %2609 = vmatpush2.msra.mxu0 0.0
      %2610 = vmatprep.subr.mxu0 0.0
      %2611 = vmatpush2.msra.mxu0 0.0
      %2612 = vmatprep.subr.mxu0 0.0
      %2613 = vmatpush2.msra.mxu0 0.0
      %2614 = vmatprep.subr.mxu0 0.0
      %2615 = vmatpush2.msra.mxu0 0.0
      %2616 = vmatprep.subr.mxu0 0.0
      %2617 = vmatpush2.msra.mxu0 0.0
      %2618 = vmatprep.subr.mxu0 0.0
      %2619 = vmatpush2.msra.mxu0 0.0
      %2620 = vmatprep.subr.mxu0 0.0
      %2621 = vmatpush2.msra.mxu0 0.0
      %2622 = vmatprep.subr.mxu0 0.0
      %2623 = vmatpush2.msra.mxu0 0.0
      %2624 = vmatprep.subr.mxu0 0.0
      %2625 = vmatpush2.msra.mxu0 0.0
      %2626 = vmatprep.subr.mxu0 0.0
      %2627 = vmatpush2.msra.mxu0 0.0
      %2628 = vmatprep.subr.mxu0 0.0
      %2629 = vmatpush2.msra.mxu0 0.0
      %2630 = vmatprep.subr.mxu0 0.0
      %2631 = vmatpush2.msra.mxu0 0.0
      %2632 = vmatprep.mubr.f32.mxu0 0.0
      %2633 = vmatmul.mubr.f32.gmra.mxu0 %v2561
      %v2634 = vpop.f32.mrf.mxu0
      %v2635 = vadd.f32 0.0, %v2634
      %v2636 = vpop.f32.mrf.mxu0
      %2637 = vmatprep.mubr.f32.mxu0 0.0
      %2638 = vmatmul.mubr.f32.gmra.mxu0 %v2563
      %v2639 = vpop.f32.mrf.mxu0
      %v2640 = vadd.f32 0.0, %v2639
      %v2641 = vpop.f32.mrf.mxu0
      %2642 = vdwg.mxu0
      %v2643 = vadd.f32 %v2552, %v2635
      %v2644 = vadd.f32 %v2553, %v2640
      %v2645 = vld [vmem:[%s979] sm:$0xf]
      %v2646 = vrot.slane %v2464, 2
      %v2647 = vrot.slane %v2465, 2
      %v2648 = vsel %vm426, %v2646, %v2647
      %v2649 = vrot.slane %v2466, 2
      %v2650 = vsel %vm426, %v2647, %v2649
      %v2651 = vsel %vm258, %v2648, 0
      %v2653 = vsel %vm258, %v2650, 0
      %v2656 = vsel %vm263, %v2645, 0
      %2658 = vmatprep.subr.mxu0 0.0
      %2659 = vmatpush1.msra.mxu0 0.0
      %2660 = vmatprep.subr.mxu0 0.0
      %2661 = vmatpush1.msra.mxu0 0.0
      %2662 = vmatprep.subr.mxu0 0.0
      %2663 = vmatpush1.msra.mxu0 0.0
      %2664 = vmatprep.subr.mxu0 0.0
      %2665 = vmatpush1.msra.mxu0 0.0
      %2666 = vmatprep.subr.mxu0 0.0
      %2667 = vmatpush1.msra.mxu0 0.0
      %2668 = vmatprep.subr.mxu0 0.0
      %2669 = vmatpush1.msra.mxu0 0.0
      %2670 = vmatprep.subr.mxu0 0.0
      %2671 = vmatpush1.msra.mxu0 0.0
      %2672 = vmatprep.subr.mxu0 0.0
      %2673 = vmatpush1.msra.mxu0 0.0
      %2674 = vmatprep.subr.mxu0 0.0
      %2675 = vmatpush1.msra.mxu0 0.0
      %2676 = vmatprep.subr.mxu0 0.0
      %2677 = vmatpush1.msra.mxu0 0.0
      %2678 = vmatprep.subr.mxu0 0.0
      %2679 = vmatpush1.msra.mxu0 0.0
      %2680 = vmatprep.subr.mxu0 0.0
      %2681 = vmatpush1.msra.mxu0 0.0
      %2682 = vmatprep.subr.mxu0 0.0
      %2683 = vmatpush1.msra.mxu0 0.0
      %2684 = vmatprep.subr.mxu0 0.0
      %2685 = vmatpush1.msra.mxu0 0.0
      %2686 = vmatprep.subr.mxu0 0.0
      %2687 = vmatpush1.msra.mxu0 0.0
      %2688 = vmatprep.subr.mxu0 0.0
      %2689 = vmatpush1.msra.mxu0 %v2656
      %2690 = vmatprep.subr.mxu0 0.0
      %2691 = vmatpush2.msra.mxu0 0.0
      %2692 = vmatprep.subr.mxu0 0.0
      %2693 = vmatpush2.msra.mxu0 0.0
      %2694 = vmatprep.subr.mxu0 0.0
      %2695 = vmatpush2.msra.mxu0 0.0
      %2696 = vmatprep.subr.mxu0 0.0
      %2697 = vmatpush2.msra.mxu0 0.0
      %2698 = vmatprep.subr.mxu0 0.0
      %2699 = vmatpush2.msra.mxu0 0.0
      %2700 = vmatprep.subr.mxu0 0.0
      %2701 = vmatpush2.msra.mxu0 0.0
      %2702 = vmatprep.subr.mxu0 0.0
      %2703 = vmatpush2.msra.mxu0 0.0
      %2704 = vmatprep.subr.mxu0 0.0
      %2705 = vmatpush2.msra.mxu0 0.0
      %2706 = vmatprep.subr.mxu0 0.0
      %2707 = vmatpush2.msra.mxu0 0.0
      %2708 = vmatprep.subr.mxu0 0.0
      %2709 = vmatpush2.msra.mxu0 0.0
      %2710 = vmatprep.subr.mxu0 0.0
      %2711 = vmatpush2.msra.mxu0 0.0
      %2712 = vmatprep.subr.mxu0 0.0
      %2713 = vmatpush2.msra.mxu0 0.0
      %2714 = vmatprep.subr.mxu0 0.0
      %2715 = vmatpush2.msra.mxu0 0.0
      %2716 = vmatprep.subr.mxu0 0.0
      %2717 = vmatpush2.msra.mxu0 0.0
      %2718 = vmatprep.subr.mxu0 0.0
      %2719 = vmatpush2.msra.mxu0 0.0
      %2720 = vmatprep.subr.mxu0 0.0
      %2721 = vmatpush2.msra.mxu0 0.0
      %2722 = vmatprep.mubr.f32.mxu0 0.0
      %2723 = vmatmul.mubr.f32.gmra.mxu0 %v2651
      %v2724 = vpop.f32.mrf.mxu0
      %v2725 = vadd.f32 0.0, %v2724
      %v2726 = vpop.f32.mrf.mxu0
      %2727 = vmatprep.mubr.f32.mxu0 0.0
      %2728 = vmatmul.mubr.f32.gmra.mxu0 %v2653
      %v2729 = vpop.f32.mrf.mxu0
      %v2730 = vadd.f32 0.0, %v2729
      %v2731 = vpop.f32.mrf.mxu0
      %2732 = vdwg.mxu0
      %v2733 = vadd.f32 %v2643, %v2725
      %v2734 = vadd.f32 %v2644, %v2730
      %s2735 = scalar_lea.vmem %s232, 32
      %2736 = vst [vmem:[%s2735] sm:$0xff] %v2733
      %2737 = vst [vmem:[%s2735 + $0x8] sm:$0xff] %v2734
      %v2738 = vadd.f32 %v2733, %v2734
      %v2739 = vrot.slane %v2738, 4
      %v2740 = vadd.f32 %v2738, %v2739
      %v2741 = vrot.slane %v2740, 2
      %v2742 = vadd.f32 %v2740, %v2741
      %v2743 = vrot.slane %v2742, 1
      %v2744 = vadd.f32 %v2742, %v2743
      %v2745 = vadd.f32 %v1912, %v2744
      %v2746 = vmul.f32 %v2733, %v2733
      %v2747 = vmul.f32 %v2734, %v2734
      %v2748 = vadd.f32 %v2746, %v2747
      %v2749 = vrot.slane %v2748, 4
      %v2750 = vadd.f32 %v2748, %v2749
      %v2751 = vrot.slane %v2750, 2
      %v2752 = vadd.f32 %v2750, %v2751
      %v2753 = vrot.slane %v2752, 1
      %v2754 = vadd.f32 %v2752, %v2753
      %v2755 = vadd.f32 %v1922, %v2754
      %v2756 = vld [vmem:[%s1630] sm:$0xff]
      %v2757 = vld [vmem:[%s1630 + $0x8] sm:$0xff]
      %v2758 = vld [vmem:[%s1630 + $0x10] sm:$0x3]
      %v2759 = vld [vmem:[%s1] sm:$0xf]
      %v2760 = vld [vmem:[%s247] sm:$0xf]
      %v2764 = vrot.slane %v2756, 1
      %v2765 = vrot.slane %v2757, 1
      %v2766 = vsel %vm252, %v2764, %v2765
      %v2767 = vrot.slane %v2758, 1
      %v2768 = vsel %vm252, %v2765, %v2767
      %v2769 = vsel %vm258, %v2766, 0
      %v2771 = vsel %vm258, %v2768, 0
      %v2774 = vsel %vm263, %v2760, 0
      %2776 = vmatprep.subr.mxu0 0.0
      %2777 = vmatpush1.msra.mxu0 0.0
      %2778 = vmatprep.subr.mxu0 0.0
      %2779 = vmatpush1.msra.mxu0 0.0
      %2780 = vmatprep.subr.mxu0 0.0
      %2781 = vmatpush1.msra.mxu0 0.0
      %2782 = vmatprep.subr.mxu0 0.0
      %2783 = vmatpush1.msra.mxu0 0.0
      %2784 = vmatprep.subr.mxu0 0.0
      %2785 = vmatpush1.msra.mxu0 0.0
      %2786 = vmatprep.subr.mxu0 0.0
      %2787 = vmatpush1.msra.mxu0 0.0
      %2788 = vmatprep.subr.mxu0 0.0
      %2789 = vmatpush1.msra.mxu0 0.0
      %2790 = vmatprep.subr.mxu0 0.0
      %2791 = vmatpush1.msra.mxu0 0.0
      %2792 = vmatprep.subr.mxu0 0.0
      %2793 = vmatpush1.msra.mxu0 0.0
      %2794 = vmatprep.subr.mxu0 0.0
      %2795 = vmatpush1.msra.mxu0 0.0
      %2796 = vmatprep.subr.mxu0 0.0
      %2797 = vmatpush1.msra.mxu0 0.0
      %2798 = vmatprep.subr.mxu0 0.0
      %2799 = vmatpush1.msra.mxu0 0.0
      %2800 = vmatprep.subr.mxu0 0.0
      %2801 = vmatpush1.msra.mxu0 0.0
      %2802 = vmatprep.subr.mxu0 0.0
      %2803 = vmatpush1.msra.mxu0 0.0
      %2804 = vmatprep.subr.mxu0 0.0
      %2805 = vmatpush1.msra.mxu0 0.0
      %2806 = vmatprep.subr.mxu0 0.0
      %2807 = vmatpush1.msra.mxu0 %v2774
      %2808 = vmatprep.subr.mxu0 0.0
      %2809 = vmatpush2.msra.mxu0 0.0
      %2810 = vmatprep.subr.mxu0 0.0
      %2811 = vmatpush2.msra.mxu0 0.0
      %2812 = vmatprep.subr.mxu0 0.0
      %2813 = vmatpush2.msra.mxu0 0.0
      %2814 = vmatprep.subr.mxu0 0.0
      %2815 = vmatpush2.msra.mxu0 0.0
      %2816 = vmatprep.subr.mxu0 0.0
      %2817 = vmatpush2.msra.mxu0 0.0
      %2818 = vmatprep.subr.mxu0 0.0
      %2819 = vmatpush2.msra.mxu0 0.0
      %2820 = vmatprep.subr.mxu0 0.0
      %2821 = vmatpush2.msra.mxu0 0.0
      %2822 = vmatprep.subr.mxu0 0.0
      %2823 = vmatpush2.msra.mxu0 0.0
      %2824 = vmatprep.subr.mxu0 0.0
      %2825 = vmatpush2.msra.mxu0 0.0
      %2826 = vmatprep.subr.mxu0 0.0
      %2827 = vmatpush2.msra.mxu0 0.0
      %2828 = vmatprep.subr.mxu0 0.0
      %2829 = vmatpush2.msra.mxu0 0.0
      %2830 = vmatprep.subr.mxu0 0.0
      %2831 = vmatpush2.msra.mxu0 0.0
      %2832 = vmatprep.subr.mxu0 0.0
      %2833 = vmatpush2.msra.mxu0 0.0
      %2834 = vmatprep.subr.mxu0 0.0
      %2835 = vmatpush2.msra.mxu0 0.0
      %2836 = vmatprep.subr.mxu0 0.0
      %2837 = vmatpush2.msra.mxu0 0.0
      %2838 = vmatprep.subr.mxu0 0.0
      %2839 = vmatpush2.msra.mxu0 0.0
      %2840 = vmatprep.mubr.f32.mxu0 0.0
      %2841 = vmatmul.mubr.f32.gmra.mxu0 %v2769
      %v2842 = vpop.f32.mrf.mxu0
      %v2843 = vadd.f32 0.0, %v2842
      %v2844 = vpop.f32.mrf.mxu0
      %2845 = vmatprep.mubr.f32.mxu0 0.0
      %2846 = vmatmul.mubr.f32.gmra.mxu0 %v2771
      %v2847 = vpop.f32.mrf.mxu0
      %v2848 = vadd.f32 0.0, %v2847
      %v2849 = vpop.f32.mrf.mxu0
      %2850 = vdwg.mxu0
      %v2851 = vsel %vm258, %v2756, 0
      %v2853 = vsel %vm258, %v2757, 0
      %v2856 = vsel %vm263, %v2759, 0
      %2858 = vmatprep.subr.mxu0 0.0
      %2859 = vmatpush1.msra.mxu0 0.0
      %2860 = vmatprep.subr.mxu0 0.0
      %2861 = vmatpush1.msra.mxu0 0.0
      %2862 = vmatprep.subr.mxu0 0.0
      %2863 = vmatpush1.msra.mxu0 0.0
      %2864 = vmatprep.subr.mxu0 0.0
      %2865 = vmatpush1.msra.mxu0 0.0
      %2866 = vmatprep.subr.mxu0 0.0
      %2867 = vmatpush1.msra.mxu0 0.0
      %2868 = vmatprep.subr.mxu0 0.0
      %2869 = vmatpush1.msra.mxu0 0.0
      %2870 = vmatprep.subr.mxu0 0.0
      %2871 = vmatpush1.msra.mxu0 0.0
      %2872 = vmatprep.subr.mxu0 0.0
      %2873 = vmatpush1.msra.mxu0 0.0
      %2874 = vmatprep.subr.mxu0 0.0
      %2875 = vmatpush1.msra.mxu0 0.0
      %2876 = vmatprep.subr.mxu0 0.0
      %2877 = vmatpush1.msra.mxu0 0.0
      %2878 = vmatprep.subr.mxu0 0.0
      %2879 = vmatpush1.msra.mxu0 0.0
      %2880 = vmatprep.subr.mxu0 0.0
      %2881 = vmatpush1.msra.mxu0 0.0
      %2882 = vmatprep.subr.mxu0 0.0
      %2883 = vmatpush1.msra.mxu0 0.0
      %2884 = vmatprep.subr.mxu0 0.0
      %2885 = vmatpush1.msra.mxu0 0.0
      %2886 = vmatprep.subr.mxu0 0.0
      %2887 = vmatpush1.msra.mxu0 0.0
      %2888 = vmatprep.subr.mxu0 0.0
      %2889 = vmatpush1.msra.mxu0 %v2856
      %2890 = vmatprep.subr.mxu0 0.0
      %2891 = vmatpush2.msra.mxu0 0.0
      %2892 = vmatprep.subr.mxu0 0.0
      %2893 = vmatpush2.msra.mxu0 0.0
      %2894 = vmatprep.subr.mxu0 0.0
      %2895 = vmatpush2.msra.mxu0 0.0
      %2896 = vmatprep.subr.mxu0 0.0
      %2897 = vmatpush2.msra.mxu0 0.0
      %2898 = vmatprep.subr.mxu0 0.0
      %2899 = vmatpush2.msra.mxu0 0.0
      %2900 = vmatprep.subr.mxu0 0.0
      %2901 = vmatpush2.msra.mxu0 0.0
      %2902 = vmatprep.subr.mxu0 0.0
      %2903 = vmatpush2.msra.mxu0 0.0
      %2904 = vmatprep.subr.mxu0 0.0
      %2905 = vmatpush2.msra.mxu0 0.0
      %2906 = vmatprep.subr.mxu0 0.0
      %2907 = vmatpush2.msra.mxu0 0.0
      %2908 = vmatprep.subr.mxu0 0.0
      %2909 = vmatpush2.msra.mxu0 0.0
      %2910 = vmatprep.subr.mxu0 0.0
      %2911 = vmatpush2.msra.mxu0 0.0
      %2912 = vmatprep.subr.mxu0 0.0
      %2913 = vmatpush2.msra.mxu0 0.0
      %2914 = vmatprep.subr.mxu0 0.0
      %2915 = vmatpush2.msra.mxu0 0.0
      %2916 = vmatprep.subr.mxu0 0.0
      %2917 = vmatpush2.msra.mxu0 0.0
      %2918 = vmatprep.subr.mxu0 0.0
      %2919 = vmatpush2.msra.mxu0 0.0
      %2920 = vmatprep.subr.mxu0 0.0
      %2921 = vmatpush2.msra.mxu0 0.0
      %2922 = vmatprep.mubr.f32.mxu0 0.0
      %2923 = vmatmul.mubr.f32.gmra.mxu0 %v2851
      %v2924 = vpop.f32.mrf.mxu0
      %v2925 = vadd.f32 %v2843, %v2924
      %v2926 = vpop.f32.mrf.mxu0
      %2927 = vmatprep.mubr.f32.mxu0 0.0
      %2928 = vmatmul.mubr.f32.gmra.mxu0 %v2853
      %v2929 = vpop.f32.mrf.mxu0
      %v2930 = vadd.f32 %v2848, %v2929
      %v2931 = vpop.f32.mrf.mxu0
      %2932 = vdwg.mxu0
      %v2933 = vld [vmem:[%s424] sm:$0xf]
      %v2934 = vrot.slane %v2756, 2
      %v2935 = vrot.slane %v2757, 2
      %v2936 = vsel %vm426, %v2934, %v2935
      %v2937 = vrot.slane %v2758, 2
      %v2938 = vsel %vm426, %v2935, %v2937
      %v2939 = vsel %vm258, %v2936, 0
      %v2941 = vsel %vm258, %v2938, 0
      %v2944 = vsel %vm263, %v2933, 0
      %2946 = vmatprep.subr.mxu0 0.0
      %2947 = vmatpush1.msra.mxu0 0.0
      %2948 = vmatprep.subr.mxu0 0.0
      %2949 = vmatpush1.msra.mxu0 0.0
      %2950 = vmatprep.subr.mxu0 0.0
      %2951 = vmatpush1.msra.mxu0 0.0
      %2952 = vmatprep.subr.mxu0 0.0
      %2953 = vmatpush1.msra.mxu0 0.0
      %2954 = vmatprep.subr.mxu0 0.0
      %2955 = vmatpush1.msra.mxu0 0.0
      %2956 = vmatprep.subr.mxu0 0.0
      %2957 = vmatpush1.msra.mxu0 0.0
      %2958 = vmatprep.subr.mxu0 0.0
      %2959 = vmatpush1.msra.mxu0 0.0
      %2960 = vmatprep.subr.mxu0 0.0
      %2961 = vmatpush1.msra.mxu0 0.0
      %2962 = vmatprep.subr.mxu0 0.0
      %2963 = vmatpush1.msra.mxu0 0.0
      %2964 = vmatprep.subr.mxu0 0.0
      %2965 = vmatpush1.msra.mxu0 0.0
      %2966 = vmatprep.subr.mxu0 0.0
      %2967 = vmatpush1.msra.mxu0 0.0
      %2968 = vmatprep.subr.mxu0 0.0
      %2969 = vmatpush1.msra.mxu0 0.0
      %2970 = vmatprep.subr.mxu0 0.0
      %2971 = vmatpush1.msra.mxu0 0.0
      %2972 = vmatprep.subr.mxu0 0.0
      %2973 = vmatpush1.msra.mxu0 0.0
      %2974 = vmatprep.subr.mxu0 0.0
      %2975 = vmatpush1.msra.mxu0 0.0
      %2976 = vmatprep.subr.mxu0 0.0
      %2977 = vmatpush1.msra.mxu0 %v2944
      %2978 = vmatprep.subr.mxu0 0.0
      %2979 = vmatpush2.msra.mxu0 0.0
      %2980 = vmatprep.subr.mxu0 0.0
      %2981 = vmatpush2.msra.mxu0 0.0
      %2982 = vmatprep.subr.mxu0 0.0
      %2983 = vmatpush2.msra.mxu0 0.0
      %2984 = vmatprep.subr.mxu0 0.0
      %2985 = vmatpush2.msra.mxu0 0.0
      %2986 = vmatprep.subr.mxu0 0.0
      %2987 = vmatpush2.msra.mxu0 0.0
      %2988 = vmatprep.subr.mxu0 0.0
      %2989 = vmatpush2.msra.mxu0 0.0
      %2990 = vmatprep.subr.mxu0 0.0
      %2991 = vmatpush2.msra.mxu0 0.0
      %2992 = vmatprep.subr.mxu0 0.0
      %2993 = vmatpush2.msra.mxu0 0.0
      %2994 = vmatprep.subr.mxu0 0.0
      %2995 = vmatpush2.msra.mxu0 0.0
      %2996 = vmatprep.subr.mxu0 0.0
      %2997 = vmatpush2.msra.mxu0 0.0
      %2998 = vmatprep.subr.mxu0 0.0
      %2999 = vmatpush2.msra.mxu0 0.0
      %3000 = vmatprep.subr.mxu0 0.0
      %3001 = vmatpush2.msra.mxu0 0.0
      %3002 = vmatprep.subr.mxu0 0.0
      %3003 = vmatpush2.msra.mxu0 0.0
      %3004 = vmatprep.subr.mxu0 0.0
      %3005 = vmatpush2.msra.mxu0 0.0
      %3006 = vmatprep.subr.mxu0 0.0
      %3007 = vmatpush2.msra.mxu0 0.0
      %3008 = vmatprep.subr.mxu0 0.0
      %3009 = vmatpush2.msra.mxu0 0.0
      %3010 = vmatprep.mubr.f32.mxu0 0.0
      %3011 = vmatmul.mubr.f32.gmra.mxu0 %v2939
      %v3012 = vpop.f32.mrf.mxu0
      %v3013 = vadd.f32 0.0, %v3012
      %v3014 = vpop.f32.mrf.mxu0
      %3015 = vmatprep.mubr.f32.mxu0 0.0
      %3016 = vmatmul.mubr.f32.gmra.mxu0 %v2941
      %v3017 = vpop.f32.mrf.mxu0
      %v3018 = vadd.f32 0.0, %v3017
      %v3019 = vpop.f32.mrf.mxu0
      %3020 = vdwg.mxu0
      %v3021 = vadd.f32 %v2925, %v3013
      %v3022 = vadd.f32 %v2930, %v3018
      %v3023 = vld [vmem:[%s2463] sm:$0xff]
      %v3024 = vld [vmem:[%s2463 + $0x8] sm:$0xff]
      %v3025 = vld [vmem:[%s2463 + $0x10] sm:$0x3]
      %v3026 = vld [vmem:[%s522] sm:$0xf]
      %v3028 = vsel %vm258, %v3023, 0
      %v3031 = vsel %vm258, %v3024, 0
      %v3034 = vsel %vm263, %v3026, 0
      %3036 = vmatprep.subr.mxu0 0.0
      %3037 = vmatpush1.msra.mxu0 0.0
      %3038 = vmatprep.subr.mxu0 0.0
      %3039 = vmatpush1.msra.mxu0 0.0
      %3040 = vmatprep.subr.mxu0 0.0
      %3041 = vmatpush1.msra.mxu0 0.0
      %3042 = vmatprep.subr.mxu0 0.0
      %3043 = vmatpush1.msra.mxu0 0.0
      %3044 = vmatprep.subr.mxu0 0.0
      %3045 = vmatpush1.msra.mxu0 0.0
      %3046 = vmatprep.subr.mxu0 0.0
      %3047 = vmatpush1.msra.mxu0 0.0
      %3048 = vmatprep.subr.mxu0 0.0
      %3049 = vmatpush1.msra.mxu0 0.0
      %3050 = vmatprep.subr.mxu0 0.0
      %3051 = vmatpush1.msra.mxu0 0.0
      %3052 = vmatprep.subr.mxu0 0.0
      %3053 = vmatpush1.msra.mxu0 0.0
      %3054 = vmatprep.subr.mxu0 0.0
      %3055 = vmatpush1.msra.mxu0 0.0
      %3056 = vmatprep.subr.mxu0 0.0
      %3057 = vmatpush1.msra.mxu0 0.0
      %3058 = vmatprep.subr.mxu0 0.0
      %3059 = vmatpush1.msra.mxu0 0.0
      %3060 = vmatprep.subr.mxu0 0.0
      %3061 = vmatpush1.msra.mxu0 0.0
      %3062 = vmatprep.subr.mxu0 0.0
      %3063 = vmatpush1.msra.mxu0 0.0
      %3064 = vmatprep.subr.mxu0 0.0
      %3065 = vmatpush1.msra.mxu0 0.0
      %3066 = vmatprep.subr.mxu0 0.0
      %3067 = vmatpush1.msra.mxu0 %v3034
      %3068 = vmatprep.subr.mxu0 0.0
      %3069 = vmatpush2.msra.mxu0 0.0
      %3070 = vmatprep.subr.mxu0 0.0
      %3071 = vmatpush2.msra.mxu0 0.0
      %3072 = vmatprep.subr.mxu0 0.0
      %3073 = vmatpush2.msra.mxu0 0.0
      %3074 = vmatprep.subr.mxu0 0.0
      %3075 = vmatpush2.msra.mxu0 0.0
      %3076 = vmatprep.subr.mxu0 0.0
      %3077 = vmatpush2.msra.mxu0 0.0
      %3078 = vmatprep.subr.mxu0 0.0
      %3079 = vmatpush2.msra.mxu0 0.0
      %3080 = vmatprep.subr.mxu0 0.0
      %3081 = vmatpush2.msra.mxu0 0.0
      %3082 = vmatprep.subr.mxu0 0.0
      %3083 = vmatpush2.msra.mxu0 0.0
      %3084 = vmatprep.subr.mxu0 0.0
      %3085 = vmatpush2.msra.mxu0 0.0
      %3086 = vmatprep.subr.mxu0 0.0
      %3087 = vmatpush2.msra.mxu0 0.0
      %3088 = vmatprep.subr.mxu0 0.0
      %3089 = vmatpush2.msra.mxu0 0.0
      %3090 = vmatprep.subr.mxu0 0.0
      %3091 = vmatpush2.msra.mxu0 0.0
      %3092 = vmatprep.subr.mxu0 0.0
      %3093 = vmatpush2.msra.mxu0 0.0
      %3094 = vmatprep.subr.mxu0 0.0
      %3095 = vmatpush2.msra.mxu0 0.0
      %3096 = vmatprep.subr.mxu0 0.0
      %3097 = vmatpush2.msra.mxu0 0.0
      %3098 = vmatprep.subr.mxu0 0.0
      %3099 = vmatpush2.msra.mxu0 0.0
      %3100 = vmatprep.mubr.f32.mxu0 0.0
      %3101 = vmatmul.mubr.f32.gmra.mxu0 %v3028
      %v3102 = vpop.f32.mrf.mxu0
      %v3103 = vadd.f32 0.0, %v3102
      %v3104 = vpop.f32.mrf.mxu0
      %3105 = vmatprep.mubr.f32.mxu0 0.0
      %3106 = vmatmul.mubr.f32.gmra.mxu0 %v3031
      %v3107 = vpop.f32.mrf.mxu0
      %v3108 = vadd.f32 0.0, %v3107
      %v3109 = vpop.f32.mrf.mxu0
      %3110 = vdwg.mxu0
      %v3111 = vadd.f32 %v3021, %v3103
      %v3112 = vadd.f32 %v3022, %v3108
      %v3113 = vld [vmem:[%s610] sm:$0xf]
      %v3115 = vrot.slane %v3023, 1
      %v3116 = vrot.slane %v3024, 1
      %v3117 = vsel %vm252, %v3115, %v3116
      %v3118 = vrot.slane %v3025, 1
      %v3119 = vsel %vm252, %v3116, %v3118
      %v3120 = vsel %vm258, %v3117, 0
      %v3122 = vsel %vm258, %v3119, 0
      %v3125 = vsel %vm263, %v3113, 0
      %3127 = vmatprep.subr.mxu0 0.0
      %3128 = vmatpush1.msra.mxu0 0.0
      %3129 = vmatprep.subr.mxu0 0.0
      %3130 = vmatpush1.msra.mxu0 0.0
      %3131 = vmatprep.subr.mxu0 0.0
      %3132 = vmatpush1.msra.mxu0 0.0
      %3133 = vmatprep.subr.mxu0 0.0
      %3134 = vmatpush1.msra.mxu0 0.0
      %3135 = vmatprep.subr.mxu0 0.0
      %3136 = vmatpush1.msra.mxu0 0.0
      %3137 = vmatprep.subr.mxu0 0.0
      %3138 = vmatpush1.msra.mxu0 0.0
      %3139 = vmatprep.subr.mxu0 0.0
      %3140 = vmatpush1.msra.mxu0 0.0
      %3141 = vmatprep.subr.mxu0 0.0
      %3142 = vmatpush1.msra.mxu0 0.0
      %3143 = vmatprep.subr.mxu0 0.0
      %3144 = vmatpush1.msra.mxu0 0.0
      %3145 = vmatprep.subr.mxu0 0.0
      %3146 = vmatpush1.msra.mxu0 0.0
      %3147 = vmatprep.subr.mxu0 0.0
      %3148 = vmatpush1.msra.mxu0 0.0
      %3149 = vmatprep.subr.mxu0 0.0
      %3150 = vmatpush1.msra.mxu0 0.0
      %3151 = vmatprep.subr.mxu0 0.0
      %3152 = vmatpush1.msra.mxu0 0.0
      %3153 = vmatprep.subr.mxu0 0.0
      %3154 = vmatpush1.msra.mxu0 0.0
      %3155 = vmatprep.subr.mxu0 0.0
      %3156 = vmatpush1.msra.mxu0 0.0
      %3157 = vmatprep.subr.mxu0 0.0
      %3158 = vmatpush1.msra.mxu0 %v3125
      %3159 = vmatprep.subr.mxu0 0.0
      %3160 = vmatpush2.msra.mxu0 0.0
      %3161 = vmatprep.subr.mxu0 0.0
      %3162 = vmatpush2.msra.mxu0 0.0
      %3163 = vmatprep.subr.mxu0 0.0
      %3164 = vmatpush2.msra.mxu0 0.0
      %3165 = vmatprep.subr.mxu0 0.0
      %3166 = vmatpush2.msra.mxu0 0.0
      %3167 = vmatprep.subr.mxu0 0.0
      %3168 = vmatpush2.msra.mxu0 0.0
      %3169 = vmatprep.subr.mxu0 0.0
      %3170 = vmatpush2.msra.mxu0 0.0
      %3171 = vmatprep.subr.mxu0 0.0
      %3172 = vmatpush2.msra.mxu0 0.0
      %3173 = vmatprep.subr.mxu0 0.0
      %3174 = vmatpush2.msra.mxu0 0.0
      %3175 = vmatprep.subr.mxu0 0.0
      %3176 = vmatpush2.msra.mxu0 0.0
      %3177 = vmatprep.subr.mxu0 0.0
      %3178 = vmatpush2.msra.mxu0 0.0
      %3179 = vmatprep.subr.mxu0 0.0
      %3180 = vmatpush2.msra.mxu0 0.0
      %3181 = vmatprep.subr.mxu0 0.0
      %3182 = vmatpush2.msra.mxu0 0.0
      %3183 = vmatprep.subr.mxu0 0.0
      %3184 = vmatpush2.msra.mxu0 0.0
      %3185 = vmatprep.subr.mxu0 0.0
      %3186 = vmatpush2.msra.mxu0 0.0
      %3187 = vmatprep.subr.mxu0 0.0
      %3188 = vmatpush2.msra.mxu0 0.0
      %3189 = vmatprep.subr.mxu0 0.0
      %3190 = vmatpush2.msra.mxu0 0.0
      %3191 = vmatprep.mubr.f32.mxu0 0.0
      %3192 = vmatmul.mubr.f32.gmra.mxu0 %v3120
      %v3193 = vpop.f32.mrf.mxu0
      %v3194 = vadd.f32 0.0, %v3193
      %v3195 = vpop.f32.mrf.mxu0
      %3196 = vmatprep.mubr.f32.mxu0 0.0
      %3197 = vmatmul.mubr.f32.gmra.mxu0 %v3122
      %v3198 = vpop.f32.mrf.mxu0
      %v3199 = vadd.f32 0.0, %v3198
      %v3200 = vpop.f32.mrf.mxu0
      %3201 = vdwg.mxu0
      %v3202 = vadd.f32 %v3111, %v3194
      %v3203 = vadd.f32 %v3112, %v3199
      %v3204 = vld [vmem:[%s702] sm:$0xf]
      %v3205 = vrot.slane %v3023, 2
      %v3206 = vrot.slane %v3024, 2
      %v3207 = vsel %vm426, %v3205, %v3206
      %v3208 = vrot.slane %v3025, 2
      %v3209 = vsel %vm426, %v3206, %v3208
      %v3210 = vsel %vm258, %v3207, 0
      %v3212 = vsel %vm258, %v3209, 0
      %v3215 = vsel %vm263, %v3204, 0
      %3217 = vmatprep.subr.mxu0 0.0
      %3218 = vmatpush1.msra.mxu0 0.0
      %3219 = vmatprep.subr.mxu0 0.0
      %3220 = vmatpush1.msra.mxu0 0.0
      %3221 = vmatprep.subr.mxu0 0.0
      %3222 = vmatpush1.msra.mxu0 0.0
      %3223 = vmatprep.subr.mxu0 0.0
      %3224 = vmatpush1.msra.mxu0 0.0
      %3225 = vmatprep.subr.mxu0 0.0
      %3226 = vmatpush1.msra.mxu0 0.0
      %3227 = vmatprep.subr.mxu0 0.0
      %3228 = vmatpush1.msra.mxu0 0.0
      %3229 = vmatprep.subr.mxu0 0.0
      %3230 = vmatpush1.msra.mxu0 0.0
      %3231 = vmatprep.subr.mxu0 0.0
      %3232 = vmatpush1.msra.mxu0 0.0
      %3233 = vmatprep.subr.mxu0 0.0
      %3234 = vmatpush1.msra.mxu0 0.0
      %3235 = vmatprep.subr.mxu0 0.0
      %3236 = vmatpush1.msra.mxu0 0.0
      %3237 = vmatprep.subr.mxu0 0.0
      %3238 = vmatpush1.msra.mxu0 0.0
      %3239 = vmatprep.subr.mxu0 0.0
      %3240 = vmatpush1.msra.mxu0 0.0
      %3241 = vmatprep.subr.mxu0 0.0
      %3242 = vmatpush1.msra.mxu0 0.0
      %3243 = vmatprep.subr.mxu0 0.0
      %3244 = vmatpush1.msra.mxu0 0.0
      %3245 = vmatprep.subr.mxu0 0.0
      %3246 = vmatpush1.msra.mxu0 0.0
      %3247 = vmatprep.subr.mxu0 0.0
      %3248 = vmatpush1.msra.mxu0 %v3215
      %3249 = vmatprep.subr.mxu0 0.0
      %3250 = vmatpush2.msra.mxu0 0.0
      %3251 = vmatprep.subr.mxu0 0.0
      %3252 = vmatpush2.msra.mxu0 0.0
      %3253 = vmatprep.subr.mxu0 0.0
      %3254 = vmatpush2.msra.mxu0 0.0
      %3255 = vmatprep.subr.mxu0 0.0
      %3256 = vmatpush2.msra.mxu0 0.0
      %3257 = vmatprep.subr.mxu0 0.0
      %3258 = vmatpush2.msra.mxu0 0.0
      %3259 = vmatprep.subr.mxu0 0.0
      %3260 = vmatpush2.msra.mxu0 0.0
      %3261 = vmatprep.subr.mxu0 0.0
      %3262 = vmatpush2.msra.mxu0 0.0
      %3263 = vmatprep.subr.mxu0 0.0
      %3264 = vmatpush2.msra.mxu0 0.0
      %3265 = vmatprep.subr.mxu0 0.0
      %3266 = vmatpush2.msra.mxu0 0.0
      %3267 = vmatprep.subr.mxu0 0.0
      %3268 = vmatpush2.msra.mxu0 0.0
      %3269 = vmatprep.subr.mxu0 0.0
      %3270 = vmatpush2.msra.mxu0 0.0
      %3271 = vmatprep.subr.mxu0 0.0
      %3272 = vmatpush2.msra.mxu0 0.0
      %3273 = vmatprep.subr.mxu0 0.0
      %3274 = vmatpush2.msra.mxu0 0.0
      %3275 = vmatprep.subr.mxu0 0.0
      %3276 = vmatpush2.msra.mxu0 0.0
      %3277 = vmatprep.subr.mxu0 0.0
      %3278 = vmatpush2.msra.mxu0 0.0
      %3279 = vmatprep.subr.mxu0 0.0
      %3280 = vmatpush2.msra.mxu0 0.0
      %3281 = vmatprep.mubr.f32.mxu0 0.0
      %3282 = vmatmul.mubr.f32.gmra.mxu0 %v3210
      %v3283 = vpop.f32.mrf.mxu0
      %v3284 = vadd.f32 0.0, %v3283
      %v3285 = vpop.f32.mrf.mxu0
      %3286 = vmatprep.mubr.f32.mxu0 0.0
      %3287 = vmatmul.mubr.f32.gmra.mxu0 %v3212
      %v3288 = vpop.f32.mrf.mxu0
      %v3289 = vadd.f32 0.0, %v3288
      %v3290 = vpop.f32.mrf.mxu0
      %3291 = vdwg.mxu0
      %v3292 = vadd.f32 %v3202, %v3284
      %v3293 = vadd.f32 %v3203, %v3289
      %s3294 = sadd.s32 %s240, 5
      %s3295 = smul.u32 %s3294, 24
      %s3296 = scalar_lea.vmem %s222, %s3295
      %v3297 = vld [vmem:[%s3296] sm:$0xff]
      %v3298 = vld [vmem:[%s3296 + $0x8] sm:$0xff]
      %v3299 = vld [vmem:[%s3296 + $0x10] sm:$0x3]
      %v3300 = vld [vmem:[%s799] sm:$0xf]
      %v3302 = vsel %vm258, %v3297, 0
      %v3305 = vsel %vm258, %v3298, 0
      %v3308 = vsel %vm263, %v3300, 0
      %3310 = vmatprep.subr.mxu0 0.0
      %3311 = vmatpush1.msra.mxu0 0.0
      %3312 = vmatprep.subr.mxu0 0.0
      %3313 = vmatpush1.msra.mxu0 0.0
      %3314 = vmatprep.subr.mxu0 0.0
      %3315 = vmatpush1.msra.mxu0 0.0
      %3316 = vmatprep.subr.mxu0 0.0
      %3317 = vmatpush1.msra.mxu0 0.0
      %3318 = vmatprep.subr.mxu0 0.0
      %3319 = vmatpush1.msra.mxu0 0.0
      %3320 = vmatprep.subr.mxu0 0.0
      %3321 = vmatpush1.msra.mxu0 0.0
      %3322 = vmatprep.subr.mxu0 0.0
      %3323 = vmatpush1.msra.mxu0 0.0
      %3324 = vmatprep.subr.mxu0 0.0
      %3325 = vmatpush1.msra.mxu0 0.0
      %3326 = vmatprep.subr.mxu0 0.0
      %3327 = vmatpush1.msra.mxu0 0.0
      %3328 = vmatprep.subr.mxu0 0.0
      %3329 = vmatpush1.msra.mxu0 0.0
      %3330 = vmatprep.subr.mxu0 0.0
      %3331 = vmatpush1.msra.mxu0 0.0
      %3332 = vmatprep.subr.mxu0 0.0
      %3333 = vmatpush1.msra.mxu0 0.0
      %3334 = vmatprep.subr.mxu0 0.0
      %3335 = vmatpush1.msra.mxu0 0.0
      %3336 = vmatprep.subr.mxu0 0.0
      %3337 = vmatpush1.msra.mxu0 0.0
      %3338 = vmatprep.subr.mxu0 0.0
      %3339 = vmatpush1.msra.mxu0 0.0
      %3340 = vmatprep.subr.mxu0 0.0
      %3341 = vmatpush1.msra.mxu0 %v3308
      %3342 = vmatprep.subr.mxu0 0.0
      %3343 = vmatpush2.msra.mxu0 0.0
      %3344 = vmatprep.subr.mxu0 0.0
      %3345 = vmatpush2.msra.mxu0 0.0
      %3346 = vmatprep.subr.mxu0 0.0
      %3347 = vmatpush2.msra.mxu0 0.0
      %3348 = vmatprep.subr.mxu0 0.0
      %3349 = vmatpush2.msra.mxu0 0.0
      %3350 = vmatprep.subr.mxu0 0.0
      %3351 = vmatpush2.msra.mxu0 0.0
      %3352 = vmatprep.subr.mxu0 0.0
      %3353 = vmatpush2.msra.mxu0 0.0
      %3354 = vmatprep.subr.mxu0 0.0
      %3355 = vmatpush2.msra.mxu0 0.0
      %3356 = vmatprep.subr.mxu0 0.0
      %3357 = vmatpush2.msra.mxu0 0.0
      %3358 = vmatprep.subr.mxu0 0.0
      %3359 = vmatpush2.msra.mxu0 0.0
      %3360 = vmatprep.subr.mxu0 0.0
      %3361 = vmatpush2.msra.mxu0 0.0
      %3362 = vmatprep.subr.mxu0 0.0
      %3363 = vmatpush2.msra.mxu0 0.0
      %3364 = vmatprep.subr.mxu0 0.0
      %3365 = vmatpush2.msra.mxu0 0.0
      %3366 = vmatprep.subr.mxu0 0.0
      %3367 = vmatpush2.msra.mxu0 0.0
      %3368 = vmatprep.subr.mxu0 0.0
      %3369 = vmatpush2.msra.mxu0 0.0
      %3370 = vmatprep.subr.mxu0 0.0
      %3371 = vmatpush2.msra.mxu0 0.0
      %3372 = vmatprep.subr.mxu0 0.0
      %3373 = vmatpush2.msra.mxu0 0.0
      %3374 = vmatprep.mubr.f32.mxu0 0.0
      %3375 = vmatmul.mubr.f32.gmra.mxu0 %v3302
      %v3376 = vpop.f32.mrf.mxu0
      %v3377 = vadd.f32 0.0, %v3376
      %v3378 = vpop.f32.mrf.mxu0
      %3379 = vmatprep.mubr.f32.mxu0 0.0
      %3380 = vmatmul.mubr.f32.gmra.mxu0 %v3305
      %v3381 = vpop.f32.mrf.mxu0
      %v3382 = vadd.f32 0.0, %v3381
      %v3383 = vpop.f32.mrf.mxu0
      %3384 = vdwg.mxu0
      %v3385 = vadd.f32 %v3292, %v3377
      %v3386 = vadd.f32 %v3293, %v3382
      %v3387 = vld [vmem:[%s887] sm:$0xf]
      %v3389 = vrot.slane %v3297, 1
      %v3390 = vrot.slane %v3298, 1
      %v3391 = vsel %vm252, %v3389, %v3390
      %v3392 = vrot.slane %v3299, 1
      %v3393 = vsel %vm252, %v3390, %v3392
      %v3394 = vsel %vm258, %v3391, 0
      %v3396 = vsel %vm258, %v3393, 0
      %v3399 = vsel %vm263, %v3387, 0
      %3401 = vmatprep.subr.mxu0 0.0
      %3402 = vmatpush1.msra.mxu0 0.0
      %3403 = vmatprep.subr.mxu0 0.0
      %3404 = vmatpush1.msra.mxu0 0.0
      %3405 = vmatprep.subr.mxu0 0.0
      %3406 = vmatpush1.msra.mxu0 0.0
      %3407 = vmatprep.subr.mxu0 0.0
      %3408 = vmatpush1.msra.mxu0 0.0
      %3409 = vmatprep.subr.mxu0 0.0
      %3410 = vmatpush1.msra.mxu0 0.0
      %3411 = vmatprep.subr.mxu0 0.0
      %3412 = vmatpush1.msra.mxu0 0.0
      %3413 = vmatprep.subr.mxu0 0.0
      %3414 = vmatpush1.msra.mxu0 0.0
      %3415 = vmatprep.subr.mxu0 0.0
      %3416 = vmatpush1.msra.mxu0 0.0
      %3417 = vmatprep.subr.mxu0 0.0
      %3418 = vmatpush1.msra.mxu0 0.0
      %3419 = vmatprep.subr.mxu0 0.0
      %3420 = vmatpush1.msra.mxu0 0.0
      %3421 = vmatprep.subr.mxu0 0.0
      %3422 = vmatpush1.msra.mxu0 0.0
      %3423 = vmatprep.subr.mxu0 0.0
      %3424 = vmatpush1.msra.mxu0 0.0
      %3425 = vmatprep.subr.mxu0 0.0
      %3426 = vmatpush1.msra.mxu0 0.0
      %3427 = vmatprep.subr.mxu0 0.0
      %3428 = vmatpush1.msra.mxu0 0.0
      %3429 = vmatprep.subr.mxu0 0.0
      %3430 = vmatpush1.msra.mxu0 0.0
      %3431 = vmatprep.subr.mxu0 0.0
      %3432 = vmatpush1.msra.mxu0 %v3399
      %3433 = vmatprep.subr.mxu0 0.0
      %3434 = vmatpush2.msra.mxu0 0.0
      %3435 = vmatprep.subr.mxu0 0.0
      %3436 = vmatpush2.msra.mxu0 0.0
      %3437 = vmatprep.subr.mxu0 0.0
      %3438 = vmatpush2.msra.mxu0 0.0
      %3439 = vmatprep.subr.mxu0 0.0
      %3440 = vmatpush2.msra.mxu0 0.0
      %3441 = vmatprep.subr.mxu0 0.0
      %3442 = vmatpush2.msra.mxu0 0.0
      %3443 = vmatprep.subr.mxu0 0.0
      %3444 = vmatpush2.msra.mxu0 0.0
      %3445 = vmatprep.subr.mxu0 0.0
      %3446 = vmatpush2.msra.mxu0 0.0
      %3447 = vmatprep.subr.mxu0 0.0
      %3448 = vmatpush2.msra.mxu0 0.0
      %3449 = vmatprep.subr.mxu0 0.0
      %3450 = vmatpush2.msra.mxu0 0.0
      %3451 = vmatprep.subr.mxu0 0.0
      %3452 = vmatpush2.msra.mxu0 0.0
      %3453 = vmatprep.subr.mxu0 0.0
      %3454 = vmatpush2.msra.mxu0 0.0
      %3455 = vmatprep.subr.mxu0 0.0
      %3456 = vmatpush2.msra.mxu0 0.0
      %3457 = vmatprep.subr.mxu0 0.0
      %3458 = vmatpush2.msra.mxu0 0.0
      %3459 = vmatprep.subr.mxu0 0.0
      %3460 = vmatpush2.msra.mxu0 0.0
      %3461 = vmatprep.subr.mxu0 0.0
      %3462 = vmatpush2.msra.mxu0 0.0
      %3463 = vmatprep.subr.mxu0 0.0
      %3464 = vmatpush2.msra.mxu0 0.0
      %3465 = vmatprep.mubr.f32.mxu0 0.0
      %3466 = vmatmul.mubr.f32.gmra.mxu0 %v3394
      %v3467 = vpop.f32.mrf.mxu0
      %v3468 = vadd.f32 0.0, %v3467
      %v3469 = vpop.f32.mrf.mxu0
      %3470 = vmatprep.mubr.f32.mxu0 0.0
      %3471 = vmatmul.mubr.f32.gmra.mxu0 %v3396
      %v3472 = vpop.f32.mrf.mxu0
      %v3473 = vadd.f32 0.0, %v3472
      %v3474 = vpop.f32.mrf.mxu0
      %3475 = vdwg.mxu0
      %v3476 = vadd.f32 %v3385, %v3468
      %v3477 = vadd.f32 %v3386, %v3473
      %v3478 = vld [vmem:[%s979] sm:$0xf]
      %v3479 = vrot.slane %v3297, 2
      %v3480 = vrot.slane %v3298, 2
      %v3481 = vsel %vm426, %v3479, %v3480
      %v3482 = vrot.slane %v3299, 2
      %v3483 = vsel %vm426, %v3480, %v3482
      %v3484 = vsel %vm258, %v3481, 0
      %v3486 = vsel %vm258, %v3483, 0
      %v3489 = vsel %vm263, %v3478, 0
      %3491 = vmatprep.subr.mxu0 0.0
      %3492 = vmatpush1.msra.mxu0 0.0
      %3493 = vmatprep.subr.mxu0 0.0
      %3494 = vmatpush1.msra.mxu0 0.0
      %3495 = vmatprep.subr.mxu0 0.0
      %3496 = vmatpush1.msra.mxu0 0.0
      %3497 = vmatprep.subr.mxu0 0.0
      %3498 = vmatpush1.msra.mxu0 0.0
      %3499 = vmatprep.subr.mxu0 0.0
      %3500 = vmatpush1.msra.mxu0 0.0
      %3501 = vmatprep.subr.mxu0 0.0
      %3502 = vmatpush1.msra.mxu0 0.0
      %3503 = vmatprep.subr.mxu0 0.0
      %3504 = vmatpush1.msra.mxu0 0.0
      %3505 = vmatprep.subr.mxu0 0.0
      %3506 = vmatpush1.msra.mxu0 0.0
      %3507 = vmatprep.subr.mxu0 0.0
      %3508 = vmatpush1.msra.mxu0 0.0
      %3509 = vmatprep.subr.mxu0 0.0
      %3510 = vmatpush1.msra.mxu0 0.0
      %3511 = vmatprep.subr.mxu0 0.0
      %3512 = vmatpush1.msra.mxu0 0.0
      %3513 = vmatprep.subr.mxu0 0.0
      %3514 = vmatpush1.msra.mxu0 0.0
      %3515 = vmatprep.subr.mxu0 0.0
      %3516 = vmatpush1.msra.mxu0 0.0
      %3517 = vmatprep.subr.mxu0 0.0
      %3518 = vmatpush1.msra.mxu0 0.0
      %3519 = vmatprep.subr.mxu0 0.0
      %3520 = vmatpush1.msra.mxu0 0.0
      %3521 = vmatprep.subr.mxu0 0.0
      %3522 = vmatpush1.msra.mxu0 %v3489
      %3523 = vmatprep.subr.mxu0 0.0
      %3524 = vmatpush2.msra.mxu0 0.0
      %3525 = vmatprep.subr.mxu0 0.0
      %3526 = vmatpush2.msra.mxu0 0.0
      %3527 = vmatprep.subr.mxu0 0.0
      %3528 = vmatpush2.msra.mxu0 0.0
      %3529 = vmatprep.subr.mxu0 0.0
      %3530 = vmatpush2.msra.mxu0 0.0
      %3531 = vmatprep.subr.mxu0 0.0
      %3532 = vmatpush2.msra.mxu0 0.0
      %3533 = vmatprep.subr.mxu0 0.0
      %3534 = vmatpush2.msra.mxu0 0.0
      %3535 = vmatprep.subr.mxu0 0.0
      %3536 = vmatpush2.msra.mxu0 0.0
      %3537 = vmatprep.subr.mxu0 0.0
      %3538 = vmatpush2.msra.mxu0 0.0
      %3539 = vmatprep.subr.mxu0 0.0
      %3540 = vmatpush2.msra.mxu0 0.0
      %3541 = vmatprep.subr.mxu0 0.0
      %3542 = vmatpush2.msra.mxu0 0.0
      %3543 = vmatprep.subr.mxu0 0.0
      %3544 = vmatpush2.msra.mxu0 0.0
      %3545 = vmatprep.subr.mxu0 0.0
      %3546 = vmatpush2.msra.mxu0 0.0
      %3547 = vmatprep.subr.mxu0 0.0
      %3548 = vmatpush2.msra.mxu0 0.0
      %3549 = vmatprep.subr.mxu0 0.0
      %3550 = vmatpush2.msra.mxu0 0.0
      %3551 = vmatprep.subr.mxu0 0.0
      %3552 = vmatpush2.msra.mxu0 0.0
      %3553 = vmatprep.subr.mxu0 0.0
      %3554 = vmatpush2.msra.mxu0 0.0
      %3555 = vmatprep.mubr.f32.mxu0 0.0
      %3556 = vmatmul.mubr.f32.gmra.mxu0 %v3484
      %v3557 = vpop.f32.mrf.mxu0
      %v3558 = vadd.f32 0.0, %v3557
      %v3559 = vpop.f32.mrf.mxu0
      %3560 = vmatprep.mubr.f32.mxu0 0.0
      %3561 = vmatmul.mubr.f32.gmra.mxu0 %v3486
      %v3562 = vpop.f32.mrf.mxu0
      %v3563 = vadd.f32 0.0, %v3562
      %v3564 = vpop.f32.mrf.mxu0
      %3565 = vdwg.mxu0
      %v3566 = vadd.f32 %v3476, %v3558
      %v3567 = vadd.f32 %v3477, %v3563
      %s3568 = scalar_lea.vmem %s232, 48
      %3569 = vst [vmem:[%s3568] sm:$0xff] %v3566
      %3570 = vst [vmem:[%s3568 + $0x8] sm:$0xff] %v3567
      %v3571 = vadd.f32 %v3566, %v3567
      %v3572 = vrot.slane %v3571, 4
      %v3573 = vadd.f32 %v3571, %v3572
      %v3574 = vrot.slane %v3573, 2
      %v3575 = vadd.f32 %v3573, %v3574
      %v3576 = vrot.slane %v3575, 1
      %v3577 = vadd.f32 %v3575, %v3576
      %v3578 = vadd.f32 %v2745, %v3577
      %v3579 = vmul.f32 %v3566, %v3566
      %v3580 = vmul.f32 %v3567, %v3567
      %v3581 = vadd.f32 %v3579, %v3580
      %v3582 = vrot.slane %v3581, 4
      %v3583 = vadd.f32 %v3581, %v3582
      %v3584 = vrot.slane %v3583, 2
      %v3585 = vadd.f32 %v3583, %v3584
      %v3586 = vrot.slane %v3585, 1
      %v3587 = vadd.f32 %v3585, %v3586
      %v3588 = vadd.f32 %v2755, %v3587
      %v3589 = vld [vmem:[%s2463] sm:$0xff]
      %v3590 = vld [vmem:[%s2463 + $0x8] sm:$0xff]
      %v3591 = vld [vmem:[%s2463 + $0x10] sm:$0x3]
      %v3592 = vld [vmem:[%s1] sm:$0xf]
      %v3593 = vld [vmem:[%s247] sm:$0xf]
      %v3597 = vrot.slane %v3589, 1
      %v3598 = vrot.slane %v3590, 1
      %v3599 = vsel %vm252, %v3597, %v3598
      %v3600 = vrot.slane %v3591, 1
      %v3601 = vsel %vm252, %v3598, %v3600
      %v3602 = vsel %vm258, %v3599, 0
      %v3604 = vsel %vm258, %v3601, 0
      %v3607 = vsel %vm263, %v3593, 0
      %3609 = vmatprep.subr.mxu0 0.0
      %3610 = vmatpush1.msra.mxu0 0.0
      %3611 = vmatprep.subr.mxu0 0.0
      %3612 = vmatpush1.msra.mxu0 0.0
      %3613 = vmatprep.subr.mxu0 0.0
      %3614 = vmatpush1.msra.mxu0 0.0
      %3615 = vmatprep.subr.mxu0 0.0
      %3616 = vmatpush1.msra.mxu0 0.0
      %3617 = vmatprep.subr.mxu0 0.0
      %3618 = vmatpush1.msra.mxu0 0.0
      %3619 = vmatprep.subr.mxu0 0.0
      %3620 = vmatpush1.msra.mxu0 0.0
      %3621 = vmatprep.subr.mxu0 0.0
      %3622 = vmatpush1.msra.mxu0 0.0
      %3623 = vmatprep.subr.mxu0 0.0
      %3624 = vmatpush1.msra.mxu0 0.0
      %3625 = vmatprep.subr.mxu0 0.0
      %3626 = vmatpush1.msra.mxu0 0.0
      %3627 = vmatprep.subr.mxu0 0.0
      %3628 = vmatpush1.msra.mxu0 0.0
      %3629 = vmatprep.subr.mxu0 0.0
      %3630 = vmatpush1.msra.mxu0 0.0
      %3631 = vmatprep.subr.mxu0 0.0
      %3632 = vmatpush1.msra.mxu0 0.0
      %3633 = vmatprep.subr.mxu0 0.0
      %3634 = vmatpush1.msra.mxu0 0.0
      %3635 = vmatprep.subr.mxu0 0.0
      %3636 = vmatpush1.msra.mxu0 0.0
      %3637 = vmatprep.subr.mxu0 0.0
      %3638 = vmatpush1.msra.mxu0 0.0
      %3639 = vmatprep.subr.mxu0 0.0
      %3640 = vmatpush1.msra.mxu0 %v3607
      %3641 = vmatprep.subr.mxu0 0.0
      %3642 = vmatpush2.msra.mxu0 0.0
      %3643 = vmatprep.subr.mxu0 0.0
      %3644 = vmatpush2.msra.mxu0 0.0
      %3645 = vmatprep.subr.mxu0 0.0
      %3646 = vmatpush2.msra.mxu0 0.0
      %3647 = vmatprep.subr.mxu0 0.0
      %3648 = vmatpush2.msra.mxu0 0.0
      %3649 = vmatprep.subr.mxu0 0.0
      %3650 = vmatpush2.msra.mxu0 0.0
      %3651 = vmatprep.subr.mxu0 0.0
      %3652 = vmatpush2.msra.mxu0 0.0
      %3653 = vmatprep.subr.mxu0 0.0
      %3654 = vmatpush2.msra.mxu0 0.0
      %3655 = vmatprep.subr.mxu0 0.0
      %3656 = vmatpush2.msra.mxu0 0.0
      %3657 = vmatprep.subr.mxu0 0.0
      %3658 = vmatpush2.msra.mxu0 0.0
      %3659 = vmatprep.subr.mxu0 0.0
      %3660 = vmatpush2.msra.mxu0 0.0
      %3661 = vmatprep.subr.mxu0 0.0
      %3662 = vmatpush2.msra.mxu0 0.0
      %3663 = vmatprep.subr.mxu0 0.0
      %3664 = vmatpush2.msra.mxu0 0.0
      %3665 = vmatprep.subr.mxu0 0.0
      %3666 = vmatpush2.msra.mxu0 0.0
      %3667 = vmatprep.subr.mxu0 0.0
      %3668 = vmatpush2.msra.mxu0 0.0
      %3669 = vmatprep.subr.mxu0 0.0
      %3670 = vmatpush2.msra.mxu0 0.0
      %3671 = vmatprep.subr.mxu0 0.0
      %3672 = vmatpush2.msra.mxu0 0.0
      %3673 = vmatprep.mubr.f32.mxu0 0.0
      %3674 = vmatmul.mubr.f32.gmra.mxu0 %v3602
      %v3675 = vpop.f32.mrf.mxu0
      %v3676 = vadd.f32 0.0, %v3675
      %v3677 = vpop.f32.mrf.mxu0
      %3678 = vmatprep.mubr.f32.mxu0 0.0
      %3679 = vmatmul.mubr.f32.gmra.mxu0 %v3604
      %v3680 = vpop.f32.mrf.mxu0
      %v3681 = vadd.f32 0.0, %v3680
      %v3682 = vpop.f32.mrf.mxu0
      %3683 = vdwg.mxu0
      %v3684 = vsel %vm258, %v3589, 0
      %v3686 = vsel %vm258, %v3590, 0
      %v3689 = vsel %vm263, %v3592, 0
      %3691 = vmatprep.subr.mxu0 0.0
      %3692 = vmatpush1.msra.mxu0 0.0
      %3693 = vmatprep.subr.mxu0 0.0
      %3694 = vmatpush1.msra.mxu0 0.0
      %3695 = vmatprep.subr.mxu0 0.0
      %3696 = vmatpush1.msra.mxu0 0.0
      %3697 = vmatprep.subr.mxu0 0.0
      %3698 = vmatpush1.msra.mxu0 0.0
      %3699 = vmatprep.subr.mxu0 0.0
      %3700 = vmatpush1.msra.mxu0 0.0
      %3701 = vmatprep.subr.mxu0 0.0
      %3702 = vmatpush1.msra.mxu0 0.0
      %3703 = vmatprep.subr.mxu0 0.0
      %3704 = vmatpush1.msra.mxu0 0.0
      %3705 = vmatprep.subr.mxu0 0.0
      %3706 = vmatpush1.msra.mxu0 0.0
      %3707 = vmatprep.subr.mxu0 0.0
      %3708 = vmatpush1.msra.mxu0 0.0
      %3709 = vmatprep.subr.mxu0 0.0
      %3710 = vmatpush1.msra.mxu0 0.0
      %3711 = vmatprep.subr.mxu0 0.0
      %3712 = vmatpush1.msra.mxu0 0.0
      %3713 = vmatprep.subr.mxu0 0.0
      %3714 = vmatpush1.msra.mxu0 0.0
      %3715 = vmatprep.subr.mxu0 0.0
      %3716 = vmatpush1.msra.mxu0 0.0
      %3717 = vmatprep.subr.mxu0 0.0
      %3718 = vmatpush1.msra.mxu0 0.0
      %3719 = vmatprep.subr.mxu0 0.0
      %3720 = vmatpush1.msra.mxu0 0.0
      %3721 = vmatprep.subr.mxu0 0.0
      %3722 = vmatpush1.msra.mxu0 %v3689
      %3723 = vmatprep.subr.mxu0 0.0
      %3724 = vmatpush2.msra.mxu0 0.0
      %3725 = vmatprep.subr.mxu0 0.0
      %3726 = vmatpush2.msra.mxu0 0.0
      %3727 = vmatprep.subr.mxu0 0.0
      %3728 = vmatpush2.msra.mxu0 0.0
      %3729 = vmatprep.subr.mxu0 0.0
      %3730 = vmatpush2.msra.mxu0 0.0
      %3731 = vmatprep.subr.mxu0 0.0
      %3732 = vmatpush2.msra.mxu0 0.0
      %3733 = vmatprep.subr.mxu0 0.0
      %3734 = vmatpush2.msra.mxu0 0.0
      %3735 = vmatprep.subr.mxu0 0.0
      %3736 = vmatpush2.msra.mxu0 0.0
      %3737 = vmatprep.subr.mxu0 0.0
      %3738 = vmatpush2.msra.mxu0 0.0
      %3739 = vmatprep.subr.mxu0 0.0
      %3740 = vmatpush2.msra.mxu0 0.0
      %3741 = vmatprep.subr.mxu0 0.0
      %3742 = vmatpush2.msra.mxu0 0.0
      %3743 = vmatprep.subr.mxu0 0.0
      %3744 = vmatpush2.msra.mxu0 0.0
      %3745 = vmatprep.subr.mxu0 0.0
      %3746 = vmatpush2.msra.mxu0 0.0
      %3747 = vmatprep.subr.mxu0 0.0
      %3748 = vmatpush2.msra.mxu0 0.0
      %3749 = vmatprep.subr.mxu0 0.0
      %3750 = vmatpush2.msra.mxu0 0.0
      %3751 = vmatprep.subr.mxu0 0.0
      %3752 = vmatpush2.msra.mxu0 0.0
      %3753 = vmatprep.subr.mxu0 0.0
      %3754 = vmatpush2.msra.mxu0 0.0
      %3755 = vmatprep.mubr.f32.mxu0 0.0
      %3756 = vmatmul.mubr.f32.gmra.mxu0 %v3684
      %v3757 = vpop.f32.mrf.mxu0
      %v3758 = vadd.f32 %v3676, %v3757
      %v3759 = vpop.f32.mrf.mxu0
      %3760 = vmatprep.mubr.f32.mxu0 0.0
      %3761 = vmatmul.mubr.f32.gmra.mxu0 %v3686
      %v3762 = vpop.f32.mrf.mxu0
      %v3763 = vadd.f32 %v3681, %v3762
      %v3764 = vpop.f32.mrf.mxu0
      %3765 = vdwg.mxu0
      %v3766 = vld [vmem:[%s424] sm:$0xf]
      %v3767 = vrot.slane %v3589, 2
      %v3768 = vrot.slane %v3590, 2
      %v3769 = vsel %vm426, %v3767, %v3768
      %v3770 = vrot.slane %v3591, 2
      %v3771 = vsel %vm426, %v3768, %v3770
      %v3772 = vsel %vm258, %v3769, 0
      %v3774 = vsel %vm258, %v3771, 0
      %v3777 = vsel %vm263, %v3766, 0
      %3779 = vmatprep.subr.mxu0 0.0
      %3780 = vmatpush1.msra.mxu0 0.0
      %3781 = vmatprep.subr.mxu0 0.0
      %3782 = vmatpush1.msra.mxu0 0.0
      %3783 = vmatprep.subr.mxu0 0.0
      %3784 = vmatpush1.msra.mxu0 0.0
      %3785 = vmatprep.subr.mxu0 0.0
      %3786 = vmatpush1.msra.mxu0 0.0
      %3787 = vmatprep.subr.mxu0 0.0
      %3788 = vmatpush1.msra.mxu0 0.0
      %3789 = vmatprep.subr.mxu0 0.0
      %3790 = vmatpush1.msra.mxu0 0.0
      %3791 = vmatprep.subr.mxu0 0.0
      %3792 = vmatpush1.msra.mxu0 0.0
      %3793 = vmatprep.subr.mxu0 0.0
      %3794 = vmatpush1.msra.mxu0 0.0
      %3795 = vmatprep.subr.mxu0 0.0
      %3796 = vmatpush1.msra.mxu0 0.0
      %3797 = vmatprep.subr.mxu0 0.0
      %3798 = vmatpush1.msra.mxu0 0.0
      %3799 = vmatprep.subr.mxu0 0.0
      %3800 = vmatpush1.msra.mxu0 0.0
      %3801 = vmatprep.subr.mxu0 0.0
      %3802 = vmatpush1.msra.mxu0 0.0
      %3803 = vmatprep.subr.mxu0 0.0
      %3804 = vmatpush1.msra.mxu0 0.0
      %3805 = vmatprep.subr.mxu0 0.0
      %3806 = vmatpush1.msra.mxu0 0.0
      %3807 = vmatprep.subr.mxu0 0.0
      %3808 = vmatpush1.msra.mxu0 0.0
      %3809 = vmatprep.subr.mxu0 0.0
      %3810 = vmatpush1.msra.mxu0 %v3777
      %3811 = vmatprep.subr.mxu0 0.0
      %3812 = vmatpush2.msra.mxu0 0.0
      %3813 = vmatprep.subr.mxu0 0.0
      %3814 = vmatpush2.msra.mxu0 0.0
      %3815 = vmatprep.subr.mxu0 0.0
      %3816 = vmatpush2.msra.mxu0 0.0
      %3817 = vmatprep.subr.mxu0 0.0
      %3818 = vmatpush2.msra.mxu0 0.0
      %3819 = vmatprep.subr.mxu0 0.0
      %3820 = vmatpush2.msra.mxu0 0.0
      %3821 = vmatprep.subr.mxu0 0.0
      %3822 = vmatpush2.msra.mxu0 0.0
      %3823 = vmatprep.subr.mxu0 0.0
      %3824 = vmatpush2.msra.mxu0 0.0
      %3825 = vmatprep.subr.mxu0 0.0
      %3826 = vmatpush2.msra.mxu0 0.0
      %3827 = vmatprep.subr.mxu0 0.0
      %3828 = vmatpush2.msra.mxu0 0.0
      %3829 = vmatprep.subr.mxu0 0.0
      %3830 = vmatpush2.msra.mxu0 0.0
      %3831 = vmatprep.subr.mxu0 0.0
      %3832 = vmatpush2.msra.mxu0 0.0
      %3833 = vmatprep.subr.mxu0 0.0
      %3834 = vmatpush2.msra.mxu0 0.0
      %3835 = vmatprep.subr.mxu0 0.0
      %3836 = vmatpush2.msra.mxu0 0.0
      %3837 = vmatprep.subr.mxu0 0.0
      %3838 = vmatpush2.msra.mxu0 0.0
      %3839 = vmatprep.subr.mxu0 0.0
      %3840 = vmatpush2.msra.mxu0 0.0
      %3841 = vmatprep.subr.mxu0 0.0
      %3842 = vmatpush2.msra.mxu0 0.0
      %3843 = vmatprep.mubr.f32.mxu0 0.0
      %3844 = vmatmul.mubr.f32.gmra.mxu0 %v3772
      %v3845 = vpop.f32.mrf.mxu0
      %v3846 = vadd.f32 0.0, %v3845
      %v3847 = vpop.f32.mrf.mxu0
      %3848 = vmatprep.mubr.f32.mxu0 0.0
      %3849 = vmatmul.mubr.f32.gmra.mxu0 %v3774
      %v3850 = vpop.f32.mrf.mxu0
      %v3851 = vadd.f32 0.0, %v3850
      %v3852 = vpop.f32.mrf.mxu0
      %3853 = vdwg.mxu0
      %v3854 = vadd.f32 %v3758, %v3846
      %v3855 = vadd.f32 %v3763, %v3851
      %v3856 = vld [vmem:[%s3296] sm:$0xff]
      %v3857 = vld [vmem:[%s3296 + $0x8] sm:$0xff]
      %v3858 = vld [vmem:[%s3296 + $0x10] sm:$0x3]
      %v3859 = vld [vmem:[%s522] sm:$0xf]
      %v3861 = vsel %vm258, %v3856, 0
      %v3864 = vsel %vm258, %v3857, 0
      %v3867 = vsel %vm263, %v3859, 0
      %3869 = vmatprep.subr.mxu0 0.0
      %3870 = vmatpush1.msra.mxu0 0.0
      %3871 = vmatprep.subr.mxu0 0.0
      %3872 = vmatpush1.msra.mxu0 0.0
      %3873 = vmatprep.subr.mxu0 0.0
      %3874 = vmatpush1.msra.mxu0 0.0
      %3875 = vmatprep.subr.mxu0 0.0
      %3876 = vmatpush1.msra.mxu0 0.0
      %3877 = vmatprep.subr.mxu0 0.0
      %3878 = vmatpush1.msra.mxu0 0.0
      %3879 = vmatprep.subr.mxu0 0.0
      %3880 = vmatpush1.msra.mxu0 0.0
      %3881 = vmatprep.subr.mxu0 0.0
      %3882 = vmatpush1.msra.mxu0 0.0
      %3883 = vmatprep.subr.mxu0 0.0
      %3884 = vmatpush1.msra.mxu0 0.0
      %3885 = vmatprep.subr.mxu0 0.0
      %3886 = vmatpush1.msra.mxu0 0.0
      %3887 = vmatprep.subr.mxu0 0.0
      %3888 = vmatpush1.msra.mxu0 0.0
      %3889 = vmatprep.subr.mxu0 0.0
      %3890 = vmatpush1.msra.mxu0 0.0
      %3891 = vmatprep.subr.mxu0 0.0
      %3892 = vmatpush1.msra.mxu0 0.0
      %3893 = vmatprep.subr.mxu0 0.0
      %3894 = vmatpush1.msra.mxu0 0.0
      %3895 = vmatprep.subr.mxu0 0.0
      %3896 = vmatpush1.msra.mxu0 0.0
      %3897 = vmatprep.subr.mxu0 0.0
      %3898 = vmatpush1.msra.mxu0 0.0
      %3899 = vmatprep.subr.mxu0 0.0
      %3900 = vmatpush1.msra.mxu0 %v3867
      %3901 = vmatprep.subr.mxu0 0.0
      %3902 = vmatpush2.msra.mxu0 0.0
      %3903 = vmatprep.subr.mxu0 0.0
      %3904 = vmatpush2.msra.mxu0 0.0
      %3905 = vmatprep.subr.mxu0 0.0
      %3906 = vmatpush2.msra.mxu0 0.0
      %3907 = vmatprep.subr.mxu0 0.0
      %3908 = vmatpush2.msra.mxu0 0.0
      %3909 = vmatprep.subr.mxu0 0.0
      %3910 = vmatpush2.msra.mxu0 0.0
      %3911 = vmatprep.subr.mxu0 0.0
      %3912 = vmatpush2.msra.mxu0 0.0
      %3913 = vmatprep.subr.mxu0 0.0
      %3914 = vmatpush2.msra.mxu0 0.0
      %3915 = vmatprep.subr.mxu0 0.0
      %3916 = vmatpush2.msra.mxu0 0.0
      %3917 = vmatprep.subr.mxu0 0.0
      %3918 = vmatpush2.msra.mxu0 0.0
      %3919 = vmatprep.subr.mxu0 0.0
      %3920 = vmatpush2.msra.mxu0 0.0
      %3921 = vmatprep.subr.mxu0 0.0
      %3922 = vmatpush2.msra.mxu0 0.0
      %3923 = vmatprep.subr.mxu0 0.0
      %3924 = vmatpush2.msra.mxu0 0.0
      %3925 = vmatprep.subr.mxu0 0.0
      %3926 = vmatpush2.msra.mxu0 0.0
      %3927 = vmatprep.subr.mxu0 0.0
      %3928 = vmatpush2.msra.mxu0 0.0
      %3929 = vmatprep.subr.mxu0 0.0
      %3930 = vmatpush2.msra.mxu0 0.0
      %3931 = vmatprep.subr.mxu0 0.0
      %3932 = vmatpush2.msra.mxu0 0.0
      %3933 = vmatprep.mubr.f32.mxu0 0.0
      %3934 = vmatmul.mubr.f32.gmra.mxu0 %v3861
      %v3935 = vpop.f32.mrf.mxu0
      %v3936 = vadd.f32 0.0, %v3935
      %v3937 = vpop.f32.mrf.mxu0
      %3938 = vmatprep.mubr.f32.mxu0 0.0
      %3939 = vmatmul.mubr.f32.gmra.mxu0 %v3864
      %v3940 = vpop.f32.mrf.mxu0
      %v3941 = vadd.f32 0.0, %v3940
      %v3942 = vpop.f32.mrf.mxu0
      %3943 = vdwg.mxu0
      %v3944 = vadd.f32 %v3854, %v3936
      %v3945 = vadd.f32 %v3855, %v3941
      %v3946 = vld [vmem:[%s610] sm:$0xf]
      %v3948 = vrot.slane %v3856, 1
      %v3949 = vrot.slane %v3857, 1
      %v3950 = vsel %vm252, %v3948, %v3949
      %v3951 = vrot.slane %v3858, 1
      %v3952 = vsel %vm252, %v3949, %v3951
      %v3953 = vsel %vm258, %v3950, 0
      %v3955 = vsel %vm258, %v3952, 0
      %v3958 = vsel %vm263, %v3946, 0
      %3960 = vmatprep.subr.mxu0 0.0
      %3961 = vmatpush1.msra.mxu0 0.0
      %3962 = vmatprep.subr.mxu0 0.0
      %3963 = vmatpush1.msra.mxu0 0.0
      %3964 = vmatprep.subr.mxu0 0.0
      %3965 = vmatpush1.msra.mxu0 0.0
      %3966 = vmatprep.subr.mxu0 0.0
      %3967 = vmatpush1.msra.mxu0 0.0
      %3968 = vmatprep.subr.mxu0 0.0
      %3969 = vmatpush1.msra.mxu0 0.0
      %3970 = vmatprep.subr.mxu0 0.0
      %3971 = vmatpush1.msra.mxu0 0.0
      %3972 = vmatprep.subr.mxu0 0.0
      %3973 = vmatpush1.msra.mxu0 0.0
      %3974 = vmatprep.subr.mxu0 0.0
      %3975 = vmatpush1.msra.mxu0 0.0
      %3976 = vmatprep.subr.mxu0 0.0
      %3977 = vmatpush1.msra.mxu0 0.0
      %3978 = vmatprep.subr.mxu0 0.0
      %3979 = vmatpush1.msra.mxu0 0.0
      %3980 = vmatprep.subr.mxu0 0.0
      %3981 = vmatpush1.msra.mxu0 0.0
      %3982 = vmatprep.subr.mxu0 0.0
      %3983 = vmatpush1.msra.mxu0 0.0
      %3984 = vmatprep.subr.mxu0 0.0
      %3985 = vmatpush1.msra.mxu0 0.0
      %3986 = vmatprep.subr.mxu0 0.0
      %3987 = vmatpush1.msra.mxu0 0.0
      %3988 = vmatprep.subr.mxu0 0.0
      %3989 = vmatpush1.msra.mxu0 0.0
      %3990 = vmatprep.subr.mxu0 0.0
      %3991 = vmatpush1.msra.mxu0 %v3958
      %3992 = vmatprep.subr.mxu0 0.0
      %3993 = vmatpush2.msra.mxu0 0.0
      %3994 = vmatprep.subr.mxu0 0.0
      %3995 = vmatpush2.msra.mxu0 0.0
      %3996 = vmatprep.subr.mxu0 0.0
      %3997 = vmatpush2.msra.mxu0 0.0
      %3998 = vmatprep.subr.mxu0 0.0
      %3999 = vmatpush2.msra.mxu0 0.0
      %4000 = vmatprep.subr.mxu0 0.0
      %4001 = vmatpush2.msra.mxu0 0.0
      %4002 = vmatprep.subr.mxu0 0.0
      %4003 = vmatpush2.msra.mxu0 0.0
      %4004 = vmatprep.subr.mxu0 0.0
      %4005 = vmatpush2.msra.mxu0 0.0
      %4006 = vmatprep.subr.mxu0 0.0
      %4007 = vmatpush2.msra.mxu0 0.0
      %4008 = vmatprep.subr.mxu0 0.0
      %4009 = vmatpush2.msra.mxu0 0.0
      %4010 = vmatprep.subr.mxu0 0.0
      %4011 = vmatpush2.msra.mxu0 0.0
      %4012 = vmatprep.subr.mxu0 0.0
      %4013 = vmatpush2.msra.mxu0 0.0
      %4014 = vmatprep.subr.mxu0 0.0
      %4015 = vmatpush2.msra.mxu0 0.0
      %4016 = vmatprep.subr.mxu0 0.0
      %4017 = vmatpush2.msra.mxu0 0.0
      %4018 = vmatprep.subr.mxu0 0.0
      %4019 = vmatpush2.msra.mxu0 0.0
      %4020 = vmatprep.subr.mxu0 0.0
      %4021 = vmatpush2.msra.mxu0 0.0
      %4022 = vmatprep.subr.mxu0 0.0
      %4023 = vmatpush2.msra.mxu0 0.0
      %4024 = vmatprep.mubr.f32.mxu0 0.0
      %4025 = vmatmul.mubr.f32.gmra.mxu0 %v3953
      %v4026 = vpop.f32.mrf.mxu0
      %v4027 = vadd.f32 0.0, %v4026
      %v4028 = vpop.f32.mrf.mxu0
      %4029 = vmatprep.mubr.f32.mxu0 0.0
      %4030 = vmatmul.mubr.f32.gmra.mxu0 %v3955
      %v4031 = vpop.f32.mrf.mxu0
      %v4032 = vadd.f32 0.0, %v4031
      %v4033 = vpop.f32.mrf.mxu0
      %4034 = vdwg.mxu0
      %v4035 = vadd.f32 %v3944, %v4027
      %v4036 = vadd.f32 %v3945, %v4032
      %v4037 = vld [vmem:[%s702] sm:$0xf]
      %v4038 = vrot.slane %v3856, 2
      %v4039 = vrot.slane %v3857, 2
      %v4040 = vsel %vm426, %v4038, %v4039
      %v4041 = vrot.slane %v3858, 2
      %v4042 = vsel %vm426, %v4039, %v4041
      %v4043 = vsel %vm258, %v4040, 0
      %v4045 = vsel %vm258, %v4042, 0
      %v4048 = vsel %vm263, %v4037, 0
      %4050 = vmatprep.subr.mxu0 0.0
      %4051 = vmatpush1.msra.mxu0 0.0
      %4052 = vmatprep.subr.mxu0 0.0
      %4053 = vmatpush1.msra.mxu0 0.0
      %4054 = vmatprep.subr.mxu0 0.0
      %4055 = vmatpush1.msra.mxu0 0.0
      %4056 = vmatprep.subr.mxu0 0.0
      %4057 = vmatpush1.msra.mxu0 0.0
      %4058 = vmatprep.subr.mxu0 0.0
      %4059 = vmatpush1.msra.mxu0 0.0
      %4060 = vmatprep.subr.mxu0 0.0
      %4061 = vmatpush1.msra.mxu0 0.0
      %4062 = vmatprep.subr.mxu0 0.0
      %4063 = vmatpush1.msra.mxu0 0.0
      %4064 = vmatprep.subr.mxu0 0.0
      %4065 = vmatpush1.msra.mxu0 0.0
      %4066 = vmatprep.subr.mxu0 0.0
      %4067 = vmatpush1.msra.mxu0 0.0
      %4068 = vmatprep.subr.mxu0 0.0
      %4069 = vmatpush1.msra.mxu0 0.0
      %4070 = vmatprep.subr.mxu0 0.0
      %4071 = vmatpush1.msra.mxu0 0.0
      %4072 = vmatprep.subr.mxu0 0.0
      %4073 = vmatpush1.msra.mxu0 0.0
      %4074 = vmatprep.subr.mxu0 0.0
      %4075 = vmatpush1.msra.mxu0 0.0
      %4076 = vmatprep.subr.mxu0 0.0
      %4077 = vmatpush1.msra.mxu0 0.0
      %4078 = vmatprep.subr.mxu0 0.0
      %4079 = vmatpush1.msra.mxu0 0.0
      %4080 = vmatprep.subr.mxu0 0.0
      %4081 = vmatpush1.msra.mxu0 %v4048
      %4082 = vmatprep.subr.mxu0 0.0
      %4083 = vmatpush2.msra.mxu0 0.0
      %4084 = vmatprep.subr.mxu0 0.0
      %4085 = vmatpush2.msra.mxu0 0.0
      %4086 = vmatprep.subr.mxu0 0.0
      %4087 = vmatpush2.msra.mxu0 0.0
      %4088 = vmatprep.subr.mxu0 0.0
      %4089 = vmatpush2.msra.mxu0 0.0
      %4090 = vmatprep.subr.mxu0 0.0
      %4091 = vmatpush2.msra.mxu0 0.0
      %4092 = vmatprep.subr.mxu0 0.0
      %4093 = vmatpush2.msra.mxu0 0.0
      %4094 = vmatprep.subr.mxu0 0.0
      %4095 = vmatpush2.msra.mxu0 0.0
      %4096 = vmatprep.subr.mxu0 0.0
      %4097 = vmatpush2.msra.mxu0 0.0
      %4098 = vmatprep.subr.mxu0 0.0
      %4099 = vmatpush2.msra.mxu0 0.0
      %4100 = vmatprep.subr.mxu0 0.0
      %4101 = vmatpush2.msra.mxu0 0.0
      %4102 = vmatprep.subr.mxu0 0.0
      %4103 = vmatpush2.msra.mxu0 0.0
      %4104 = vmatprep.subr.mxu0 0.0
      %4105 = vmatpush2.msra.mxu0 0.0
      %4106 = vmatprep.subr.mxu0 0.0
      %4107 = vmatpush2.msra.mxu0 0.0
      %4108 = vmatprep.subr.mxu0 0.0
      %4109 = vmatpush2.msra.mxu0 0.0
      %4110 = vmatprep.subr.mxu0 0.0
      %4111 = vmatpush2.msra.mxu0 0.0
      %4112 = vmatprep.subr.mxu0 0.0
      %4113 = vmatpush2.msra.mxu0 0.0
      %4114 = vmatprep.mubr.f32.mxu0 0.0
      %4115 = vmatmul.mubr.f32.gmra.mxu0 %v4043
      %v4116 = vpop.f32.mrf.mxu0
      %v4117 = vadd.f32 0.0, %v4116
      %v4118 = vpop.f32.mrf.mxu0
      %4119 = vmatprep.mubr.f32.mxu0 0.0
      %4120 = vmatmul.mubr.f32.gmra.mxu0 %v4045
      %v4121 = vpop.f32.mrf.mxu0
      %v4122 = vadd.f32 0.0, %v4121
      %v4123 = vpop.f32.mrf.mxu0
      %4124 = vdwg.mxu0
      %v4125 = vadd.f32 %v4035, %v4117
      %v4126 = vadd.f32 %v4036, %v4122
      %s4127 = sadd.s32 %s240, 6
      %s4128 = smul.u32 %s4127, 24
      %s4129 = scalar_lea.vmem %s222, %s4128
      %v4130 = vld [vmem:[%s4129] sm:$0xff]
      %v4131 = vld [vmem:[%s4129 + $0x8] sm:$0xff]
      %v4132 = vld [vmem:[%s4129 + $0x10] sm:$0x3]
      %v4133 = vld [vmem:[%s799] sm:$0xf]
      %v4135 = vsel %vm258, %v4130, 0
      %v4138 = vsel %vm258, %v4131, 0
      %v4141 = vsel %vm263, %v4133, 0
      %4143 = vmatprep.subr.mxu0 0.0
      %4144 = vmatpush1.msra.mxu0 0.0
      %4145 = vmatprep.subr.mxu0 0.0
      %4146 = vmatpush1.msra.mxu0 0.0
      %4147 = vmatprep.subr.mxu0 0.0
      %4148 = vmatpush1.msra.mxu0 0.0
      %4149 = vmatprep.subr.mxu0 0.0
      %4150 = vmatpush1.msra.mxu0 0.0
      %4151 = vmatprep.subr.mxu0 0.0
      %4152 = vmatpush1.msra.mxu0 0.0
      %4153 = vmatprep.subr.mxu0 0.0
      %4154 = vmatpush1.msra.mxu0 0.0
      %4155 = vmatprep.subr.mxu0 0.0
      %4156 = vmatpush1.msra.mxu0 0.0
      %4157 = vmatprep.subr.mxu0 0.0
      %4158 = vmatpush1.msra.mxu0 0.0
      %4159 = vmatprep.subr.mxu0 0.0
      %4160 = vmatpush1.msra.mxu0 0.0
      %4161 = vmatprep.subr.mxu0 0.0
      %4162 = vmatpush1.msra.mxu0 0.0
      %4163 = vmatprep.subr.mxu0 0.0
      %4164 = vmatpush1.msra.mxu0 0.0
      %4165 = vmatprep.subr.mxu0 0.0
      %4166 = vmatpush1.msra.mxu0 0.0
      %4167 = vmatprep.subr.mxu0 0.0
      %4168 = vmatpush1.msra.mxu0 0.0
      %4169 = vmatprep.subr.mxu0 0.0
      %4170 = vmatpush1.msra.mxu0 0.0
      %4171 = vmatprep.subr.mxu0 0.0
      %4172 = vmatpush1.msra.mxu0 0.0
      %4173 = vmatprep.subr.mxu0 0.0
      %4174 = vmatpush1.msra.mxu0 %v4141
      %4175 = vmatprep.subr.mxu0 0.0
      %4176 = vmatpush2.msra.mxu0 0.0
      %4177 = vmatprep.subr.mxu0 0.0
      %4178 = vmatpush2.msra.mxu0 0.0
      %4179 = vmatprep.subr.mxu0 0.0
      %4180 = vmatpush2.msra.mxu0 0.0
      %4181 = vmatprep.subr.mxu0 0.0
      %4182 = vmatpush2.msra.mxu0 0.0
      %4183 = vmatprep.subr.mxu0 0.0
      %4184 = vmatpush2.msra.mxu0 0.0
      %4185 = vmatprep.subr.mxu0 0.0
      %4186 = vmatpush2.msra.mxu0 0.0
      %4187 = vmatprep.subr.mxu0 0.0
      %4188 = vmatpush2.msra.mxu0 0.0
      %4189 = vmatprep.subr.mxu0 0.0
      %4190 = vmatpush2.msra.mxu0 0.0
      %4191 = vmatprep.subr.mxu0 0.0
      %4192 = vmatpush2.msra.mxu0 0.0
      %4193 = vmatprep.subr.mxu0 0.0
      %4194 = vmatpush2.msra.mxu0 0.0
      %4195 = vmatprep.subr.mxu0 0.0
      %4196 = vmatpush2.msra.mxu0 0.0
      %4197 = vmatprep.subr.mxu0 0.0
      %4198 = vmatpush2.msra.mxu0 0.0
      %4199 = vmatprep.subr.mxu0 0.0
      %4200 = vmatpush2.msra.mxu0 0.0
      %4201 = vmatprep.subr.mxu0 0.0
      %4202 = vmatpush2.msra.mxu0 0.0
      %4203 = vmatprep.subr.mxu0 0.0
      %4204 = vmatpush2.msra.mxu0 0.0
      %4205 = vmatprep.subr.mxu0 0.0
      %4206 = vmatpush2.msra.mxu0 0.0
      %4207 = vmatprep.mubr.f32.mxu0 0.0
      %4208 = vmatmul.mubr.f32.gmra.mxu0 %v4135
      %v4209 = vpop.f32.mrf.mxu0
      %v4210 = vadd.f32 0.0, %v4209
      %v4211 = vpop.f32.mrf.mxu0
      %4212 = vmatprep.mubr.f32.mxu0 0.0
      %4213 = vmatmul.mubr.f32.gmra.mxu0 %v4138
      %v4214 = vpop.f32.mrf.mxu0
      %v4215 = vadd.f32 0.0, %v4214
      %v4216 = vpop.f32.mrf.mxu0
      %4217 = vdwg.mxu0
      %v4218 = vadd.f32 %v4125, %v4210
      %v4219 = vadd.f32 %v4126, %v4215
      %v4220 = vld [vmem:[%s887] sm:$0xf]
      %v4222 = vrot.slane %v4130, 1
      %v4223 = vrot.slane %v4131, 1
      %v4224 = vsel %vm252, %v4222, %v4223
      %v4225 = vrot.slane %v4132, 1
      %v4226 = vsel %vm252, %v4223, %v4225
      %v4227 = vsel %vm258, %v4224, 0
      %v4229 = vsel %vm258, %v4226, 0
      %v4232 = vsel %vm263, %v4220, 0
      %4234 = vmatprep.subr.mxu0 0.0
      %4235 = vmatpush1.msra.mxu0 0.0
      %4236 = vmatprep.subr.mxu0 0.0
      %4237 = vmatpush1.msra.mxu0 0.0
      %4238 = vmatprep.subr.mxu0 0.0
      %4239 = vmatpush1.msra.mxu0 0.0
      %4240 = vmatprep.subr.mxu0 0.0
      %4241 = vmatpush1.msra.mxu0 0.0
      %4242 = vmatprep.subr.mxu0 0.0
      %4243 = vmatpush1.msra.mxu0 0.0
      %4244 = vmatprep.subr.mxu0 0.0
      %4245 = vmatpush1.msra.mxu0 0.0
      %4246 = vmatprep.subr.mxu0 0.0
      %4247 = vmatpush1.msra.mxu0 0.0
      %4248 = vmatprep.subr.mxu0 0.0
      %4249 = vmatpush1.msra.mxu0 0.0
      %4250 = vmatprep.subr.mxu0 0.0
      %4251 = vmatpush1.msra.mxu0 0.0
      %4252 = vmatprep.subr.mxu0 0.0
      %4253 = vmatpush1.msra.mxu0 0.0
      %4254 = vmatprep.subr.mxu0 0.0
      %4255 = vmatpush1.msra.mxu0 0.0
      %4256 = vmatprep.subr.mxu0 0.0
      %4257 = vmatpush1.msra.mxu0 0.0
      %4258 = vmatprep.subr.mxu0 0.0
      %4259 = vmatpush1.msra.mxu0 0.0
      %4260 = vmatprep.subr.mxu0 0.0
      %4261 = vmatpush1.msra.mxu0 0.0
      %4262 = vmatprep.subr.mxu0 0.0
      %4263 = vmatpush1.msra.mxu0 0.0
      %4264 = vmatprep.subr.mxu0 0.0
      %4265 = vmatpush1.msra.mxu0 %v4232
      %4266 = vmatprep.subr.mxu0 0.0
      %4267 = vmatpush2.msra.mxu0 0.0
      %4268 = vmatprep.subr.mxu0 0.0
      %4269 = vmatpush2.msra.mxu0 0.0
      %4270 = vmatprep.subr.mxu0 0.0
      %4271 = vmatpush2.msra.mxu0 0.0
      %4272 = vmatprep.subr.mxu0 0.0
      %4273 = vmatpush2.msra.mxu0 0.0
      %4274 = vmatprep.subr.mxu0 0.0
      %4275 = vmatpush2.msra.mxu0 0.0
      %4276 = vmatprep.subr.mxu0 0.0
      %4277 = vmatpush2.msra.mxu0 0.0
      %4278 = vmatprep.subr.mxu0 0.0
      %4279 = vmatpush2.msra.mxu0 0.0
      %4280 = vmatprep.subr.mxu0 0.0
      %4281 = vmatpush2.msra.mxu0 0.0
      %4282 = vmatprep.subr.mxu0 0.0
      %4283 = vmatpush2.msra.mxu0 0.0
      %4284 = vmatprep.subr.mxu0 0.0
      %4285 = vmatpush2.msra.mxu0 0.0
      %4286 = vmatprep.subr.mxu0 0.0
      %4287 = vmatpush2.msra.mxu0 0.0
      %4288 = vmatprep.subr.mxu0 0.0
      %4289 = vmatpush2.msra.mxu0 0.0
      %4290 = vmatprep.subr.mxu0 0.0
      %4291 = vmatpush2.msra.mxu0 0.0
      %4292 = vmatprep.subr.mxu0 0.0
      %4293 = vmatpush2.msra.mxu0 0.0
      %4294 = vmatprep.subr.mxu0 0.0
      %4295 = vmatpush2.msra.mxu0 0.0
      %4296 = vmatprep.subr.mxu0 0.0
      %4297 = vmatpush2.msra.mxu0 0.0
      %4298 = vmatprep.mubr.f32.mxu0 0.0
      %4299 = vmatmul.mubr.f32.gmra.mxu0 %v4227
      %v4300 = vpop.f32.mrf.mxu0
      %v4301 = vadd.f32 0.0, %v4300
      %v4302 = vpop.f32.mrf.mxu0
      %4303 = vmatprep.mubr.f32.mxu0 0.0
      %4304 = vmatmul.mubr.f32.gmra.mxu0 %v4229
      %v4305 = vpop.f32.mrf.mxu0
      %v4306 = vadd.f32 0.0, %v4305
      %v4307 = vpop.f32.mrf.mxu0
      %4308 = vdwg.mxu0
      %v4309 = vadd.f32 %v4218, %v4301
      %v4310 = vadd.f32 %v4219, %v4306
      %v4311 = vld [vmem:[%s979] sm:$0xf]
      %v4312 = vrot.slane %v4130, 2
      %v4313 = vrot.slane %v4131, 2
      %v4314 = vsel %vm426, %v4312, %v4313
      %v4315 = vrot.slane %v4132, 2
      %v4316 = vsel %vm426, %v4313, %v4315
      %v4317 = vsel %vm258, %v4314, 0
      %v4319 = vsel %vm258, %v4316, 0
      %v4322 = vsel %vm263, %v4311, 0
      %4324 = vmatprep.subr.mxu0 0.0
      %4325 = vmatpush1.msra.mxu0 0.0
      %4326 = vmatprep.subr.mxu0 0.0
      %4327 = vmatpush1.msra.mxu0 0.0
      %4328 = vmatprep.subr.mxu0 0.0
      %4329 = vmatpush1.msra.mxu0 0.0
      %4330 = vmatprep.subr.mxu0 0.0
      %4331 = vmatpush1.msra.mxu0 0.0
      %4332 = vmatprep.subr.mxu0 0.0
      %4333 = vmatpush1.msra.mxu0 0.0
      %4334 = vmatprep.subr.mxu0 0.0
      %4335 = vmatpush1.msra.mxu0 0.0
      %4336 = vmatprep.subr.mxu0 0.0
      %4337 = vmatpush1.msra.mxu0 0.0
      %4338 = vmatprep.subr.mxu0 0.0
      %4339 = vmatpush1.msra.mxu0 0.0
      %4340 = vmatprep.subr.mxu0 0.0
      %4341 = vmatpush1.msra.mxu0 0.0
      %4342 = vmatprep.subr.mxu0 0.0
      %4343 = vmatpush1.msra.mxu0 0.0
      %4344 = vmatprep.subr.mxu0 0.0
      %4345 = vmatpush1.msra.mxu0 0.0
      %4346 = vmatprep.subr.mxu0 0.0
      %4347 = vmatpush1.msra.mxu0 0.0
      %4348 = vmatprep.subr.mxu0 0.0
      %4349 = vmatpush1.msra.mxu0 0.0
      %4350 = vmatprep.subr.mxu0 0.0
      %4351 = vmatpush1.msra.mxu0 0.0
      %4352 = vmatprep.subr.mxu0 0.0
      %4353 = vmatpush1.msra.mxu0 0.0
      %4354 = vmatprep.subr.mxu0 0.0
      %4355 = vmatpush1.msra.mxu0 %v4322
      %4356 = vmatprep.subr.mxu0 0.0
      %4357 = vmatpush2.msra.mxu0 0.0
      %4358 = vmatprep.subr.mxu0 0.0
      %4359 = vmatpush2.msra.mxu0 0.0
      %4360 = vmatprep.subr.mxu0 0.0
      %4361 = vmatpush2.msra.mxu0 0.0
      %4362 = vmatprep.subr.mxu0 0.0
      %4363 = vmatpush2.msra.mxu0 0.0
      %4364 = vmatprep.subr.mxu0 0.0
      %4365 = vmatpush2.msra.mxu0 0.0
      %4366 = vmatprep.subr.mxu0 0.0
      %4367 = vmatpush2.msra.mxu0 0.0
      %4368 = vmatprep.subr.mxu0 0.0
      %4369 = vmatpush2.msra.mxu0 0.0
      %4370 = vmatprep.subr.mxu0 0.0
      %4371 = vmatpush2.msra.mxu0 0.0
      %4372 = vmatprep.subr.mxu0 0.0
      %4373 = vmatpush2.msra.mxu0 0.0
      %4374 = vmatprep.subr.mxu0 0.0
      %4375 = vmatpush2.msra.mxu0 0.0
      %4376 = vmatprep.subr.mxu0 0.0
      %4377 = vmatpush2.msra.mxu0 0.0
      %4378 = vmatprep.subr.mxu0 0.0
      %4379 = vmatpush2.msra.mxu0 0.0
      %4380 = vmatprep.subr.mxu0 0.0
      %4381 = vmatpush2.msra.mxu0 0.0
      %4382 = vmatprep.subr.mxu0 0.0
      %4383 = vmatpush2.msra.mxu0 0.0
      %4384 = vmatprep.subr.mxu0 0.0
      %4385 = vmatpush2.msra.mxu0 0.0
      %4386 = vmatprep.subr.mxu0 0.0
      %4387 = vmatpush2.msra.mxu0 0.0
      %4388 = vmatprep.mubr.f32.mxu0 0.0
      %4389 = vmatmul.mubr.f32.gmra.mxu0 %v4317
      %v4390 = vpop.f32.mrf.mxu0
      %v4391 = vadd.f32 0.0, %v4390
      %v4392 = vpop.f32.mrf.mxu0
      %4393 = vmatprep.mubr.f32.mxu0 0.0
      %4394 = vmatmul.mubr.f32.gmra.mxu0 %v4319
      %v4395 = vpop.f32.mrf.mxu0
      %v4396 = vadd.f32 0.0, %v4395
      %v4397 = vpop.f32.mrf.mxu0
      %4398 = vdwg.mxu0
      %v4399 = vadd.f32 %v4309, %v4391
      %v4400 = vadd.f32 %v4310, %v4396
      %s4401 = scalar_lea.vmem %s232, 64
      %4402 = vst [vmem:[%s4401] sm:$0xff] %v4399
      %4403 = vst [vmem:[%s4401 + $0x8] sm:$0xff] %v4400
      %v4404 = vadd.f32 %v4399, %v4400
      %v4405 = vrot.slane %v4404, 4
      %v4406 = vadd.f32 %v4404, %v4405
      %v4407 = vrot.slane %v4406, 2
      %v4408 = vadd.f32 %v4406, %v4407
      %v4409 = vrot.slane %v4408, 1
      %v4410 = vadd.f32 %v4408, %v4409
      %v4411 = vadd.f32 %v3578, %v4410
      %v4412 = vmul.f32 %v4399, %v4399
      %v4413 = vmul.f32 %v4400, %v4400
      %v4414 = vadd.f32 %v4412, %v4413
      %v4415 = vrot.slane %v4414, 4
      %v4416 = vadd.f32 %v4414, %v4415
      %v4417 = vrot.slane %v4416, 2
      %v4418 = vadd.f32 %v4416, %v4417
      %v4419 = vrot.slane %v4418, 1
      %v4420 = vadd.f32 %v4418, %v4419
      %v4421 = vadd.f32 %v3588, %v4420
      %v4422 = vld [vmem:[%s3296] sm:$0xff]
      %v4423 = vld [vmem:[%s3296 + $0x8] sm:$0xff]
      %v4424 = vld [vmem:[%s3296 + $0x10] sm:$0x3]
      %v4425 = vld [vmem:[%s1] sm:$0xf]
      %v4426 = vld [vmem:[%s247] sm:$0xf]
      %v4430 = vrot.slane %v4422, 1
      %v4431 = vrot.slane %v4423, 1
      %v4432 = vsel %vm252, %v4430, %v4431
      %v4433 = vrot.slane %v4424, 1
      %v4434 = vsel %vm252, %v4431, %v4433
      %v4435 = vsel %vm258, %v4432, 0
      %v4437 = vsel %vm258, %v4434, 0
      %v4440 = vsel %vm263, %v4426, 0
      %4442 = vmatprep.subr.mxu0 0.0
      %4443 = vmatpush1.msra.mxu0 0.0
      %4444 = vmatprep.subr.mxu0 0.0
      %4445 = vmatpush1.msra.mxu0 0.0
      %4446 = vmatprep.subr.mxu0 0.0
      %4447 = vmatpush1.msra.mxu0 0.0
      %4448 = vmatprep.subr.mxu0 0.0
      %4449 = vmatpush1.msra.mxu0 0.0
      %4450 = vmatprep.subr.mxu0 0.0
      %4451 = vmatpush1.msra.mxu0 0.0
      %4452 = vmatprep.subr.mxu0 0.0
      %4453 = vmatpush1.msra.mxu0 0.0
      %4454 = vmatprep.subr.mxu0 0.0
      %4455 = vmatpush1.msra.mxu0 0.0
      %4456 = vmatprep.subr.mxu0 0.0
      %4457 = vmatpush1.msra.mxu0 0.0
      %4458 = vmatprep.subr.mxu0 0.0
      %4459 = vmatpush1.msra.mxu0 0.0
      %4460 = vmatprep.subr.mxu0 0.0
      %4461 = vmatpush1.msra.mxu0 0.0
      %4462 = vmatprep.subr.mxu0 0.0
      %4463 = vmatpush1.msra.mxu0 0.0
      %4464 = vmatprep.subr.mxu0 0.0
      %4465 = vmatpush1.msra.mxu0 0.0
      %4466 = vmatprep.subr.mxu0 0.0
      %4467 = vmatpush1.msra.mxu0 0.0
      %4468 = vmatprep.subr.mxu0 0.0
      %4469 = vmatpush1.msra.mxu0 0.0
      %4470 = vmatprep.subr.mxu0 0.0
      %4471 = vmatpush1.msra.mxu0 0.0
      %4472 = vmatprep.subr.mxu0 0.0
      %4473 = vmatpush1.msra.mxu0 %v4440
      %4474 = vmatprep.subr.mxu0 0.0
      %4475 = vmatpush2.msra.mxu0 0.0
      %4476 = vmatprep.subr.mxu0 0.0
      %4477 = vmatpush2.msra.mxu0 0.0
      %4478 = vmatprep.subr.mxu0 0.0
      %4479 = vmatpush2.msra.mxu0 0.0
      %4480 = vmatprep.subr.mxu0 0.0
      %4481 = vmatpush2.msra.mxu0 0.0
      %4482 = vmatprep.subr.mxu0 0.0
      %4483 = vmatpush2.msra.mxu0 0.0
      %4484 = vmatprep.subr.mxu0 0.0
      %4485 = vmatpush2.msra.mxu0 0.0
      %4486 = vmatprep.subr.mxu0 0.0
      %4487 = vmatpush2.msra.mxu0 0.0
      %4488 = vmatprep.subr.mxu0 0.0
      %4489 = vmatpush2.msra.mxu0 0.0
      %4490 = vmatprep.subr.mxu0 0.0
      %4491 = vmatpush2.msra.mxu0 0.0
      %4492 = vmatprep.subr.mxu0 0.0
      %4493 = vmatpush2.msra.mxu0 0.0
      %4494 = vmatprep.subr.mxu0 0.0
      %4495 = vmatpush2.msra.mxu0 0.0
      %4496 = vmatprep.subr.mxu0 0.0
      %4497 = vmatpush2.msra.mxu0 0.0
      %4498 = vmatprep.subr.mxu0 0.0
      %4499 = vmatpush2.msra.mxu0 0.0
      %4500 = vmatprep.subr.mxu0 0.0
      %4501 = vmatpush2.msra.mxu0 0.0
      %4502 = vmatprep.subr.mxu0 0.0
      %4503 = vmatpush2.msra.mxu0 0.0
      %4504 = vmatprep.subr.mxu0 0.0
      %4505 = vmatpush2.msra.mxu0 0.0
      %4506 = vmatprep.mubr.f32.mxu0 0.0
      %4507 = vmatmul.mubr.f32.gmra.mxu0 %v4435
      %v4508 = vpop.f32.mrf.mxu0
      %v4509 = vadd.f32 0.0, %v4508
      %v4510 = vpop.f32.mrf.mxu0
      %4511 = vmatprep.mubr.f32.mxu0 0.0
      %4512 = vmatmul.mubr.f32.gmra.mxu0 %v4437
      %v4513 = vpop.f32.mrf.mxu0
      %v4514 = vadd.f32 0.0, %v4513
      %v4515 = vpop.f32.mrf.mxu0
      %4516 = vdwg.mxu0
      %v4517 = vsel %vm258, %v4422, 0
      %v4519 = vsel %vm258, %v4423, 0
      %v4522 = vsel %vm263, %v4425, 0
      %4524 = vmatprep.subr.mxu0 0.0
      %4525 = vmatpush1.msra.mxu0 0.0
      %4526 = vmatprep.subr.mxu0 0.0
      %4527 = vmatpush1.msra.mxu0 0.0
      %4528 = vmatprep.subr.mxu0 0.0
      %4529 = vmatpush1.msra.mxu0 0.0
      %4530 = vmatprep.subr.mxu0 0.0
      %4531 = vmatpush1.msra.mxu0 0.0
      %4532 = vmatprep.subr.mxu0 0.0
      %4533 = vmatpush1.msra.mxu0 0.0
      %4534 = vmatprep.subr.mxu0 0.0
      %4535 = vmatpush1.msra.mxu0 0.0
      %4536 = vmatprep.subr.mxu0 0.0
      %4537 = vmatpush1.msra.mxu0 0.0
      %4538 = vmatprep.subr.mxu0 0.0
      %4539 = vmatpush1.msra.mxu0 0.0
      %4540 = vmatprep.subr.mxu0 0.0
      %4541 = vmatpush1.msra.mxu0 0.0
      %4542 = vmatprep.subr.mxu0 0.0
      %4543 = vmatpush1.msra.mxu0 0.0
      %4544 = vmatprep.subr.mxu0 0.0
      %4545 = vmatpush1.msra.mxu0 0.0
      %4546 = vmatprep.subr.mxu0 0.0
      %4547 = vmatpush1.msra.mxu0 0.0
      %4548 = vmatprep.subr.mxu0 0.0
      %4549 = vmatpush1.msra.mxu0 0.0
      %4550 = vmatprep.subr.mxu0 0.0
      %4551 = vmatpush1.msra.mxu0 0.0
      %4552 = vmatprep.subr.mxu0 0.0
      %4553 = vmatpush1.msra.mxu0 0.0
      %4554 = vmatprep.subr.mxu0 0.0
      %4555 = vmatpush1.msra.mxu0 %v4522
      %4556 = vmatprep.subr.mxu0 0.0
      %4557 = vmatpush2.msra.mxu0 0.0
      %4558 = vmatprep.subr.mxu0 0.0
      %4559 = vmatpush2.msra.mxu0 0.0
      %4560 = vmatprep.subr.mxu0 0.0
      %4561 = vmatpush2.msra.mxu0 0.0
      %4562 = vmatprep.subr.mxu0 0.0
      %4563 = vmatpush2.msra.mxu0 0.0
      %4564 = vmatprep.subr.mxu0 0.0
      %4565 = vmatpush2.msra.mxu0 0.0
      %4566 = vmatprep.subr.mxu0 0.0
      %4567 = vmatpush2.msra.mxu0 0.0
      %4568 = vmatprep.subr.mxu0 0.0
      %4569 = vmatpush2.msra.mxu0 0.0
      %4570 = vmatprep.subr.mxu0 0.0
      %4571 = vmatpush2.msra.mxu0 0.0
      %4572 = vmatprep.subr.mxu0 0.0
      %4573 = vmatpush2.msra.mxu0 0.0
      %4574 = vmatprep.subr.mxu0 0.0
      %4575 = vmatpush2.msra.mxu0 0.0
      %4576 = vmatprep.subr.mxu0 0.0
      %4577 = vmatpush2.msra.mxu0 0.0
      %4578 = vmatprep.subr.mxu0 0.0
      %4579 = vmatpush2.msra.mxu0 0.0
      %4580 = vmatprep.subr.mxu0 0.0
      %4581 = vmatpush2.msra.mxu0 0.0
      %4582 = vmatprep.subr.mxu0 0.0
      %4583 = vmatpush2.msra.mxu0 0.0
      %4584 = vmatprep.subr.mxu0 0.0
      %4585 = vmatpush2.msra.mxu0 0.0
      %4586 = vmatprep.subr.mxu0 0.0
      %4587 = vmatpush2.msra.mxu0 0.0
      %4588 = vmatprep.mubr.f32.mxu0 0.0
      %4589 = vmatmul.mubr.f32.gmra.mxu0 %v4517
      %v4590 = vpop.f32.mrf.mxu0
      %v4591 = vadd.f32 %v4509, %v4590
      %v4592 = vpop.f32.mrf.mxu0
      %4593 = vmatprep.mubr.f32.mxu0 0.0
      %4594 = vmatmul.mubr.f32.gmra.mxu0 %v4519
      %v4595 = vpop.f32.mrf.mxu0
      %v4596 = vadd.f32 %v4514, %v4595
      %v4597 = vpop.f32.mrf.mxu0
      %4598 = vdwg.mxu0
      %v4599 = vld [vmem:[%s424] sm:$0xf]
      %v4600 = vrot.slane %v4422, 2
      %v4601 = vrot.slane %v4423, 2
      %v4602 = vsel %vm426, %v4600, %v4601
      %v4603 = vrot.slane %v4424, 2
      %v4604 = vsel %vm426, %v4601, %v4603
      %v4605 = vsel %vm258, %v4602, 0
      %v4607 = vsel %vm258, %v4604, 0
      %v4610 = vsel %vm263, %v4599, 0
      %4612 = vmatprep.subr.mxu0 0.0
      %4613 = vmatpush1.msra.mxu0 0.0
      %4614 = vmatprep.subr.mxu0 0.0
      %4615 = vmatpush1.msra.mxu0 0.0
      %4616 = vmatprep.subr.mxu0 0.0
      %4617 = vmatpush1.msra.mxu0 0.0
      %4618 = vmatprep.subr.mxu0 0.0
      %4619 = vmatpush1.msra.mxu0 0.0
      %4620 = vmatprep.subr.mxu0 0.0
      %4621 = vmatpush1.msra.mxu0 0.0
      %4622 = vmatprep.subr.mxu0 0.0
      %4623 = vmatpush1.msra.mxu0 0.0
      %4624 = vmatprep.subr.mxu0 0.0
      %4625 = vmatpush1.msra.mxu0 0.0
      %4626 = vmatprep.subr.mxu0 0.0
      %4627 = vmatpush1.msra.mxu0 0.0
      %4628 = vmatprep.subr.mxu0 0.0
      %4629 = vmatpush1.msra.mxu0 0.0
      %4630 = vmatprep.subr.mxu0 0.0
      %4631 = vmatpush1.msra.mxu0 0.0
      %4632 = vmatprep.subr.mxu0 0.0
      %4633 = vmatpush1.msra.mxu0 0.0
      %4634 = vmatprep.subr.mxu0 0.0
      %4635 = vmatpush1.msra.mxu0 0.0
      %4636 = vmatprep.subr.mxu0 0.0
      %4637 = vmatpush1.msra.mxu0 0.0
      %4638 = vmatprep.subr.mxu0 0.0
      %4639 = vmatpush1.msra.mxu0 0.0
      %4640 = vmatprep.subr.mxu0 0.0
      %4641 = vmatpush1.msra.mxu0 0.0
      %4642 = vmatprep.subr.mxu0 0.0
      %4643 = vmatpush1.msra.mxu0 %v4610
      %4644 = vmatprep.subr.mxu0 0.0
      %4645 = vmatpush2.msra.mxu0 0.0
      %4646 = vmatprep.subr.mxu0 0.0
      %4647 = vmatpush2.msra.mxu0 0.0
      %4648 = vmatprep.subr.mxu0 0.0
      %4649 = vmatpush2.msra.mxu0 0.0
      %4650 = vmatprep.subr.mxu0 0.0
      %4651 = vmatpush2.msra.mxu0 0.0
      %4652 = vmatprep.subr.mxu0 0.0
      %4653 = vmatpush2.msra.mxu0 0.0
      %4654 = vmatprep.subr.mxu0 0.0
      %4655 = vmatpush2.msra.mxu0 0.0
      %4656 = vmatprep.subr.mxu0 0.0
      %4657 = vmatpush2.msra.mxu0 0.0
      %4658 = vmatprep.subr.mxu0 0.0
      %4659 = vmatpush2.msra.mxu0 0.0
      %4660 = vmatprep.subr.mxu0 0.0
      %4661 = vmatpush2.msra.mxu0 0.0
      %4662 = vmatprep.subr.mxu0 0.0
      %4663 = vmatpush2.msra.mxu0 0.0
      %4664 = vmatprep.subr.mxu0 0.0
      %4665 = vmatpush2.msra.mxu0 0.0
      %4666 = vmatprep.subr.mxu0 0.0
      %4667 = vmatpush2.msra.mxu0 0.0
      %4668 = vmatprep.subr.mxu0 0.0
      %4669 = vmatpush2.msra.mxu0 0.0
      %4670 = vmatprep.subr.mxu0 0.0
      %4671 = vmatpush2.msra.mxu0 0.0
      %4672 = vmatprep.subr.mxu0 0.0
      %4673 = vmatpush2.msra.mxu0 0.0
      %4674 = vmatprep.subr.mxu0 0.0
      %4675 = vmatpush2.msra.mxu0 0.0
      %4676 = vmatprep.mubr.f32.mxu0 0.0
      %4677 = vmatmul.mubr.f32.gmra.mxu0 %v4605
      %v4678 = vpop.f32.mrf.mxu0
      %v4679 = vadd.f32 0.0, %v4678
      %v4680 = vpop.f32.mrf.mxu0
      %4681 = vmatprep.mubr.f32.mxu0 0.0
      %4682 = vmatmul.mubr.f32.gmra.mxu0 %v4607
      %v4683 = vpop.f32.mrf.mxu0
      %v4684 = vadd.f32 0.0, %v4683
      %v4685 = vpop.f32.mrf.mxu0
      %4686 = vdwg.mxu0
      %v4687 = vadd.f32 %v4591, %v4679
      %v4688 = vadd.f32 %v4596, %v4684
      %v4689 = vld [vmem:[%s4129] sm:$0xff]
      %v4690 = vld [vmem:[%s4129 + $0x8] sm:$0xff]
      %v4691 = vld [vmem:[%s4129 + $0x10] sm:$0x3]
      %v4692 = vld [vmem:[%s522] sm:$0xf]
      %v4694 = vsel %vm258, %v4689, 0
      %v4697 = vsel %vm258, %v4690, 0
      %v4700 = vsel %vm263, %v4692, 0
      %4702 = vmatprep.subr.mxu0 0.0
      %4703 = vmatpush1.msra.mxu0 0.0
      %4704 = vmatprep.subr.mxu0 0.0
      %4705 = vmatpush1.msra.mxu0 0.0
      %4706 = vmatprep.subr.mxu0 0.0
      %4707 = vmatpush1.msra.mxu0 0.0
      %4708 = vmatprep.subr.mxu0 0.0
      %4709 = vmatpush1.msra.mxu0 0.0
      %4710 = vmatprep.subr.mxu0 0.0
      %4711 = vmatpush1.msra.mxu0 0.0
      %4712 = vmatprep.subr.mxu0 0.0
      %4713 = vmatpush1.msra.mxu0 0.0
      %4714 = vmatprep.subr.mxu0 0.0
      %4715 = vmatpush1.msra.mxu0 0.0
      %4716 = vmatprep.subr.mxu0 0.0
      %4717 = vmatpush1.msra.mxu0 0.0
      %4718 = vmatprep.subr.mxu0 0.0
      %4719 = vmatpush1.msra.mxu0 0.0
      %4720 = vmatprep.subr.mxu0 0.0
      %4721 = vmatpush1.msra.mxu0 0.0
      %4722 = vmatprep.subr.mxu0 0.0
      %4723 = vmatpush1.msra.mxu0 0.0
      %4724 = vmatprep.subr.mxu0 0.0
      %4725 = vmatpush1.msra.mxu0 0.0
      %4726 = vmatprep.subr.mxu0 0.0
      %4727 = vmatpush1.msra.mxu0 0.0
      %4728 = vmatprep.subr.mxu0 0.0
      %4729 = vmatpush1.msra.mxu0 0.0
      %4730 = vmatprep.subr.mxu0 0.0
      %4731 = vmatpush1.msra.mxu0 0.0
      %4732 = vmatprep.subr.mxu0 0.0
      %4733 = vmatpush1.msra.mxu0 %v4700
      %4734 = vmatprep.subr.mxu0 0.0
      %4735 = vmatpush2.msra.mxu0 0.0
      %4736 = vmatprep.subr.mxu0 0.0
      %4737 = vmatpush2.msra.mxu0 0.0
      %4738 = vmatprep.subr.mxu0 0.0
      %4739 = vmatpush2.msra.mxu0 0.0
      %4740 = vmatprep.subr.mxu0 0.0
      %4741 = vmatpush2.msra.mxu0 0.0
      %4742 = vmatprep.subr.mxu0 0.0
      %4743 = vmatpush2.msra.mxu0 0.0
      %4744 = vmatprep.subr.mxu0 0.0
      %4745 = vmatpush2.msra.mxu0 0.0
      %4746 = vmatprep.subr.mxu0 0.0
      %4747 = vmatpush2.msra.mxu0 0.0
      %4748 = vmatprep.subr.mxu0 0.0
      %4749 = vmatpush2.msra.mxu0 0.0
      %4750 = vmatprep.subr.mxu0 0.0
      %4751 = vmatpush2.msra.mxu0 0.0
      %4752 = vmatprep.subr.mxu0 0.0
      %4753 = vmatpush2.msra.mxu0 0.0
      %4754 = vmatprep.subr.mxu0 0.0
      %4755 = vmatpush2.msra.mxu0 0.0
      %4756 = vmatprep.subr.mxu0 0.0
      %4757 = vmatpush2.msra.mxu0 0.0
      %4758 = vmatprep.subr.mxu0 0.0
      %4759 = vmatpush2.msra.mxu0 0.0
      %4760 = vmatprep.subr.mxu0 0.0
      %4761 = vmatpush2.msra.mxu0 0.0
      %4762 = vmatprep.subr.mxu0 0.0
      %4763 = vmatpush2.msra.mxu0 0.0
      %4764 = vmatprep.subr.mxu0 0.0
      %4765 = vmatpush2.msra.mxu0 0.0
      %4766 = vmatprep.mubr.f32.mxu0 0.0
      %4767 = vmatmul.mubr.f32.gmra.mxu0 %v4694
      %v4768 = vpop.f32.mrf.mxu0
      %v4769 = vadd.f32 0.0, %v4768
      %v4770 = vpop.f32.mrf.mxu0
      %4771 = vmatprep.mubr.f32.mxu0 0.0
      %4772 = vmatmul.mubr.f32.gmra.mxu0 %v4697
      %v4773 = vpop.f32.mrf.mxu0
      %v4774 = vadd.f32 0.0, %v4773
      %v4775 = vpop.f32.mrf.mxu0
      %4776 = vdwg.mxu0
      %v4777 = vadd.f32 %v4687, %v4769
      %v4778 = vadd.f32 %v4688, %v4774
      %v4779 = vld [vmem:[%s610] sm:$0xf]
      %v4781 = vrot.slane %v4689, 1
      %v4782 = vrot.slane %v4690, 1
      %v4783 = vsel %vm252, %v4781, %v4782
      %v4784 = vrot.slane %v4691, 1
      %v4785 = vsel %vm252, %v4782, %v4784
      %v4786 = vsel %vm258, %v4783, 0
      %v4788 = vsel %vm258, %v4785, 0
      %v4791 = vsel %vm263, %v4779, 0
      %4793 = vmatprep.subr.mxu0 0.0
      %4794 = vmatpush1.msra.mxu0 0.0
      %4795 = vmatprep.subr.mxu0 0.0
      %4796 = vmatpush1.msra.mxu0 0.0
      %4797 = vmatprep.subr.mxu0 0.0
      %4798 = vmatpush1.msra.mxu0 0.0
      %4799 = vmatprep.subr.mxu0 0.0
      %4800 = vmatpush1.msra.mxu0 0.0
      %4801 = vmatprep.subr.mxu0 0.0
      %4802 = vmatpush1.msra.mxu0 0.0
      %4803 = vmatprep.subr.mxu0 0.0
      %4804 = vmatpush1.msra.mxu0 0.0
      %4805 = vmatprep.subr.mxu0 0.0
      %4806 = vmatpush1.msra.mxu0 0.0
      %4807 = vmatprep.subr.mxu0 0.0
      %4808 = vmatpush1.msra.mxu0 0.0
      %4809 = vmatprep.subr.mxu0 0.0
      %4810 = vmatpush1.msra.mxu0 0.0
      %4811 = vmatprep.subr.mxu0 0.0
      %4812 = vmatpush1.msra.mxu0 0.0
      %4813 = vmatprep.subr.mxu0 0.0
      %4814 = vmatpush1.msra.mxu0 0.0
      %4815 = vmatprep.subr.mxu0 0.0
      %4816 = vmatpush1.msra.mxu0 0.0
      %4817 = vmatprep.subr.mxu0 0.0
      %4818 = vmatpush1.msra.mxu0 0.0
      %4819 = vmatprep.subr.mxu0 0.0
      %4820 = vmatpush1.msra.mxu0 0.0
      %4821 = vmatprep.subr.mxu0 0.0
      %4822 = vmatpush1.msra.mxu0 0.0
      %4823 = vmatprep.subr.mxu0 0.0
      %4824 = vmatpush1.msra.mxu0 %v4791
      %4825 = vmatprep.subr.mxu0 0.0
      %4826 = vmatpush2.msra.mxu0 0.0
      %4827 = vmatprep.subr.mxu0 0.0
      %4828 = vmatpush2.msra.mxu0 0.0
      %4829 = vmatprep.subr.mxu0 0.0
      %4830 = vmatpush2.msra.mxu0 0.0
      %4831 = vmatprep.subr.mxu0 0.0
      %4832 = vmatpush2.msra.mxu0 0.0
      %4833 = vmatprep.subr.mxu0 0.0
      %4834 = vmatpush2.msra.mxu0 0.0
      %4835 = vmatprep.subr.mxu0 0.0
      %4836 = vmatpush2.msra.mxu0 0.0
      %4837 = vmatprep.subr.mxu0 0.0
      %4838 = vmatpush2.msra.mxu0 0.0
      %4839 = vmatprep.subr.mxu0 0.0
      %4840 = vmatpush2.msra.mxu0 0.0
      %4841 = vmatprep.subr.mxu0 0.0
      %4842 = vmatpush2.msra.mxu0 0.0
      %4843 = vmatprep.subr.mxu0 0.0
      %4844 = vmatpush2.msra.mxu0 0.0
      %4845 = vmatprep.subr.mxu0 0.0
      %4846 = vmatpush2.msra.mxu0 0.0
      %4847 = vmatprep.subr.mxu0 0.0
      %4848 = vmatpush2.msra.mxu0 0.0
      %4849 = vmatprep.subr.mxu0 0.0
      %4850 = vmatpush2.msra.mxu0 0.0
      %4851 = vmatprep.subr.mxu0 0.0
      %4852 = vmatpush2.msra.mxu0 0.0
      %4853 = vmatprep.subr.mxu0 0.0
      %4854 = vmatpush2.msra.mxu0 0.0
      %4855 = vmatprep.subr.mxu0 0.0
      %4856 = vmatpush2.msra.mxu0 0.0
      %4857 = vmatprep.mubr.f32.mxu0 0.0
      %4858 = vmatmul.mubr.f32.gmra.mxu0 %v4786
      %v4859 = vpop.f32.mrf.mxu0
      %v4860 = vadd.f32 0.0, %v4859
      %v4861 = vpop.f32.mrf.mxu0
      %4862 = vmatprep.mubr.f32.mxu0 0.0
      %4863 = vmatmul.mubr.f32.gmra.mxu0 %v4788
      %v4864 = vpop.f32.mrf.mxu0
      %v4865 = vadd.f32 0.0, %v4864
      %v4866 = vpop.f32.mrf.mxu0
      %4867 = vdwg.mxu0
      %v4868 = vadd.f32 %v4777, %v4860
      %v4869 = vadd.f32 %v4778, %v4865
      %v4870 = vld [vmem:[%s702] sm:$0xf]
      %v4871 = vrot.slane %v4689, 2
      %v4872 = vrot.slane %v4690, 2
      %v4873 = vsel %vm426, %v4871, %v4872
      %v4874 = vrot.slane %v4691, 2
      %v4875 = vsel %vm426, %v4872, %v4874
      %v4876 = vsel %vm258, %v4873, 0
      %v4878 = vsel %vm258, %v4875, 0
      %v4881 = vsel %vm263, %v4870, 0
      %4883 = vmatprep.subr.mxu0 0.0
      %4884 = vmatpush1.msra.mxu0 0.0
      %4885 = vmatprep.subr.mxu0 0.0
      %4886 = vmatpush1.msra.mxu0 0.0
      %4887 = vmatprep.subr.mxu0 0.0
      %4888 = vmatpush1.msra.mxu0 0.0
      %4889 = vmatprep.subr.mxu0 0.0
      %4890 = vmatpush1.msra.mxu0 0.0
      %4891 = vmatprep.subr.mxu0 0.0
      %4892 = vmatpush1.msra.mxu0 0.0
      %4893 = vmatprep.subr.mxu0 0.0
      %4894 = vmatpush1.msra.mxu0 0.0
      %4895 = vmatprep.subr.mxu0 0.0
      %4896 = vmatpush1.msra.mxu0 0.0
      %4897 = vmatprep.subr.mxu0 0.0
      %4898 = vmatpush1.msra.mxu0 0.0
      %4899 = vmatprep.subr.mxu0 0.0
      %4900 = vmatpush1.msra.mxu0 0.0
      %4901 = vmatprep.subr.mxu0 0.0
      %4902 = vmatpush1.msra.mxu0 0.0
      %4903 = vmatprep.subr.mxu0 0.0
      %4904 = vmatpush1.msra.mxu0 0.0
      %4905 = vmatprep.subr.mxu0 0.0
      %4906 = vmatpush1.msra.mxu0 0.0
      %4907 = vmatprep.subr.mxu0 0.0
      %4908 = vmatpush1.msra.mxu0 0.0
      %4909 = vmatprep.subr.mxu0 0.0
      %4910 = vmatpush1.msra.mxu0 0.0
      %4911 = vmatprep.subr.mxu0 0.0
      %4912 = vmatpush1.msra.mxu0 0.0
      %4913 = vmatprep.subr.mxu0 0.0
      %4914 = vmatpush1.msra.mxu0 %v4881
      %4915 = vmatprep.subr.mxu0 0.0
      %4916 = vmatpush2.msra.mxu0 0.0
      %4917 = vmatprep.subr.mxu0 0.0
      %4918 = vmatpush2.msra.mxu0 0.0
      %4919 = vmatprep.subr.mxu0 0.0
      %4920 = vmatpush2.msra.mxu0 0.0
      %4921 = vmatprep.subr.mxu0 0.0
      %4922 = vmatpush2.msra.mxu0 0.0
      %4923 = vmatprep.subr.mxu0 0.0
      %4924 = vmatpush2.msra.mxu0 0.0
      %4925 = vmatprep.subr.mxu0 0.0
      %4926 = vmatpush2.msra.mxu0 0.0
      %4927 = vmatprep.subr.mxu0 0.0
      %4928 = vmatpush2.msra.mxu0 0.0
      %4929 = vmatprep.subr.mxu0 0.0
      %4930 = vmatpush2.msra.mxu0 0.0
      %4931 = vmatprep.subr.mxu0 0.0
      %4932 = vmatpush2.msra.mxu0 0.0
      %4933 = vmatprep.subr.mxu0 0.0
      %4934 = vmatpush2.msra.mxu0 0.0
      %4935 = vmatprep.subr.mxu0 0.0
      %4936 = vmatpush2.msra.mxu0 0.0
      %4937 = vmatprep.subr.mxu0 0.0
      %4938 = vmatpush2.msra.mxu0 0.0
      %4939 = vmatprep.subr.mxu0 0.0
      %4940 = vmatpush2.msra.mxu0 0.0
      %4941 = vmatprep.subr.mxu0 0.0
      %4942 = vmatpush2.msra.mxu0 0.0
      %4943 = vmatprep.subr.mxu0 0.0
      %4944 = vmatpush2.msra.mxu0 0.0
      %4945 = vmatprep.subr.mxu0 0.0
      %4946 = vmatpush2.msra.mxu0 0.0
      %4947 = vmatprep.mubr.f32.mxu0 0.0
      %4948 = vmatmul.mubr.f32.gmra.mxu0 %v4876
      %v4949 = vpop.f32.mrf.mxu0
      %v4950 = vadd.f32 0.0, %v4949
      %v4951 = vpop.f32.mrf.mxu0
      %4952 = vmatprep.mubr.f32.mxu0 0.0
      %4953 = vmatmul.mubr.f32.gmra.mxu0 %v4878
      %v4954 = vpop.f32.mrf.mxu0
      %v4955 = vadd.f32 0.0, %v4954
      %v4956 = vpop.f32.mrf.mxu0
      %4957 = vdwg.mxu0
      %v4958 = vadd.f32 %v4868, %v4950
      %v4959 = vadd.f32 %v4869, %v4955
      %s4960 = sadd.s32 %s240, 7
      %s4961 = smul.u32 %s4960, 24
      %s4962 = scalar_lea.vmem %s222, %s4961
      %v4963 = vld [vmem:[%s4962] sm:$0xff]
      %v4964 = vld [vmem:[%s4962 + $0x8] sm:$0xff]
      %v4965 = vld [vmem:[%s4962 + $0x10] sm:$0x3]
      %v4966 = vld [vmem:[%s799] sm:$0xf]
      %v4968 = vsel %vm258, %v4963, 0
      %v4971 = vsel %vm258, %v4964, 0
      %v4974 = vsel %vm263, %v4966, 0
      %4976 = vmatprep.subr.mxu0 0.0
      %4977 = vmatpush1.msra.mxu0 0.0
      %4978 = vmatprep.subr.mxu0 0.0
      %4979 = vmatpush1.msra.mxu0 0.0
      %4980 = vmatprep.subr.mxu0 0.0
      %4981 = vmatpush1.msra.mxu0 0.0
      %4982 = vmatprep.subr.mxu0 0.0
      %4983 = vmatpush1.msra.mxu0 0.0
      %4984 = vmatprep.subr.mxu0 0.0
      %4985 = vmatpush1.msra.mxu0 0.0
      %4986 = vmatprep.subr.mxu0 0.0
      %4987 = vmatpush1.msra.mxu0 0.0
      %4988 = vmatprep.subr.mxu0 0.0
      %4989 = vmatpush1.msra.mxu0 0.0
      %4990 = vmatprep.subr.mxu0 0.0
      %4991 = vmatpush1.msra.mxu0 0.0
      %4992 = vmatprep.subr.mxu0 0.0
      %4993 = vmatpush1.msra.mxu0 0.0
      %4994 = vmatprep.subr.mxu0 0.0
      %4995 = vmatpush1.msra.mxu0 0.0
      %4996 = vmatprep.subr.mxu0 0.0
      %4997 = vmatpush1.msra.mxu0 0.0
      %4998 = vmatprep.subr.mxu0 0.0
      %4999 = vmatpush1.msra.mxu0 0.0
      %5000 = vmatprep.subr.mxu0 0.0
      %5001 = vmatpush1.msra.mxu0 0.0
      %5002 = vmatprep.subr.mxu0 0.0
      %5003 = vmatpush1.msra.mxu0 0.0
      %5004 = vmatprep.subr.mxu0 0.0
      %5005 = vmatpush1.msra.mxu0 0.0
      %5006 = vmatprep.subr.mxu0 0.0
      %5007 = vmatpush1.msra.mxu0 %v4974
      %5008 = vmatprep.subr.mxu0 0.0
      %5009 = vmatpush2.msra.mxu0 0.0
      %5010 = vmatprep.subr.mxu0 0.0
      %5011 = vmatpush2.msra.mxu0 0.0
      %5012 = vmatprep.subr.mxu0 0.0
      %5013 = vmatpush2.msra.mxu0 0.0
      %5014 = vmatprep.subr.mxu0 0.0
      %5015 = vmatpush2.msra.mxu0 0.0
      %5016 = vmatprep.subr.mxu0 0.0
      %5017 = vmatpush2.msra.mxu0 0.0
      %5018 = vmatprep.subr.mxu0 0.0
      %5019 = vmatpush2.msra.mxu0 0.0
      %5020 = vmatprep.subr.mxu0 0.0
      %5021 = vmatpush2.msra.mxu0 0.0
      %5022 = vmatprep.subr.mxu0 0.0
      %5023 = vmatpush2.msra.mxu0 0.0
      %5024 = vmatprep.subr.mxu0 0.0
      %5025 = vmatpush2.msra.mxu0 0.0
      %5026 = vmatprep.subr.mxu0 0.0
      %5027 = vmatpush2.msra.mxu0 0.0
      %5028 = vmatprep.subr.mxu0 0.0
      %5029 = vmatpush2.msra.mxu0 0.0
      %5030 = vmatprep.subr.mxu0 0.0
      %5031 = vmatpush2.msra.mxu0 0.0
      %5032 = vmatprep.subr.mxu0 0.0
      %5033 = vmatpush2.msra.mxu0 0.0
      %5034 = vmatprep.subr.mxu0 0.0
      %5035 = vmatpush2.msra.mxu0 0.0
      %5036 = vmatprep.subr.mxu0 0.0
      %5037 = vmatpush2.msra.mxu0 0.0
      %5038 = vmatprep.subr.mxu0 0.0
      %5039 = vmatpush2.msra.mxu0 0.0
      %5040 = vmatprep.mubr.f32.mxu0 0.0
      %5041 = vmatmul.mubr.f32.gmra.mxu0 %v4968
      %v5042 = vpop.f32.mrf.mxu0
      %v5043 = vadd.f32 0.0, %v5042
      %v5044 = vpop.f32.mrf.mxu0
      %5045 = vmatprep.mubr.f32.mxu0 0.0
      %5046 = vmatmul.mubr.f32.gmra.mxu0 %v4971
      %v5047 = vpop.f32.mrf.mxu0
      %v5048 = vadd.f32 0.0, %v5047
      %v5049 = vpop.f32.mrf.mxu0
      %5050 = vdwg.mxu0
      %v5051 = vadd.f32 %v4958, %v5043
      %v5052 = vadd.f32 %v4959, %v5048
      %v5053 = vld [vmem:[%s887] sm:$0xf]
      %v5055 = vrot.slane %v4963, 1
      %v5056 = vrot.slane %v4964, 1
      %v5057 = vsel %vm252, %v5055, %v5056
      %v5058 = vrot.slane %v4965, 1
      %v5059 = vsel %vm252, %v5056, %v5058
      %v5060 = vsel %vm258, %v5057, 0
      %v5062 = vsel %vm258, %v5059, 0
      %v5065 = vsel %vm263, %v5053, 0
      %5067 = vmatprep.subr.mxu0 0.0
      %5068 = vmatpush1.msra.mxu0 0.0
      %5069 = vmatprep.subr.mxu0 0.0
      %5070 = vmatpush1.msra.mxu0 0.0
      %5071 = vmatprep.subr.mxu0 0.0
      %5072 = vmatpush1.msra.mxu0 0.0
      %5073 = vmatprep.subr.mxu0 0.0
      %5074 = vmatpush1.msra.mxu0 0.0
      %5075 = vmatprep.subr.mxu0 0.0
      %5076 = vmatpush1.msra.mxu0 0.0
      %5077 = vmatprep.subr.mxu0 0.0
      %5078 = vmatpush1.msra.mxu0 0.0
      %5079 = vmatprep.subr.mxu0 0.0
      %5080 = vmatpush1.msra.mxu0 0.0
      %5081 = vmatprep.subr.mxu0 0.0
      %5082 = vmatpush1.msra.mxu0 0.0
      %5083 = vmatprep.subr.mxu0 0.0
      %5084 = vmatpush1.msra.mxu0 0.0
      %5085 = vmatprep.subr.mxu0 0.0
      %5086 = vmatpush1.msra.mxu0 0.0
      %5087 = vmatprep.subr.mxu0 0.0
      %5088 = vmatpush1.msra.mxu0 0.0
      %5089 = vmatprep.subr.mxu0 0.0
      %5090 = vmatpush1.msra.mxu0 0.0
      %5091 = vmatprep.subr.mxu0 0.0
      %5092 = vmatpush1.msra.mxu0 0.0
      %5093 = vmatprep.subr.mxu0 0.0
      %5094 = vmatpush1.msra.mxu0 0.0
      %5095 = vmatprep.subr.mxu0 0.0
      %5096 = vmatpush1.msra.mxu0 0.0
      %5097 = vmatprep.subr.mxu0 0.0
      %5098 = vmatpush1.msra.mxu0 %v5065
      %5099 = vmatprep.subr.mxu0 0.0
      %5100 = vmatpush2.msra.mxu0 0.0
      %5101 = vmatprep.subr.mxu0 0.0
      %5102 = vmatpush2.msra.mxu0 0.0
      %5103 = vmatprep.subr.mxu0 0.0
      %5104 = vmatpush2.msra.mxu0 0.0
      %5105 = vmatprep.subr.mxu0 0.0
      %5106 = vmatpush2.msra.mxu0 0.0
      %5107 = vmatprep.subr.mxu0 0.0
      %5108 = vmatpush2.msra.mxu0 0.0
      %5109 = vmatprep.subr.mxu0 0.0
      %5110 = vmatpush2.msra.mxu0 0.0
      %5111 = vmatprep.subr.mxu0 0.0
      %5112 = vmatpush2.msra.mxu0 0.0
      %5113 = vmatprep.subr.mxu0 0.0
      %5114 = vmatpush2.msra.mxu0 0.0
      %5115 = vmatprep.subr.mxu0 0.0
      %5116 = vmatpush2.msra.mxu0 0.0
      %5117 = vmatprep.subr.mxu0 0.0
      %5118 = vmatpush2.msra.mxu0 0.0
      %5119 = vmatprep.subr.mxu0 0.0
      %5120 = vmatpush2.msra.mxu0 0.0
      %5121 = vmatprep.subr.mxu0 0.0
      %5122 = vmatpush2.msra.mxu0 0.0
      %5123 = vmatprep.subr.mxu0 0.0
      %5124 = vmatpush2.msra.mxu0 0.0
      %5125 = vmatprep.subr.mxu0 0.0
      %5126 = vmatpush2.msra.mxu0 0.0
      %5127 = vmatprep.subr.mxu0 0.0
      %5128 = vmatpush2.msra.mxu0 0.0
      %5129 = vmatprep.subr.mxu0 0.0
      %5130 = vmatpush2.msra.mxu0 0.0
      %5131 = vmatprep.mubr.f32.mxu0 0.0
      %5132 = vmatmul.mubr.f32.gmra.mxu0 %v5060
      %v5133 = vpop.f32.mrf.mxu0
      %v5134 = vadd.f32 0.0, %v5133
      %v5135 = vpop.f32.mrf.mxu0
      %5136 = vmatprep.mubr.f32.mxu0 0.0
      %5137 = vmatmul.mubr.f32.gmra.mxu0 %v5062
      %v5138 = vpop.f32.mrf.mxu0
      %v5139 = vadd.f32 0.0, %v5138
      %v5140 = vpop.f32.mrf.mxu0
      %5141 = vdwg.mxu0
      %v5142 = vadd.f32 %v5051, %v5134
      %v5143 = vadd.f32 %v5052, %v5139
      %v5144 = vld [vmem:[%s979] sm:$0xf]
      %v5145 = vrot.slane %v4963, 2
      %v5146 = vrot.slane %v4964, 2
      %v5147 = vsel %vm426, %v5145, %v5146
      %v5148 = vrot.slane %v4965, 2
      %v5149 = vsel %vm426, %v5146, %v5148
      %v5150 = vsel %vm258, %v5147, 0
      %v5152 = vsel %vm258, %v5149, 0
      %v5155 = vsel %vm263, %v5144, 0
      %5157 = vmatprep.subr.mxu0 0.0
      %5158 = vmatpush1.msra.mxu0 0.0
      %5159 = vmatprep.subr.mxu0 0.0
      %5160 = vmatpush1.msra.mxu0 0.0
      %5161 = vmatprep.subr.mxu0 0.0
      %5162 = vmatpush1.msra.mxu0 0.0
      %5163 = vmatprep.subr.mxu0 0.0
      %5164 = vmatpush1.msra.mxu0 0.0
      %5165 = vmatprep.subr.mxu0 0.0
      %5166 = vmatpush1.msra.mxu0 0.0
      %5167 = vmatprep.subr.mxu0 0.0
      %5168 = vmatpush1.msra.mxu0 0.0
      %5169 = vmatprep.subr.mxu0 0.0
      %5170 = vmatpush1.msra.mxu0 0.0
      %5171 = vmatprep.subr.mxu0 0.0
      %5172 = vmatpush1.msra.mxu0 0.0
      %5173 = vmatprep.subr.mxu0 0.0
      %5174 = vmatpush1.msra.mxu0 0.0
      %5175 = vmatprep.subr.mxu0 0.0
      %5176 = vmatpush1.msra.mxu0 0.0
      %5177 = vmatprep.subr.mxu0 0.0
      %5178 = vmatpush1.msra.mxu0 0.0
      %5179 = vmatprep.subr.mxu0 0.0
      %5180 = vmatpush1.msra.mxu0 0.0
      %5181 = vmatprep.subr.mxu0 0.0
      %5182 = vmatpush1.msra.mxu0 0.0
      %5183 = vmatprep.subr.mxu0 0.0
      %5184 = vmatpush1.msra.mxu0 0.0
      %5185 = vmatprep.subr.mxu0 0.0
      %5186 = vmatpush1.msra.mxu0 0.0
      %5187 = vmatprep.subr.mxu0 0.0
      %5188 = vmatpush1.msra.mxu0 %v5155
      %5189 = vmatprep.subr.mxu0 0.0
      %5190 = vmatpush2.msra.mxu0 0.0
      %5191 = vmatprep.subr.mxu0 0.0
      %5192 = vmatpush2.msra.mxu0 0.0
      %5193 = vmatprep.subr.mxu0 0.0
      %5194 = vmatpush2.msra.mxu0 0.0
      %5195 = vmatprep.subr.mxu0 0.0
      %5196 = vmatpush2.msra.mxu0 0.0
      %5197 = vmatprep.subr.mxu0 0.0
      %5198 = vmatpush2.msra.mxu0 0.0
      %5199 = vmatprep.subr.mxu0 0.0
      %5200 = vmatpush2.msra.mxu0 0.0
      %5201 = vmatprep.subr.mxu0 0.0
      %5202 = vmatpush2.msra.mxu0 0.0
      %5203 = vmatprep.subr.mxu0 0.0
      %5204 = vmatpush2.msra.mxu0 0.0
      %5205 = vmatprep.subr.mxu0 0.0
      %5206 = vmatpush2.msra.mxu0 0.0
      %5207 = vmatprep.subr.mxu0 0.0
      %5208 = vmatpush2.msra.mxu0 0.0
      %5209 = vmatprep.subr.mxu0 0.0
      %5210 = vmatpush2.msra.mxu0 0.0
      %5211 = vmatprep.subr.mxu0 0.0
      %5212 = vmatpush2.msra.mxu0 0.0
      %5213 = vmatprep.subr.mxu0 0.0
      %5214 = vmatpush2.msra.mxu0 0.0
      %5215 = vmatprep.subr.mxu0 0.0
      %5216 = vmatpush2.msra.mxu0 0.0
      %5217 = vmatprep.subr.mxu0 0.0
      %5218 = vmatpush2.msra.mxu0 0.0
      %5219 = vmatprep.subr.mxu0 0.0
      %5220 = vmatpush2.msra.mxu0 0.0
      %5221 = vmatprep.mubr.f32.mxu0 0.0
      %5222 = vmatmul.mubr.f32.gmra.mxu0 %v5150
      %v5223 = vpop.f32.mrf.mxu0
      %v5224 = vadd.f32 0.0, %v5223
      %v5225 = vpop.f32.mrf.mxu0
      %5226 = vmatprep.mubr.f32.mxu0 0.0
      %5227 = vmatmul.mubr.f32.gmra.mxu0 %v5152
      %v5228 = vpop.f32.mrf.mxu0
      %v5229 = vadd.f32 0.0, %v5228
      %v5230 = vpop.f32.mrf.mxu0
      %5231 = vdwg.mxu0
      %v5232 = vadd.f32 %v5142, %v5224
      %v5233 = vadd.f32 %v5143, %v5229
      %s5234 = scalar_lea.vmem %s232, 80
      %5235 = vst [vmem:[%s5234] sm:$0xff] %v5232
      %5236 = vst [vmem:[%s5234 + $0x8] sm:$0xff] %v5233
      %v5237 = vadd.f32 %v5232, %v5233
      %v5238 = vrot.slane %v5237, 4
      %v5239 = vadd.f32 %v5237, %v5238
      %v5240 = vrot.slane %v5239, 2
      %v5241 = vadd.f32 %v5239, %v5240
      %v5242 = vrot.slane %v5241, 1
      %v5243 = vadd.f32 %v5241, %v5242
      %v5244 = vadd.f32 %v4411, %v5243
      %v5245 = vmul.f32 %v5232, %v5232
      %v5246 = vmul.f32 %v5233, %v5233
      %v5247 = vadd.f32 %v5245, %v5246
      %v5248 = vrot.slane %v5247, 4
      %v5249 = vadd.f32 %v5247, %v5248
      %v5250 = vrot.slane %v5249, 2
      %v5251 = vadd.f32 %v5249, %v5250
      %v5252 = vrot.slane %v5251, 1
      %v5253 = vadd.f32 %v5251, %v5252
      %v5254 = vadd.f32 %v4421, %v5253
      %v5255 = vld [vmem:[%s4129] sm:$0xff]
      %v5256 = vld [vmem:[%s4129 + $0x8] sm:$0xff]
      %v5257 = vld [vmem:[%s4129 + $0x10] sm:$0x3]
      %v5258 = vld [vmem:[%s1] sm:$0xf]
      %v5259 = vld [vmem:[%s247] sm:$0xf]
      %v5263 = vrot.slane %v5255, 1
      %v5264 = vrot.slane %v5256, 1
      %v5265 = vsel %vm252, %v5263, %v5264
      %v5266 = vrot.slane %v5257, 1
      %v5267 = vsel %vm252, %v5264, %v5266
      %v5268 = vsel %vm258, %v5265, 0
      %v5270 = vsel %vm258, %v5267, 0
      %v5273 = vsel %vm263, %v5259, 0
      %5275 = vmatprep.subr.mxu0 0.0
      %5276 = vmatpush1.msra.mxu0 0.0
      %5277 = vmatprep.subr.mxu0 0.0
      %5278 = vmatpush1.msra.mxu0 0.0
      %5279 = vmatprep.subr.mxu0 0.0
      %5280 = vmatpush1.msra.mxu0 0.0
      %5281 = vmatprep.subr.mxu0 0.0
      %5282 = vmatpush1.msra.mxu0 0.0
      %5283 = vmatprep.subr.mxu0 0.0
      %5284 = vmatpush1.msra.mxu0 0.0
      %5285 = vmatprep.subr.mxu0 0.0
      %5286 = vmatpush1.msra.mxu0 0.0
      %5287 = vmatprep.subr.mxu0 0.0
      %5288 = vmatpush1.msra.mxu0 0.0
      %5289 = vmatprep.subr.mxu0 0.0
      %5290 = vmatpush1.msra.mxu0 0.0
      %5291 = vmatprep.subr.mxu0 0.0
      %5292 = vmatpush1.msra.mxu0 0.0
      %5293 = vmatprep.subr.mxu0 0.0
      %5294 = vmatpush1.msra.mxu0 0.0
      %5295 = vmatprep.subr.mxu0 0.0
      %5296 = vmatpush1.msra.mxu0 0.0
      %5297 = vmatprep.subr.mxu0 0.0
      %5298 = vmatpush1.msra.mxu0 0.0
      %5299 = vmatprep.subr.mxu0 0.0
      %5300 = vmatpush1.msra.mxu0 0.0
      %5301 = vmatprep.subr.mxu0 0.0
      %5302 = vmatpush1.msra.mxu0 0.0
      %5303 = vmatprep.subr.mxu0 0.0
      %5304 = vmatpush1.msra.mxu0 0.0
      %5305 = vmatprep.subr.mxu0 0.0
      %5306 = vmatpush1.msra.mxu0 %v5273
      %5307 = vmatprep.subr.mxu0 0.0
      %5308 = vmatpush2.msra.mxu0 0.0
      %5309 = vmatprep.subr.mxu0 0.0
      %5310 = vmatpush2.msra.mxu0 0.0
      %5311 = vmatprep.subr.mxu0 0.0
      %5312 = vmatpush2.msra.mxu0 0.0
      %5313 = vmatprep.subr.mxu0 0.0
      %5314 = vmatpush2.msra.mxu0 0.0
      %5315 = vmatprep.subr.mxu0 0.0
      %5316 = vmatpush2.msra.mxu0 0.0
      %5317 = vmatprep.subr.mxu0 0.0
      %5318 = vmatpush2.msra.mxu0 0.0
      %5319 = vmatprep.subr.mxu0 0.0
      %5320 = vmatpush2.msra.mxu0 0.0
      %5321 = vmatprep.subr.mxu0 0.0
      %5322 = vmatpush2.msra.mxu0 0.0
      %5323 = vmatprep.subr.mxu0 0.0
      %5324 = vmatpush2.msra.mxu0 0.0
      %5325 = vmatprep.subr.mxu0 0.0
      %5326 = vmatpush2.msra.mxu0 0.0
      %5327 = vmatprep.subr.mxu0 0.0
      %5328 = vmatpush2.msra.mxu0 0.0
      %5329 = vmatprep.subr.mxu0 0.0
      %5330 = vmatpush2.msra.mxu0 0.0
      %5331 = vmatprep.subr.mxu0 0.0
      %5332 = vmatpush2.msra.mxu0 0.0
      %5333 = vmatprep.subr.mxu0 0.0
      %5334 = vmatpush2.msra.mxu0 0.0
      %5335 = vmatprep.subr.mxu0 0.0
      %5336 = vmatpush2.msra.mxu0 0.0
      %5337 = vmatprep.subr.mxu0 0.0
      %5338 = vmatpush2.msra.mxu0 0.0
      %5339 = vmatprep.mubr.f32.mxu0 0.0
      %5340 = vmatmul.mubr.f32.gmra.mxu0 %v5268
      %v5341 = vpop.f32.mrf.mxu0
      %v5342 = vadd.f32 0.0, %v5341
      %v5343 = vpop.f32.mrf.mxu0
      %5344 = vmatprep.mubr.f32.mxu0 0.0
      %5345 = vmatmul.mubr.f32.gmra.mxu0 %v5270
      %v5346 = vpop.f32.mrf.mxu0
      %v5347 = vadd.f32 0.0, %v5346
      %v5348 = vpop.f32.mrf.mxu0
      %5349 = vdwg.mxu0
      %v5350 = vsel %vm258, %v5255, 0
      %v5352 = vsel %vm258, %v5256, 0
      %v5355 = vsel %vm263, %v5258, 0
      %5357 = vmatprep.subr.mxu0 0.0
      %5358 = vmatpush1.msra.mxu0 0.0
      %5359 = vmatprep.subr.mxu0 0.0
      %5360 = vmatpush1.msra.mxu0 0.0
      %5361 = vmatprep.subr.mxu0 0.0
      %5362 = vmatpush1.msra.mxu0 0.0
      %5363 = vmatprep.subr.mxu0 0.0
      %5364 = vmatpush1.msra.mxu0 0.0
      %5365 = vmatprep.subr.mxu0 0.0
      %5366 = vmatpush1.msra.mxu0 0.0
      %5367 = vmatprep.subr.mxu0 0.0
      %5368 = vmatpush1.msra.mxu0 0.0
      %5369 = vmatprep.subr.mxu0 0.0
      %5370 = vmatpush1.msra.mxu0 0.0
      %5371 = vmatprep.subr.mxu0 0.0
      %5372 = vmatpush1.msra.mxu0 0.0
      %5373 = vmatprep.subr.mxu0 0.0
      %5374 = vmatpush1.msra.mxu0 0.0
      %5375 = vmatprep.subr.mxu0 0.0
      %5376 = vmatpush1.msra.mxu0 0.0
      %5377 = vmatprep.subr.mxu0 0.0
      %5378 = vmatpush1.msra.mxu0 0.0
      %5379 = vmatprep.subr.mxu0 0.0
      %5380 = vmatpush1.msra.mxu0 0.0
      %5381 = vmatprep.subr.mxu0 0.0
      %5382 = vmatpush1.msra.mxu0 0.0
      %5383 = vmatprep.subr.mxu0 0.0
      %5384 = vmatpush1.msra.mxu0 0.0
      %5385 = vmatprep.subr.mxu0 0.0
      %5386 = vmatpush1.msra.mxu0 0.0
      %5387 = vmatprep.subr.mxu0 0.0
      %5388 = vmatpush1.msra.mxu0 %v5355
      %5389 = vmatprep.subr.mxu0 0.0
      %5390 = vmatpush2.msra.mxu0 0.0
      %5391 = vmatprep.subr.mxu0 0.0
      %5392 = vmatpush2.msra.mxu0 0.0
      %5393 = vmatprep.subr.mxu0 0.0
      %5394 = vmatpush2.msra.mxu0 0.0
      %5395 = vmatprep.subr.mxu0 0.0
      %5396 = vmatpush2.msra.mxu0 0.0
      %5397 = vmatprep.subr.mxu0 0.0
      %5398 = vmatpush2.msra.mxu0 0.0
      %5399 = vmatprep.subr.mxu0 0.0
      %5400 = vmatpush2.msra.mxu0 0.0
      %5401 = vmatprep.subr.mxu0 0.0
      %5402 = vmatpush2.msra.mxu0 0.0
      %5403 = vmatprep.subr.mxu0 0.0
      %5404 = vmatpush2.msra.mxu0 0.0
      %5405 = vmatprep.subr.mxu0 0.0
      %5406 = vmatpush2.msra.mxu0 0.0
      %5407 = vmatprep.subr.mxu0 0.0
      %5408 = vmatpush2.msra.mxu0 0.0
      %5409 = vmatprep.subr.mxu0 0.0
      %5410 = vmatpush2.msra.mxu0 0.0
      %5411 = vmatprep.subr.mxu0 0.0
      %5412 = vmatpush2.msra.mxu0 0.0
      %5413 = vmatprep.subr.mxu0 0.0
      %5414 = vmatpush2.msra.mxu0 0.0
      %5415 = vmatprep.subr.mxu0 0.0
      %5416 = vmatpush2.msra.mxu0 0.0
      %5417 = vmatprep.subr.mxu0 0.0
      %5418 = vmatpush2.msra.mxu0 0.0
      %5419 = vmatprep.subr.mxu0 0.0
      %5420 = vmatpush2.msra.mxu0 0.0
      %5421 = vmatprep.mubr.f32.mxu0 0.0
      %5422 = vmatmul.mubr.f32.gmra.mxu0 %v5350
      %v5423 = vpop.f32.mrf.mxu0
      %v5424 = vadd.f32 %v5342, %v5423
      %v5425 = vpop.f32.mrf.mxu0
      %5426 = vmatprep.mubr.f32.mxu0 0.0
      %5427 = vmatmul.mubr.f32.gmra.mxu0 %v5352
      %v5428 = vpop.f32.mrf.mxu0
      %v5429 = vadd.f32 %v5347, %v5428
      %v5430 = vpop.f32.mrf.mxu0
      %5431 = vdwg.mxu0
      %v5432 = vld [vmem:[%s424] sm:$0xf]
      %v5433 = vrot.slane %v5255, 2
      %v5434 = vrot.slane %v5256, 2
      %v5435 = vsel %vm426, %v5433, %v5434
      %v5436 = vrot.slane %v5257, 2
      %v5437 = vsel %vm426, %v5434, %v5436
      %v5438 = vsel %vm258, %v5435, 0
      %v5440 = vsel %vm258, %v5437, 0
      %v5443 = vsel %vm263, %v5432, 0
      %5445 = vmatprep.subr.mxu0 0.0
      %5446 = vmatpush1.msra.mxu0 0.0
      %5447 = vmatprep.subr.mxu0 0.0
      %5448 = vmatpush1.msra.mxu0 0.0
      %5449 = vmatprep.subr.mxu0 0.0
      %5450 = vmatpush1.msra.mxu0 0.0
      %5451 = vmatprep.subr.mxu0 0.0
      %5452 = vmatpush1.msra.mxu0 0.0
      %5453 = vmatprep.subr.mxu0 0.0
      %5454 = vmatpush1.msra.mxu0 0.0
      %5455 = vmatprep.subr.mxu0 0.0
      %5456 = vmatpush1.msra.mxu0 0.0
      %5457 = vmatprep.subr.mxu0 0.0
      %5458 = vmatpush1.msra.mxu0 0.0
      %5459 = vmatprep.subr.mxu0 0.0
      %5460 = vmatpush1.msra.mxu0 0.0
      %5461 = vmatprep.subr.mxu0 0.0
      %5462 = vmatpush1.msra.mxu0 0.0
      %5463 = vmatprep.subr.mxu0 0.0
      %5464 = vmatpush1.msra.mxu0 0.0
      %5465 = vmatprep.subr.mxu0 0.0
      %5466 = vmatpush1.msra.mxu0 0.0
      %5467 = vmatprep.subr.mxu0 0.0
      %5468 = vmatpush1.msra.mxu0 0.0
      %5469 = vmatprep.subr.mxu0 0.0
      %5470 = vmatpush1.msra.mxu0 0.0
      %5471 = vmatprep.subr.mxu0 0.0
      %5472 = vmatpush1.msra.mxu0 0.0
      %5473 = vmatprep.subr.mxu0 0.0
      %5474 = vmatpush1.msra.mxu0 0.0
      %5475 = vmatprep.subr.mxu0 0.0
      %5476 = vmatpush1.msra.mxu0 %v5443
      %5477 = vmatprep.subr.mxu0 0.0
      %5478 = vmatpush2.msra.mxu0 0.0
      %5479 = vmatprep.subr.mxu0 0.0
      %5480 = vmatpush2.msra.mxu0 0.0
      %5481 = vmatprep.subr.mxu0 0.0
      %5482 = vmatpush2.msra.mxu0 0.0
      %5483 = vmatprep.subr.mxu0 0.0
      %5484 = vmatpush2.msra.mxu0 0.0
      %5485 = vmatprep.subr.mxu0 0.0
      %5486 = vmatpush2.msra.mxu0 0.0
      %5487 = vmatprep.subr.mxu0 0.0
      %5488 = vmatpush2.msra.mxu0 0.0
      %5489 = vmatprep.subr.mxu0 0.0
      %5490 = vmatpush2.msra.mxu0 0.0
      %5491 = vmatprep.subr.mxu0 0.0
      %5492 = vmatpush2.msra.mxu0 0.0
      %5493 = vmatprep.subr.mxu0 0.0
      %5494 = vmatpush2.msra.mxu0 0.0
      %5495 = vmatprep.subr.mxu0 0.0
      %5496 = vmatpush2.msra.mxu0 0.0
      %5497 = vmatprep.subr.mxu0 0.0
      %5498 = vmatpush2.msra.mxu0 0.0
      %5499 = vmatprep.subr.mxu0 0.0
      %5500 = vmatpush2.msra.mxu0 0.0
      %5501 = vmatprep.subr.mxu0 0.0
      %5502 = vmatpush2.msra.mxu0 0.0
      %5503 = vmatprep.subr.mxu0 0.0
      %5504 = vmatpush2.msra.mxu0 0.0
      %5505 = vmatprep.subr.mxu0 0.0
      %5506 = vmatpush2.msra.mxu0 0.0
      %5507 = vmatprep.subr.mxu0 0.0
      %5508 = vmatpush2.msra.mxu0 0.0
      %5509 = vmatprep.mubr.f32.mxu0 0.0
      %5510 = vmatmul.mubr.f32.gmra.mxu0 %v5438
      %v5511 = vpop.f32.mrf.mxu0
      %v5512 = vadd.f32 0.0, %v5511
      %v5513 = vpop.f32.mrf.mxu0
      %5514 = vmatprep.mubr.f32.mxu0 0.0
      %5515 = vmatmul.mubr.f32.gmra.mxu0 %v5440
      %v5516 = vpop.f32.mrf.mxu0
      %v5517 = vadd.f32 0.0, %v5516
      %v5518 = vpop.f32.mrf.mxu0
      %5519 = vdwg.mxu0
      %v5520 = vadd.f32 %v5424, %v5512
      %v5521 = vadd.f32 %v5429, %v5517
      %v5522 = vld [vmem:[%s4962] sm:$0xff]
      %v5523 = vld [vmem:[%s4962 + $0x8] sm:$0xff]
      %v5524 = vld [vmem:[%s4962 + $0x10] sm:$0x3]
      %v5525 = vld [vmem:[%s522] sm:$0xf]
      %v5527 = vsel %vm258, %v5522, 0
      %v5530 = vsel %vm258, %v5523, 0
      %v5533 = vsel %vm263, %v5525, 0
      %5535 = vmatprep.subr.mxu0 0.0
      %5536 = vmatpush1.msra.mxu0 0.0
      %5537 = vmatprep.subr.mxu0 0.0
      %5538 = vmatpush1.msra.mxu0 0.0
      %5539 = vmatprep.subr.mxu0 0.0
      %5540 = vmatpush1.msra.mxu0 0.0
      %5541 = vmatprep.subr.mxu0 0.0
      %5542 = vmatpush1.msra.mxu0 0.0
      %5543 = vmatprep.subr.mxu0 0.0
      %5544 = vmatpush1.msra.mxu0 0.0
      %5545 = vmatprep.subr.mxu0 0.0
      %5546 = vmatpush1.msra.mxu0 0.0
      %5547 = vmatprep.subr.mxu0 0.0
      %5548 = vmatpush1.msra.mxu0 0.0
      %5549 = vmatprep.subr.mxu0 0.0
      %5550 = vmatpush1.msra.mxu0 0.0
      %5551 = vmatprep.subr.mxu0 0.0
      %5552 = vmatpush1.msra.mxu0 0.0
      %5553 = vmatprep.subr.mxu0 0.0
      %5554 = vmatpush1.msra.mxu0 0.0
      %5555 = vmatprep.subr.mxu0 0.0
      %5556 = vmatpush1.msra.mxu0 0.0
      %5557 = vmatprep.subr.mxu0 0.0
      %5558 = vmatpush1.msra.mxu0 0.0
      %5559 = vmatprep.subr.mxu0 0.0
      %5560 = vmatpush1.msra.mxu0 0.0
      %5561 = vmatprep.subr.mxu0 0.0
      %5562 = vmatpush1.msra.mxu0 0.0
      %5563 = vmatprep.subr.mxu0 0.0
      %5564 = vmatpush1.msra.mxu0 0.0
      %5565 = vmatprep.subr.mxu0 0.0
      %5566 = vmatpush1.msra.mxu0 %v5533
      %5567 = vmatprep.subr.mxu0 0.0
      %5568 = vmatpush2.msra.mxu0 0.0
      %5569 = vmatprep.subr.mxu0 0.0
      %5570 = vmatpush2.msra.mxu0 0.0
      %5571 = vmatprep.subr.mxu0 0.0
      %5572 = vmatpush2.msra.mxu0 0.0
      %5573 = vmatprep.subr.mxu0 0.0
      %5574 = vmatpush2.msra.mxu0 0.0
      %5575 = vmatprep.subr.mxu0 0.0
      %5576 = vmatpush2.msra.mxu0 0.0
      %5577 = vmatprep.subr.mxu0 0.0
      %5578 = vmatpush2.msra.mxu0 0.0
      %5579 = vmatprep.subr.mxu0 0.0
      %5580 = vmatpush2.msra.mxu0 0.0
      %5581 = vmatprep.subr.mxu0 0.0
      %5582 = vmatpush2.msra.mxu0 0.0
      %5583 = vmatprep.subr.mxu0 0.0
      %5584 = vmatpush2.msra.mxu0 0.0
      %5585 = vmatprep.subr.mxu0 0.0
      %5586 = vmatpush2.msra.mxu0 0.0
      %5587 = vmatprep.subr.mxu0 0.0
      %5588 = vmatpush2.msra.mxu0 0.0
      %5589 = vmatprep.subr.mxu0 0.0
      %5590 = vmatpush2.msra.mxu0 0.0
      %5591 = vmatprep.subr.mxu0 0.0
      %5592 = vmatpush2.msra.mxu0 0.0
      %5593 = vmatprep.subr.mxu0 0.0
      %5594 = vmatpush2.msra.mxu0 0.0
      %5595 = vmatprep.subr.mxu0 0.0
      %5596 = vmatpush2.msra.mxu0 0.0
      %5597 = vmatprep.subr.mxu0 0.0
      %5598 = vmatpush2.msra.mxu0 0.0
      %5599 = vmatprep.mubr.f32.mxu0 0.0
      %5600 = vmatmul.mubr.f32.gmra.mxu0 %v5527
      %v5601 = vpop.f32.mrf.mxu0
      %v5602 = vadd.f32 0.0, %v5601
      %v5603 = vpop.f32.mrf.mxu0
      %5604 = vmatprep.mubr.f32.mxu0 0.0
      %5605 = vmatmul.mubr.f32.gmra.mxu0 %v5530
      %v5606 = vpop.f32.mrf.mxu0
      %v5607 = vadd.f32 0.0, %v5606
      %v5608 = vpop.f32.mrf.mxu0
      %5609 = vdwg.mxu0
      %v5610 = vadd.f32 %v5520, %v5602
      %v5611 = vadd.f32 %v5521, %v5607
      %v5612 = vld [vmem:[%s610] sm:$0xf]
      %v5614 = vrot.slane %v5522, 1
      %v5615 = vrot.slane %v5523, 1
      %v5616 = vsel %vm252, %v5614, %v5615
      %v5617 = vrot.slane %v5524, 1
      %v5618 = vsel %vm252, %v5615, %v5617
      %v5619 = vsel %vm258, %v5616, 0
      %v5621 = vsel %vm258, %v5618, 0
      %v5624 = vsel %vm263, %v5612, 0
      %5626 = vmatprep.subr.mxu0 0.0
      %5627 = vmatpush1.msra.mxu0 0.0
      %5628 = vmatprep.subr.mxu0 0.0
      %5629 = vmatpush1.msra.mxu0 0.0
      %5630 = vmatprep.subr.mxu0 0.0
      %5631 = vmatpush1.msra.mxu0 0.0
      %5632 = vmatprep.subr.mxu0 0.0
      %5633 = vmatpush1.msra.mxu0 0.0
      %5634 = vmatprep.subr.mxu0 0.0
      %5635 = vmatpush1.msra.mxu0 0.0
      %5636 = vmatprep.subr.mxu0 0.0
      %5637 = vmatpush1.msra.mxu0 0.0
      %5638 = vmatprep.subr.mxu0 0.0
      %5639 = vmatpush1.msra.mxu0 0.0
      %5640 = vmatprep.subr.mxu0 0.0
      %5641 = vmatpush1.msra.mxu0 0.0
      %5642 = vmatprep.subr.mxu0 0.0
      %5643 = vmatpush1.msra.mxu0 0.0
      %5644 = vmatprep.subr.mxu0 0.0
      %5645 = vmatpush1.msra.mxu0 0.0
      %5646 = vmatprep.subr.mxu0 0.0
      %5647 = vmatpush1.msra.mxu0 0.0
      %5648 = vmatprep.subr.mxu0 0.0
      %5649 = vmatpush1.msra.mxu0 0.0
      %5650 = vmatprep.subr.mxu0 0.0
      %5651 = vmatpush1.msra.mxu0 0.0
      %5652 = vmatprep.subr.mxu0 0.0
      %5653 = vmatpush1.msra.mxu0 0.0
      %5654 = vmatprep.subr.mxu0 0.0
      %5655 = vmatpush1.msra.mxu0 0.0
      %5656 = vmatprep.subr.mxu0 0.0
      %5657 = vmatpush1.msra.mxu0 %v5624
      %5658 = vmatprep.subr.mxu0 0.0
      %5659 = vmatpush2.msra.mxu0 0.0
      %5660 = vmatprep.subr.mxu0 0.0
      %5661 = vmatpush2.msra.mxu0 0.0
      %5662 = vmatprep.subr.mxu0 0.0
      %5663 = vmatpush2.msra.mxu0 0.0
      %5664 = vmatprep.subr.mxu0 0.0
      %5665 = vmatpush2.msra.mxu0 0.0
      %5666 = vmatprep.subr.mxu0 0.0
      %5667 = vmatpush2.msra.mxu0 0.0
      %5668 = vmatprep.subr.mxu0 0.0
      %5669 = vmatpush2.msra.mxu0 0.0
      %5670 = vmatprep.subr.mxu0 0.0
      %5671 = vmatpush2.msra.mxu0 0.0
      %5672 = vmatprep.subr.mxu0 0.0
      %5673 = vmatpush2.msra.mxu0 0.0
      %5674 = vmatprep.subr.mxu0 0.0
      %5675 = vmatpush2.msra.mxu0 0.0
      %5676 = vmatprep.subr.mxu0 0.0
      %5677 = vmatpush2.msra.mxu0 0.0
      %5678 = vmatprep.subr.mxu0 0.0
      %5679 = vmatpush2.msra.mxu0 0.0
      %5680 = vmatprep.subr.mxu0 0.0
      %5681 = vmatpush2.msra.mxu0 0.0
      %5682 = vmatprep.subr.mxu0 0.0
      %5683 = vmatpush2.msra.mxu0 0.0
      %5684 = vmatprep.subr.mxu0 0.0
      %5685 = vmatpush2.msra.mxu0 0.0
      %5686 = vmatprep.subr.mxu0 0.0
      %5687 = vmatpush2.msra.mxu0 0.0
      %5688 = vmatprep.subr.mxu0 0.0
      %5689 = vmatpush2.msra.mxu0 0.0
      %5690 = vmatprep.mubr.f32.mxu0 0.0
      %5691 = vmatmul.mubr.f32.gmra.mxu0 %v5619
      %v5692 = vpop.f32.mrf.mxu0
      %v5693 = vadd.f32 0.0, %v5692
      %v5694 = vpop.f32.mrf.mxu0
      %5695 = vmatprep.mubr.f32.mxu0 0.0
      %5696 = vmatmul.mubr.f32.gmra.mxu0 %v5621
      %v5697 = vpop.f32.mrf.mxu0
      %v5698 = vadd.f32 0.0, %v5697
      %v5699 = vpop.f32.mrf.mxu0
      %5700 = vdwg.mxu0
      %v5701 = vadd.f32 %v5610, %v5693
      %v5702 = vadd.f32 %v5611, %v5698
      %v5703 = vld [vmem:[%s702] sm:$0xf]
      %v5704 = vrot.slane %v5522, 2
      %v5705 = vrot.slane %v5523, 2
      %v5706 = vsel %vm426, %v5704, %v5705
      %v5707 = vrot.slane %v5524, 2
      %v5708 = vsel %vm426, %v5705, %v5707
      %v5709 = vsel %vm258, %v5706, 0
      %v5711 = vsel %vm258, %v5708, 0
      %v5714 = vsel %vm263, %v5703, 0
      %5716 = vmatprep.subr.mxu0 0.0
      %5717 = vmatpush1.msra.mxu0 0.0
      %5718 = vmatprep.subr.mxu0 0.0
      %5719 = vmatpush1.msra.mxu0 0.0
      %5720 = vmatprep.subr.mxu0 0.0
      %5721 = vmatpush1.msra.mxu0 0.0
      %5722 = vmatprep.subr.mxu0 0.0
      %5723 = vmatpush1.msra.mxu0 0.0
      %5724 = vmatprep.subr.mxu0 0.0
      %5725 = vmatpush1.msra.mxu0 0.0
      %5726 = vmatprep.subr.mxu0 0.0
      %5727 = vmatpush1.msra.mxu0 0.0
      %5728 = vmatprep.subr.mxu0 0.0
      %5729 = vmatpush1.msra.mxu0 0.0
      %5730 = vmatprep.subr.mxu0 0.0
      %5731 = vmatpush1.msra.mxu0 0.0
      %5732 = vmatprep.subr.mxu0 0.0
      %5733 = vmatpush1.msra.mxu0 0.0
      %5734 = vmatprep.subr.mxu0 0.0
      %5735 = vmatpush1.msra.mxu0 0.0
      %5736 = vmatprep.subr.mxu0 0.0
      %5737 = vmatpush1.msra.mxu0 0.0
      %5738 = vmatprep.subr.mxu0 0.0
      %5739 = vmatpush1.msra.mxu0 0.0
      %5740 = vmatprep.subr.mxu0 0.0
      %5741 = vmatpush1.msra.mxu0 0.0
      %5742 = vmatprep.subr.mxu0 0.0
      %5743 = vmatpush1.msra.mxu0 0.0
      %5744 = vmatprep.subr.mxu0 0.0
      %5745 = vmatpush1.msra.mxu0 0.0
      %5746 = vmatprep.subr.mxu0 0.0
      %5747 = vmatpush1.msra.mxu0 %v5714
      %5748 = vmatprep.subr.mxu0 0.0
      %5749 = vmatpush2.msra.mxu0 0.0
      %5750 = vmatprep.subr.mxu0 0.0
      %5751 = vmatpush2.msra.mxu0 0.0
      %5752 = vmatprep.subr.mxu0 0.0
      %5753 = vmatpush2.msra.mxu0 0.0
      %5754 = vmatprep.subr.mxu0 0.0
      %5755 = vmatpush2.msra.mxu0 0.0
      %5756 = vmatprep.subr.mxu0 0.0
      %5757 = vmatpush2.msra.mxu0 0.0
      %5758 = vmatprep.subr.mxu0 0.0
      %5759 = vmatpush2.msra.mxu0 0.0
      %5760 = vmatprep.subr.mxu0 0.0
      %5761 = vmatpush2.msra.mxu0 0.0
      %5762 = vmatprep.subr.mxu0 0.0
      %5763 = vmatpush2.msra.mxu0 0.0
      %5764 = vmatprep.subr.mxu0 0.0
      %5765 = vmatpush2.msra.mxu0 0.0
      %5766 = vmatprep.subr.mxu0 0.0
      %5767 = vmatpush2.msra.mxu0 0.0
      %5768 = vmatprep.subr.mxu0 0.0
      %5769 = vmatpush2.msra.mxu0 0.0
      %5770 = vmatprep.subr.mxu0 0.0
      %5771 = vmatpush2.msra.mxu0 0.0
      %5772 = vmatprep.subr.mxu0 0.0
      %5773 = vmatpush2.msra.mxu0 0.0
      %5774 = vmatprep.subr.mxu0 0.0
      %5775 = vmatpush2.msra.mxu0 0.0
      %5776 = vmatprep.subr.mxu0 0.0
      %5777 = vmatpush2.msra.mxu0 0.0
      %5778 = vmatprep.subr.mxu0 0.0
      %5779 = vmatpush2.msra.mxu0 0.0
      %5780 = vmatprep.mubr.f32.mxu0 0.0
      %5781 = vmatmul.mubr.f32.gmra.mxu0 %v5709
      %v5782 = vpop.f32.mrf.mxu0
      %v5783 = vadd.f32 0.0, %v5782
      %v5784 = vpop.f32.mrf.mxu0
      %5785 = vmatprep.mubr.f32.mxu0 0.0
      %5786 = vmatmul.mubr.f32.gmra.mxu0 %v5711
      %v5787 = vpop.f32.mrf.mxu0
      %v5788 = vadd.f32 0.0, %v5787
      %v5789 = vpop.f32.mrf.mxu0
      %5790 = vdwg.mxu0
      %v5791 = vadd.f32 %v5701, %v5783
      %v5792 = vadd.f32 %v5702, %v5788
      %s5793 = sadd.s32 %s240, 8
      %s5794 = smul.u32 %s5793, 24
      %s5795 = scalar_lea.vmem %s222, %s5794
      %v5796 = vld [vmem:[%s5795] sm:$0xff]
      %v5797 = vld [vmem:[%s5795 + $0x8] sm:$0xff]
      %v5798 = vld [vmem:[%s5795 + $0x10] sm:$0x3]
      %v5799 = vld [vmem:[%s799] sm:$0xf]
      %v5801 = vsel %vm258, %v5796, 0
      %v5804 = vsel %vm258, %v5797, 0
      %v5807 = vsel %vm263, %v5799, 0
      %5809 = vmatprep.subr.mxu0 0.0
      %5810 = vmatpush1.msra.mxu0 0.0
      %5811 = vmatprep.subr.mxu0 0.0
      %5812 = vmatpush1.msra.mxu0 0.0
      %5813 = vmatprep.subr.mxu0 0.0
      %5814 = vmatpush1.msra.mxu0 0.0
      %5815 = vmatprep.subr.mxu0 0.0
      %5816 = vmatpush1.msra.mxu0 0.0
      %5817 = vmatprep.subr.mxu0 0.0
      %5818 = vmatpush1.msra.mxu0 0.0
      %5819 = vmatprep.subr.mxu0 0.0
      %5820 = vmatpush1.msra.mxu0 0.0
      %5821 = vmatprep.subr.mxu0 0.0
      %5822 = vmatpush1.msra.mxu0 0.0
      %5823 = vmatprep.subr.mxu0 0.0
      %5824 = vmatpush1.msra.mxu0 0.0
      %5825 = vmatprep.subr.mxu0 0.0
      %5826 = vmatpush1.msra.mxu0 0.0
      %5827 = vmatprep.subr.mxu0 0.0
      %5828 = vmatpush1.msra.mxu0 0.0
      %5829 = vmatprep.subr.mxu0 0.0
      %5830 = vmatpush1.msra.mxu0 0.0
      %5831 = vmatprep.subr.mxu0 0.0
      %5832 = vmatpush1.msra.mxu0 0.0
      %5833 = vmatprep.subr.mxu0 0.0
      %5834 = vmatpush1.msra.mxu0 0.0
      %5835 = vmatprep.subr.mxu0 0.0
      %5836 = vmatpush1.msra.mxu0 0.0
      %5837 = vmatprep.subr.mxu0 0.0
      %5838 = vmatpush1.msra.mxu0 0.0
      %5839 = vmatprep.subr.mxu0 0.0
      %5840 = vmatpush1.msra.mxu0 %v5807
      %5841 = vmatprep.subr.mxu0 0.0
      %5842 = vmatpush2.msra.mxu0 0.0
      %5843 = vmatprep.subr.mxu0 0.0
      %5844 = vmatpush2.msra.mxu0 0.0
      %5845 = vmatprep.subr.mxu0 0.0
      %5846 = vmatpush2.msra.mxu0 0.0
      %5847 = vmatprep.subr.mxu0 0.0
      %5848 = vmatpush2.msra.mxu0 0.0
      %5849 = vmatprep.subr.mxu0 0.0
      %5850 = vmatpush2.msra.mxu0 0.0
      %5851 = vmatprep.subr.mxu0 0.0
      %5852 = vmatpush2.msra.mxu0 0.0
      %5853 = vmatprep.subr.mxu0 0.0
      %5854 = vmatpush2.msra.mxu0 0.0
      %5855 = vmatprep.subr.mxu0 0.0
      %5856 = vmatpush2.msra.mxu0 0.0
      %5857 = vmatprep.subr.mxu0 0.0
      %5858 = vmatpush2.msra.mxu0 0.0
      %5859 = vmatprep.subr.mxu0 0.0
      %5860 = vmatpush2.msra.mxu0 0.0
      %5861 = vmatprep.subr.mxu0 0.0
      %5862 = vmatpush2.msra.mxu0 0.0
      %5863 = vmatprep.subr.mxu0 0.0
      %5864 = vmatpush2.msra.mxu0 0.0
      %5865 = vmatprep.subr.mxu0 0.0
      %5866 = vmatpush2.msra.mxu0 0.0
      %5867 = vmatprep.subr.mxu0 0.0
      %5868 = vmatpush2.msra.mxu0 0.0
      %5869 = vmatprep.subr.mxu0 0.0
      %5870 = vmatpush2.msra.mxu0 0.0
      %5871 = vmatprep.subr.mxu0 0.0
      %5872 = vmatpush2.msra.mxu0 0.0
      %5873 = vmatprep.mubr.f32.mxu0 0.0
      %5874 = vmatmul.mubr.f32.gmra.mxu0 %v5801
      %v5875 = vpop.f32.mrf.mxu0
      %v5876 = vadd.f32 0.0, %v5875
      %v5877 = vpop.f32.mrf.mxu0
      %5878 = vmatprep.mubr.f32.mxu0 0.0
      %5879 = vmatmul.mubr.f32.gmra.mxu0 %v5804
      %v5880 = vpop.f32.mrf.mxu0
      %v5881 = vadd.f32 0.0, %v5880
      %v5882 = vpop.f32.mrf.mxu0
      %5883 = vdwg.mxu0
      %v5884 = vadd.f32 %v5791, %v5876
      %v5885 = vadd.f32 %v5792, %v5881
      %v5886 = vld [vmem:[%s887] sm:$0xf]
      %v5888 = vrot.slane %v5796, 1
      %v5889 = vrot.slane %v5797, 1
      %v5890 = vsel %vm252, %v5888, %v5889
      %v5891 = vrot.slane %v5798, 1
      %v5892 = vsel %vm252, %v5889, %v5891
      %v5893 = vsel %vm258, %v5890, 0
      %v5895 = vsel %vm258, %v5892, 0
      %v5898 = vsel %vm263, %v5886, 0
      %5900 = vmatprep.subr.mxu0 0.0
      %5901 = vmatpush1.msra.mxu0 0.0
      %5902 = vmatprep.subr.mxu0 0.0
      %5903 = vmatpush1.msra.mxu0 0.0
      %5904 = vmatprep.subr.mxu0 0.0
      %5905 = vmatpush1.msra.mxu0 0.0
      %5906 = vmatprep.subr.mxu0 0.0
      %5907 = vmatpush1.msra.mxu0 0.0
      %5908 = vmatprep.subr.mxu0 0.0
      %5909 = vmatpush1.msra.mxu0 0.0
      %5910 = vmatprep.subr.mxu0 0.0
      %5911 = vmatpush1.msra.mxu0 0.0
      %5912 = vmatprep.subr.mxu0 0.0
      %5913 = vmatpush1.msra.mxu0 0.0
      %5914 = vmatprep.subr.mxu0 0.0
      %5915 = vmatpush1.msra.mxu0 0.0
      %5916 = vmatprep.subr.mxu0 0.0
      %5917 = vmatpush1.msra.mxu0 0.0
      %5918 = vmatprep.subr.mxu0 0.0
      %5919 = vmatpush1.msra.mxu0 0.0
      %5920 = vmatprep.subr.mxu0 0.0
      %5921 = vmatpush1.msra.mxu0 0.0
      %5922 = vmatprep.subr.mxu0 0.0
      %5923 = vmatpush1.msra.mxu0 0.0
      %5924 = vmatprep.subr.mxu0 0.0
      %5925 = vmatpush1.msra.mxu0 0.0
      %5926 = vmatprep.subr.mxu0 0.0
      %5927 = vmatpush1.msra.mxu0 0.0
      %5928 = vmatprep.subr.mxu0 0.0
      %5929 = vmatpush1.msra.mxu0 0.0
      %5930 = vmatprep.subr.mxu0 0.0
      %5931 = vmatpush1.msra.mxu0 %v5898
      %5932 = vmatprep.subr.mxu0 0.0
      %5933 = vmatpush2.msra.mxu0 0.0
      %5934 = vmatprep.subr.mxu0 0.0
      %5935 = vmatpush2.msra.mxu0 0.0
      %5936 = vmatprep.subr.mxu0 0.0
      %5937 = vmatpush2.msra.mxu0 0.0
      %5938 = vmatprep.subr.mxu0 0.0
      %5939 = vmatpush2.msra.mxu0 0.0
      %5940 = vmatprep.subr.mxu0 0.0
      %5941 = vmatpush2.msra.mxu0 0.0
      %5942 = vmatprep.subr.mxu0 0.0
      %5943 = vmatpush2.msra.mxu0 0.0
      %5944 = vmatprep.subr.mxu0 0.0
      %5945 = vmatpush2.msra.mxu0 0.0
      %5946 = vmatprep.subr.mxu0 0.0
      %5947 = vmatpush2.msra.mxu0 0.0
      %5948 = vmatprep.subr.mxu0 0.0
      %5949 = vmatpush2.msra.mxu0 0.0
      %5950 = vmatprep.subr.mxu0 0.0
      %5951 = vmatpush2.msra.mxu0 0.0
      %5952 = vmatprep.subr.mxu0 0.0
      %5953 = vmatpush2.msra.mxu0 0.0
      %5954 = vmatprep.subr.mxu0 0.0
      %5955 = vmatpush2.msra.mxu0 0.0
      %5956 = vmatprep.subr.mxu0 0.0
      %5957 = vmatpush2.msra.mxu0 0.0
      %5958 = vmatprep.subr.mxu0 0.0
      %5959 = vmatpush2.msra.mxu0 0.0
      %5960 = vmatprep.subr.mxu0 0.0
      %5961 = vmatpush2.msra.mxu0 0.0
      %5962 = vmatprep.subr.mxu0 0.0
      %5963 = vmatpush2.msra.mxu0 0.0
      %5964 = vmatprep.mubr.f32.mxu0 0.0
      %5965 = vmatmul.mubr.f32.gmra.mxu0 %v5893
      %v5966 = vpop.f32.mrf.mxu0
      %v5967 = vadd.f32 0.0, %v5966
      %v5968 = vpop.f32.mrf.mxu0
      %5969 = vmatprep.mubr.f32.mxu0 0.0
      %5970 = vmatmul.mubr.f32.gmra.mxu0 %v5895
      %v5971 = vpop.f32.mrf.mxu0
      %v5972 = vadd.f32 0.0, %v5971
      %v5973 = vpop.f32.mrf.mxu0
      %5974 = vdwg.mxu0
      %v5975 = vadd.f32 %v5884, %v5967
      %v5976 = vadd.f32 %v5885, %v5972
      %v5977 = vld [vmem:[%s979] sm:$0xf]
      %v5978 = vrot.slane %v5796, 2
      %v5979 = vrot.slane %v5797, 2
      %v5980 = vsel %vm426, %v5978, %v5979
      %v5981 = vrot.slane %v5798, 2
      %v5982 = vsel %vm426, %v5979, %v5981
      %v5983 = vsel %vm258, %v5980, 0
      %v5985 = vsel %vm258, %v5982, 0
      %v5988 = vsel %vm263, %v5977, 0
      %5990 = vmatprep.subr.mxu0 0.0
      %5991 = vmatpush1.msra.mxu0 0.0
      %5992 = vmatprep.subr.mxu0 0.0
      %5993 = vmatpush1.msra.mxu0 0.0
      %5994 = vmatprep.subr.mxu0 0.0
      %5995 = vmatpush1.msra.mxu0 0.0
      %5996 = vmatprep.subr.mxu0 0.0
      %5997 = vmatpush1.msra.mxu0 0.0
      %5998 = vmatprep.subr.mxu0 0.0
      %5999 = vmatpush1.msra.mxu0 0.0
      %6000 = vmatprep.subr.mxu0 0.0
      %6001 = vmatpush1.msra.mxu0 0.0
      %6002 = vmatprep.subr.mxu0 0.0
      %6003 = vmatpush1.msra.mxu0 0.0
      %6004 = vmatprep.subr.mxu0 0.0
      %6005 = vmatpush1.msra.mxu0 0.0
      %6006 = vmatprep.subr.mxu0 0.0
      %6007 = vmatpush1.msra.mxu0 0.0
      %6008 = vmatprep.subr.mxu0 0.0
      %6009 = vmatpush1.msra.mxu0 0.0
      %6010 = vmatprep.subr.mxu0 0.0
      %6011 = vmatpush1.msra.mxu0 0.0
      %6012 = vmatprep.subr.mxu0 0.0
      %6013 = vmatpush1.msra.mxu0 0.0
      %6014 = vmatprep.subr.mxu0 0.0
      %6015 = vmatpush1.msra.mxu0 0.0
      %6016 = vmatprep.subr.mxu0 0.0
      %6017 = vmatpush1.msra.mxu0 0.0
      %6018 = vmatprep.subr.mxu0 0.0
      %6019 = vmatpush1.msra.mxu0 0.0
      %6020 = vmatprep.subr.mxu0 0.0
      %6021 = vmatpush1.msra.mxu0 %v5988
      %6022 = vmatprep.subr.mxu0 0.0
      %6023 = vmatpush2.msra.mxu0 0.0
      %6024 = vmatprep.subr.mxu0 0.0
      %6025 = vmatpush2.msra.mxu0 0.0
      %6026 = vmatprep.subr.mxu0 0.0
      %6027 = vmatpush2.msra.mxu0 0.0
      %6028 = vmatprep.subr.mxu0 0.0
      %6029 = vmatpush2.msra.mxu0 0.0
      %6030 = vmatprep.subr.mxu0 0.0
      %6031 = vmatpush2.msra.mxu0 0.0
      %6032 = vmatprep.subr.mxu0 0.0
      %6033 = vmatpush2.msra.mxu0 0.0
      %6034 = vmatprep.subr.mxu0 0.0
      %6035 = vmatpush2.msra.mxu0 0.0
      %6036 = vmatprep.subr.mxu0 0.0
      %6037 = vmatpush2.msra.mxu0 0.0
      %6038 = vmatprep.subr.mxu0 0.0
      %6039 = vmatpush2.msra.mxu0 0.0
      %6040 = vmatprep.subr.mxu0 0.0
      %6041 = vmatpush2.msra.mxu0 0.0
      %6042 = vmatprep.subr.mxu0 0.0
      %6043 = vmatpush2.msra.mxu0 0.0
      %6044 = vmatprep.subr.mxu0 0.0
      %6045 = vmatpush2.msra.mxu0 0.0
      %6046 = vmatprep.subr.mxu0 0.0
      %6047 = vmatpush2.msra.mxu0 0.0
      %6048 = vmatprep.subr.mxu0 0.0
      %6049 = vmatpush2.msra.mxu0 0.0
      %6050 = vmatprep.subr.mxu0 0.0
      %6051 = vmatpush2.msra.mxu0 0.0
      %6052 = vmatprep.subr.mxu0 0.0
      %6053 = vmatpush2.msra.mxu0 0.0
      %6054 = vmatprep.mubr.f32.mxu0 0.0
      %6055 = vmatmul.mubr.f32.gmra.mxu0 %v5983
      %v6056 = vpop.f32.mrf.mxu0
      %v6057 = vadd.f32 0.0, %v6056
      %v6058 = vpop.f32.mrf.mxu0
      %6059 = vmatprep.mubr.f32.mxu0 0.0
      %6060 = vmatmul.mubr.f32.gmra.mxu0 %v5985
      %v6061 = vpop.f32.mrf.mxu0
      %v6062 = vadd.f32 0.0, %v6061
      %v6063 = vpop.f32.mrf.mxu0
      %6064 = vdwg.mxu0
      %v6065 = vadd.f32 %v5975, %v6057
      %v6066 = vadd.f32 %v5976, %v6062
      %s6067 = scalar_lea.vmem %s232, 96
      %6068 = vst [vmem:[%s6067] sm:$0xff] %v6065
      %6069 = vst [vmem:[%s6067 + $0x8] sm:$0xff] %v6066
      %v6070 = vadd.f32 %v6065, %v6066
      %v6071 = vrot.slane %v6070, 4
      %v6072 = vadd.f32 %v6070, %v6071
      %v6073 = vrot.slane %v6072, 2
      %v6074 = vadd.f32 %v6072, %v6073
      %v6075 = vrot.slane %v6074, 1
      %v6076 = vadd.f32 %v6074, %v6075
      %v6077 = vadd.f32 %v5244, %v6076
      %v6078 = vmul.f32 %v6065, %v6065
      %v6079 = vmul.f32 %v6066, %v6066
      %v6080 = vadd.f32 %v6078, %v6079
      %v6081 = vrot.slane %v6080, 4
      %v6082 = vadd.f32 %v6080, %v6081
      %v6083 = vrot.slane %v6082, 2
      %v6084 = vadd.f32 %v6082, %v6083
      %v6085 = vrot.slane %v6084, 1
      %v6086 = vadd.f32 %v6084, %v6085
      %v6087 = vadd.f32 %v5254, %v6086
      %v6088 = vld [vmem:[%s4962] sm:$0xff]
      %v6089 = vld [vmem:[%s4962 + $0x8] sm:$0xff]
      %v6090 = vld [vmem:[%s4962 + $0x10] sm:$0x3]
      %v6091 = vld [vmem:[%s1] sm:$0xf]
      %v6092 = vld [vmem:[%s247] sm:$0xf]
      %v6096 = vrot.slane %v6088, 1
      %v6097 = vrot.slane %v6089, 1
      %v6098 = vsel %vm252, %v6096, %v6097
      %v6099 = vrot.slane %v6090, 1
      %v6100 = vsel %vm252, %v6097, %v6099
      %v6101 = vsel %vm258, %v6098, 0
      %v6103 = vsel %vm258, %v6100, 0
      %v6106 = vsel %vm263, %v6092, 0
      %6108 = vmatprep.subr.mxu0 0.0
      %6109 = vmatpush1.msra.mxu0 0.0
      %6110 = vmatprep.subr.mxu0 0.0
      %6111 = vmatpush1.msra.mxu0 0.0
      %6112 = vmatprep.subr.mxu0 0.0
      %6113 = vmatpush1.msra.mxu0 0.0
      %6114 = vmatprep.subr.mxu0 0.0
      %6115 = vmatpush1.msra.mxu0 0.0
      %6116 = vmatprep.subr.mxu0 0.0
      %6117 = vmatpush1.msra.mxu0 0.0
      %6118 = vmatprep.subr.mxu0 0.0
      %6119 = vmatpush1.msra.mxu0 0.0
      %6120 = vmatprep.subr.mxu0 0.0
      %6121 = vmatpush1.msra.mxu0 0.0
      %6122 = vmatprep.subr.mxu0 0.0
      %6123 = vmatpush1.msra.mxu0 0.0
      %6124 = vmatprep.subr.mxu0 0.0
      %6125 = vmatpush1.msra.mxu0 0.0
      %6126 = vmatprep.subr.mxu0 0.0
      %6127 = vmatpush1.msra.mxu0 0.0
      %6128 = vmatprep.subr.mxu0 0.0
      %6129 = vmatpush1.msra.mxu0 0.0
      %6130 = vmatprep.subr.mxu0 0.0
      %6131 = vmatpush1.msra.mxu0 0.0
      %6132 = vmatprep.subr.mxu0 0.0
      %6133 = vmatpush1.msra.mxu0 0.0
      %6134 = vmatprep.subr.mxu0 0.0
      %6135 = vmatpush1.msra.mxu0 0.0
      %6136 = vmatprep.subr.mxu0 0.0
      %6137 = vmatpush1.msra.mxu0 0.0
      %6138 = vmatprep.subr.mxu0 0.0
      %6139 = vmatpush1.msra.mxu0 %v6106
      %6140 = vmatprep.subr.mxu0 0.0
      %6141 = vmatpush2.msra.mxu0 0.0
      %6142 = vmatprep.subr.mxu0 0.0
      %6143 = vmatpush2.msra.mxu0 0.0
      %6144 = vmatprep.subr.mxu0 0.0
      %6145 = vmatpush2.msra.mxu0 0.0
      %6146 = vmatprep.subr.mxu0 0.0
      %6147 = vmatpush2.msra.mxu0 0.0
      %6148 = vmatprep.subr.mxu0 0.0
      %6149 = vmatpush2.msra.mxu0 0.0
      %6150 = vmatprep.subr.mxu0 0.0
      %6151 = vmatpush2.msra.mxu0 0.0
      %6152 = vmatprep.subr.mxu0 0.0
      %6153 = vmatpush2.msra.mxu0 0.0
      %6154 = vmatprep.subr.mxu0 0.0
      %6155 = vmatpush2.msra.mxu0 0.0
      %6156 = vmatprep.subr.mxu0 0.0
      %6157 = vmatpush2.msra.mxu0 0.0
      %6158 = vmatprep.subr.mxu0 0.0
      %6159 = vmatpush2.msra.mxu0 0.0
      %6160 = vmatprep.subr.mxu0 0.0
      %6161 = vmatpush2.msra.mxu0 0.0
      %6162 = vmatprep.subr.mxu0 0.0
      %6163 = vmatpush2.msra.mxu0 0.0
      %6164 = vmatprep.subr.mxu0 0.0
      %6165 = vmatpush2.msra.mxu0 0.0
      %6166 = vmatprep.subr.mxu0 0.0
      %6167 = vmatpush2.msra.mxu0 0.0
      %6168 = vmatprep.subr.mxu0 0.0
      %6169 = vmatpush2.msra.mxu0 0.0
      %6170 = vmatprep.subr.mxu0 0.0
      %6171 = vmatpush2.msra.mxu0 0.0
      %6172 = vmatprep.mubr.f32.mxu0 0.0
      %6173 = vmatmul.mubr.f32.gmra.mxu0 %v6101
      %v6174 = vpop.f32.mrf.mxu0
      %v6175 = vadd.f32 0.0, %v6174
      %v6176 = vpop.f32.mrf.mxu0
      %6177 = vmatprep.mubr.f32.mxu0 0.0
      %6178 = vmatmul.mubr.f32.gmra.mxu0 %v6103
      %v6179 = vpop.f32.mrf.mxu0
      %v6180 = vadd.f32 0.0, %v6179
      %v6181 = vpop.f32.mrf.mxu0
      %6182 = vdwg.mxu0
      %v6183 = vsel %vm258, %v6088, 0
      %v6185 = vsel %vm258, %v6089, 0
      %v6188 = vsel %vm263, %v6091, 0
      %6190 = vmatprep.subr.mxu0 0.0
      %6191 = vmatpush1.msra.mxu0 0.0
      %6192 = vmatprep.subr.mxu0 0.0
      %6193 = vmatpush1.msra.mxu0 0.0
      %6194 = vmatprep.subr.mxu0 0.0
      %6195 = vmatpush1.msra.mxu0 0.0
      %6196 = vmatprep.subr.mxu0 0.0
      %6197 = vmatpush1.msra.mxu0 0.0
      %6198 = vmatprep.subr.mxu0 0.0
      %6199 = vmatpush1.msra.mxu0 0.0
      %6200 = vmatprep.subr.mxu0 0.0
      %6201 = vmatpush1.msra.mxu0 0.0
      %6202 = vmatprep.subr.mxu0 0.0
      %6203 = vmatpush1.msra.mxu0 0.0
      %6204 = vmatprep.subr.mxu0 0.0
      %6205 = vmatpush1.msra.mxu0 0.0
      %6206 = vmatprep.subr.mxu0 0.0
      %6207 = vmatpush1.msra.mxu0 0.0
      %6208 = vmatprep.subr.mxu0 0.0
      %6209 = vmatpush1.msra.mxu0 0.0
      %6210 = vmatprep.subr.mxu0 0.0
      %6211 = vmatpush1.msra.mxu0 0.0
      %6212 = vmatprep.subr.mxu0 0.0
      %6213 = vmatpush1.msra.mxu0 0.0
      %6214 = vmatprep.subr.mxu0 0.0
      %6215 = vmatpush1.msra.mxu0 0.0
      %6216 = vmatprep.subr.mxu0 0.0
      %6217 = vmatpush1.msra.mxu0 0.0
      %6218 = vmatprep.subr.mxu0 0.0
      %6219 = vmatpush1.msra.mxu0 0.0
      %6220 = vmatprep.subr.mxu0 0.0
      %6221 = vmatpush1.msra.mxu0 %v6188
      %6222 = vmatprep.subr.mxu0 0.0
      %6223 = vmatpush2.msra.mxu0 0.0
      %6224 = vmatprep.subr.mxu0 0.0
      %6225 = vmatpush2.msra.mxu0 0.0
      %6226 = vmatprep.subr.mxu0 0.0
      %6227 = vmatpush2.msra.mxu0 0.0
      %6228 = vmatprep.subr.mxu0 0.0
      %6229 = vmatpush2.msra.mxu0 0.0
      %6230 = vmatprep.subr.mxu0 0.0
      %6231 = vmatpush2.msra.mxu0 0.0
      %6232 = vmatprep.subr.mxu0 0.0
      %6233 = vmatpush2.msra.mxu0 0.0
      %6234 = vmatprep.subr.mxu0 0.0
      %6235 = vmatpush2.msra.mxu0 0.0
      %6236 = vmatprep.subr.mxu0 0.0
      %6237 = vmatpush2.msra.mxu0 0.0
      %6238 = vmatprep.subr.mxu0 0.0
      %6239 = vmatpush2.msra.mxu0 0.0
      %6240 = vmatprep.subr.mxu0 0.0
      %6241 = vmatpush2.msra.mxu0 0.0
      %6242 = vmatprep.subr.mxu0 0.0
      %6243 = vmatpush2.msra.mxu0 0.0
      %6244 = vmatprep.subr.mxu0 0.0
      %6245 = vmatpush2.msra.mxu0 0.0
      %6246 = vmatprep.subr.mxu0 0.0
      %6247 = vmatpush2.msra.mxu0 0.0
      %6248 = vmatprep.subr.mxu0 0.0
      %6249 = vmatpush2.msra.mxu0 0.0
      %6250 = vmatprep.subr.mxu0 0.0
      %6251 = vmatpush2.msra.mxu0 0.0
      %6252 = vmatprep.subr.mxu0 0.0
      %6253 = vmatpush2.msra.mxu0 0.0
      %6254 = vmatprep.mubr.f32.mxu0 0.0
      %6255 = vmatmul.mubr.f32.gmra.mxu0 %v6183
      %v6256 = vpop.f32.mrf.mxu0
      %v6257 = vadd.f32 %v6175, %v6256
      %v6258 = vpop.f32.mrf.mxu0
      %6259 = vmatprep.mubr.f32.mxu0 0.0
      %6260 = vmatmul.mubr.f32.gmra.mxu0 %v6185
      %v6261 = vpop.f32.mrf.mxu0
      %v6262 = vadd.f32 %v6180, %v6261
      %v6263 = vpop.f32.mrf.mxu0
      %6264 = vdwg.mxu0
      %v6265 = vld [vmem:[%s424] sm:$0xf]
      %v6266 = vrot.slane %v6088, 2
      %v6267 = vrot.slane %v6089, 2
      %v6268 = vsel %vm426, %v6266, %v6267
      %v6269 = vrot.slane %v6090, 2
      %v6270 = vsel %vm426, %v6267, %v6269
      %v6271 = vsel %vm258, %v6268, 0
      %v6273 = vsel %vm258, %v6270, 0
      %v6276 = vsel %vm263, %v6265, 0
      %6278 = vmatprep.subr.mxu0 0.0
      %6279 = vmatpush1.msra.mxu0 0.0
      %6280 = vmatprep.subr.mxu0 0.0
      %6281 = vmatpush1.msra.mxu0 0.0
      %6282 = vmatprep.subr.mxu0 0.0
      %6283 = vmatpush1.msra.mxu0 0.0
      %6284 = vmatprep.subr.mxu0 0.0
      %6285 = vmatpush1.msra.mxu0 0.0
      %6286 = vmatprep.subr.mxu0 0.0
      %6287 = vmatpush1.msra.mxu0 0.0
      %6288 = vmatprep.subr.mxu0 0.0
      %6289 = vmatpush1.msra.mxu0 0.0
      %6290 = vmatprep.subr.mxu0 0.0
      %6291 = vmatpush1.msra.mxu0 0.0
      %6292 = vmatprep.subr.mxu0 0.0
      %6293 = vmatpush1.msra.mxu0 0.0
      %6294 = vmatprep.subr.mxu0 0.0
      %6295 = vmatpush1.msra.mxu0 0.0
      %6296 = vmatprep.subr.mxu0 0.0
      %6297 = vmatpush1.msra.mxu0 0.0
      %6298 = vmatprep.subr.mxu0 0.0
      %6299 = vmatpush1.msra.mxu0 0.0
      %6300 = vmatprep.subr.mxu0 0.0
      %6301 = vmatpush1.msra.mxu0 0.0
      %6302 = vmatprep.subr.mxu0 0.0
      %6303 = vmatpush1.msra.mxu0 0.0
      %6304 = vmatprep.subr.mxu0 0.0
      %6305 = vmatpush1.msra.mxu0 0.0
      %6306 = vmatprep.subr.mxu0 0.0
      %6307 = vmatpush1.msra.mxu0 0.0
      %6308 = vmatprep.subr.mxu0 0.0
      %6309 = vmatpush1.msra.mxu0 %v6276
      %6310 = vmatprep.subr.mxu0 0.0
      %6311 = vmatpush2.msra.mxu0 0.0
      %6312 = vmatprep.subr.mxu0 0.0
      %6313 = vmatpush2.msra.mxu0 0.0
      %6314 = vmatprep.subr.mxu0 0.0
      %6315 = vmatpush2.msra.mxu0 0.0
      %6316 = vmatprep.subr.mxu0 0.0
      %6317 = vmatpush2.msra.mxu0 0.0
      %6318 = vmatprep.subr.mxu0 0.0
      %6319 = vmatpush2.msra.mxu0 0.0
      %6320 = vmatprep.subr.mxu0 0.0
      %6321 = vmatpush2.msra.mxu0 0.0
      %6322 = vmatprep.subr.mxu0 0.0
      %6323 = vmatpush2.msra.mxu0 0.0
      %6324 = vmatprep.subr.mxu0 0.0
      %6325 = vmatpush2.msra.mxu0 0.0
      %6326 = vmatprep.subr.mxu0 0.0
      %6327 = vmatpush2.msra.mxu0 0.0
      %6328 = vmatprep.subr.mxu0 0.0
      %6329 = vmatpush2.msra.mxu0 0.0
      %6330 = vmatprep.subr.mxu0 0.0
      %6331 = vmatpush2.msra.mxu0 0.0
      %6332 = vmatprep.subr.mxu0 0.0
      %6333 = vmatpush2.msra.mxu0 0.0
      %6334 = vmatprep.subr.mxu0 0.0
      %6335 = vmatpush2.msra.mxu0 0.0
      %6336 = vmatprep.subr.mxu0 0.0
      %6337 = vmatpush2.msra.mxu0 0.0
      %6338 = vmatprep.subr.mxu0 0.0
      %6339 = vmatpush2.msra.mxu0 0.0
      %6340 = vmatprep.subr.mxu0 0.0
      %6341 = vmatpush2.msra.mxu0 0.0
      %6342 = vmatprep.mubr.f32.mxu0 0.0
      %6343 = vmatmul.mubr.f32.gmra.mxu0 %v6271
      %v6344 = vpop.f32.mrf.mxu0
      %v6345 = vadd.f32 0.0, %v6344
      %v6346 = vpop.f32.mrf.mxu0
      %6347 = vmatprep.mubr.f32.mxu0 0.0
      %6348 = vmatmul.mubr.f32.gmra.mxu0 %v6273
      %v6349 = vpop.f32.mrf.mxu0
      %v6350 = vadd.f32 0.0, %v6349
      %v6351 = vpop.f32.mrf.mxu0
      %6352 = vdwg.mxu0
      %v6353 = vadd.f32 %v6257, %v6345
      %v6354 = vadd.f32 %v6262, %v6350
      %v6355 = vld [vmem:[%s5795] sm:$0xff]
      %v6356 = vld [vmem:[%s5795 + $0x8] sm:$0xff]
      %v6357 = vld [vmem:[%s5795 + $0x10] sm:$0x3]
      %v6358 = vld [vmem:[%s522] sm:$0xf]
      %v6360 = vsel %vm258, %v6355, 0
      %v6363 = vsel %vm258, %v6356, 0
      %v6366 = vsel %vm263, %v6358, 0
      %6368 = vmatprep.subr.mxu0 0.0
      %6369 = vmatpush1.msra.mxu0 0.0
      %6370 = vmatprep.subr.mxu0 0.0
      %6371 = vmatpush1.msra.mxu0 0.0
      %6372 = vmatprep.subr.mxu0 0.0
      %6373 = vmatpush1.msra.mxu0 0.0
      %6374 = vmatprep.subr.mxu0 0.0
      %6375 = vmatpush1.msra.mxu0 0.0
      %6376 = vmatprep.subr.mxu0 0.0
      %6377 = vmatpush1.msra.mxu0 0.0
      %6378 = vmatprep.subr.mxu0 0.0
      %6379 = vmatpush1.msra.mxu0 0.0
      %6380 = vmatprep.subr.mxu0 0.0
      %6381 = vmatpush1.msra.mxu0 0.0
      %6382 = vmatprep.subr.mxu0 0.0
      %6383 = vmatpush1.msra.mxu0 0.0
      %6384 = vmatprep.subr.mxu0 0.0
      %6385 = vmatpush1.msra.mxu0 0.0
      %6386 = vmatprep.subr.mxu0 0.0
      %6387 = vmatpush1.msra.mxu0 0.0
      %6388 = vmatprep.subr.mxu0 0.0
      %6389 = vmatpush1.msra.mxu0 0.0
      %6390 = vmatprep.subr.mxu0 0.0
      %6391 = vmatpush1.msra.mxu0 0.0
      %6392 = vmatprep.subr.mxu0 0.0
      %6393 = vmatpush1.msra.mxu0 0.0
      %6394 = vmatprep.subr.mxu0 0.0
      %6395 = vmatpush1.msra.mxu0 0.0
      %6396 = vmatprep.subr.mxu0 0.0
      %6397 = vmatpush1.msra.mxu0 0.0
      %6398 = vmatprep.subr.mxu0 0.0
      %6399 = vmatpush1.msra.mxu0 %v6366
      %6400 = vmatprep.subr.mxu0 0.0
      %6401 = vmatpush2.msra.mxu0 0.0
      %6402 = vmatprep.subr.mxu0 0.0
      %6403 = vmatpush2.msra.mxu0 0.0
      %6404 = vmatprep.subr.mxu0 0.0
      %6405 = vmatpush2.msra.mxu0 0.0
      %6406 = vmatprep.subr.mxu0 0.0
      %6407 = vmatpush2.msra.mxu0 0.0
      %6408 = vmatprep.subr.mxu0 0.0
      %6409 = vmatpush2.msra.mxu0 0.0
      %6410 = vmatprep.subr.mxu0 0.0
      %6411 = vmatpush2.msra.mxu0 0.0
      %6412 = vmatprep.subr.mxu0 0.0
      %6413 = vmatpush2.msra.mxu0 0.0
      %6414 = vmatprep.subr.mxu0 0.0
      %6415 = vmatpush2.msra.mxu0 0.0
      %6416 = vmatprep.subr.mxu0 0.0
      %6417 = vmatpush2.msra.mxu0 0.0
      %6418 = vmatprep.subr.mxu0 0.0
      %6419 = vmatpush2.msra.mxu0 0.0
      %6420 = vmatprep.subr.mxu0 0.0
      %6421 = vmatpush2.msra.mxu0 0.0
      %6422 = vmatprep.subr.mxu0 0.0
      %6423 = vmatpush2.msra.mxu0 0.0
      %6424 = vmatprep.subr.mxu0 0.0
      %6425 = vmatpush2.msra.mxu0 0.0
      %6426 = vmatprep.subr.mxu0 0.0
      %6427 = vmatpush2.msra.mxu0 0.0
      %6428 = vmatprep.subr.mxu0 0.0
      %6429 = vmatpush2.msra.mxu0 0.0
      %6430 = vmatprep.subr.mxu0 0.0
      %6431 = vmatpush2.msra.mxu0 0.0
      %6432 = vmatprep.mubr.f32.mxu0 0.0
      %6433 = vmatmul.mubr.f32.gmra.mxu0 %v6360
      %v6434 = vpop.f32.mrf.mxu0
      %v6435 = vadd.f32 0.0, %v6434
      %v6436 = vpop.f32.mrf.mxu0
      %6437 = vmatprep.mubr.f32.mxu0 0.0
      %6438 = vmatmul.mubr.f32.gmra.mxu0 %v6363
      %v6439 = vpop.f32.mrf.mxu0
      %v6440 = vadd.f32 0.0, %v6439
      %v6441 = vpop.f32.mrf.mxu0
      %6442 = vdwg.mxu0
      %v6443 = vadd.f32 %v6353, %v6435
      %v6444 = vadd.f32 %v6354, %v6440
      %v6445 = vld [vmem:[%s610] sm:$0xf]
      %v6447 = vrot.slane %v6355, 1
      %v6448 = vrot.slane %v6356, 1
      %v6449 = vsel %vm252, %v6447, %v6448
      %v6450 = vrot.slane %v6357, 1
      %v6451 = vsel %vm252, %v6448, %v6450
      %v6452 = vsel %vm258, %v6449, 0
      %v6454 = vsel %vm258, %v6451, 0
      %v6457 = vsel %vm263, %v6445, 0
      %6459 = vmatprep.subr.mxu0 0.0
      %6460 = vmatpush1.msra.mxu0 0.0
      %6461 = vmatprep.subr.mxu0 0.0
      %6462 = vmatpush1.msra.mxu0 0.0
      %6463 = vmatprep.subr.mxu0 0.0
      %6464 = vmatpush1.msra.mxu0 0.0
      %6465 = vmatprep.subr.mxu0 0.0
      %6466 = vmatpush1.msra.mxu0 0.0
      %6467 = vmatprep.subr.mxu0 0.0
      %6468 = vmatpush1.msra.mxu0 0.0
      %6469 = vmatprep.subr.mxu0 0.0
      %6470 = vmatpush1.msra.mxu0 0.0
      %6471 = vmatprep.subr.mxu0 0.0
      %6472 = vmatpush1.msra.mxu0 0.0
      %6473 = vmatprep.subr.mxu0 0.0
      %6474 = vmatpush1.msra.mxu0 0.0
      %6475 = vmatprep.subr.mxu0 0.0
      %6476 = vmatpush1.msra.mxu0 0.0
      %6477 = vmatprep.subr.mxu0 0.0
      %6478 = vmatpush1.msra.mxu0 0.0
      %6479 = vmatprep.subr.mxu0 0.0
      %6480 = vmatpush1.msra.mxu0 0.0
      %6481 = vmatprep.subr.mxu0 0.0
      %6482 = vmatpush1.msra.mxu0 0.0
      %6483 = vmatprep.subr.mxu0 0.0
      %6484 = vmatpush1.msra.mxu0 0.0
      %6485 = vmatprep.subr.mxu0 0.0
      %6486 = vmatpush1.msra.mxu0 0.0
      %6487 = vmatprep.subr.mxu0 0.0
      %6488 = vmatpush1.msra.mxu0 0.0
      %6489 = vmatprep.subr.mxu0 0.0
      %6490 = vmatpush1.msra.mxu0 %v6457
      %6491 = vmatprep.subr.mxu0 0.0
      %6492 = vmatpush2.msra.mxu0 0.0
      %6493 = vmatprep.subr.mxu0 0.0
      %6494 = vmatpush2.msra.mxu0 0.0
      %6495 = vmatprep.subr.mxu0 0.0
      %6496 = vmatpush2.msra.mxu0 0.0
      %6497 = vmatprep.subr.mxu0 0.0
      %6498 = vmatpush2.msra.mxu0 0.0
      %6499 = vmatprep.subr.mxu0 0.0
      %6500 = vmatpush2.msra.mxu0 0.0
      %6501 = vmatprep.subr.mxu0 0.0
      %6502 = vmatpush2.msra.mxu0 0.0
      %6503 = vmatprep.subr.mxu0 0.0
      %6504 = vmatpush2.msra.mxu0 0.0
      %6505 = vmatprep.subr.mxu0 0.0
      %6506 = vmatpush2.msra.mxu0 0.0
      %6507 = vmatprep.subr.mxu0 0.0
      %6508 = vmatpush2.msra.mxu0 0.0
      %6509 = vmatprep.subr.mxu0 0.0
      %6510 = vmatpush2.msra.mxu0 0.0
      %6511 = vmatprep.subr.mxu0 0.0
      %6512 = vmatpush2.msra.mxu0 0.0
      %6513 = vmatprep.subr.mxu0 0.0
      %6514 = vmatpush2.msra.mxu0 0.0
      %6515 = vmatprep.subr.mxu0 0.0
      %6516 = vmatpush2.msra.mxu0 0.0
      %6517 = vmatprep.subr.mxu0 0.0
      %6518 = vmatpush2.msra.mxu0 0.0
      %6519 = vmatprep.subr.mxu0 0.0
      %6520 = vmatpush2.msra.mxu0 0.0
      %6521 = vmatprep.subr.mxu0 0.0
      %6522 = vmatpush2.msra.mxu0 0.0
      %6523 = vmatprep.mubr.f32.mxu0 0.0
      %6524 = vmatmul.mubr.f32.gmra.mxu0 %v6452
      %v6525 = vpop.f32.mrf.mxu0
      %v6526 = vadd.f32 0.0, %v6525
      %v6527 = vpop.f32.mrf.mxu0
      %6528 = vmatprep.mubr.f32.mxu0 0.0
      %6529 = vmatmul.mubr.f32.gmra.mxu0 %v6454
      %v6530 = vpop.f32.mrf.mxu0
      %v6531 = vadd.f32 0.0, %v6530
      %v6532 = vpop.f32.mrf.mxu0
      %6533 = vdwg.mxu0
      %v6534 = vadd.f32 %v6443, %v6526
      %v6535 = vadd.f32 %v6444, %v6531
      %v6536 = vld [vmem:[%s702] sm:$0xf]
      %v6537 = vrot.slane %v6355, 2
      %v6538 = vrot.slane %v6356, 2
      %v6539 = vsel %vm426, %v6537, %v6538
      %v6540 = vrot.slane %v6357, 2
      %v6541 = vsel %vm426, %v6538, %v6540
      %v6542 = vsel %vm258, %v6539, 0
      %v6544 = vsel %vm258, %v6541, 0
      %v6547 = vsel %vm263, %v6536, 0
      %6549 = vmatprep.subr.mxu0 0.0
      %6550 = vmatpush1.msra.mxu0 0.0
      %6551 = vmatprep.subr.mxu0 0.0
      %6552 = vmatpush1.msra.mxu0 0.0
      %6553 = vmatprep.subr.mxu0 0.0
      %6554 = vmatpush1.msra.mxu0 0.0
      %6555 = vmatprep.subr.mxu0 0.0
      %6556 = vmatpush1.msra.mxu0 0.0
      %6557 = vmatprep.subr.mxu0 0.0
      %6558 = vmatpush1.msra.mxu0 0.0
      %6559 = vmatprep.subr.mxu0 0.0
      %6560 = vmatpush1.msra.mxu0 0.0
      %6561 = vmatprep.subr.mxu0 0.0
      %6562 = vmatpush1.msra.mxu0 0.0
      %6563 = vmatprep.subr.mxu0 0.0
      %6564 = vmatpush1.msra.mxu0 0.0
      %6565 = vmatprep.subr.mxu0 0.0
      %6566 = vmatpush1.msra.mxu0 0.0
      %6567 = vmatprep.subr.mxu0 0.0
      %6568 = vmatpush1.msra.mxu0 0.0
      %6569 = vmatprep.subr.mxu0 0.0
      %6570 = vmatpush1.msra.mxu0 0.0
      %6571 = vmatprep.subr.mxu0 0.0
      %6572 = vmatpush1.msra.mxu0 0.0
      %6573 = vmatprep.subr.mxu0 0.0
      %6574 = vmatpush1.msra.mxu0 0.0
      %6575 = vmatprep.subr.mxu0 0.0
      %6576 = vmatpush1.msra.mxu0 0.0
      %6577 = vmatprep.subr.mxu0 0.0
      %6578 = vmatpush1.msra.mxu0 0.0
      %6579 = vmatprep.subr.mxu0 0.0
      %6580 = vmatpush1.msra.mxu0 %v6547
      %6581 = vmatprep.subr.mxu0 0.0
      %6582 = vmatpush2.msra.mxu0 0.0
      %6583 = vmatprep.subr.mxu0 0.0
      %6584 = vmatpush2.msra.mxu0 0.0
      %6585 = vmatprep.subr.mxu0 0.0
      %6586 = vmatpush2.msra.mxu0 0.0
      %6587 = vmatprep.subr.mxu0 0.0
      %6588 = vmatpush2.msra.mxu0 0.0
      %6589 = vmatprep.subr.mxu0 0.0
      %6590 = vmatpush2.msra.mxu0 0.0
      %6591 = vmatprep.subr.mxu0 0.0
      %6592 = vmatpush2.msra.mxu0 0.0
      %6593 = vmatprep.subr.mxu0 0.0
      %6594 = vmatpush2.msra.mxu0 0.0
      %6595 = vmatprep.subr.mxu0 0.0
      %6596 = vmatpush2.msra.mxu0 0.0
      %6597 = vmatprep.subr.mxu0 0.0
      %6598 = vmatpush2.msra.mxu0 0.0
      %6599 = vmatprep.subr.mxu0 0.0
      %6600 = vmatpush2.msra.mxu0 0.0
      %6601 = vmatprep.subr.mxu0 0.0
      %6602 = vmatpush2.msra.mxu0 0.0
      %6603 = vmatprep.subr.mxu0 0.0
      %6604 = vmatpush2.msra.mxu0 0.0
      %6605 = vmatprep.subr.mxu0 0.0
      %6606 = vmatpush2.msra.mxu0 0.0
      %6607 = vmatprep.subr.mxu0 0.0
      %6608 = vmatpush2.msra.mxu0 0.0
      %6609 = vmatprep.subr.mxu0 0.0
      %6610 = vmatpush2.msra.mxu0 0.0
      %6611 = vmatprep.subr.mxu0 0.0
      %6612 = vmatpush2.msra.mxu0 0.0
      %6613 = vmatprep.mubr.f32.mxu0 0.0
      %6614 = vmatmul.mubr.f32.gmra.mxu0 %v6542
      %v6615 = vpop.f32.mrf.mxu0
      %v6616 = vadd.f32 0.0, %v6615
      %v6617 = vpop.f32.mrf.mxu0
      %6618 = vmatprep.mubr.f32.mxu0 0.0
      %6619 = vmatmul.mubr.f32.gmra.mxu0 %v6544
      %v6620 = vpop.f32.mrf.mxu0
      %v6621 = vadd.f32 0.0, %v6620
      %v6622 = vpop.f32.mrf.mxu0
      %6623 = vdwg.mxu0
      %v6624 = vadd.f32 %v6534, %v6616
      %v6625 = vadd.f32 %v6535, %v6621
      %s6626 = sadd.s32 %s240, 9
      %s6627 = smul.u32 %s6626, 24
      %s6628 = scalar_lea.vmem %s222, %s6627
      %v6629 = vld [vmem:[%s6628] sm:$0xff]
      %v6630 = vld [vmem:[%s6628 + $0x8] sm:$0xff]
      %v6631 = vld [vmem:[%s6628 + $0x10] sm:$0x3]
      %v6632 = vld [vmem:[%s799] sm:$0xf]
      %v6634 = vsel %vm258, %v6629, 0
      %v6637 = vsel %vm258, %v6630, 0
      %v6640 = vsel %vm263, %v6632, 0
      %6642 = vmatprep.subr.mxu0 0.0
      %6643 = vmatpush1.msra.mxu0 0.0
      %6644 = vmatprep.subr.mxu0 0.0
      %6645 = vmatpush1.msra.mxu0 0.0
      %6646 = vmatprep.subr.mxu0 0.0
      %6647 = vmatpush1.msra.mxu0 0.0
      %6648 = vmatprep.subr.mxu0 0.0
      %6649 = vmatpush1.msra.mxu0 0.0
      %6650 = vmatprep.subr.mxu0 0.0
      %6651 = vmatpush1.msra.mxu0 0.0
      %6652 = vmatprep.subr.mxu0 0.0
      %6653 = vmatpush1.msra.mxu0 0.0
      %6654 = vmatprep.subr.mxu0 0.0
      %6655 = vmatpush1.msra.mxu0 0.0
      %6656 = vmatprep.subr.mxu0 0.0
      %6657 = vmatpush1.msra.mxu0 0.0
      %6658 = vmatprep.subr.mxu0 0.0
      %6659 = vmatpush1.msra.mxu0 0.0
      %6660 = vmatprep.subr.mxu0 0.0
      %6661 = vmatpush1.msra.mxu0 0.0
      %6662 = vmatprep.subr.mxu0 0.0
      %6663 = vmatpush1.msra.mxu0 0.0
      %6664 = vmatprep.subr.mxu0 0.0
      %6665 = vmatpush1.msra.mxu0 0.0
      %6666 = vmatprep.subr.mxu0 0.0
      %6667 = vmatpush1.msra.mxu0 0.0
      %6668 = vmatprep.subr.mxu0 0.0
      %6669 = vmatpush1.msra.mxu0 0.0
      %6670 = vmatprep.subr.mxu0 0.0
      %6671 = vmatpush1.msra.mxu0 0.0
      %6672 = vmatprep.subr.mxu0 0.0
      %6673 = vmatpush1.msra.mxu0 %v6640
      %6674 = vmatprep.subr.mxu0 0.0
      %6675 = vmatpush2.msra.mxu0 0.0
      %6676 = vmatprep.subr.mxu0 0.0
      %6677 = vmatpush2.msra.mxu0 0.0
      %6678 = vmatprep.subr.mxu0 0.0
      %6679 = vmatpush2.msra.mxu0 0.0
      %6680 = vmatprep.subr.mxu0 0.0
      %6681 = vmatpush2.msra.mxu0 0.0
      %6682 = vmatprep.subr.mxu0 0.0
      %6683 = vmatpush2.msra.mxu0 0.0
      %6684 = vmatprep.subr.mxu0 0.0
      %6685 = vmatpush2.msra.mxu0 0.0
      %6686 = vmatprep.subr.mxu0 0.0
      %6687 = vmatpush2.msra.mxu0 0.0
      %6688 = vmatprep.subr.mxu0 0.0
      %6689 = vmatpush2.msra.mxu0 0.0
      %6690 = vmatprep.subr.mxu0 0.0
      %6691 = vmatpush2.msra.mxu0 0.0
      %6692 = vmatprep.subr.mxu0 0.0
      %6693 = vmatpush2.msra.mxu0 0.0
      %6694 = vmatprep.subr.mxu0 0.0
      %6695 = vmatpush2.msra.mxu0 0.0
      %6696 = vmatprep.subr.mxu0 0.0
      %6697 = vmatpush2.msra.mxu0 0.0
      %6698 = vmatprep.subr.mxu0 0.0
      %6699 = vmatpush2.msra.mxu0 0.0
      %6700 = vmatprep.subr.mxu0 0.0
      %6701 = vmatpush2.msra.mxu0 0.0
      %6702 = vmatprep.subr.mxu0 0.0
      %6703 = vmatpush2.msra.mxu0 0.0
      %6704 = vmatprep.subr.mxu0 0.0
      %6705 = vmatpush2.msra.mxu0 0.0
      %6706 = vmatprep.mubr.f32.mxu0 0.0
      %6707 = vmatmul.mubr.f32.gmra.mxu0 %v6634
      %v6708 = vpop.f32.mrf.mxu0
      %v6709 = vadd.f32 0.0, %v6708
      %v6710 = vpop.f32.mrf.mxu0
      %6711 = vmatprep.mubr.f32.mxu0 0.0
      %6712 = vmatmul.mubr.f32.gmra.mxu0 %v6637
      %v6713 = vpop.f32.mrf.mxu0
      %v6714 = vadd.f32 0.0, %v6713
      %v6715 = vpop.f32.mrf.mxu0
      %6716 = vdwg.mxu0
      %v6717 = vadd.f32 %v6624, %v6709
      %v6718 = vadd.f32 %v6625, %v6714
      %v6719 = vld [vmem:[%s887] sm:$0xf]
      %v6721 = vrot.slane %v6629, 1
      %v6722 = vrot.slane %v6630, 1
      %v6723 = vsel %vm252, %v6721, %v6722
      %v6724 = vrot.slane %v6631, 1
      %v6725 = vsel %vm252, %v6722, %v6724
      %v6726 = vsel %vm258, %v6723, 0
      %v6728 = vsel %vm258, %v6725, 0
      %v6731 = vsel %vm263, %v6719, 0
      %6733 = vmatprep.subr.mxu0 0.0
      %6734 = vmatpush1.msra.mxu0 0.0
      %6735 = vmatprep.subr.mxu0 0.0
      %6736 = vmatpush1.msra.mxu0 0.0
      %6737 = vmatprep.subr.mxu0 0.0
      %6738 = vmatpush1.msra.mxu0 0.0
      %6739 = vmatprep.subr.mxu0 0.0
      %6740 = vmatpush1.msra.mxu0 0.0
      %6741 = vmatprep.subr.mxu0 0.0
      %6742 = vmatpush1.msra.mxu0 0.0
      %6743 = vmatprep.subr.mxu0 0.0
      %6744 = vmatpush1.msra.mxu0 0.0
      %6745 = vmatprep.subr.mxu0 0.0
      %6746 = vmatpush1.msra.mxu0 0.0
      %6747 = vmatprep.subr.mxu0 0.0
      %6748 = vmatpush1.msra.mxu0 0.0
      %6749 = vmatprep.subr.mxu0 0.0
      %6750 = vmatpush1.msra.mxu0 0.0
      %6751 = vmatprep.subr.mxu0 0.0
      %6752 = vmatpush1.msra.mxu0 0.0
      %6753 = vmatprep.subr.mxu0 0.0
      %6754 = vmatpush1.msra.mxu0 0.0
      %6755 = vmatprep.subr.mxu0 0.0
      %6756 = vmatpush1.msra.mxu0 0.0
      %6757 = vmatprep.subr.mxu0 0.0
      %6758 = vmatpush1.msra.mxu0 0.0
      %6759 = vmatprep.subr.mxu0 0.0
      %6760 = vmatpush1.msra.mxu0 0.0
      %6761 = vmatprep.subr.mxu0 0.0
      %6762 = vmatpush1.msra.mxu0 0.0
      %6763 = vmatprep.subr.mxu0 0.0
      %6764 = vmatpush1.msra.mxu0 %v6731
      %6765 = vmatprep.subr.mxu0 0.0
      %6766 = vmatpush2.msra.mxu0 0.0
      %6767 = vmatprep.subr.mxu0 0.0
      %6768 = vmatpush2.msra.mxu0 0.0
      %6769 = vmatprep.subr.mxu0 0.0
      %6770 = vmatpush2.msra.mxu0 0.0
      %6771 = vmatprep.subr.mxu0 0.0
      %6772 = vmatpush2.msra.mxu0 0.0
      %6773 = vmatprep.subr.mxu0 0.0
      %6774 = vmatpush2.msra.mxu0 0.0
      %6775 = vmatprep.subr.mxu0 0.0
      %6776 = vmatpush2.msra.mxu0 0.0
      %6777 = vmatprep.subr.mxu0 0.0
      %6778 = vmatpush2.msra.mxu0 0.0
      %6779 = vmatprep.subr.mxu0 0.0
      %6780 = vmatpush2.msra.mxu0 0.0
      %6781 = vmatprep.subr.mxu0 0.0
      %6782 = vmatpush2.msra.mxu0 0.0
      %6783 = vmatprep.subr.mxu0 0.0
      %6784 = vmatpush2.msra.mxu0 0.0
      %6785 = vmatprep.subr.mxu0 0.0
      %6786 = vmatpush2.msra.mxu0 0.0
      %6787 = vmatprep.subr.mxu0 0.0
      %6788 = vmatpush2.msra.mxu0 0.0
      %6789 = vmatprep.subr.mxu0 0.0
      %6790 = vmatpush2.msra.mxu0 0.0
      %6791 = vmatprep.subr.mxu0 0.0
      %6792 = vmatpush2.msra.mxu0 0.0
      %6793 = vmatprep.subr.mxu0 0.0
      %6794 = vmatpush2.msra.mxu0 0.0
      %6795 = vmatprep.subr.mxu0 0.0
      %6796 = vmatpush2.msra.mxu0 0.0
      %6797 = vmatprep.mubr.f32.mxu0 0.0
      %6798 = vmatmul.mubr.f32.gmra.mxu0 %v6726
      %v6799 = vpop.f32.mrf.mxu0
      %v6800 = vadd.f32 0.0, %v6799
      %v6801 = vpop.f32.mrf.mxu0
      %6802 = vmatprep.mubr.f32.mxu0 0.0
      %6803 = vmatmul.mubr.f32.gmra.mxu0 %v6728
      %v6804 = vpop.f32.mrf.mxu0
      %v6805 = vadd.f32 0.0, %v6804
      %v6806 = vpop.f32.mrf.mxu0
      %6807 = vdwg.mxu0
      %v6808 = vadd.f32 %v6717, %v6800
      %v6809 = vadd.f32 %v6718, %v6805
      %v6810 = vld [vmem:[%s979] sm:$0xf]
      %v6811 = vrot.slane %v6629, 2
      %v6812 = vrot.slane %v6630, 2
      %v6813 = vsel %vm426, %v6811, %v6812
      %v6814 = vrot.slane %v6631, 2
      %v6815 = vsel %vm426, %v6812, %v6814
      %v6816 = vsel %vm258, %v6813, 0
      %v6818 = vsel %vm258, %v6815, 0
      %v6821 = vsel %vm263, %v6810, 0
      %6823 = vmatprep.subr.mxu0 0.0
      %6824 = vmatpush1.msra.mxu0 0.0
      %6825 = vmatprep.subr.mxu0 0.0
      %6826 = vmatpush1.msra.mxu0 0.0
      %6827 = vmatprep.subr.mxu0 0.0
      %6828 = vmatpush1.msra.mxu0 0.0
      %6829 = vmatprep.subr.mxu0 0.0
      %6830 = vmatpush1.msra.mxu0 0.0
      %6831 = vmatprep.subr.mxu0 0.0
      %6832 = vmatpush1.msra.mxu0 0.0
      %6833 = vmatprep.subr.mxu0 0.0
      %6834 = vmatpush1.msra.mxu0 0.0
      %6835 = vmatprep.subr.mxu0 0.0
      %6836 = vmatpush1.msra.mxu0 0.0
      %6837 = vmatprep.subr.mxu0 0.0
      %6838 = vmatpush1.msra.mxu0 0.0
      %6839 = vmatprep.subr.mxu0 0.0
      %6840 = vmatpush1.msra.mxu0 0.0
      %6841 = vmatprep.subr.mxu0 0.0
      %6842 = vmatpush1.msra.mxu0 0.0
      %6843 = vmatprep.subr.mxu0 0.0
      %6844 = vmatpush1.msra.mxu0 0.0
      %6845 = vmatprep.subr.mxu0 0.0
      %6846 = vmatpush1.msra.mxu0 0.0
      %6847 = vmatprep.subr.mxu0 0.0
      %6848 = vmatpush1.msra.mxu0 0.0
      %6849 = vmatprep.subr.mxu0 0.0
      %6850 = vmatpush1.msra.mxu0 0.0
      %6851 = vmatprep.subr.mxu0 0.0
      %6852 = vmatpush1.msra.mxu0 0.0
      %6853 = vmatprep.subr.mxu0 0.0
      %6854 = vmatpush1.msra.mxu0 %v6821
      %6855 = vmatprep.subr.mxu0 0.0
      %6856 = vmatpush2.msra.mxu0 0.0
      %6857 = vmatprep.subr.mxu0 0.0
      %6858 = vmatpush2.msra.mxu0 0.0
      %6859 = vmatprep.subr.mxu0 0.0
      %6860 = vmatpush2.msra.mxu0 0.0
      %6861 = vmatprep.subr.mxu0 0.0
      %6862 = vmatpush2.msra.mxu0 0.0
      %6863 = vmatprep.subr.mxu0 0.0
      %6864 = vmatpush2.msra.mxu0 0.0
      %6865 = vmatprep.subr.mxu0 0.0
      %6866 = vmatpush2.msra.mxu0 0.0
      %6867 = vmatprep.subr.mxu0 0.0
      %6868 = vmatpush2.msra.mxu0 0.0
      %6869 = vmatprep.subr.mxu0 0.0
      %6870 = vmatpush2.msra.mxu0 0.0
      %6871 = vmatprep.subr.mxu0 0.0
      %6872 = vmatpush2.msra.mxu0 0.0
      %6873 = vmatprep.subr.mxu0 0.0
      %6874 = vmatpush2.msra.mxu0 0.0
      %6875 = vmatprep.subr.mxu0 0.0
      %6876 = vmatpush2.msra.mxu0 0.0
      %6877 = vmatprep.subr.mxu0 0.0
      %6878 = vmatpush2.msra.mxu0 0.0
      %6879 = vmatprep.subr.mxu0 0.0
      %6880 = vmatpush2.msra.mxu0 0.0
      %6881 = vmatprep.subr.mxu0 0.0
      %6882 = vmatpush2.msra.mxu0 0.0
      %6883 = vmatprep.subr.mxu0 0.0
      %6884 = vmatpush2.msra.mxu0 0.0
      %6885 = vmatprep.subr.mxu0 0.0
      %6886 = vmatpush2.msra.mxu0 0.0
      %6887 = vmatprep.mubr.f32.mxu0 0.0
      %6888 = vmatmul.mubr.f32.gmra.mxu0 %v6816
      %v6889 = vpop.f32.mrf.mxu0
      %v6890 = vadd.f32 0.0, %v6889
      %v6891 = vpop.f32.mrf.mxu0
      %6892 = vmatprep.mubr.f32.mxu0 0.0
      %6893 = vmatmul.mubr.f32.gmra.mxu0 %v6818
      %v6894 = vpop.f32.mrf.mxu0
      %v6895 = vadd.f32 0.0, %v6894
      %v6896 = vpop.f32.mrf.mxu0
      %6897 = vdwg.mxu0
      %v6898 = vadd.f32 %v6808, %v6890
      %v6899 = vadd.f32 %v6809, %v6895
      %s6900 = scalar_lea.vmem %s232, 112
      %6901 = vst [vmem:[%s6900] sm:$0xff] %v6898
      %6902 = vst [vmem:[%s6900 + $0x8] sm:$0xff] %v6899
      %v6903 = vadd.f32 %v6898, %v6899
      %v6904 = vrot.slane %v6903, 4
      %v6905 = vadd.f32 %v6903, %v6904
      %v6906 = vrot.slane %v6905, 2
      %v6907 = vadd.f32 %v6905, %v6906
      %v6908 = vrot.slane %v6907, 1
      %v6909 = vadd.f32 %v6907, %v6908
      %v6910 = vadd.f32 %v6077, %v6909
      %v6911 = vmul.f32 %v6898, %v6898
      %v6912 = vmul.f32 %v6899, %v6899
      %v6913 = vadd.f32 %v6911, %v6912
      %v6914 = vrot.slane %v6913, 4
      %v6915 = vadd.f32 %v6913, %v6914
      %v6916 = vrot.slane %v6915, 2
      %v6917 = vadd.f32 %v6915, %v6916
      %v6918 = vrot.slane %v6917, 1
      %v6919 = vadd.f32 %v6917, %v6918
      %v6920 = vadd.f32 %v6087, %v6919
      %p6921 = scmp.eq.s32.totalorder %s21, 0
      // Predicated region
      $region29: #{layer_forward.2} parent=27 // pred_check
        %p6922 = pneg %p6921
      $region30: #{layer_forward.2} parent=27 // pred_check_branch
        %6924 = sbr.rel (%p6922) target = $region32
      $region31: #{layer_forward.2} parent=27 // pred_region
        %6925 = vst [vmem:[%s236] sm:$0x1] %v6910
        %6926 = vst [vmem:[%s239] sm:$0x1] %v6920
      $region32: #{layer_forward.2} parent=27 // pred_fallthru
        _
      %p6927 = scmp.gt.s32.totalorder %s21, 0
      // Predicated region
      $region33: #{layer_forward.2} parent=27 // pred_check
        %p6928 = pneg %p6927
      $region34: #{layer_forward.2} parent=27 // pred_check_branch
        %6930 = sbr.rel (%p6928) target = $region36
      $region35: #{layer_forward.2} parent=27 // pred_region
        %v6931 = vld [vmem:[%s236] sm:$0x1]
        %v6932 = vadd.f32 %v6931, %v6910
        %6933 = vst [vmem:[%s236] sm:$0x1] %v6932
        %v6934 = vld [vmem:[%s239] sm:$0x1]
        %v6935 = vadd.f32 %v6934, %v6920
        %6936 = vst [vmem:[%s239] sm:$0x1] %v6935
      $region36: #{layer_forward.2} parent=27 // pred_fallthru
        _
      %s6937 = smul.u32 8, %s21
      %p6938 = scmp.lt.s32.totalorder %s20, 1
      %s6939 = scalar_select %p6938, %s20, 1
      %p6940 = scmp.lt.s32.totalorder %s6937, 15
      %s6941 = scalar_select %p6940, %s6937, 15
      %s6942 = smul.addr %s6941, 2
      %s6943 = smul.addr %s6939, 32
      %s6944 = sadd.s32 %s6942, %s6943
      %s6945 = smul.addr %s6944, 8
      %s6946 = scalar_lea.vmem %s2, %s6945
      %p6947 = scmp.lt.s32.totalorder %s20, 1
      %s6948 = scalar_select %p6947, %s20, 1
      %s6949 = scalar_lea.vmem %s3, %s6948
      %p6950 = scmp.lt.s32.totalorder %s20, 1
      %s6951 = scalar_select %p6950, %s20, 1
      %s6952 = scalar_lea.vmem %s4, %s6951
      // Predicated region
      $region37: #{layer_forward.2} parent=27 // pred_check
        %p6953 = pneg %p95
      $region38: #{layer_forward.2} parent=27 // pred_check_branch
        %6955 = sbr.rel (%p6953) target = $region40
      $region39: #{layer_forward.2} parent=27 // pred_region
        %s6956 = smul.u32 8, %s21
      $region40: #{layer_forward.2} parent=27 // pred_fallthru
        _
      // Predicated region
      $region41: #{layer_forward.2} parent=27 // pred_check
        %p6957 = pneg %p121
      $region42: #{layer_forward.2} parent=27 // pred_check_branch
        %6959 = sbr.rel (%p6957) target = $region44
      $region43: #{layer_forward.2} parent=27 // pred_region
        _
      $region44: #{layer_forward.2} parent=27 // pred_fallthru
        _
      // Predicated region
      $region45: #{layer_forward.2} parent=27 // pred_check
        %p6960 = pneg %p147
      $region46: #{layer_forward.2} parent=27 // pred_check_branch
        %6962 = sbr.rel (%p6960) target = $region48
      $region47: #{layer_forward.2} parent=27 // pred_region
        _
      $region48: #{layer_forward.2} parent=27 // pred_fallthru
        _
    $region28: #{layer_forward.2} parent=5 // pred_fallthru
      _
    %p6963 = scmp.le.s32.totalorder 2, %s11
    // Predicated region
    $region49: #{layer_forward.2} parent=5 // pred_check
      %p6964 = pneg %p6963
    $region50: #{layer_forward.2} parent=5 // pred_check_branch
      %6966 = sbr.rel (%p6964) target = $region52
    $region51: #{layer_forward.2} parent=5 // pred_region
      %s6967 = ssub.s32 %s11, 2
      // Predicated region
      $region53: #{layer_forward.2} parent=51 // pred_check
        %p6968 = pneg %p101
      $region54: #{layer_forward.2} parent=51 // pred_check_branch
        %6970 = sbr.rel (%p6968) target = $region56
      $region55: #{layer_forward.2} parent=51 // pred_region
        %s6971 = smul.u32 8, %s23
        %p6972 = scmp.lt.s32.totalorder %s22, 1
        %s6973 = scalar_select %p6972, %s22, 1
        %p6974 = scmp.lt.s32.totalorder %s6971, 15
        %s6975 = scalar_select %p6974, %s6971, 15
        %s6976 = smul.addr %s6975, 2
        %s6977 = smul.addr %s6973, 32
        %s6978 = sadd.s32 %s6976, %s6977
        %s6979 = smul.addr %s6978, 8
        %s6980 = scalar_lea.vmem %s2, %s6979
      $region56: #{layer_forward.2} parent=51 // pred_fallthru
        _
      // Predicated region
      $region57: #{layer_forward.2} parent=51 // pred_check
        %p6981 = pneg %p127
      $region58: #{layer_forward.2} parent=51 // pred_check_branch
        %6983 = sbr.rel (%p6981) target = $region60
      $region59: #{layer_forward.2} parent=51 // pred_region
        %p6984 = scmp.lt.s32.totalorder %s22, 1
        %s6985 = scalar_select %p6984, %s22, 1
        %s6986 = scalar_lea.vmem %s3, %s6985
      $region60: #{layer_forward.2} parent=51 // pred_fallthru
        _
      // Predicated region
      $region61: #{layer_forward.2} parent=51 // pred_check
        %p6987 = pneg %p153
      $region62: #{layer_forward.2} parent=51 // pred_check_branch
        %6989 = sbr.rel (%p6987) target = $region64
      $region63: #{layer_forward.2} parent=51 // pred_region
        %p6990 = scmp.lt.s32.totalorder %s22, 1
        %s6991 = scalar_select %p6990, %s22, 1
        %s6992 = scalar_lea.vmem %s4, %s6991
      $region64: #{layer_forward.2} parent=51 // pred_fallthru
        _
    $region52: #{layer_forward.2} parent=5 // pred_fallthru
      _
  $region6: #{layer_forward.2} parent=0 // loop_footer
    %s15 = sadd.s32 1, %s11
  $region7: #{layer_forward.2} parent=0 // loop_footer_branch
    %10 = sbr.rel target = $region3
  $region8: #{layer_forward.2} parent=0 // loop_exit
    _

</llo_original>
